<compile_context>
chip_gen: v5e
topology: v5e:2x2
jax: 0.10.0
libtpu: 0.0.40
codegen_flags: <defaults>
</compile_context>

<pallas_src>
import functools

import jax
import jax.numpy as jnp
from jax.experimental import pallas as pl
from jax.experimental.pallas import tpu as pltpu

NEG_SLOPE = 0.01   # nn.LeakyReLU default
BN_EPS = 1e-5      # nn.BatchNorm3d default


# ----------------------------------------------------------------------------
# Pallas kernels
# ----------------------------------------------------------------------------
def conv_fused_kernel(p_ref, w_ref, b_ref, o_ref, sum_ref, sq_ref, *, apply_act):
    """One lane-dense tile of out[Cout, T] = W[Cout, KC] @ patches[KC, T] + b.

    Fuses bias, optional LeakyReLU and the BatchNorm batch statistics
    (per-channel sum / sum-of-squares accumulated over all grid steps).
    """
    y = jnp.dot(w_ref[...], p_ref[0],
                preferred_element_type=jnp.float32) + b_ref[...]
    if apply_act:
        y = jnp.where(y >= 0, y, NEG_SLOPE * y)
    o_ref[0] = y

    @pl.when(jnp.logical_and(pl.program_id(0) == 0, pl.program_id(1) == 0))
    def _init():
        sum_ref[...] = jnp.zeros_like(sum_ref)
        sq_ref[...] = jnp.zeros_like(sq_ref)

    # Single-pass E[x^2]-E[x]^2 stats in f32 (adequate at these scales; a
    # shifted two-pass reduction would be safer when |mean| >> std).
    sum_ref[...] += jnp.sum(y, axis=-1, keepdims=True)
    sq_ref[...] += jnp.sum(y * y, axis=-1, keepdims=True)


def bn_add_kernel(h_ref, r_ref, scale_ref, shift_ref, o_ref):
    """Final fused pass: out = bn3(h) + residual_bn, lane-dense stores."""
    o_ref[0] = h_ref[0] * scale_ref[...] + shift_ref[...] + r_ref[0]


# ----------------------------------------------------------------------------
# Pallas wrappers
# ----------------------------------------------------------------------------
def _pick_cols(s):
    """Largest multiple-of-128 tile (<=2048) dividing s, else the full axis."""
    for t in (2048, 1024, 512, 256, 128):
        if s % t == 0:
            return t
    return s


def conv_core(patches, w_mat, bias, apply_act):
    """patches: (N, KC, S) f32; w_mat: (Cout, KC); bias: (Cout,).

    Returns (y, sum, sumsq): y is (N, Cout, S); sum/sumsq are (Cout, 1)
    reductions of y over all N*S positions (post-activation if apply_act).
    """
    N, KC, S = patches.shape
    Cout = w_mat.shape[0]
    tc = _pick_cols(S)
    kernel = functools.partial(conv_fused_kernel, apply_act=apply_act)
    return pl.pallas_call(
        kernel,
        out_shape=(jax.ShapeDtypeStruct((N, Cout, S), jnp.float32),
                   jax.ShapeDtypeStruct((Cout, 1), jnp.float32),
                   jax.ShapeDtypeStruct((Cout, 1), jnp.float32)),
        grid_spec=pltpu.PrefetchScalarGridSpec(
            num_scalar_prefetch=0,
            grid=(N, S // tc),
            in_specs=[
                pl.BlockSpec((1, KC, tc), lambda n, i: (n, 0, i)),
                pl.BlockSpec((Cout, KC), lambda n, i: (0, 0)),   # resident
                pl.BlockSpec((Cout, 1), lambda n, i: (0, 0)),    # resident
            ],
            out_specs=(pl.BlockSpec((1, Cout, tc), lambda n, i: (n, 0, i)),
                       pl.BlockSpec((Cout, 1), lambda n, i: (0, 0)),
                       pl.BlockSpec((Cout, 1), lambda n, i: (0, 0))),
        ),
        compiler_params=pltpu.CompilerParams(
            dimension_semantics=("arbitrary", "arbitrary")),
    )(patches, w_mat, bias.reshape(Cout, 1))


def bn_add(h, res, scale, shift):
    """out = h * scale + shift + res, all (N, C, S), per-channel scale/shift."""
    N, C, S = h.shape
    tc = _pick_cols(S)
    return pl.pallas_call(
        bn_add_kernel,
        out_shape=jax.ShapeDtypeStruct((N, C, S), jnp.float32),
        grid_spec=pltpu.PrefetchScalarGridSpec(
            num_scalar_prefetch=0,
            grid=(N, S // tc),
            in_specs=[pl.BlockSpec((1, C, tc), lambda n, i: (n, 0, i)),
                      pl.BlockSpec((1, C, tc), lambda n, i: (n, 0, i)),
                      pl.BlockSpec((C, 1), lambda n, i: (0, 0)),
                      pl.BlockSpec((C, 1), lambda n, i: (0, 0))],
            out_specs=pl.BlockSpec((1, C, tc), lambda n, i: (n, 0, i)),
        ),
        compiler_params=pltpu.CompilerParams(
            dimension_semantics=("parallel", "parallel")),
    )(h, res, scale.reshape(C, 1), shift.reshape(C, 1))


# ----------------------------------------------------------------------------
# JAX glue: BN affine math, weight folding, im2col, sub-pixel ConvTranspose
# ----------------------------------------------------------------------------
def bn_affine(s, q, count, gamma, beta):
    """Per-channel scale/shift so that bn(x) = x*scale + shift."""
    mean = s[:, 0] / count
    var = q[:, 0] / count - mean * mean        # biased variance (training mode)
    scale = gamma / jnp.sqrt(var + BN_EPS)
    shift = beta - mean * scale
    return scale, shift


def fold_bn_into_conv(w, b, scale, shift):
    """Fold a per-channel affine (applied to the conv input) into Conv3d
    weights/bias.  w: (Cout, Cin, 3,3,3) torch layout."""
    w_f = w * scale.reshape(1, -1, 1, 1, 1)
    b_f = b + jnp.einsum("oiklm,i->o", w, shift)
    return w_f, b_f


def conv_weight_to_mat(w):
    """torch Conv3d weight (Cout, Cin, 3,3,3) -> (Cout, 27*Cin), tap-major."""
    Cout, Cin = w.shape[0], w.shape[1]
    return jnp.transpose(w, (0, 2, 3, 4, 1)).reshape(Cout, 27 * Cin)


def pad_with_value(h5, pad_val):
    """Pad (N,C,D,H,W) by 1 on every spatial side with a per-channel value."""
    N, C, D, H, W = h5.shape
    out = jnp.broadcast_to(pad_val.reshape(1, C, 1, 1, 1),
                           (N, C, D + 2, H + 2, W + 2)).astype(h5.dtype)
    return out.at[:, :, 1:-1, 1:-1, 1:-1].set(h5)


def im2col_cf(xp, k):
    """xp: padded (N, C, Dp, Hp, Wp) -> patches (N, k^3*C, Do*Ho*Wo)."""
    N, C, Dp, Hp, Wp = xp.shape
    Do, Ho, Wo = Dp - k + 1, Hp - k + 1, Wp - k + 1
    slabs = []
    for kd in range(k):
        for kh in range(k):
            for kw in range(k):
                slabs.append(
                    xp[:, :, kd:kd + Do, kh:kh + Ho, kw:kw + Wo]
                    .reshape(N, C, Do * Ho * Wo))
    return jnp.concatenate(slabs, axis=1)


def _phase_taps(s):
    """ConvTranspose (k=3, pad=1) sub-pixel taps.

    For output o = od*s + p:  out[o] = sum_j W[j] * x[od + delta_j],
    taps[p] = [(j, delta_j), ...].  delta is always in {-1, 0, +1}.
    """
    taps = []
    for p in range(s):
        t = []
        for j in range(3):
            if (p + 1 - j) % s == 0:
                t.append((j, (p + 1 - j) // s))
        taps.append(t)
    return taps


def interleave_phases(subs, N, C, D, H, W, ts):
    """subs: list (phase order pd,ph,pw) of (N, C, D*H*W) -> (N, C, D*ts, 2H, 2W)."""
    stack = jnp.stack(subs, axis=0).reshape(ts, 2, 2, N, C, D, H, W)
    out = jnp.transpose(stack, (3, 4, 5, 0, 6, 1, 7, 2))
    return out.reshape(N, C, D * ts, 2 * H, 2 * W)


def convT3_subpixel(x, wt, bias, ts, apply_act):
    """ConvTranspose3d(k=3, stride=(ts,2,2), pad=1, out_pad=(ts-1,1,1)) via
    sub-pixel decomposition.  x: (N,Cin,D,H,W); wt: (Cin,Cout,3,3,3).

    Returns (list of per-phase outputs (N,Cout,D*H*W), total sum, total sumsq).
    """
    N, Cin, D, H, W = x.shape
    Cout = wt.shape[1]
    S = D * H * W
    xp = jnp.pad(x, ((0, 0), (0, 0), (1, 1), (1, 1), (1, 1)))
    taps_d, taps_h, taps_w = _phase_taps(ts), _phase_taps(2), _phase_taps(2)

    subs = []
    tot_s = jnp.zeros((Cout, 1), jnp.float32)
    tot_q = jnp.zeros((Cout, 1), jnp.float32)
    for pd in range(ts):
        for ph in range(2):
            for pw in range(2):
                tlist = [(jd, dd, jh, dh, jw, dw)
                         for (jd, dd) in taps_d[pd]
                         for (jh, dh) in taps_h[ph]
                         for (jw, dw) in taps_w[pw]]
                if not tlist:                       # bias-only phase (ts >= 4)
                    yb = bias.astype(jnp.float32)
                    if apply_act:
                        yb = jnp.where(yb >= 0, yb, NEG_SLOPE * yb)
                    subs.append(jnp.broadcast_to(yb.reshape(1, Cout, 1),
                                                 (N, Cout, S)))
                    tot_s = tot_s + (N * S) * yb.reshape(Cout, 1)
                    tot_q = tot_q + (N * S) * (yb * yb).reshape(Cout, 1)
                    continue
                slabs, wrows = [], []
                for (jd, dd, jh, dh, jw, dw) in tlist:
                    slabs.append(
                        xp[:, :, 1 + dd:1 + dd + D, 1 + dh:1 + dh + H,
                           1 + dw:1 + dw + W].reshape(N, Cin, S))
                    wrows.append(jnp.transpose(wt[:, :, jd, jh, jw]))  # (Cout,Cin)
                patches = jnp.concatenate(slabs, axis=1)    # (N, ntaps*Cin, S)
                wmat = jnp.concatenate(wrows, axis=1)        # (Cout, ntaps*Cin)
                y, s, q = conv_core(patches, wmat, bias, apply_act)
                subs.append(y)
                tot_s = tot_s + s
                tot_q = tot_q + q
    return subs, tot_s, tot_q


# ----------------------------------------------------------------------------
# DecoderBlock forward
# ----------------------------------------------------------------------------
def decoder_block_forward(x_ncdhw, params, temporal_stride=2):
    ts = temporal_stride
    x = x_ncdhw.astype(jnp.float32)
    N, Cin, D, H, W = x.shape
    Cout = params["res_w"].shape[1]
    Do, Ho, Wo = D * ts, 2 * H, 2 * W
    S_x, S_t = D * H * W, Do * Ho * Wo
    M_total, M_x = N * S_t, N * S_x
    n_phases = ts * 4

    # ---- residual path: sparse k=1 ConvT (data only at stride-aligned pos) ----
    res_w_mat = jnp.transpose(params["res_w"][:, :, 0, 0, 0])     # (Cout, Cin)
    res_data, s_r, q_r = conv_core(x.reshape(N, Cin, S_x), res_w_mat,
                                   params["res_b"], apply_act=False)
    b_r = params["res_b"]
    sum_r = s_r[:, 0] + (M_total - M_x) * b_r
    sq_r = q_r[:, 0] + (M_total - M_x) * b_r * b_r
    scale_r, shift_r = bn_affine(sum_r.reshape(Cout, 1), sq_r.reshape(Cout, 1),
                                 M_total, params["bnr_g"], params["bnr_b"])
    res_bn_data = res_data * scale_r.reshape(1, Cout, 1) + shift_r.reshape(1, Cout, 1)
    res_bn_const = jnp.broadcast_to((b_r * scale_r + shift_r).reshape(1, Cout, 1),
                                    (N, Cout, S_x))
    res_subs = [res_bn_data if p == 0 else res_bn_const for p in range(n_phases)]
    res_bn = interleave_phases(res_subs, N, Cout, D, H, W, ts).reshape(N, Cout, S_t)

    # ---- conv path ----
    # ConvTranspose3d(k=3) via sub-pixel decomposition, LeakyReLU + stats fused.
    subs, s1, q1 = convT3_subpixel(x, params["ct_w"], params["ct_b"], ts,
                                   apply_act=True)
    scale1, shift1 = bn_affine(s1, q1, M_total, params["bn1_g"], params["bn1_b"])
    h1 = interleave_phases(subs, N, Cout, D, H, W, ts)     # (N, Cout, Do, Ho, Wo)

    # Conv3d #1 with bn1 folded into weights; border padded with the value that
    # maps to 0 after bn1 (assumes gamma != 0, the PyTorch default).
    w1, b1 = fold_bn_into_conv(params["c1_w"], params["c1_b"], scale1, shift1)
    h1p = pad_with_value(h1, -shift1 / scale1)
    h2, s2, q2 = conv_core(im2col_cf(h1p, 3), conv_weight_to_mat(w1), b1,
                           apply_act=True)
    scale2, shift2 = bn_affine(s2, q2, M_total, params["bn2_g"], params["bn2_b"])

    # Conv3d #2 with bn2 folded; no activation.
    w2, b2 = fold_bn_into_conv(params["c2_w"], params["c2_b"], scale2, shift2)
    h2p = pad_with_value(h2.reshape(N, Cout, Do, Ho, Wo), -shift2 / scale2)
    h3, s3, q3 = conv_core(im2col_cf(h2p, 3), conv_weight_to_mat(w2), b2,
                           apply_act=False)
    scale3, shift3 = bn_affine(s3, q3, M_total, params["bn3_g"], params["bn3_b"])

    # Final fused pass: bn3(h3) + residual_bn.
    out = bn_add(h3, res_bn, scale3, shift3)
    return out.reshape(N, Cout, Do, Ho, Wo)                # already NCDHW


# ----------------------------------------------------------------------------
if __name__ == "__main__":
    N, Cin, D, H, W = 2, 4, 4, 8, 8
    Cout, ts = 8, 2

    key = jax.random.PRNGKey(0)
    keys = jax.random.split(key, 10)

    def init(k, shape):
        return 0.1 * jax.random.normal(k, shape, jnp.float32)

    params = dict(
        # ConvTranspose3d weights use torch layout (Cin, Cout, kD, kH, kW)
        res_w=init(keys[0], (Cin, Cout, 1, 1, 1)), res_b=init(keys[1], (Cout,)),
        ct_w=init(keys[2], (Cin, Cout, 3, 3, 3)), ct_b=init(keys[3], (Cout,)),
        # Conv3d weights use torch layout (Cout, Cin, kD, kH, kW)
        c1_w=init(keys[4], (Cout, Cout, 3, 3, 3)), c1_b=init(keys[5], (Cout,)),
        c2_w=init(keys[6], (Cout, Cout, 3, 3, 3)), c2_b=init(keys[7], (Cout,)),
        # BatchNorm affine params: PyTorch default init (weight=1, bias=0)
        bnr_g=jnp.ones((Cout,), jnp.float32), bnr_b=jnp.zeros((Cout,), jnp.float32),
        bn1_g=jnp.ones((Cout,), jnp.float32), bn1_b=jnp.zeros((Cout,), jnp.float32),
        bn2_g=jnp.ones((Cout,), jnp.float32), bn2_b=jnp.zeros((Cout,), jnp.float32),
        bn3_g=jnp.ones((Cout,), jnp.float32), bn3_b=jnp.zeros((Cout,), jnp.float32),
    )

    x = jax.random.normal(keys[8], (N, Cin, D, H, W), jnp.float32)

    fwd = jax.jit(functools.partial(decoder_block_forward, temporal_stride=ts))
    out = fwd(x, params)
    jax.block_until_ready(out)

    assert out.shape == (N, Cout, D * ts, 2 * H, 2 * W), out.shape
    assert bool(jnp.all(jnp.isfinite(out)))
    print("KERNEL_OK")
</pallas_src>

<mosaic_0001>
module attributes {stable_mosaic.version = 11 : i64} {
  func.func @conv_fused_kernel(%arg0: i32, %arg1: i32, %arg2: memref<1x4x256xf32, #tpu.memory_space<vmem>>, %arg3: memref<8x4xf32, #tpu.memory_space<vmem>>, %arg4: memref<8x1xf32, #tpu.memory_space<vmem>>, %arg5: memref<1x8x256xf32, #tpu.memory_space<vmem>>, %arg6: memref<8x1xf32, #tpu.memory_space<vmem>>, %arg7: memref<8x1xf32, #tpu.memory_space<vmem>>) attributes {dimension_semantics = [#tpu.dimension_semantics<arbitrary>, #tpu.dimension_semantics<arbitrary>], iteration_bounds = array<i64: 2, 1>, scalar_prefetch = 0 : i64, scratch_operands = 0 : i64, tpu.core_type = #tpu.core_type<tc>, window_params = [{transform_indices = @transform_0, window_bounds = array<i64: 1, 4, 256>}, {pipeline_mode = #tpu.pipeline_mode<synchronous>, transform_indices = @transform_1, window_bounds = array<i64: 8, 4>}, {pipeline_mode = #tpu.pipeline_mode<synchronous>, transform_indices = @transform_2, window_bounds = array<i64: 8, 1>}, {transform_indices = @transform_3, window_bounds = array<i64: 1, 8, 256>}, {pipeline_mode = #tpu.pipeline_mode<synchronous>, transform_indices = @transform_4, window_bounds = array<i64: 8, 1>}, {pipeline_mode = #tpu.pipeline_mode<synchronous>, transform_indices = @transform_5, window_bounds = array<i64: 8, 1>}]} {
    %c0 = arith.constant 0 : index
    %c0_0 = arith.constant 0 : index
    %0 = vector.load %arg3[%c0, %c0_0] : memref<8x4xf32, #tpu.memory_space<vmem>>, vector<8x4xf32>
    %c0_1 = arith.constant 0 : index
    %c0_2 = arith.constant 0 : index
    %c0_3 = arith.constant 0 : index
    %1 = vector.load %arg2[%c0_1, %c0_2, %c0_3] : memref<1x4x256xf32, #tpu.memory_space<vmem>>, vector<1x4x256xf32>
    %2 = vector.shape_cast %1 : vector<1x4x256xf32> to vector<4x256xf32>
    %cst = arith.constant dense<0.000000e+00> : vector<8x256xf32>
    %3 = tpu.matmul %0, %2, %cst {dimension_numbers = #tpu.dot_dimension_numbers<[1], [0], [0], [1], [0, 0, 1, 1], [], []>} : vector<8x4xf32>, vector<4x256xf32>, vector<8x256xf32> -> vector<8x256xf32>
    %c0_4 = arith.constant 0 : index
    %c0_5 = arith.constant 0 : index
    %4 = vector.load %arg4[%c0_4, %c0_5] : memref<8x1xf32, #tpu.memory_space<vmem>>, vector<8x1xf32>
    %5 = vector.broadcast %4 : vector<8x1xf32> to vector<8x256xf32>
    %6 = arith.addf %3, %5 : vector<8x256xf32>
    %c0_6 = arith.constant 0 : index
    %c0_7 = arith.constant 0 : index
    %c0_8 = arith.constant 0 : index
    %7 = vector.load %arg5[%c0_6, %c0_7, %c0_8] : memref<1x8x256xf32, #tpu.memory_space<vmem>>, vector<1x8x256xf32>
    %8 = vector.shape_cast %7 : vector<1x8x256xf32> to vector<8x256xf32>
    %9 = vector.shape_cast %6 : vector<8x256xf32> to vector<1x8x256xf32>
    tpu.vector_store %arg5[%c0_6, %c0_7, %c0_8], %9 {strides = array<i32>} : memref<1x8x256xf32, #tpu.memory_space<vmem>>, vector<1x8x256xf32>,
    %c0_i32 = arith.constant 0 : i32
    %10 = arith.cmpi eq, %arg0, %c0_i32 : i32
    %c0_i32_9 = arith.constant 0 : i32
    %11 = arith.cmpi eq, %arg1, %c0_i32_9 : i32
    %12 = arith.andi %10, %11 : i1
    %13 = arith.extui %12 : i1 to i32
    %c0_i32_10 = arith.constant 0 : i32
    %14 = arith.cmpi ne, %13, %c0_i32_10 : i32
    scf.if %14 {
      %cst_21 = arith.constant 0.000000e+00 : f32
      %26 = vector.broadcast %cst_21 : f32 to vector<8x1xf32>
      %c0_22 = arith.constant 0 : index
      %c0_23 = arith.constant 0 : index
      %27 = vector.load %arg6[%c0_22, %c0_23] : memref<8x1xf32, #tpu.memory_space<vmem>>, vector<8x1xf32>
      tpu.vector_store %arg6[%c0_22, %c0_23], %26 {strides = array<i32>} : memref<8x1xf32, #tpu.memory_space<vmem>>, vector<8x1xf32>,
      %cst_24 = arith.constant 0.000000e+00 : f32
      %28 = vector.broadcast %cst_24 : f32 to vector<8x1xf32>
      %c0_25 = arith.constant 0 : index
      %c0_26 = arith.constant 0 : index
      %29 = vector.load %arg7[%c0_25, %c0_26] : memref<8x1xf32, #tpu.memory_space<vmem>>, vector<8x1xf32>
      tpu.vector_store %arg7[%c0_25, %c0_26], %28 {strides = array<i32>} : memref<8x1xf32, #tpu.memory_space<vmem>>, vector<8x1xf32>,
    } else {
    }
    %c0_11 = arith.constant 0 : index
    %c0_12 = arith.constant 0 : index
    %15 = vector.load %arg6[%c0_11, %c0_12] : memref<8x1xf32, #tpu.memory_space<vmem>>, vector<8x1xf32>
    %cst_13 = arith.constant dense<0.000000e+00> : vector<8xf32>
    %16 = vector.multi_reduction <add>, %6, %cst_13 [1] : vector<8x256xf32> to vector<8xf32>
    %17 = vector.shape_cast %16 : vector<8xf32> to vector<8x1xf32>
    %18 = arith.addf %15, %17 : vector<8x1xf32>
    %c0_14 = arith.constant 0 : index
    %c0_15 = arith.constant 0 : index
    %19 = vector.load %arg6[%c0_14, %c0_15] : memref<8x1xf32, #tpu.memory_space<vmem>>, vector<8x1xf32>
    tpu.vector_store %arg6[%c0_14, %c0_15], %18 {strides = array<i32>} : memref<8x1xf32, #tpu.memory_space<vmem>>, vector<8x1xf32>,
    %c0_16 = arith.constant 0 : index
    %c0_17 = arith.constant 0 : index
    %20 = vector.load %arg7[%c0_16, %c0_17] : memref<8x1xf32, #tpu.memory_space<vmem>>, vector<8x1xf32>
    %21 = arith.mulf %6, %6 : vector<8x256xf32>
    %cst_18 = arith.constant dense<0.000000e+00> : vector<8xf32>
    %22 = vector.multi_reduction <add>, %21, %cst_18 [1] : vector<8x256xf32> to vector<8xf32>
    %23 = vector.shape_cast %22 : vector<8xf32> to vector<8x1xf32>
    %24 = arith.addf %20, %23 : vector<8x1xf32>
    %c0_19 = arith.constant 0 : index
    %c0_20 = arith.constant 0 : index
    %25 = vector.load %arg7[%c0_19, %c0_20] : memref<8x1xf32, #tpu.memory_space<vmem>>, vector<8x1xf32>
    tpu.vector_store %arg7[%c0_19, %c0_20], %24 {strides = array<i32>} : memref<8x1xf32, #tpu.memory_space<vmem>>, vector<8x1xf32>,
    return
  }
  func.func @transform_0(%arg0: i32, %arg1: i32) -> (i32, i32, i32) {
    %c0_i32 = arith.constant 0 : i32
    %c0_i32_0 = arith.constant 0 : i32
    return %arg0, %c0_i32, %arg1 : i32, i32, i32
  }
  func.func @transform_1(%arg0: i32, %arg1: i32) -> (i32, i32) {
    %c0_i32 = arith.constant 0 : i32
    %c0_i32_0 = arith.constant 0 : i32
    %c0_i32_1 = arith.constant 0 : i32
    return %c0_i32, %c0_i32_0 : i32, i32
  }
  func.func @transform_2(%arg0: i32, %arg1: i32) -> (i32, i32) {
    %c0_i32 = arith.constant 0 : i32
    %c0_i32_0 = arith.constant 0 : i32
    %c0_i32_1 = arith.constant 0 : i32
    return %c0_i32, %c0_i32_0 : i32, i32
  }
  func.func @transform_3(%arg0: i32, %arg1: i32) -> (i32, i32, i32) {
    %c0_i32 = arith.constant 0 : i32
    %c0_i32_0 = arith.constant 0 : i32
    return %arg0, %c0_i32, %arg1 : i32, i32, i32
  }
  func.func @transform_4(%arg0: i32, %arg1: i32) -> (i32, i32) {
    %c0_i32 = arith.constant 0 : i32
    %c0_i32_0 = arith.constant 0 : i32
    %c0_i32_1 = arith.constant 0 : i32
    return %c0_i32, %c0_i32_0 : i32, i32
  }
  func.func @transform_5(%arg0: i32, %arg1: i32) -> (i32, i32) {
    %c0_i32 = arith.constant 0 : i32
    %c0_i32_0 = arith.constant 0 : i32
    %c0_i32_1 = arith.constant 0 : i32
    return %c0_i32, %c0_i32_0 : i32, i32
  }
}

module attributes {stable_mosaic.version = 11 : i64} {
  func.func @conv_fused_kernel(%arg0: i32, %arg1: i32, %arg2: memref<1x4x256xf32, #tpu.memory_space<vmem>>, %arg3: memref<8x4xf32, #tpu.memory_space<vmem>>, %arg4: memref<8x1xf32, #tpu.memory_space<vmem>>, %arg5: memref<1x8x256xf32, #tpu.memory_space<vmem>>, %arg6: memref<8x1xf32, #tpu.memory_space<vmem>>, %arg7: memref<8x1xf32, #tpu.memory_space<vmem>>) attributes {dimension_semantics = [#tpu.dimension_semantics<arbitrary>, #tpu.dimension_semantics<arbitrary>], iteration_bounds = array<i64: 2, 1>, scalar_prefetch = 0 : i64, scratch_operands = 0 : i64, tpu.core_type = #tpu.core_type<tc>, window_params = [{transform_indices = @transform_0, window_bounds = array<i64: 1, 4, 256>}, {pipeline_mode = #tpu.pipeline_mode<synchronous>, transform_indices = @transform_1, window_bounds = array<i64: 8, 4>}, {pipeline_mode = #tpu.pipeline_mode<synchronous>, transform_indices = @transform_2, window_bounds = array<i64: 8, 1>}, {transform_indices = @transform_3, window_bounds = array<i64: 1, 8, 256>}, {pipeline_mode = #tpu.pipeline_mode<synchronous>, transform_indices = @transform_4, window_bounds = array<i64: 8, 1>}, {pipeline_mode = #tpu.pipeline_mode<synchronous>, transform_indices = @transform_5, window_bounds = array<i64: 8, 1>}]} {
    %c0 = arith.constant 0 : index
    %c0_0 = arith.constant 0 : index
    %0 = vector.load %arg3[%c0, %c0_0] : memref<8x4xf32, #tpu.memory_space<vmem>>, vector<8x4xf32>
    %c0_1 = arith.constant 0 : index
    %c0_2 = arith.constant 0 : index
    %c0_3 = arith.constant 0 : index
    %1 = vector.load %arg2[%c0_1, %c0_2, %c0_3] : memref<1x4x256xf32, #tpu.memory_space<vmem>>, vector<1x4x256xf32>
    %2 = vector.shape_cast %1 : vector<1x4x256xf32> to vector<4x256xf32>
    %cst = arith.constant dense<0.000000e+00> : vector<8x256xf32>
    %3 = tpu.matmul %0, %2, %cst {dimension_numbers = #tpu.dot_dimension_numbers<[1], [0], [0], [1], [0, 0, 1, 1], [], []>} : vector<8x4xf32>, vector<4x256xf32>, vector<8x256xf32> -> vector<8x256xf32>
    %c0_4 = arith.constant 0 : index
    %c0_5 = arith.constant 0 : index
    %4 = vector.load %arg4[%c0_4, %c0_5] : memref<8x1xf32, #tpu.memory_space<vmem>>, vector<8x1xf32>
    %5 = vector.broadcast %4 : vector<8x1xf32> to vector<8x256xf32>
    %6 = arith.addf %3, %5 : vector<8x256xf32>
    %cst_6 = arith.constant 0.000000e+00 : f32
    %7 = vector.broadcast %cst_6 : f32 to vector<8x256xf32>
    %8 = arith.cmpf oge, %6, %7 : vector<8x256xf32>
    %cst_7 = arith.constant 0.00999999977 : f32
    %9 = vector.broadcast %cst_7 : f32 to vector<8x256xf32>
    %10 = arith.mulf %9, %6 : vector<8x256xf32>
    %11 = arith.select %8, %6, %10 : vector<8x256xi1>, vector<8x256xf32>
    %c0_8 = arith.constant 0 : index
    %c0_9 = arith.constant 0 : index
    %c0_10 = arith.constant 0 : index
    %12 = vector.load %arg5[%c0_8, %c0_9, %c0_10] : memref<1x8x256xf32, #tpu.memory_space<vmem>>, vector<1x8x256xf32>
    %13 = vector.shape_cast %12 : vector<1x8x256xf32> to vector<8x256xf32>
    %14 = vector.shape_cast %11 : vector<8x256xf32> to vector<1x8x256xf32>
    tpu.vector_store %arg5[%c0_8, %c0_9, %c0_10], %14 {strides = array<i32>} : memref<1x8x256xf32, #tpu.memory_space<vmem>>, vector<1x8x256xf32>,
    %c0_i32 = arith.constant 0 : i32
    %15 = arith.cmpi eq, %arg0, %c0_i32 : i32
    %c0_i32_11 = arith.constant 0 : i32
    %16 = arith.cmpi eq, %arg1, %c0_i32_11 : i32
    %17 = arith.andi %15, %16 : i1
    %18 = arith.extui %17 : i1 to i32
    %c0_i32_12 = arith.constant 0 : i32
    %19 = arith.cmpi ne, %18, %c0_i32_12 : i32
    scf.if %19 {
      %cst_23 = arith.constant 0.000000e+00 : f32
      %31 = vector.broadcast %cst_23 : f32 to vector<8x1xf32>
      %c0_24 = arith.constant 0 : index
      %c0_25 = arith.constant 0 : index
      %32 = vector.load %arg6[%c0_24, %c0_25] : memref<8x1xf32, #tpu.memory_space<vmem>>, vector<8x1xf32>
      tpu.vector_store %arg6[%c0_24, %c0_25], %31 {strides = array<i32>} : memref<8x1xf32, #tpu.memory_space<vmem>>, vector<8x1xf32>,
      %cst_26 = arith.constant 0.000000e+00 : f32
      %33 = vector.broadcast %cst_26 : f32 to vector<8x1xf32>
      %c0_27 = arith.constant 0 : index
      %c0_28 = arith.constant 0 : index
      %34 = vector.load %arg7[%c0_27, %c0_28] : memref<8x1xf32, #tpu.memory_space<vmem>>, vector<8x1xf32>
      tpu.vector_store %arg7[%c0_27, %c0_28], %33 {strides = array<i32>} : memref<8x1xf32, #tpu.memory_space<vmem>>, vector<8x1xf32>,
    } else {
    }
    %c0_13 = arith.constant 0 : index
    %c0_14 = arith.constant 0 : index
    %20 = vector.load %arg6[%c0_13, %c0_14] : memref<8x1xf32, #tpu.memory_space<vmem>>, vector<8x1xf32>
    %cst_15 = arith.constant dense<0.000000e+00> : vector<8xf32>
    %21 = vector.multi_reduction <add>, %11, %cst_15 [1] : vector<8x256xf32> to vector<8xf32>
    %22 = vector.shape_cast %21 : vector<8xf32> to vector<8x1xf32>
    %23 = arith.addf %20, %22 : vector<8x1xf32>
    %c0_16 = arith.constant 0 : index
    %c0_17 = arith.constant 0 : index
    %24 = vector.load %arg6[%c0_16, %c0_17] : memref<8x1xf32, #tpu.memory_space<vmem>>, vector<8x1xf32>
    tpu.vector_store %arg6[%c0_16, %c0_17], %23 {strides = array<i32>} : memref<8x1xf32, #tpu.memory_space<vmem>>, vector<8x1xf32>,
    %c0_18 = arith.constant 0 : index
    %c0_19 = arith.constant 0 : index
    %25 = vector.load %arg7[%c0_18, %c0_19] : memref<8x1xf32, #tpu.memory_space<vmem>>, vector<8x1xf32>
    %26 = arith.mulf %11, %11 : vector<8x256xf32>
    %cst_20 = arith.constant dense<0.000000e+00> : vector<8xf32>
    %27 = vector.multi_reduction <add>, %26, %cst_20 [1] : vector<8x256xf32> to vector<8xf32>
    %28 = vector.shape_cast %27 : vector<8xf32> to vector<8x1xf32>
    %29 = arith.addf %25, %28 : vector<8x1xf32>
    %c0_21 = arith.constant 0 : index
    %c0_22 = arith.constant 0 : index
    %30 = vector.load %arg7[%c0_21, %c0_22] : memref<8x1xf32, #tpu.memory_space<vmem>>, vector<8x1xf32>
    tpu.vector_store %arg7[%c0_21, %c0_22], %29 {strides = array<i32>} : memref<8x1xf32, #tpu.memory_space<vmem>>, vector<8x1xf32>,
    return
  }
  func.func @transform_0(%arg0: i32, %arg1: i32) -> (i32, i32, i32) {
    %c0_i32 = arith.constant 0 : i32
    %c0_i32_0 = arith.constant 0 : i32
    return %arg0, %c0_i32, %arg1 : i32, i32, i32
  }
  func.func @transform_1(%arg0: i32, %arg1: i32) -> (i32, i32) {
    %c0_i32 = arith.constant 0 : i32
    %c0_i32_0 = arith.constant 0 : i32
    %c0_i32_1 = arith.constant 0 : i32
    return %c0_i32, %c0_i32_0 : i32, i32
  }
  func.func @transform_2(%arg0: i32, %arg1: i32) -> (i32, i32) {
    %c0_i32 = arith.constant 0 : i32
    %c0_i32_0 = arith.constant 0 : i32
    %c0_i32_1 = arith.constant 0 : i32
    return %c0_i32, %c0_i32_0 : i32, i32
  }
  func.func @transform_3(%arg0: i32, %arg1: i32) -> (i32, i32, i32) {
    %c0_i32 = arith.constant 0 : i32
    %c0_i32_0 = arith.constant 0 : i32
    return %arg0, %c0_i32, %arg1 : i32, i32, i32
  }
  func.func @transform_4(%arg0: i32, %arg1: i32) -> (i32, i32) {
    %c0_i32 = arith.constant 0 : i32
    %c0_i32_0 = arith.constant 0 : i32
    %c0_i32_1 = arith.constant 0 : i32
    return %c0_i32, %c0_i32_0 : i32, i32
  }
  func.func @transform_5(%arg0: i32, %arg1: i32) -> (i32, i32) {
    %c0_i32 = arith.constant 0 : i32
    %c0_i32_0 = arith.constant 0 : i32
    %c0_i32_1 = arith.constant 0 : i32
    return %c0_i32, %c0_i32_0 : i32, i32
  }
}

module attributes {stable_mosaic.version = 11 : i64} {
  func.func @conv_fused_kernel(%arg0: i32, %arg1: i32, %arg2: memref<1x8x256xf32, #tpu.memory_space<vmem>>, %arg3: memref<8x8xf32, #tpu.memory_space<vmem>>, %arg4: memref<8x1xf32, #tpu.memory_space<vmem>>, %arg5: memref<1x8x256xf32, #tpu.memory_space<vmem>>, %arg6: memref<8x1xf32, #tpu.memory_space<vmem>>, %arg7: memref<8x1xf32, #tpu.memory_space<vmem>>) attributes {dimension_semantics = [#tpu.dimension_semantics<arbitrary>, #tpu.dimension_semantics<arbitrary>], iteration_bounds = array<i64: 2, 1>, scalar_prefetch = 0 : i64, scratch_operands = 0 : i64, tpu.core_type = #tpu.core_type<tc>, window_params = [{transform_indices = @transform_0, window_bounds = array<i64: 1, 8, 256>}, {pipeline_mode = #tpu.pipeline_mode<synchronous>, transform_indices = @transform_1, window_bounds = array<i64: 8, 8>}, {pipeline_mode = #tpu.pipeline_mode<synchronous>, transform_indices = @transform_2, window_bounds = array<i64: 8, 1>}, {transform_indices = @transform_3, window_bounds = array<i64: 1, 8, 256>}, {pipeline_mode = #tpu.pipeline_mode<synchronous>, transform_indices = @transform_4, window_bounds = array<i64: 8, 1>}, {pipeline_mode = #tpu.pipeline_mode<synchronous>, transform_indices = @transform_5, window_bounds = array<i64: 8, 1>}]} {
    %c0 = arith.constant 0 : index
    %c0_0 = arith.constant 0 : index
    %0 = vector.load %arg3[%c0, %c0_0] : memref<8x8xf32, #tpu.memory_space<vmem>>, vector<8x8xf32>
    %c0_1 = arith.constant 0 : index
    %c0_2 = arith.constant 0 : index
    %c0_3 = arith.constant 0 : index
    %1 = vector.load %arg2[%c0_1, %c0_2, %c0_3] : memref<1x8x256xf32, #tpu.memory_space<vmem>>, vector<1x8x256xf32>
    %2 = vector.shape_cast %1 : vector<1x8x256xf32> to vector<8x256xf32>
    %cst = arith.constant dense<0.000000e+00> : vector<8x256xf32>
    %3 = tpu.matmul %0, %2, %cst {dimension_numbers = #tpu.dot_dimension_numbers<[1], [0], [0], [1], [0, 0, 1, 1], [], []>} : vector<8x8xf32>, vector<8x256xf32>, vector<8x256xf32> -> vector<8x256xf32>
    %c0_4 = arith.constant 0 : index
    %c0_5 = arith.constant 0 : index
    %4 = vector.load %arg4[%c0_4, %c0_5] : memref<8x1xf32, #tpu.memory_space<vmem>>, vector<8x1xf32>
    %5 = vector.broadcast %4 : vector<8x1xf32> to vector<8x256xf32>
    %6 = arith.addf %3, %5 : vector<8x256xf32>
    %cst_6 = arith.constant 0.000000e+00 : f32
    %7 = vector.broadcast %cst_6 : f32 to vector<8x256xf32>
    %8 = arith.cmpf oge, %6, %7 : vector<8x256xf32>
    %cst_7 = arith.constant 0.00999999977 : f32
    %9 = vector.broadcast %cst_7 : f32 to vector<8x256xf32>
    %10 = arith.mulf %9, %6 : vector<8x256xf32>
    %11 = arith.select %8, %6, %10 : vector<8x256xi1>, vector<8x256xf32>
    %c0_8 = arith.constant 0 : index
    %c0_9 = arith.constant 0 : index
    %c0_10 = arith.constant 0 : index
    %12 = vector.load %arg5[%c0_8, %c0_9, %c0_10] : memref<1x8x256xf32, #tpu.memory_space<vmem>>, vector<1x8x256xf32>
    %13 = vector.shape_cast %12 : vector<1x8x256xf32> to vector<8x256xf32>
    %14 = vector.shape_cast %11 : vector<8x256xf32> to vector<1x8x256xf32>
    tpu.vector_store %arg5[%c0_8, %c0_9, %c0_10], %14 {strides = array<i32>} : memref<1x8x256xf32, #tpu.memory_space<vmem>>, vector<1x8x256xf32>,
    %c0_i32 = arith.constant 0 : i32
    %15 = arith.cmpi eq, %arg0, %c0_i32 : i32
    %c0_i32_11 = arith.constant 0 : i32
    %16 = arith.cmpi eq, %arg1, %c0_i32_11 : i32
    %17 = arith.andi %15, %16 : i1
    %18 = arith.extui %17 : i1 to i32
    %c0_i32_12 = arith.constant 0 : i32
    %19 = arith.cmpi ne, %18, %c0_i32_12 : i32
    scf.if %19 {
      %cst_23 = arith.constant 0.000000e+00 : f32
      %31 = vector.broadcast %cst_23 : f32 to vector<8x1xf32>
      %c0_24 = arith.constant 0 : index
      %c0_25 = arith.constant 0 : index
      %32 = vector.load %arg6[%c0_24, %c0_25] : memref<8x1xf32, #tpu.memory_space<vmem>>, vector<8x1xf32>
      tpu.vector_store %arg6[%c0_24, %c0_25], %31 {strides = array<i32>} : memref<8x1xf32, #tpu.memory_space<vmem>>, vector<8x1xf32>,
      %cst_26 = arith.constant 0.000000e+00 : f32
      %33 = vector.broadcast %cst_26 : f32 to vector<8x1xf32>
      %c0_27 = arith.constant 0 : index
      %c0_28 = arith.constant 0 : index
      %34 = vector.load %arg7[%c0_27, %c0_28] : memref<8x1xf32, #tpu.memory_space<vmem>>, vector<8x1xf32>
      tpu.vector_store %arg7[%c0_27, %c0_28], %33 {strides = array<i32>} : memref<8x1xf32, #tpu.memory_space<vmem>>, vector<8x1xf32>,
    } else {
    }
    %c0_13 = arith.constant 0 : index
    %c0_14 = arith.constant 0 : index
    %20 = vector.load %arg6[%c0_13, %c0_14] : memref<8x1xf32, #tpu.memory_space<vmem>>, vector<8x1xf32>
    %cst_15 = arith.constant dense<0.000000e+00> : vector<8xf32>
    %21 = vector.multi_reduction <add>, %11, %cst_15 [1] : vector<8x256xf32> to vector<8xf32>
    %22 = vector.shape_cast %21 : vector<8xf32> to vector<8x1xf32>
    %23 = arith.addf %20, %22 : vector<8x1xf32>
    %c0_16 = arith.constant 0 : index
    %c0_17 = arith.constant 0 : index
    %24 = vector.load %arg6[%c0_16, %c0_17] : memref<8x1xf32, #tpu.memory_space<vmem>>, vector<8x1xf32>
    tpu.vector_store %arg6[%c0_16, %c0_17], %23 {strides = array<i32>} : memref<8x1xf32, #tpu.memory_space<vmem>>, vector<8x1xf32>,
    %c0_18 = arith.constant 0 : index
    %c0_19 = arith.constant 0 : index
    %25 = vector.load %arg7[%c0_18, %c0_19] : memref<8x1xf32, #tpu.memory_space<vmem>>, vector<8x1xf32>
    %26 = arith.mulf %11, %11 : vector<8x256xf32>
    %cst_20 = arith.constant dense<0.000000e+00> : vector<8xf32>
    %27 = vector.multi_reduction <add>, %26, %cst_20 [1] : vector<8x256xf32> to vector<8xf32>
    %28 = vector.shape_cast %27 : vector<8xf32> to vector<8x1xf32>
    %29 = arith.addf %25, %28 : vector<8x1xf32>
    %c0_21 = arith.constant 0 : index
    %c0_22 = arith.constant 0 : index
    %30 = vector.load %arg7[%c0_21, %c0_22] : memref<8x1xf32, #tpu.memory_space<vmem>>, vector<8x1xf32>
    tpu.vector_store %arg7[%c0_21, %c0_22], %29 {strides = array<i32>} : memref<8x1xf32, #tpu.memory_space<vmem>>, vector<8x1xf32>,
    return
  }
  func.func @transform_0(%arg0: i32, %arg1: i32) -> (i32, i32, i32) {
    %c0_i32 = arith.constant 0 : i32
    %c0_i32_0 = arith.constant 0 : i32
    return %arg0, %c0_i32, %arg1 : i32, i32, i32
  }
  func.func @transform_1(%arg0: i32, %arg1: i32) -> (i32, i32) {
    %c0_i32 = arith.constant 0 : i32
    %c0_i32_0 = arith.constant 0 : i32
    %c0_i32_1 = arith.constant 0 : i32
    return %c0_i32, %c0_i32_0 : i32, i32
  }
  func.func @transform_2(%arg0: i32, %arg1: i32) -> (i32, i32) {
    %c0_i32 = arith.constant 0 : i32
    %c0_i32_0 = arith.constant 0 : i32
    %c0_i32_1 = arith.constant 0 : i32
    return %c0_i32, %c0_i32_0 : i32, i32
  }
  func.func @transform_3(%arg0: i32, %arg1: i32) -> (i32, i32, i32) {
    %c0_i32 = arith.constant 0 : i32
    %c0_i32_0 = arith.constant 0 : i32
    return %arg0, %c0_i32, %arg1 : i32, i32, i32
  }
  func.func @transform_4(%arg0: i32, %arg1: i32) -> (i32, i32) {
    %c0_i32 = arith.constant 0 : i32
    %c0_i32_0 = arith.constant 0 : i32
    %c0_i32_1 = arith.constant 0 : i32
    return %c0_i32, %c0_i32_0 : i32, i32
  }
  func.func @transform_5(%arg0: i32, %arg1: i32) -> (i32, i32) {
    %c0_i32 = arith.constant 0 : i32
    %c0_i32_0 = arith.constant 0 : i32
    %c0_i32_1 = arith.constant 0 : i32
    return %c0_i32, %c0_i32_0 : i32, i32
  }
}

module attributes {stable_mosaic.version = 11 : i64} {
  func.func @conv_fused_kernel(%arg0: i32, %arg1: i32, %arg2: memref<1x32x256xf32, #tpu.memory_space<vmem>>, %arg3: memref<8x32xf32, #tpu.memory_space<vmem>>, %arg4: memref<8x1xf32, #tpu.memory_space<vmem>>, %arg5: memref<1x8x256xf32, #tpu.memory_space<vmem>>, %arg6: memref<8x1xf32, #tpu.memory_space<vmem>>, %arg7: memref<8x1xf32, #tpu.memory_space<vmem>>) attributes {dimension_semantics = [#tpu.dimension_semantics<arbitrary>, #tpu.dimension_semantics<arbitrary>], iteration_bounds = array<i64: 2, 1>, scalar_prefetch = 0 : i64, scratch_operands = 0 : i64, tpu.core_type = #tpu.core_type<tc>, window_params = [{transform_indices = @transform_0, window_bounds = array<i64: 1, 32, 256>}, {pipeline_mode = #tpu.pipeline_mode<synchronous>, transform_indices = @transform_1, window_bounds = array<i64: 8, 32>}, {pipeline_mode = #tpu.pipeline_mode<synchronous>, transform_indices = @transform_2, window_bounds = array<i64: 8, 1>}, {transform_indices = @transform_3, window_bounds = array<i64: 1, 8, 256>}, {pipeline_mode = #tpu.pipeline_mode<synchronous>, transform_indices = @transform_4, window_bounds = array<i64: 8, 1>}, {pipeline_mode = #tpu.pipeline_mode<synchronous>, transform_indices = @transform_5, window_bounds = array<i64: 8, 1>}]} {
    %c0 = arith.constant 0 : index
    %c0_0 = arith.constant 0 : index
    %0 = vector.load %arg3[%c0, %c0_0] : memref<8x32xf32, #tpu.memory_space<vmem>>, vector<8x32xf32>
    %c0_1 = arith.constant 0 : index
    %c0_2 = arith.constant 0 : index
    %c0_3 = arith.constant 0 : index
    %1 = vector.load %arg2[%c0_1, %c0_2, %c0_3] : memref<1x32x256xf32, #tpu.memory_space<vmem>>, vector<1x32x256xf32>
    %2 = vector.shape_cast %1 : vector<1x32x256xf32> to vector<32x256xf32>
    %cst = arith.constant dense<0.000000e+00> : vector<8x256xf32>
    %3 = tpu.matmul %0, %2, %cst {dimension_numbers = #tpu.dot_dimension_numbers<[1], [0], [0], [1], [0, 0, 1, 1], [], []>} : vector<8x32xf32>, vector<32x256xf32>, vector<8x256xf32> -> vector<8x256xf32>
    %c0_4 = arith.constant 0 : index
    %c0_5 = arith.constant 0 : index
    %4 = vector.load %arg4[%c0_4, %c0_5] : memref<8x1xf32, #tpu.memory_space<vmem>>, vector<8x1xf32>
    %5 = vector.broadcast %4 : vector<8x1xf32> to vector<8x256xf32>
    %6 = arith.addf %3, %5 : vector<8x256xf32>
    %cst_6 = arith.constant 0.000000e+00 : f32
    %7 = vector.broadcast %cst_6 : f32 to vector<8x256xf32>
    %8 = arith.cmpf oge, %6, %7 : vector<8x256xf32>
    %cst_7 = arith.constant 0.00999999977 : f32
    %9 = vector.broadcast %cst_7 : f32 to vector<8x256xf32>
    %10 = arith.mulf %9, %6 : vector<8x256xf32>
    %11 = arith.select %8, %6, %10 : vector<8x256xi1>, vector<8x256xf32>
    %c0_8 = arith.constant 0 : index
    %c0_9 = arith.constant 0 : index
    %c0_10 = arith.constant 0 : index
    %12 = vector.load %arg5[%c0_8, %c0_9, %c0_10] : memref<1x8x256xf32, #tpu.memory_space<vmem>>, vector<1x8x256xf32>
    %13 = vector.shape_cast %12 : vector<1x8x256xf32> to vector<8x256xf32>
    %14 = vector.shape_cast %11 : vector<8x256xf32> to vector<1x8x256xf32>
    tpu.vector_store %arg5[%c0_8, %c0_9, %c0_10], %14 {strides = array<i32>} : memref<1x8x256xf32, #tpu.memory_space<vmem>>, vector<1x8x256xf32>,
    %c0_i32 = arith.constant 0 : i32
    %15 = arith.cmpi eq, %arg0, %c0_i32 : i32
    %c0_i32_11 = arith.constant 0 : i32
    %16 = arith.cmpi eq, %arg1, %c0_i32_11 : i32
    %17 = arith.andi %15, %16 : i1
    %18 = arith.extui %17 : i1 to i32
    %c0_i32_12 = arith.constant 0 : i32
    %19 = arith.cmpi ne, %18, %c0_i32_12 : i32
    scf.if %19 {
      %cst_23 = arith.constant 0.000000e+00 : f32
      %31 = vector.broadcast %cst_23 : f32 to vector<8x1xf32>
      %c0_24 = arith.constant 0 : index
      %c0_25 = arith.constant 0 : index
      %32 = vector.load %arg6[%c0_24, %c0_25] : memref<8x1xf32, #tpu.memory_space<vmem>>, vector<8x1xf32>
      tpu.vector_store %arg6[%c0_24, %c0_25], %31 {strides = array<i32>} : memref<8x1xf32, #tpu.memory_space<vmem>>, vector<8x1xf32>,
      %cst_26 = arith.constant 0.000000e+00 : f32
      %33 = vector.broadcast %cst_26 : f32 to vector<8x1xf32>
      %c0_27 = arith.constant 0 : index
      %c0_28 = arith.constant 0 : index
      %34 = vector.load %arg7[%c0_27, %c0_28] : memref<8x1xf32, #tpu.memory_space<vmem>>, vector<8x1xf32>
      tpu.vector_store %arg7[%c0_27, %c0_28], %33 {strides = array<i32>} : memref<8x1xf32, #tpu.memory_space<vmem>>, vector<8x1xf32>,
    } else {
    }
    %c0_13 = arith.constant 0 : index
    %c0_14 = arith.constant 0 : index
    %20 = vector.load %arg6[%c0_13, %c0_14] : memref<8x1xf32, #tpu.memory_space<vmem>>, vector<8x1xf32>
    %cst_15 = arith.constant dense<0.000000e+00> : vector<8xf32>
    %21 = vector.multi_reduction <add>, %11, %cst_15 [1] : vector<8x256xf32> to vector<8xf32>
    %22 = vector.shape_cast %21 : vector<8xf32> to vector<8x1xf32>
    %23 = arith.addf %20, %22 : vector<8x1xf32>
    %c0_16 = arith.constant 0 : index
    %c0_17 = arith.constant 0 : index
    %24 = vector.load %arg6[%c0_16, %c0_17] : memref<8x1xf32, #tpu.memory_space<vmem>>, vector<8x1xf32>
    tpu.vector_store %arg6[%c0_16, %c0_17], %23 {strides = array<i32>} : memref<8x1xf32, #tpu.memory_space<vmem>>, vector<8x1xf32>,
    %c0_18 = arith.constant 0 : index
    %c0_19 = arith.constant 0 : index
    %25 = vector.load %arg7[%c0_18, %c0_19] : memref<8x1xf32, #tpu.memory_space<vmem>>, vector<8x1xf32>
    %26 = arith.mulf %11, %11 : vector<8x256xf32>
    %cst_20 = arith.constant dense<0.000000e+00> : vector<8xf32>
    %27 = vector.multi_reduction <add>, %26, %cst_20 [1] : vector<8x256xf32> to vector<8xf32>
    %28 = vector.shape_cast %27 : vector<8xf32> to vector<8x1xf32>
    %29 = arith.addf %25, %28 : vector<8x1xf32>
    %c0_21 = arith.constant 0 : index
    %c0_22 = arith.constant 0 : index
    %30 = vector.load %arg7[%c0_21, %c0_22] : memref<8x1xf32, #tpu.memory_space<vmem>>, vector<8x1xf32>
    tpu.vector_store %arg7[%c0_21, %c0_22], %29 {strides = array<i32>} : memref<8x1xf32, #tpu.memory_space<vmem>>, vector<8x1xf32>,
    return
  }
  func.func @transform_0(%arg0: i32, %arg1: i32) -> (i32, i32, i32) {
    %c0_i32 = arith.constant 0 : i32
    %c0_i32_0 = arith.constant 0 : i32
    return %arg0, %c0_i32, %arg1 : i32, i32, i32
  }
  func.func @transform_1(%arg0: i32, %arg1: i32) -> (i32, i32) {
    %c0_i32 = arith.constant 0 : i32
    %c0_i32_0 = arith.constant 0 : i32
    %c0_i32_1 = arith.constant 0 : i32
    return %c0_i32, %c0_i32_0 : i32, i32
  }
  func.func @transform_2(%arg0: i32, %arg1: i32) -> (i32, i32) {
    %c0_i32 = arith.constant 0 : i32
    %c0_i32_0 = arith.constant 0 : i32
    %c0_i32_1 = arith.constant 0 : i32
    return %c0_i32, %c0_i32_0 : i32, i32
  }
  func.func @transform_3(%arg0: i32, %arg1: i32) -> (i32, i32, i32) {
    %c0_i32 = arith.constant 0 : i32
    %c0_i32_0 = arith.constant 0 : i32
    return %arg0, %c0_i32, %arg1 : i32, i32, i32
  }
  func.func @transform_4(%arg0: i32, %arg1: i32) -> (i32, i32) {
    %c0_i32 = arith.constant 0 : i32
    %c0_i32_0 = arith.constant 0 : i32
    %c0_i32_1 = arith.constant 0 : i32
    return %c0_i32, %c0_i32_0 : i32, i32
  }
  func.func @transform_5(%arg0: i32, %arg1: i32) -> (i32, i32) {
    %c0_i32 = arith.constant 0 : i32
    %c0_i32_0 = arith.constant 0 : i32
    %c0_i32_1 = arith.constant 0 : i32
    return %c0_i32, %c0_i32_0 : i32, i32
  }
}

module attributes {stable_mosaic.version = 11 : i64} {
  func.func @conv_fused_kernel(%arg0: i32, %arg1: i32, %arg2: memref<1x16x256xf32, #tpu.memory_space<vmem>>, %arg3: memref<8x16xf32, #tpu.memory_space<vmem>>, %arg4: memref<8x1xf32, #tpu.memory_space<vmem>>, %arg5: memref<1x8x256xf32, #tpu.memory_space<vmem>>, %arg6: memref<8x1xf32, #tpu.memory_space<vmem>>, %arg7: memref<8x1xf32, #tpu.memory_space<vmem>>) attributes {dimension_semantics = [#tpu.dimension_semantics<arbitrary>, #tpu.dimension_semantics<arbitrary>], iteration_bounds = array<i64: 2, 1>, scalar_prefetch = 0 : i64, scratch_operands = 0 : i64, tpu.core_type = #tpu.core_type<tc>, window_params = [{transform_indices = @transform_0, window_bounds = array<i64: 1, 16, 256>}, {pipeline_mode = #tpu.pipeline_mode<synchronous>, transform_indices = @transform_1, window_bounds = array<i64: 8, 16>}, {pipeline_mode = #tpu.pipeline_mode<synchronous>, transform_indices = @transform_2, window_bounds = array<i64: 8, 1>}, {transform_indices = @transform_3, window_bounds = array<i64: 1, 8, 256>}, {pipeline_mode = #tpu.pipeline_mode<synchronous>, transform_indices = @transform_4, window_bounds = array<i64: 8, 1>}, {pipeline_mode = #tpu.pipeline_mode<synchronous>, transform_indices = @transform_5, window_bounds = array<i64: 8, 1>}]} {
    %c0 = arith.constant 0 : index
    %c0_0 = arith.constant 0 : index
    %0 = vector.load %arg3[%c0, %c0_0] : memref<8x16xf32, #tpu.memory_space<vmem>>, vector<8x16xf32>
    %c0_1 = arith.constant 0 : index
    %c0_2 = arith.constant 0 : index
    %c0_3 = arith.constant 0 : index
    %1 = vector.load %arg2[%c0_1, %c0_2, %c0_3] : memref<1x16x256xf32, #tpu.memory_space<vmem>>, vector<1x16x256xf32>
    %2 = vector.shape_cast %1 : vector<1x16x256xf32> to vector<16x256xf32>
    %cst = arith.constant dense<0.000000e+00> : vector<8x256xf32>
    %3 = tpu.matmul %0, %2, %cst {dimension_numbers = #tpu.dot_dimension_numbers<[1], [0], [0], [1], [0, 0, 1, 1], [], []>} : vector<8x16xf32>, vector<16x256xf32>, vector<8x256xf32> -> vector<8x256xf32>
    %c0_4 = arith.constant 0 : index
    %c0_5 = arith.constant 0 : index
    %4 = vector.load %arg4[%c0_4, %c0_5] : memref<8x1xf32, #tpu.memory_space<vmem>>, vector<8x1xf32>
    %5 = vector.broadcast %4 : vector<8x1xf32> to vector<8x256xf32>
    %6 = arith.addf %3, %5 : vector<8x256xf32>
    %cst_6 = arith.constant 0.000000e+00 : f32
    %7 = vector.broadcast %cst_6 : f32 to vector<8x256xf32>
    %8 = arith.cmpf oge, %6, %7 : vector<8x256xf32>
    %cst_7 = arith.constant 0.00999999977 : f32
    %9 = vector.broadcast %cst_7 : f32 to vector<8x256xf32>
    %10 = arith.mulf %9, %6 : vector<8x256xf32>
    %11 = arith.select %8, %6, %10 : vector<8x256xi1>, vector<8x256xf32>
    %c0_8 = arith.constant 0 : index
    %c0_9 = arith.constant 0 : index
    %c0_10 = arith.constant 0 : index
    %12 = vector.load %arg5[%c0_8, %c0_9, %c0_10] : memref<1x8x256xf32, #tpu.memory_space<vmem>>, vector<1x8x256xf32>
    %13 = vector.shape_cast %12 : vector<1x8x256xf32> to vector<8x256xf32>
    %14 = vector.shape_cast %11 : vector<8x256xf32> to vector<1x8x256xf32>
    tpu.vector_store %arg5[%c0_8, %c0_9, %c0_10], %14 {strides = array<i32>} : memref<1x8x256xf32, #tpu.memory_space<vmem>>, vector<1x8x256xf32>,
    %c0_i32 = arith.constant 0 : i32
    %15 = arith.cmpi eq, %arg0, %c0_i32 : i32
    %c0_i32_11 = arith.constant 0 : i32
    %16 = arith.cmpi eq, %arg1, %c0_i32_11 : i32
    %17 = arith.andi %15, %16 : i1
    %18 = arith.extui %17 : i1 to i32
    %c0_i32_12 = arith.constant 0 : i32
    %19 = arith.cmpi ne, %18, %c0_i32_12 : i32
    scf.if %19 {
      %cst_23 = arith.constant 0.000000e+00 : f32
      %31 = vector.broadcast %cst_23 : f32 to vector<8x1xf32>
      %c0_24 = arith.constant 0 : index
      %c0_25 = arith.constant 0 : index
      %32 = vector.load %arg6[%c0_24, %c0_25] : memref<8x1xf32, #tpu.memory_space<vmem>>, vector<8x1xf32>
      tpu.vector_store %arg6[%c0_24, %c0_25], %31 {strides = array<i32>} : memref<8x1xf32, #tpu.memory_space<vmem>>, vector<8x1xf32>,
      %cst_26 = arith.constant 0.000000e+00 : f32
      %33 = vector.broadcast %cst_26 : f32 to vector<8x1xf32>
      %c0_27 = arith.constant 0 : index
      %c0_28 = arith.constant 0 : index
      %34 = vector.load %arg7[%c0_27, %c0_28] : memref<8x1xf32, #tpu.memory_space<vmem>>, vector<8x1xf32>
      tpu.vector_store %arg7[%c0_27, %c0_28], %33 {strides = array<i32>} : memref<8x1xf32, #tpu.memory_space<vmem>>, vector<8x1xf32>,
    } else {
    }
    %c0_13 = arith.constant 0 : index
    %c0_14 = arith.constant 0 : index
    %20 = vector.load %arg6[%c0_13, %c0_14] : memref<8x1xf32, #tpu.memory_space<vmem>>, vector<8x1xf32>
    %cst_15 = arith.constant dense<0.000000e+00> : vector<8xf32>
    %21 = vector.multi_reduction <add>, %11, %cst_15 [1] : vector<8x256xf32> to vector<8xf32>
    %22 = vector.shape_cast %21 : vector<8xf32> to vector<8x1xf32>
    %23 = arith.addf %20, %22 : vector<8x1xf32>
    %c0_16 = arith.constant 0 : index
    %c0_17 = arith.constant 0 : index
    %24 = vector.load %arg6[%c0_16, %c0_17] : memref<8x1xf32, #tpu.memory_space<vmem>>, vector<8x1xf32>
    tpu.vector_store %arg6[%c0_16, %c0_17], %23 {strides = array<i32>} : memref<8x1xf32, #tpu.memory_space<vmem>>, vector<8x1xf32>,
    %c0_18 = arith.constant 0 : index
    %c0_19 = arith.constant 0 : index
    %25 = vector.load %arg7[%c0_18, %c0_19] : memref<8x1xf32, #tpu.memory_space<vmem>>, vector<8x1xf32>
    %26 = arith.mulf %11, %11 : vector<8x256xf32>
    %cst_20 = arith.constant dense<0.000000e+00> : vector<8xf32>
    %27 = vector.multi_reduction <add>, %26, %cst_20 [1] : vector<8x256xf32> to vector<8xf32>
    %28 = vector.shape_cast %27 : vector<8xf32> to vector<8x1xf32>
    %29 = arith.addf %25, %28 : vector<8x1xf32>
    %c0_21 = arith.constant 0 : index
    %c0_22 = arith.constant 0 : index
    %30 = vector.load %arg7[%c0_21, %c0_22] : memref<8x1xf32, #tpu.memory_space<vmem>>, vector<8x1xf32>
    tpu.vector_store %arg7[%c0_21, %c0_22], %29 {strides = array<i32>} : memref<8x1xf32, #tpu.memory_space<vmem>>, vector<8x1xf32>,
    return
  }
  func.func @transform_0(%arg0: i32, %arg1: i32) -> (i32, i32, i32) {
    %c0_i32 = arith.constant 0 : i32
    %c0_i32_0 = arith.constant 0 : i32
    return %arg0, %c0_i32, %arg1 : i32, i32, i32
  }
  func.func @transform_1(%arg0: i32, %arg1: i32) -> (i32, i32) {
    %c0_i32 = arith.constant 0 : i32
    %c0_i32_0 = arith.constant 0 : i32
    %c0_i32_1 = arith.constant 0 : i32
    return %c0_i32, %c0_i32_0 : i32, i32
  }
  func.func @transform_2(%arg0: i32, %arg1: i32) -> (i32, i32) {
    %c0_i32 = arith.constant 0 : i32
    %c0_i32_0 = arith.constant 0 : i32
    %c0_i32_1 = arith.constant 0 : i32
    return %c0_i32, %c0_i32_0 : i32, i32
  }
  func.func @transform_3(%arg0: i32, %arg1: i32) -> (i32, i32, i32) {
    %c0_i32 = arith.constant 0 : i32
    %c0_i32_0 = arith.constant 0 : i32
    return %arg0, %c0_i32, %arg1 : i32, i32, i32
  }
  func.func @transform_4(%arg0: i32, %arg1: i32) -> (i32, i32) {
    %c0_i32 = arith.constant 0 : i32
    %c0_i32_0 = arith.constant 0 : i32
    %c0_i32_1 = arith.constant 0 : i32
    return %c0_i32, %c0_i32_0 : i32, i32
  }
  func.func @transform_5(%arg0: i32, %arg1: i32) -> (i32, i32) {
    %c0_i32 = arith.constant 0 : i32
    %c0_i32_0 = arith.constant 0 : i32
    %c0_i32_1 = arith.constant 0 : i32
    return %c0_i32, %c0_i32_0 : i32, i32
  }
}

module attributes {stable_mosaic.version = 11 : i64} {
  func.func @conv_fused_kernel(%arg0: i32, %arg1: i32, %arg2: memref<1x216x2048xf32, #tpu.memory_space<vmem>>, %arg3: memref<8x216xf32, #tpu.memory_space<vmem>>, %arg4: memref<8x1xf32, #tpu.memory_space<vmem>>, %arg5: memref<1x8x2048xf32, #tpu.memory_space<vmem>>, %arg6: memref<8x1xf32, #tpu.memory_space<vmem>>, %arg7: memref<8x1xf32, #tpu.memory_space<vmem>>) attributes {dimension_semantics = [#tpu.dimension_semantics<arbitrary>, #tpu.dimension_semantics<arbitrary>], iteration_bounds = array<i64: 2, 1>, scalar_prefetch = 0 : i64, scratch_operands = 0 : i64, tpu.core_type = #tpu.core_type<tc>, window_params = [{transform_indices = @transform_0, window_bounds = array<i64: 1, 216, 2048>}, {pipeline_mode = #tpu.pipeline_mode<synchronous>, transform_indices = @transform_1, window_bounds = array<i64: 8, 216>}, {pipeline_mode = #tpu.pipeline_mode<synchronous>, transform_indices = @transform_2, window_bounds = array<i64: 8, 1>}, {transform_indices = @transform_3, window_bounds = array<i64: 1, 8, 2048>}, {pipeline_mode = #tpu.pipeline_mode<synchronous>, transform_indices = @transform_4, window_bounds = array<i64: 8, 1>}, {pipeline_mode = #tpu.pipeline_mode<synchronous>, transform_indices = @transform_5, window_bounds = array<i64: 8, 1>}]} {
    %c0 = arith.constant 0 : index
    %c0_0 = arith.constant 0 : index
    %0 = vector.load %arg3[%c0, %c0_0] : memref<8x216xf32, #tpu.memory_space<vmem>>, vector<8x216xf32>
    %c0_1 = arith.constant 0 : index
    %c0_2 = arith.constant 0 : index
    %c0_3 = arith.constant 0 : index
    %1 = vector.load %arg2[%c0_1, %c0_2, %c0_3] : memref<1x216x2048xf32, #tpu.memory_space<vmem>>, vector<1x216x2048xf32>
    %2 = vector.shape_cast %1 : vector<1x216x2048xf32> to vector<216x2048xf32>
    %cst = arith.constant dense<0.000000e+00> : vector<8x2048xf32>
    %3 = tpu.matmul %0, %2, %cst {dimension_numbers = #tpu.dot_dimension_numbers<[1], [0], [0], [1], [0, 0, 1, 1], [], []>} : vector<8x216xf32>, vector<216x2048xf32>, vector<8x2048xf32> -> vector<8x2048xf32>
    %c0_4 = arith.constant 0 : index
    %c0_5 = arith.constant 0 : index
    %4 = vector.load %arg4[%c0_4, %c0_5] : memref<8x1xf32, #tpu.memory_space<vmem>>, vector<8x1xf32>
    %5 = vector.broadcast %4 : vector<8x1xf32> to vector<8x2048xf32>
    %6 = arith.addf %3, %5 : vector<8x2048xf32>
    %cst_6 = arith.constant 0.000000e+00 : f32
    %7 = vector.broadcast %cst_6 : f32 to vector<8x2048xf32>
    %8 = arith.cmpf oge, %6, %7 : vector<8x2048xf32>
    %cst_7 = arith.constant 0.00999999977 : f32
    %9 = vector.broadcast %cst_7 : f32 to vector<8x2048xf32>
    %10 = arith.mulf %9, %6 : vector<8x2048xf32>
    %11 = arith.select %8, %6, %10 : vector<8x2048xi1>, vector<8x2048xf32>
    %c0_8 = arith.constant 0 : index
    %c0_9 = arith.constant 0 : index
    %c0_10 = arith.constant 0 : index
    %12 = vector.load %arg5[%c0_8, %c0_9, %c0_10] : memref<1x8x2048xf32, #tpu.memory_space<vmem>>, vector<1x8x2048xf32>
    %13 = vector.shape_cast %12 : vector<1x8x2048xf32> to vector<8x2048xf32>
    %14 = vector.shape_cast %11 : vector<8x2048xf32> to vector<1x8x2048xf32>
    tpu.vector_store %arg5[%c0_8, %c0_9, %c0_10], %14 {strides = array<i32>} : memref<1x8x2048xf32, #tpu.memory_space<vmem>>, vector<1x8x2048xf32>,
    %c0_i32 = arith.constant 0 : i32
    %15 = arith.cmpi eq, %arg0, %c0_i32 : i32
    %c0_i32_11 = arith.constant 0 : i32
    %16 = arith.cmpi eq, %arg1, %c0_i32_11 : i32
    %17 = arith.andi %15, %16 : i1
    %18 = arith.extui %17 : i1 to i32
    %c0_i32_12 = arith.constant 0 : i32
    %19 = arith.cmpi ne, %18, %c0_i32_12 : i32
    scf.if %19 {
      %cst_23 = arith.constant 0.000000e+00 : f32
      %31 = vector.broadcast %cst_23 : f32 to vector<8x1xf32>
      %c0_24 = arith.constant 0 : index
      %c0_25 = arith.constant 0 : index
      %32 = vector.load %arg6[%c0_24, %c0_25] : memref<8x1xf32, #tpu.memory_space<vmem>>, vector<8x1xf32>
      tpu.vector_store %arg6[%c0_24, %c0_25], %31 {strides = array<i32>} : memref<8x1xf32, #tpu.memory_space<vmem>>, vector<8x1xf32>,
      %cst_26 = arith.constant 0.000000e+00 : f32
      %33 = vector.broadcast %cst_26 : f32 to vector<8x1xf32>
      %c0_27 = arith.constant 0 : index
      %c0_28 = arith.constant 0 : index
      %34 = vector.load %arg7[%c0_27, %c0_28] : memref<8x1xf32, #tpu.memory_space<vmem>>, vector<8x1xf32>
      tpu.vector_store %arg7[%c0_27, %c0_28], %33 {strides = array<i32>} : memref<8x1xf32, #tpu.memory_space<vmem>>, vector<8x1xf32>,
    } else {
    }
    %c0_13 = arith.constant 0 : index
    %c0_14 = arith.constant 0 : index
    %20 = vector.load %arg6[%c0_13, %c0_14] : memref<8x1xf32, #tpu.memory_space<vmem>>, vector<8x1xf32>
    %cst_15 = arith.constant dense<0.000000e+00> : vector<8xf32>
    %21 = vector.multi_reduction <add>, %11, %cst_15 [1] : vector<8x2048xf32> to vector<8xf32>
    %22 = vector.shape_cast %21 : vector<8xf32> to vector<8x1xf32>
    %23 = arith.addf %20, %22 : vector<8x1xf32>
    %c0_16 = arith.constant 0 : index
    %c0_17 = arith.constant 0 : index
    %24 = vector.load %arg6[%c0_16, %c0_17] : memref<8x1xf32, #tpu.memory_space<vmem>>, vector<8x1xf32>
    tpu.vector_store %arg6[%c0_16, %c0_17], %23 {strides = array<i32>} : memref<8x1xf32, #tpu.memory_space<vmem>>, vector<8x1xf32>,
    %c0_18 = arith.constant 0 : index
    %c0_19 = arith.constant 0 : index
    %25 = vector.load %arg7[%c0_18, %c0_19] : memref<8x1xf32, #tpu.memory_space<vmem>>, vector<8x1xf32>
    %26 = arith.mulf %11, %11 : vector<8x2048xf32>
    %cst_20 = arith.constant dense<0.000000e+00> : vector<8xf32>
    %27 = vector.multi_reduction <add>, %26, %cst_20 [1] : vector<8x2048xf32> to vector<8xf32>
    %28 = vector.shape_cast %27 : vector<8xf32> to vector<8x1xf32>
    %29 = arith.addf %25, %28 : vector<8x1xf32>
    %c0_21 = arith.constant 0 : index
    %c0_22 = arith.constant 0 : index
    %30 = vector.load %arg7[%c0_21, %c0_22] : memref<8x1xf32, #tpu.memory_space<vmem>>, vector<8x1xf32>
    tpu.vector_store %arg7[%c0_21, %c0_22], %29 {strides = array<i32>} : memref<8x1xf32, #tpu.memory_space<vmem>>, vector<8x1xf32>,
    return
  }
  func.func @transform_0(%arg0: i32, %arg1: i32) -> (i32, i32, i32) {
    %c0_i32 = arith.constant 0 : i32
    %c0_i32_0 = arith.constant 0 : i32
    return %arg0, %c0_i32, %arg1 : i32, i32, i32
  }
  func.func @transform_1(%arg0: i32, %arg1: i32) -> (i32, i32) {
    %c0_i32 = arith.constant 0 : i32
    %c0_i32_0 = arith.constant 0 : i32
    %c0_i32_1 = arith.constant 0 : i32
    return %c0_i32, %c0_i32_0 : i32, i32
  }
  func.func @transform_2(%arg0: i32, %arg1: i32) -> (i32, i32) {
    %c0_i32 = arith.constant 0 : i32
    %c0_i32_0 = arith.constant 0 : i32
    %c0_i32_1 = arith.constant 0 : i32
    return %c0_i32, %c0_i32_0 : i32, i32
  }
  func.func @transform_3(%arg0: i32, %arg1: i32) -> (i32, i32, i32) {
    %c0_i32 = arith.constant 0 : i32
    %c0_i32_0 = arith.constant 0 : i32
    return %arg0, %c0_i32, %arg1 : i32, i32, i32
  }
  func.func @transform_4(%arg0: i32, %arg1: i32) -> (i32, i32) {
    %c0_i32 = arith.constant 0 : i32
    %c0_i32_0 = arith.constant 0 : i32
    %c0_i32_1 = arith.constant 0 : i32
    return %c0_i32, %c0_i32_0 : i32, i32
  }
  func.func @transform_5(%arg0: i32, %arg1: i32) -> (i32, i32) {
    %c0_i32 = arith.constant 0 : i32
    %c0_i32_0 = arith.constant 0 : i32
    %c0_i32_1 = arith.constant 0 : i32
    return %c0_i32, %c0_i32_0 : i32, i32
  }
}

module attributes {stable_mosaic.version = 11 : i64} {
  func.func @conv_fused_kernel(%arg0: i32, %arg1: i32, %arg2: memref<1x216x2048xf32, #tpu.memory_space<vmem>>, %arg3: memref<8x216xf32, #tpu.memory_space<vmem>>, %arg4: memref<8x1xf32, #tpu.memory_space<vmem>>, %arg5: memref<1x8x2048xf32, #tpu.memory_space<vmem>>, %arg6: memref<8x1xf32, #tpu.memory_space<vmem>>, %arg7: memref<8x1xf32, #tpu.memory_space<vmem>>) attributes {dimension_semantics = [#tpu.dimension_semantics<arbitrary>, #tpu.dimension_semantics<arbitrary>], iteration_bounds = array<i64: 2, 1>, scalar_prefetch = 0 : i64, scratch_operands = 0 : i64, tpu.core_type = #tpu.core_type<tc>, window_params = [{transform_indices = @transform_0, window_bounds = array<i64: 1, 216, 2048>}, {pipeline_mode = #tpu.pipeline_mode<synchronous>, transform_indices = @transform_1, window_bounds = array<i64: 8, 216>}, {pipeline_mode = #tpu.pipeline_mode<synchronous>, transform_indices = @transform_2, window_bounds = array<i64: 8, 1>}, {transform_indices = @transform_3, window_bounds = array<i64: 1, 8, 2048>}, {pipeline_mode = #tpu.pipeline_mode<synchronous>, transform_indices = @transform_4, window_bounds = array<i64: 8, 1>}, {pipeline_mode = #tpu.pipeline_mode<synchronous>, transform_indices = @transform_5, window_bounds = array<i64: 8, 1>}]} {
    %c0 = arith.constant 0 : index
    %c0_0 = arith.constant 0 : index
    %0 = vector.load %arg3[%c0, %c0_0] : memref<8x216xf32, #tpu.memory_space<vmem>>, vector<8x216xf32>
    %c0_1 = arith.constant 0 : index
    %c0_2 = arith.constant 0 : index
    %c0_3 = arith.constant 0 : index
    %1 = vector.load %arg2[%c0_1, %c0_2, %c0_3] : memref<1x216x2048xf32, #tpu.memory_space<vmem>>, vector<1x216x2048xf32>
    %2 = vector.shape_cast %1 : vector<1x216x2048xf32> to vector<216x2048xf32>
    %cst = arith.constant dense<0.000000e+00> : vector<8x2048xf32>
    %3 = tpu.matmul %0, %2, %cst {dimension_numbers = #tpu.dot_dimension_numbers<[1], [0], [0], [1], [0, 0, 1, 1], [], []>} : vector<8x216xf32>, vector<216x2048xf32>, vector<8x2048xf32> -> vector<8x2048xf32>
    %c0_4 = arith.constant 0 : index
    %c0_5 = arith.constant 0 : index
    %4 = vector.load %arg4[%c0_4, %c0_5] : memref<8x1xf32, #tpu.memory_space<vmem>>, vector<8x1xf32>
    %5 = vector.broadcast %4 : vector<8x1xf32> to vector<8x2048xf32>
    %6 = arith.addf %3, %5 : vector<8x2048xf32>
    %c0_6 = arith.constant 0 : index
    %c0_7 = arith.constant 0 : index
    %c0_8 = arith.constant 0 : index
    %7 = vector.load %arg5[%c0_6, %c0_7, %c0_8] : memref<1x8x2048xf32, #tpu.memory_space<vmem>>, vector<1x8x2048xf32>
    %8 = vector.shape_cast %7 : vector<1x8x2048xf32> to vector<8x2048xf32>
    %9 = vector.shape_cast %6 : vector<8x2048xf32> to vector<1x8x2048xf32>
    tpu.vector_store %arg5[%c0_6, %c0_7, %c0_8], %9 {strides = array<i32>} : memref<1x8x2048xf32, #tpu.memory_space<vmem>>, vector<1x8x2048xf32>,
    %c0_i32 = arith.constant 0 : i32
    %10 = arith.cmpi eq, %arg0, %c0_i32 : i32
    %c0_i32_9 = arith.constant 0 : i32
    %11 = arith.cmpi eq, %arg1, %c0_i32_9 : i32
    %12 = arith.andi %10, %11 : i1
    %13 = arith.extui %12 : i1 to i32
    %c0_i32_10 = arith.constant 0 : i32
    %14 = arith.cmpi ne, %13, %c0_i32_10 : i32
    scf.if %14 {
      %cst_21 = arith.constant 0.000000e+00 : f32
      %26 = vector.broadcast %cst_21 : f32 to vector<8x1xf32>
      %c0_22 = arith.constant 0 : index
      %c0_23 = arith.constant 0 : index
      %27 = vector.load %arg6[%c0_22, %c0_23] : memref<8x1xf32, #tpu.memory_space<vmem>>, vector<8x1xf32>
      tpu.vector_store %arg6[%c0_22, %c0_23], %26 {strides = array<i32>} : memref<8x1xf32, #tpu.memory_space<vmem>>, vector<8x1xf32>,
      %cst_24 = arith.constant 0.000000e+00 : f32
      %28 = vector.broadcast %cst_24 : f32 to vector<8x1xf32>
      %c0_25 = arith.constant 0 : index
      %c0_26 = arith.constant 0 : index
      %29 = vector.load %arg7[%c0_25, %c0_26] : memref<8x1xf32, #tpu.memory_space<vmem>>, vector<8x1xf32>
      tpu.vector_store %arg7[%c0_25, %c0_26], %28 {strides = array<i32>} : memref<8x1xf32, #tpu.memory_space<vmem>>, vector<8x1xf32>,
    } else {
    }
    %c0_11 = arith.constant 0 : index
    %c0_12 = arith.constant 0 : index
    %15 = vector.load %arg6[%c0_11, %c0_12] : memref<8x1xf32, #tpu.memory_space<vmem>>, vector<8x1xf32>
    %cst_13 = arith.constant dense<0.000000e+00> : vector<8xf32>
    %16 = vector.multi_reduction <add>, %6, %cst_13 [1] : vector<8x2048xf32> to vector<8xf32>
    %17 = vector.shape_cast %16 : vector<8xf32> to vector<8x1xf32>
    %18 = arith.addf %15, %17 : vector<8x1xf32>
    %c0_14 = arith.constant 0 : index
    %c0_15 = arith.constant 0 : index
    %19 = vector.load %arg6[%c0_14, %c0_15] : memref<8x1xf32, #tpu.memory_space<vmem>>, vector<8x1xf32>
    tpu.vector_store %arg6[%c0_14, %c0_15], %18 {strides = array<i32>} : memref<8x1xf32, #tpu.memory_space<vmem>>, vector<8x1xf32>,
    %c0_16 = arith.constant 0 : index
    %c0_17 = arith.constant 0 : index
    %20 = vector.load %arg7[%c0_16, %c0_17] : memref<8x1xf32, #tpu.memory_space<vmem>>, vector<8x1xf32>
    %21 = arith.mulf %6, %6 : vector<8x2048xf32>
    %cst_18 = arith.constant dense<0.000000e+00> : vector<8xf32>
    %22 = vector.multi_reduction <add>, %21, %cst_18 [1] : vector<8x2048xf32> to vector<8xf32>
    %23 = vector.shape_cast %22 : vector<8xf32> to vector<8x1xf32>
    %24 = arith.addf %20, %23 : vector<8x1xf32>
    %c0_19 = arith.constant 0 : index
    %c0_20 = arith.constant 0 : index
    %25 = vector.load %arg7[%c0_19, %c0_20] : memref<8x1xf32, #tpu.memory_space<vmem>>, vector<8x1xf32>
    tpu.vector_store %arg7[%c0_19, %c0_20], %24 {strides = array<i32>} : memref<8x1xf32, #tpu.memory_space<vmem>>, vector<8x1xf32>,
    return
  }
  func.func @transform_0(%arg0: i32, %arg1: i32) -> (i32, i32, i32) {
    %c0_i32 = arith.constant 0 : i32
    %c0_i32_0 = arith.constant 0 : i32
    return %arg0, %c0_i32, %arg1 : i32, i32, i32
  }
  func.func @transform_1(%arg0: i32, %arg1: i32) -> (i32, i32) {
    %c0_i32 = arith.constant 0 : i32
    %c0_i32_0 = arith.constant 0 : i32
    %c0_i32_1 = arith.constant 0 : i32
    return %c0_i32, %c0_i32_0 : i32, i32
  }
  func.func @transform_2(%arg0: i32, %arg1: i32) -> (i32, i32) {
    %c0_i32 = arith.constant 0 : i32
    %c0_i32_0 = arith.constant 0 : i32
    %c0_i32_1 = arith.constant 0 : i32
    return %c0_i32, %c0_i32_0 : i32, i32
  }
  func.func @transform_3(%arg0: i32, %arg1: i32) -> (i32, i32, i32) {
    %c0_i32 = arith.constant 0 : i32
    %c0_i32_0 = arith.constant 0 : i32
    return %arg0, %c0_i32, %arg1 : i32, i32, i32
  }
  func.func @transform_4(%arg0: i32, %arg1: i32) -> (i32, i32) {
    %c0_i32 = arith.constant 0 : i32
    %c0_i32_0 = arith.constant 0 : i32
    %c0_i32_1 = arith.constant 0 : i32
    return %c0_i32, %c0_i32_0 : i32, i32
  }
  func.func @transform_5(%arg0: i32, %arg1: i32) -> (i32, i32) {
    %c0_i32 = arith.constant 0 : i32
    %c0_i32_0 = arith.constant 0 : i32
    %c0_i32_1 = arith.constant 0 : i32
    return %c0_i32, %c0_i32_0 : i32, i32
  }
}

module attributes {stable_mosaic.version = 11 : i64} {
  func.func @bn_add_kernel(%arg0: i32, %arg1: i32, %arg2: memref<1x8x2048xf32, #tpu.memory_space<vmem>>, %arg3: memref<1x8x2048xf32, #tpu.memory_space<vmem>>, %arg4: memref<8x1xf32, #tpu.memory_space<vmem>>, %arg5: memref<8x1xf32, #tpu.memory_space<vmem>>, %arg6: memref<1x8x2048xf32, #tpu.memory_space<vmem>>) attributes {dimension_semantics = [#tpu.dimension_semantics<parallel>, #tpu.dimension_semantics<parallel>], iteration_bounds = array<i64: 2, 1>, scalar_prefetch = 0 : i64, scratch_operands = 0 : i64, tpu.core_type = #tpu.core_type<tc>, window_params = [{transform_indices = @transform_0, window_bounds = array<i64: 1, 8, 2048>}, {transform_indices = @transform_1, window_bounds = array<i64: 1, 8, 2048>}, {pipeline_mode = #tpu.pipeline_mode<synchronous>, transform_indices = @transform_2, window_bounds = array<i64: 8, 1>}, {pipeline_mode = #tpu.pipeline_mode<synchronous>, transform_indices = @transform_3, window_bounds = array<i64: 8, 1>}, {transform_indices = @transform_4, window_bounds = array<i64: 1, 8, 2048>}]} {
    %c0 = arith.constant 0 : index
    %c0_0 = arith.constant 0 : index
    %c0_1 = arith.constant 0 : index
    %0 = vector.load %arg2[%c0, %c0_0, %c0_1] : memref<1x8x2048xf32, #tpu.memory_space<vmem>>, vector<1x8x2048xf32>
    %1 = vector.shape_cast %0 : vector<1x8x2048xf32> to vector<8x2048xf32>
    %c0_2 = arith.constant 0 : index
    %c0_3 = arith.constant 0 : index
    %2 = vector.load %arg4[%c0_2, %c0_3] : memref<8x1xf32, #tpu.memory_space<vmem>>, vector<8x1xf32>
    %3 = vector.broadcast %2 : vector<8x1xf32> to vector<8x2048xf32>
    %4 = arith.mulf %1, %3 : vector<8x2048xf32>
    %c0_4 = arith.constant 0 : index
    %c0_5 = arith.constant 0 : index
    %5 = vector.load %arg5[%c0_4, %c0_5] : memref<8x1xf32, #tpu.memory_space<vmem>>, vector<8x1xf32>
    %6 = vector.broadcast %5 : vector<8x1xf32> to vector<8x2048xf32>
    %7 = arith.addf %4, %6 : vector<8x2048xf32>
    %c0_6 = arith.constant 0 : index
    %c0_7 = arith.constant 0 : index
    %c0_8 = arith.constant 0 : index
    %8 = vector.load %arg3[%c0_6, %c0_7, %c0_8] : memref<1x8x2048xf32, #tpu.memory_space<vmem>>, vector<1x8x2048xf32>
    %9 = vector.shape_cast %8 : vector<1x8x2048xf32> to vector<8x2048xf32>
    %10 = arith.addf %7, %9 : vector<8x2048xf32>
    %c0_9 = arith.constant 0 : index
    %c0_10 = arith.constant 0 : index
    %c0_11 = arith.constant 0 : index
    %11 = vector.load %arg6[%c0_9, %c0_10, %c0_11] : memref<1x8x2048xf32, #tpu.memory_space<vmem>>, vector<1x8x2048xf32>
    %12 = vector.shape_cast %11 : vector<1x8x2048xf32> to vector<8x2048xf32>
    %13 = vector.shape_cast %10 : vector<8x2048xf32> to vector<1x8x2048xf32>
    tpu.vector_store %arg6[%c0_9, %c0_10, %c0_11], %13 {strides = array<i32>} : memref<1x8x2048xf32, #tpu.memory_space<vmem>>, vector<1x8x2048xf32>,
    return
  }
  func.func @transform_0(%arg0: i32, %arg1: i32) -> (i32, i32, i32) {
    %c0_i32 = arith.constant 0 : i32
    %c0_i32_0 = arith.constant 0 : i32
    return %arg0, %c0_i32, %arg1 : i32, i32, i32
  }
  func.func @transform_1(%arg0: i32, %arg1: i32) -> (i32, i32, i32) {
    %c0_i32 = arith.constant 0 : i32
    %c0_i32_0 = arith.constant 0 : i32
    return %arg0, %c0_i32, %arg1 : i32, i32, i32
  }
  func.func @transform_2(%arg0: i32, %arg1: i32) -> (i32, i32) {
    %c0_i32 = arith.constant 0 : i32
    %c0_i32_0 = arith.constant 0 : i32
    %c0_i32_1 = arith.constant 0 : i32
    return %c0_i32, %c0_i32_0 : i32, i32
  }
  func.func @transform_3(%arg0: i32, %arg1: i32) -> (i32, i32) {
    %c0_i32 = arith.constant 0 : i32
    %c0_i32_0 = arith.constant 0 : i32
    %c0_i32_1 = arith.constant 0 : i32
    return %c0_i32, %c0_i32_0 : i32, i32
  }
  func.func @transform_4(%arg0: i32, %arg1: i32) -> (i32, i32, i32) {
    %c0_i32 = arith.constant 0 : i32
    %c0_i32_0 = arith.constant 0 : i32
    return %arg0, %c0_i32, %arg1 : i32, i32, i32
  }
}

</mosaic_0001>

<llo_original>
// kernel: decoder_block_forward.12
$region0: #{decoder_block_forward.12}
  #allocation0 [shape = 'u32[]', space=smem, size = 0x4, offset = 0x4, fixed_abs, tag = 'smem constant byte address 0x4 - core index']
  #allocation1 [shape = 'u32[72,128]{1,0:T(1,128)}', space=vmem, size = 0x9000, scoped, tag = 'internal scratch']
  %s0 = inlined_call_operand.vmem [shape: f32[2,4,256], index: 0, kind: input, shape index: {}]
  %s1 = inlined_call_operand.vmem [shape: f32[8,4], index: 1, kind: input, shape index: {}]
  %s2 = inlined_call_operand.vmem [shape: f32[8,1], index: 2, kind: input, shape index: {}]
  %s3 = inlined_call_operand.vmem [shape: f32[2,8,256], index: 3, kind: output, shape index: {0}]
  %s4 = inlined_call_operand.vmem [shape: f32[8,1], index: 4, kind: output, shape index: {1}]
  %s5 = inlined_call_operand.vmem [shape: f32[8,1], index: 5, kind: output, shape index: {2}]
  %6 = xla_tuple %s3, %s4, %s5
  %s7 = sld [smem:[#allocation0]]
  $region65: #{decoder_block_forward.12} parent=0
    _
  %s9 = ssub.s32 1, %s7
  %s10 = scalar_select 0, %s9, %s7
  loop: start=0, step=1, limit=4
  $region2: #{decoder_block_forward.12} parent=0 // loop_pre_header
    _
  $region3: #{decoder_block_forward.12} parent=0 // loop_header
    %s12 = sphi 0, %s16
    %p13 = scmp.ge.s32.totalorder %s12, 4
    %s19 = sphi 0, %s31
    %s20 = sphi 0, %s27
    %s21 = sphi 0, %s19
    %s22 = sphi 0, %s20
    %s23 = sphi 0, %s21
    %s24 = sphi 0, %s22
    %s36 = sphi 0, %s38
    %s39 = sphi 0, %s36
    %s40 = sphi 0, %s39
    %s56 = sphi 0, %s40
    %s60 = sphi 0, %s60
    %s62 = sphi 0, %s60
    %s63 = sphi 0, %s62
    %s77 = sphi 0, %s63
    %s81 = sphi 0, %s81
    %s83 = sphi 0, %s81
    %s84 = sphi 0, %s83
    %s98 = sphi 0, %s84
    %s106 = sphi 0, %s108
    %s109 = sphi 0, %s106
    %s110 = sphi 0, %s109
    %s126 = sphi 0, %s110
    %s130 = sphi 0, %s130
    %s132 = sphi 0, %s130
    %s133 = sphi 0, %s132
    %s147 = sphi 0, %s133
    %s151 = sphi 0, %s151
    %s153 = sphi 0, %s151
    %s154 = sphi 0, %s153
    %s168 = sphi 0, %s154
  $region4: #{decoder_block_forward.12} parent=0 // loop_header_branch
    %15 = sbr.rel (%p13) target = $region8
  $region5: #{decoder_block_forward.12} parent=0 // loop_body
    %s17 = ssub.s32 %s12, 1
    %s18 = ssub.s32 %s12, 2
    %s25 = sadd.s32 1, %s20
    %p26 = scmp.ge.s32.totalorder %s25, 1
    %s27 = scalar_select %p26, 0, %s25
    %s28 = sadd.s32 1, %s19
    %s29 = scalar_select %p26, %s28, %s19
    %p30 = scmp.ge.s32.totalorder %s29, 2
    %s31 = scalar_select %p30, 0, %s29
    %s32 = ssub.s32 %s19, %s31
    %s33 = ssub.s32 %s20, %s27
    %s34 = sor.u32 %s32, %s33
    %p35 = scmp.eq.s32.totalorder %s34, 0
    %s37 = sadd.s32 %s36, 1
    %s38 = scalar_select %p35, %s36, %s37
    %p41 = pneg %p35
    %p42 = scmp.eq.s32.totalorder %s12, 1
    %p43 = por %p41, %p42
    %p44 = scmp.ne.s32.totalorder %s36, %s39
    %p45 = scmp.eq.s32.totalorder %s12, 0
    %p46 = por %p44, %p45
    %p47 = scmp.ne.s32.totalorder %s36, %s39
    %p48 = scmp.eq.s32.totalorder %s17, 1
    %p49 = por %p47, %p48
    %p50 = scmp.ne.s32.totalorder %s39, %s40
    %p51 = scmp.eq.s32.totalorder %s17, 0
    %p52 = por %p50, %p51
    %p53 = scmp.ne.s32.totalorder %s39, %s40
    %p54 = scmp.eq.s32.totalorder %s18, 1
    %p55 = por %p53, %p54
    %p57 = scmp.ne.s32.totalorder %s40, %s56
    %p58 = scmp.eq.s32.totalorder %s18, 0
    %p59 = por %p57, %p58
    %s61 = sadd.s32 %s60, 1
    %p64 = scmp.eq.s32.totalorder %s12, 1
    %p65 = scmp.ne.s32.totalorder %s60, %s62
    %p66 = scmp.eq.s32.totalorder %s12, 0
    %p67 = por %p65, %p66
    %p68 = scmp.ne.s32.totalorder %s60, %s62
    %p69 = scmp.eq.s32.totalorder %s17, 1
    %p70 = por %p68, %p69
    %p71 = scmp.ne.s32.totalorder %s62, %s63
    %p72 = scmp.eq.s32.totalorder %s17, 0
    %p73 = por %p71, %p72
    %p74 = scmp.ne.s32.totalorder %s62, %s63
    %p75 = scmp.eq.s32.totalorder %s18, 1
    %p76 = por %p74, %p75
    %p78 = scmp.ne.s32.totalorder %s63, %s77
    %p79 = scmp.eq.s32.totalorder %s18, 0
    %p80 = por %p78, %p79
    %s82 = sadd.s32 %s81, 1
    %p85 = scmp.eq.s32.totalorder %s12, 1
    %p86 = scmp.ne.s32.totalorder %s81, %s83
    %p87 = scmp.eq.s32.totalorder %s12, 0
    %p88 = por %p86, %p87
    %p89 = scmp.ne.s32.totalorder %s81, %s83
    %p90 = scmp.eq.s32.totalorder %s17, 1
    %p91 = por %p89, %p90
    %p92 = scmp.ne.s32.totalorder %s83, %s84
    %p93 = scmp.eq.s32.totalorder %s17, 0
    %p94 = por %p92, %p93
    %p95 = scmp.ne.s32.totalorder %s83, %s84
    %p96 = scmp.eq.s32.totalorder %s18, 1
    %p97 = por %p95, %p96
    %p99 = scmp.ne.s32.totalorder %s84, %s98
    %p100 = scmp.eq.s32.totalorder %s18, 0
    %p101 = por %p99, %p100
    %s102 = ssub.s32 %s19, %s31
    %s103 = ssub.s32 %s20, %s27
    %s104 = sor.u32 %s102, %s103
    %p105 = scmp.eq.s32.totalorder %s104, 0
    %s107 = sadd.s32 %s106, 1
    %s108 = scalar_select %p105, %s106, %s107
    %p111 = pneg %p105
    %p112 = scmp.eq.s32.totalorder %s12, 1
    %p113 = por %p111, %p112
    %p114 = scmp.ne.s32.totalorder %s106, %s109
    %p115 = scmp.eq.s32.totalorder %s12, 0
    %p116 = por %p114, %p115
    %p117 = scmp.ne.s32.totalorder %s106, %s109
    %p118 = scmp.eq.s32.totalorder %s17, 1
    %p119 = por %p117, %p118
    %p120 = scmp.ne.s32.totalorder %s109, %s110
    %p121 = scmp.eq.s32.totalorder %s17, 0
    %p122 = por %p120, %p121
    %p123 = scmp.ne.s32.totalorder %s109, %s110
    %p124 = scmp.eq.s32.totalorder %s18, 1
    %p125 = por %p123, %p124
    %p127 = scmp.ne.s32.totalorder %s110, %s126
    %p128 = scmp.eq.s32.totalorder %s18, 0
    %p129 = por %p127, %p128
    %s131 = sadd.s32 %s130, 1
    %p134 = scmp.eq.s32.totalorder %s12, 1
    %p135 = scmp.ne.s32.totalorder %s130, %s132
    %p136 = scmp.eq.s32.totalorder %s12, 0
    %p137 = por %p135, %p136
    %p138 = scmp.ne.s32.totalorder %s130, %s132
    %p139 = scmp.eq.s32.totalorder %s17, 1
    %p140 = por %p138, %p139
    %p141 = scmp.ne.s32.totalorder %s132, %s133
    %p142 = scmp.eq.s32.totalorder %s17, 0
    %p143 = por %p141, %p142
    %p144 = scmp.ne.s32.totalorder %s132, %s133
    %p145 = scmp.eq.s32.totalorder %s18, 1
    %p146 = por %p144, %p145
    %p148 = scmp.ne.s32.totalorder %s133, %s147
    %p149 = scmp.eq.s32.totalorder %s18, 0
    %p150 = por %p148, %p149
    %s152 = sadd.s32 %s151, 1
    %p155 = scmp.eq.s32.totalorder %s12, 1
    %p156 = scmp.ne.s32.totalorder %s151, %s153
    %p157 = scmp.eq.s32.totalorder %s12, 0
    %p158 = por %p156, %p157
    %p159 = scmp.ne.s32.totalorder %s151, %s153
    %p160 = scmp.eq.s32.totalorder %s17, 1
    %p161 = por %p159, %p160
    %p162 = scmp.ne.s32.totalorder %s153, %s154
    %p163 = scmp.eq.s32.totalorder %s17, 0
    %p164 = por %p162, %p163
    %p165 = scmp.ne.s32.totalorder %s153, %s154
    %p166 = scmp.eq.s32.totalorder %s18, 1
    %p167 = por %p165, %p166
    %p169 = scmp.ne.s32.totalorder %s154, %s168
    %p170 = scmp.eq.s32.totalorder %s18, 0
    %p171 = por %p169, %p170
    %p172 = scmp.le.s32.totalorder 1, %s12
    %p173 = scmp.lt.s32.totalorder %s12, 3
    %p174 = pnand %p172, %p173
    %p175 = pneg %p174
    // Predicated region
    $region9: #{decoder_block_forward.12} parent=5 // pred_check
      _
    $region10: #{decoder_block_forward.12} parent=5 // pred_check_branch
      %177 = sbr.rel (%p174) target = $region12
    $region11: #{decoder_block_forward.12} parent=5 // pred_region
      %s178 = ssub.s32 %s12, 1
      // Predicated region
      $region13: #{decoder_block_forward.12} parent=11 // pred_check
        %p179 = pneg %p73
      $region14: #{decoder_block_forward.12} parent=11 // pred_check_branch
        %181 = sbr.rel (%p179) target = $region16
      $region15: #{decoder_block_forward.12} parent=11 // pred_region
        _
      $region16: #{decoder_block_forward.12} parent=11 // pred_fallthru
        _
      // Predicated region
      $region17: #{decoder_block_forward.12} parent=11 // pred_check
        %p182 = pneg %p94
      $region18: #{decoder_block_forward.12} parent=11 // pred_check_branch
        %184 = sbr.rel (%p182) target = $region20
      $region19: #{decoder_block_forward.12} parent=11 // pred_region
        _
      $region20: #{decoder_block_forward.12} parent=11 // pred_fallthru
        _
    $region12: #{decoder_block_forward.12} parent=5 // pred_fallthru
      _
    %p185 = scmp.lt.s32.totalorder %s12, 2
    // Predicated region
    $region21: #{decoder_block_forward.12} parent=5 // pred_check
      %p186 = pneg %p185
    $region22: #{decoder_block_forward.12} parent=5 // pred_check_branch
      %188 = sbr.rel (%p186) target = $region24
    $region23: #{decoder_block_forward.12} parent=5 // pred_region
      // Predicated region
      $region25: #{decoder_block_forward.12} parent=23 // pred_check
        %p189 = pneg %p46
      $region26: #{decoder_block_forward.12} parent=23 // pred_check_branch
        %191 = sbr.rel (%p189) target = $region28
      $region27: #{decoder_block_forward.12} parent=23 // pred_region
        %s192 = smul.u32 2, %s20
        %p193 = scmp.lt.s32.totalorder %s19, 1
        %s194 = scalar_select %p193, %s19, 1
        %p195 = scmp.lt.s32.totalorder %s192, 1
        %s196 = scalar_select %p195, %s192, 1
        %s197 = smul.addr %s194, 2
        %s198 = sadd.s32 %s196, %s197
        %s199 = smul.addr %s198, 4
        %s200 = scalar_lea.vmem %s0, %s199
        %s201 = smul.u32 2, %s20
      $region28: #{decoder_block_forward.12} parent=23 // pred_fallthru
        _
    $region24: #{decoder_block_forward.12} parent=5 // pred_fallthru
      _
    %p202 = scmp.le.s32.totalorder 1, %s12
    %p203 = scmp.lt.s32.totalorder %s12, 3
    %p204 = pnand %p202, %p203
    %p205 = pneg %p204
    // Predicated region
    $region29: #{decoder_block_forward.12} parent=5 // pred_check
      _
    $region30: #{decoder_block_forward.12} parent=5 // pred_check_branch
      %207 = sbr.rel (%p204) target = $region32
    $region31: #{decoder_block_forward.12} parent=5 // pred_region
      %s208 = ssub.s32 %s12, 1
      %s209 = smul.u32 2, %s22
      %p210 = scmp.lt.s32.totalorder %s21, 1
      %s211 = scalar_select %p210, %s21, 1
      %p212 = scmp.lt.s32.totalorder %s209, 1
      %s213 = scalar_select %p212, %s209, 1
      %s214 = smul.addr %s211, 2
      %s215 = sadd.s32 %s213, %s214
      %s216 = smul.addr %s215, 4
      %s217 = scalar_lea.vmem %s0, %s216
      %p218 = pneg %p52
      %p219 = pneg %p49
      %p220 = pneg %p73
      %p221 = pneg %p70
      %p222 = pneg %p94
      %p223 = pneg %p91
      %p224 = pneg %p122
      %p225 = pneg %p119
      %s226 = smul.u32 2, %s22
      %p227 = scmp.lt.s32.totalorder %s21, 1
      %s228 = scalar_select %p227, %s21, 1
      %p229 = scmp.lt.s32.totalorder %s226, 1
      %s230 = scalar_select %p229, %s226, 1
      %s231 = smul.addr %s228, 2
      %s232 = sadd.s32 %s230, %s231
      %s233 = smul.addr %s232, 8
      %s234 = scalar_lea.vmem %s3, %s233
      %p235 = pneg %p143
      %p236 = pneg %p140
      %p237 = pneg %p164
      %p238 = pneg %p161
      %s239 = smul.u32 2, %s22
      %p240 = scmp.lt.s32.totalorder %s21, 1
      %s241 = scalar_select %p240, %s21, 1
      %p242 = scmp.lt.s32.totalorder %s239, 1
      %s243 = scalar_select %p242, %s239, 1
      %s244 = smul.addr %s241, 2
      %s245 = sadd.s32 %s243, %s244
      %s246 = smul.addr %s245, 4
      %s247 = scalar_lea.vmem %s0, %s246
      %s248 = smul.u32 2, %s22
      %s249 = smul.u32 2, %s22
      %p250 = scmp.lt.s32.totalorder %s21, 1
      %s251 = scalar_select %p250, %s21, 1
      %p252 = scmp.lt.s32.totalorder %s249, 1
      %s253 = scalar_select %p252, %s249, 1
      %s254 = smul.addr %s251, 2
      %s255 = sadd.s32 %s253, %s254
      %s256 = smul.addr %s255, 8
      %s257 = scalar_lea.vmem %s3, %s256
      %s258 = smul.u32 2, %s22
      %v259 = vld [vmem:[%s1] sm:$0xff]
      %v260 = vld [vmem:[%s247] sm:$0xff]
      %v261 = vld [vmem:[%s2] sm:$0xff]
      %263 = vset.pattern.permute.xlu0 0
      %264 = vperm.xlu0 %263, %v261
      %v265 = vpop.permute.xlu0 %264
      %268 = vst [vmem:[#allocation1] ss:$2 sm:$0xff] %v260
      %v269 = vld.sshfl [vmem:[#allocation1] sm:$0xff pattern:$0x75316420]
      %v270 = vld.sshfl [vmem:[#allocation1 + $0x8] sm:$0xff pattern:$0x75316420]
      %vm271 = vcmask 31744
      %v273 = vsel %vm271, %v259, 0
      %vm275 = vcmask 1043456
      %v276 = vsel %vm275, %v269, 0
      %v278 = vsel %vm275, %v270, 0
      %280 = vmatpush.msra.mxu0 0.0
      %281 = vmatpush.msra.mxu0 0.0
      %282 = vmatpush.msra.mxu0 0.0
      %283 = vmatpush.msra.mxu0 0.0
      %284 = vmatpush.msra.mxu0 0.0
      %285 = vmatpush.msra.mxu0 0.0
      %286 = vmatpush.msra.mxu0 0.0
      %287 = vmatpush.msra.mxu0 0.0
      %288 = vmatpush.msra.mxu0 0.0
      %289 = vmatpush.msra.mxu0 0.0
      %290 = vmatpush.msra.mxu0 0.0
      %291 = vmatpush.msra.mxu0 0.0
      %292 = vmatpush.msra.mxu0 0.0
      %293 = vmatpush.msra.mxu0 0.0
      %294 = vmatpush.msra.mxu0 0.0
      %295 = vmatpush.msra.mxu0 %v276
      %296 = vmatmul.f32.gmra.mxu0 %v273
      %v297 = vpop.f32.mrf.mxu0
      %v298 = vadd.f32 %v265, %v297
      %299 = vdwg.mxu0
      %300 = vmatpush.msra.mxu0 0.0
      %301 = vmatpush.msra.mxu0 0.0
      %302 = vmatpush.msra.mxu0 0.0
      %303 = vmatpush.msra.mxu0 0.0
      %304 = vmatpush.msra.mxu0 0.0
      %305 = vmatpush.msra.mxu0 0.0
      %306 = vmatpush.msra.mxu0 0.0
      %307 = vmatpush.msra.mxu0 0.0
      %308 = vmatpush.msra.mxu0 0.0
      %309 = vmatpush.msra.mxu0 0.0
      %310 = vmatpush.msra.mxu0 0.0
      %311 = vmatpush.msra.mxu0 0.0
      %312 = vmatpush.msra.mxu0 0.0
      %313 = vmatpush.msra.mxu0 0.0
      %314 = vmatpush.msra.mxu0 0.0
      %315 = vmatpush.msra.mxu0 %v278
      %316 = vmatmul.f32.gmra.mxu0 %v273
      %v317 = vpop.f32.mrf.mxu0
      %v318 = vadd.f32 %v265, %v317
      %319 = vdwg.mxu0
      %320 = vst [vmem:[%s257] sm:$0xff] %v298
      %321 = vst [vmem:[%s257 + $0x8] sm:$0xff] %v318
      %p322 = scmp.eq.s32.totalorder %s21, 0
      %p323 = scmp.eq.s32.totalorder %s22, 0
      %p324 = pnand %p322, %p323
      %p325 = pneg %p324
      // Predicated region
      $region33: #{decoder_block_forward.12} parent=31 // pred_check
        _
      $region34: #{decoder_block_forward.12} parent=31 // pred_check_branch
        %327 = sbr.rel (%p324) target = $region36
      $region35: #{decoder_block_forward.12} parent=31 // pred_region
        %vm328 = vcmask 7168
        %329 = vst.msk [vmem:[%s4] sm:$0xff] %vm328, 0.0
        %330 = vst.msk [vmem:[%s5] sm:$0xff] %vm328, 0.0
      $region36: #{decoder_block_forward.12} parent=31 // pred_fallthru
        _
      %v331 = vld [vmem:[%s4] sm:$0xff]
      %v332 = vadd.f32 %v298, %v318
      %333 = vadd.xlane.f32.xlu0 %v332
      %v334 = vpop.xlane.xlu0 %333
      %v335 = vadd.f32 %v331, %v334
      %vm336 = vcmask 7168
      %337 = vst.msk [vmem:[%s4] sm:$0xff] %vm336, %v335
      %v338 = vld [vmem:[%s5] sm:$0xff]
      %v339 = vmul.f32 %v298, %v298
      %v340 = vmul.f32 %v318, %v318
      %v341 = vadd.f32 %v339, %v340
      %342 = vadd.xlane.f32.xlu0 %v341
      %v343 = vpop.xlane.xlu0 %342
      %v344 = vadd.f32 %v338, %v343
      %345 = vst.msk [vmem:[%s5] sm:$0xff] %vm336, %v344
      %s346 = smul.u32 2, %s22
      %p347 = scmp.lt.s32.totalorder %s21, 1
      %s348 = scalar_select %p347, %s21, 1
      %p349 = scmp.lt.s32.totalorder %s346, 1
      %s350 = scalar_select %p349, %s346, 1
      %s351 = smul.addr %s348, 2
      %s352 = sadd.s32 %s350, %s351
      %s353 = smul.addr %s352, 8
      %s354 = scalar_lea.vmem %s3, %s353
      // Predicated region
      $region37: #{decoder_block_forward.12} parent=31 // pred_check
        %p355 = pneg %p119
      $region38: #{decoder_block_forward.12} parent=31 // pred_check_branch
        %357 = sbr.rel (%p355) target = $region40
      $region39: #{decoder_block_forward.12} parent=31 // pred_region
        %s358 = smul.u32 2, %s22
      $region40: #{decoder_block_forward.12} parent=31 // pred_fallthru
        _
      // Predicated region
      $region41: #{decoder_block_forward.12} parent=31 // pred_check
        %p359 = pneg %p140
      $region42: #{decoder_block_forward.12} parent=31 // pred_check_branch
        %361 = sbr.rel (%p359) target = $region44
      $region43: #{decoder_block_forward.12} parent=31 // pred_region
        _
      $region44: #{decoder_block_forward.12} parent=31 // pred_fallthru
        _
      // Predicated region
      $region45: #{decoder_block_forward.12} parent=31 // pred_check
        %p362 = pneg %p161
      $region46: #{decoder_block_forward.12} parent=31 // pred_check_branch
        %364 = sbr.rel (%p362) target = $region48
      $region47: #{decoder_block_forward.12} parent=31 // pred_region
        _
      $region48: #{decoder_block_forward.12} parent=31 // pred_fallthru
        _
      // Predicated region
      $region49: #{decoder_block_forward.12} parent=31 // pred_check
        %p365 = pneg %p140
      $region50: #{decoder_block_forward.12} parent=31 // pred_check_branch
        %367 = sbr.rel (%p365) target = $region52
      $region51: #{decoder_block_forward.12} parent=31 // pred_region
        _
      $region52: #{decoder_block_forward.12} parent=31 // pred_fallthru
        _
      // Predicated region
      $region53: #{decoder_block_forward.12} parent=31 // pred_check
        %p368 = pneg %p161
      $region54: #{decoder_block_forward.12} parent=31 // pred_check_branch
        %370 = sbr.rel (%p368) target = $region56
      $region55: #{decoder_block_forward.12} parent=31 // pred_region
        _
      $region56: #{decoder_block_forward.12} parent=31 // pred_fallthru
        _
    $region32: #{decoder_block_forward.12} parent=5 // pred_fallthru
      _
    %p371 = scmp.le.s32.totalorder 2, %s12
    // Predicated region
    $region57: #{decoder_block_forward.12} parent=5 // pred_check
      %p372 = pneg %p371
    $region58: #{decoder_block_forward.12} parent=5 // pred_check_branch
      %374 = sbr.rel (%p372) target = $region60
    $region59: #{decoder_block_forward.12} parent=5 // pred_region
      %s375 = ssub.s32 %s12, 2
      // Predicated region
      $region61: #{decoder_block_forward.12} parent=59 // pred_check
        %p376 = pneg %p125
      $region62: #{decoder_block_forward.12} parent=59 // pred_check_branch
        %378 = sbr.rel (%p376) target = $region64
      $region63: #{decoder_block_forward.12} parent=59 // pred_region
        %s379 = smul.u32 2, %s24
        %p380 = scmp.lt.s32.totalorder %s23, 1
        %s381 = scalar_select %p380, %s23, 1
        %p382 = scmp.lt.s32.totalorder %s379, 1
        %s383 = scalar_select %p382, %s379, 1
        %s384 = smul.addr %s381, 2
        %s385 = sadd.s32 %s383, %s384
        %s386 = smul.addr %s385, 8
        %s387 = scalar_lea.vmem %s3, %s386
      $region64: #{decoder_block_forward.12} parent=59 // pred_fallthru
        _
    $region60: #{decoder_block_forward.12} parent=5 // pred_fallthru
      _
  $region6: #{decoder_block_forward.12} parent=0 // loop_footer
    %s16 = sadd.s32 1, %s12
  $region7: #{decoder_block_forward.12} parent=0 // loop_footer_branch
    %11 = sbr.rel target = $region3
  $region8: #{decoder_block_forward.12} parent=0 // loop_exit
    _

// kernel: decoder_block_forward.13
$region0: #{decoder_block_forward.13}
  #allocation0 [shape = 'u32[]', space=smem, size = 0x4, offset = 0x4, fixed_abs, tag = 'smem constant byte address 0x4 - core index']
  #allocation1 [shape = 'u32[72,128]{1,0:T(1,128)}', space=vmem, size = 0x9000, scoped, tag = 'internal scratch']
  %s0 = inlined_call_operand.vmem [shape: f32[2,4,256], index: 0, kind: input, shape index: {}]
  %s1 = inlined_call_operand.vmem [shape: f32[8,4], index: 1, kind: input, shape index: {}]
  %s2 = inlined_call_operand.vmem [shape: f32[8,1], index: 2, kind: input, shape index: {}]
  %s3 = inlined_call_operand.vmem [shape: f32[2,8,256], index: 3, kind: output, shape index: {0}]
  %s4 = inlined_call_operand.vmem [shape: f32[8,1], index: 4, kind: output, shape index: {1}]
  %s5 = inlined_call_operand.vmem [shape: f32[8,1], index: 5, kind: output, shape index: {2}]
  %6 = xla_tuple %s3, %s4, %s5
  %s7 = sld [smem:[#allocation0]]
  $region65: #{decoder_block_forward.13} parent=0
    _
  %s9 = ssub.s32 1, %s7
  %s10 = scalar_select 0, %s9, %s7
  loop: start=0, step=1, limit=4
  $region2: #{decoder_block_forward.13} parent=0 // loop_pre_header
    _
  $region3: #{decoder_block_forward.13} parent=0 // loop_header
    %s12 = sphi 0, %s16
    %p13 = scmp.ge.s32.totalorder %s12, 4
    %s19 = sphi 0, %s31
    %s20 = sphi 0, %s27
    %s21 = sphi 0, %s19
    %s22 = sphi 0, %s20
    %s23 = sphi 0, %s21
    %s24 = sphi 0, %s22
    %s36 = sphi 0, %s38
    %s39 = sphi 0, %s36
    %s40 = sphi 0, %s39
    %s56 = sphi 0, %s40
    %s60 = sphi 0, %s60
    %s62 = sphi 0, %s60
    %s63 = sphi 0, %s62
    %s77 = sphi 0, %s63
    %s81 = sphi 0, %s81
    %s83 = sphi 0, %s81
    %s84 = sphi 0, %s83
    %s98 = sphi 0, %s84
    %s106 = sphi 0, %s108
    %s109 = sphi 0, %s106
    %s110 = sphi 0, %s109
    %s126 = sphi 0, %s110
    %s130 = sphi 0, %s130
    %s132 = sphi 0, %s130
    %s133 = sphi 0, %s132
    %s147 = sphi 0, %s133
    %s151 = sphi 0, %s151
    %s153 = sphi 0, %s151
    %s154 = sphi 0, %s153
    %s168 = sphi 0, %s154
  $region4: #{decoder_block_forward.13} parent=0 // loop_header_branch
    %15 = sbr.rel (%p13) target = $region8
  $region5: #{decoder_block_forward.13} parent=0 // loop_body
    %s17 = ssub.s32 %s12, 1
    %s18 = ssub.s32 %s12, 2
    %s25 = sadd.s32 1, %s20
    %p26 = scmp.ge.s32.totalorder %s25, 1
    %s27 = scalar_select %p26, 0, %s25
    %s28 = sadd.s32 1, %s19
    %s29 = scalar_select %p26, %s28, %s19
    %p30 = scmp.ge.s32.totalorder %s29, 2
    %s31 = scalar_select %p30, 0, %s29
    %s32 = ssub.s32 %s19, %s31
    %s33 = ssub.s32 %s20, %s27
    %s34 = sor.u32 %s32, %s33
    %p35 = scmp.eq.s32.totalorder %s34, 0
    %s37 = sadd.s32 %s36, 1
    %s38 = scalar_select %p35, %s36, %s37
    %p41 = pneg %p35
    %p42 = scmp.eq.s32.totalorder %s12, 1
    %p43 = por %p41, %p42
    %p44 = scmp.ne.s32.totalorder %s36, %s39
    %p45 = scmp.eq.s32.totalorder %s12, 0
    %p46 = por %p44, %p45
    %p47 = scmp.ne.s32.totalorder %s36, %s39
    %p48 = scmp.eq.s32.totalorder %s17, 1
    %p49 = por %p47, %p48
    %p50 = scmp.ne.s32.totalorder %s39, %s40
    %p51 = scmp.eq.s32.totalorder %s17, 0
    %p52 = por %p50, %p51
    %p53 = scmp.ne.s32.totalorder %s39, %s40
    %p54 = scmp.eq.s32.totalorder %s18, 1
    %p55 = por %p53, %p54
    %p57 = scmp.ne.s32.totalorder %s40, %s56
    %p58 = scmp.eq.s32.totalorder %s18, 0
    %p59 = por %p57, %p58
    %s61 = sadd.s32 %s60, 1
    %p64 = scmp.eq.s32.totalorder %s12, 1
    %p65 = scmp.ne.s32.totalorder %s60, %s62
    %p66 = scmp.eq.s32.totalorder %s12, 0
    %p67 = por %p65, %p66
    %p68 = scmp.ne.s32.totalorder %s60, %s62
    %p69 = scmp.eq.s32.totalorder %s17, 1
    %p70 = por %p68, %p69
    %p71 = scmp.ne.s32.totalorder %s62, %s63
    %p72 = scmp.eq.s32.totalorder %s17, 0
    %p73 = por %p71, %p72
    %p74 = scmp.ne.s32.totalorder %s62, %s63
    %p75 = scmp.eq.s32.totalorder %s18, 1
    %p76 = por %p74, %p75
    %p78 = scmp.ne.s32.totalorder %s63, %s77
    %p79 = scmp.eq.s32.totalorder %s18, 0
    %p80 = por %p78, %p79
    %s82 = sadd.s32 %s81, 1
    %p85 = scmp.eq.s32.totalorder %s12, 1
    %p86 = scmp.ne.s32.totalorder %s81, %s83
    %p87 = scmp.eq.s32.totalorder %s12, 0
    %p88 = por %p86, %p87
    %p89 = scmp.ne.s32.totalorder %s81, %s83
    %p90 = scmp.eq.s32.totalorder %s17, 1
    %p91 = por %p89, %p90
    %p92 = scmp.ne.s32.totalorder %s83, %s84
    %p93 = scmp.eq.s32.totalorder %s17, 0
    %p94 = por %p92, %p93
    %p95 = scmp.ne.s32.totalorder %s83, %s84
    %p96 = scmp.eq.s32.totalorder %s18, 1
    %p97 = por %p95, %p96
    %p99 = scmp.ne.s32.totalorder %s84, %s98
    %p100 = scmp.eq.s32.totalorder %s18, 0
    %p101 = por %p99, %p100
    %s102 = ssub.s32 %s19, %s31
    %s103 = ssub.s32 %s20, %s27
    %s104 = sor.u32 %s102, %s103
    %p105 = scmp.eq.s32.totalorder %s104, 0
    %s107 = sadd.s32 %s106, 1
    %s108 = scalar_select %p105, %s106, %s107
    %p111 = pneg %p105
    %p112 = scmp.eq.s32.totalorder %s12, 1
    %p113 = por %p111, %p112
    %p114 = scmp.ne.s32.totalorder %s106, %s109
    %p115 = scmp.eq.s32.totalorder %s12, 0
    %p116 = por %p114, %p115
    %p117 = scmp.ne.s32.totalorder %s106, %s109
    %p118 = scmp.eq.s32.totalorder %s17, 1
    %p119 = por %p117, %p118
    %p120 = scmp.ne.s32.totalorder %s109, %s110
    %p121 = scmp.eq.s32.totalorder %s17, 0
    %p122 = por %p120, %p121
    %p123 = scmp.ne.s32.totalorder %s109, %s110
    %p124 = scmp.eq.s32.totalorder %s18, 1
    %p125 = por %p123, %p124
    %p127 = scmp.ne.s32.totalorder %s110, %s126
    %p128 = scmp.eq.s32.totalorder %s18, 0
    %p129 = por %p127, %p128
    %s131 = sadd.s32 %s130, 1
    %p134 = scmp.eq.s32.totalorder %s12, 1
    %p135 = scmp.ne.s32.totalorder %s130, %s132
    %p136 = scmp.eq.s32.totalorder %s12, 0
    %p137 = por %p135, %p136
    %p138 = scmp.ne.s32.totalorder %s130, %s132
    %p139 = scmp.eq.s32.totalorder %s17, 1
    %p140 = por %p138, %p139
    %p141 = scmp.ne.s32.totalorder %s132, %s133
    %p142 = scmp.eq.s32.totalorder %s17, 0
    %p143 = por %p141, %p142
    %p144 = scmp.ne.s32.totalorder %s132, %s133
    %p145 = scmp.eq.s32.totalorder %s18, 1
    %p146 = por %p144, %p145
    %p148 = scmp.ne.s32.totalorder %s133, %s147
    %p149 = scmp.eq.s32.totalorder %s18, 0
    %p150 = por %p148, %p149
    %s152 = sadd.s32 %s151, 1
    %p155 = scmp.eq.s32.totalorder %s12, 1
    %p156 = scmp.ne.s32.totalorder %s151, %s153
    %p157 = scmp.eq.s32.totalorder %s12, 0
    %p158 = por %p156, %p157
    %p159 = scmp.ne.s32.totalorder %s151, %s153
    %p160 = scmp.eq.s32.totalorder %s17, 1
    %p161 = por %p159, %p160
    %p162 = scmp.ne.s32.totalorder %s153, %s154
    %p163 = scmp.eq.s32.totalorder %s17, 0
    %p164 = por %p162, %p163
    %p165 = scmp.ne.s32.totalorder %s153, %s154
    %p166 = scmp.eq.s32.totalorder %s18, 1
    %p167 = por %p165, %p166
    %p169 = scmp.ne.s32.totalorder %s154, %s168
    %p170 = scmp.eq.s32.totalorder %s18, 0
    %p171 = por %p169, %p170
    %p172 = scmp.le.s32.totalorder 1, %s12
    %p173 = scmp.lt.s32.totalorder %s12, 3
    %p174 = pnand %p172, %p173
    %p175 = pneg %p174
    // Predicated region
    $region9: #{decoder_block_forward.13} parent=5 // pred_check
      _
    $region10: #{decoder_block_forward.13} parent=5 // pred_check_branch
      %177 = sbr.rel (%p174) target = $region12
    $region11: #{decoder_block_forward.13} parent=5 // pred_region
      %s178 = ssub.s32 %s12, 1
      // Predicated region
      $region13: #{decoder_block_forward.13} parent=11 // pred_check
        %p179 = pneg %p73
      $region14: #{decoder_block_forward.13} parent=11 // pred_check_branch
        %181 = sbr.rel (%p179) target = $region16
      $region15: #{decoder_block_forward.13} parent=11 // pred_region
        _
      $region16: #{decoder_block_forward.13} parent=11 // pred_fallthru
        _
      // Predicated region
      $region17: #{decoder_block_forward.13} parent=11 // pred_check
        %p182 = pneg %p94
      $region18: #{decoder_block_forward.13} parent=11 // pred_check_branch
        %184 = sbr.rel (%p182) target = $region20
      $region19: #{decoder_block_forward.13} parent=11 // pred_region
        _
      $region20: #{decoder_block_forward.13} parent=11 // pred_fallthru
        _
    $region12: #{decoder_block_forward.13} parent=5 // pred_fallthru
      _
    %p185 = scmp.lt.s32.totalorder %s12, 2
    // Predicated region
    $region21: #{decoder_block_forward.13} parent=5 // pred_check
      %p186 = pneg %p185
    $region22: #{decoder_block_forward.13} parent=5 // pred_check_branch
      %188 = sbr.rel (%p186) target = $region24
    $region23: #{decoder_block_forward.13} parent=5 // pred_region
      // Predicated region
      $region25: #{decoder_block_forward.13} parent=23 // pred_check
        %p189 = pneg %p46
      $region26: #{decoder_block_forward.13} parent=23 // pred_check_branch
        %191 = sbr.rel (%p189) target = $region28
      $region27: #{decoder_block_forward.13} parent=23 // pred_region
        %s192 = smul.u32 2, %s20
        %p193 = scmp.lt.s32.totalorder %s19, 1
        %s194 = scalar_select %p193, %s19, 1
        %p195 = scmp.lt.s32.totalorder %s192, 1
        %s196 = scalar_select %p195, %s192, 1
        %s197 = smul.addr %s194, 2
        %s198 = sadd.s32 %s196, %s197
        %s199 = smul.addr %s198, 4
        %s200 = scalar_lea.vmem %s0, %s199
        %s201 = smul.u32 2, %s20
      $region28: #{decoder_block_forward.13} parent=23 // pred_fallthru
        _
    $region24: #{decoder_block_forward.13} parent=5 // pred_fallthru
      _
    %p202 = scmp.le.s32.totalorder 1, %s12
    %p203 = scmp.lt.s32.totalorder %s12, 3
    %p204 = pnand %p202, %p203
    %p205 = pneg %p204
    // Predicated region
    $region29: #{decoder_block_forward.13} parent=5 // pred_check
      _
    $region30: #{decoder_block_forward.13} parent=5 // pred_check_branch
      %207 = sbr.rel (%p204) target = $region32
    $region31: #{decoder_block_forward.13} parent=5 // pred_region
      %s208 = ssub.s32 %s12, 1
      %s209 = smul.u32 2, %s22
      %p210 = scmp.lt.s32.totalorder %s21, 1
      %s211 = scalar_select %p210, %s21, 1
      %p212 = scmp.lt.s32.totalorder %s209, 1
      %s213 = scalar_select %p212, %s209, 1
      %s214 = smul.addr %s211, 2
      %s215 = sadd.s32 %s213, %s214
      %s216 = smul.addr %s215, 4
      %s217 = scalar_lea.vmem %s0, %s216
      %p218 = pneg %p52
      %p219 = pneg %p49
      %p220 = pneg %p73
      %p221 = pneg %p70
      %p222 = pneg %p94
      %p223 = pneg %p91
      %p224 = pneg %p122
      %p225 = pneg %p119
      %s226 = smul.u32 2, %s22
      %p227 = scmp.lt.s32.totalorder %s21, 1
      %s228 = scalar_select %p227, %s21, 1
      %p229 = scmp.lt.s32.totalorder %s226, 1
      %s230 = scalar_select %p229, %s226, 1
      %s231 = smul.addr %s228, 2
      %s232 = sadd.s32 %s230, %s231
      %s233 = smul.addr %s232, 8
      %s234 = scalar_lea.vmem %s3, %s233
      %p235 = pneg %p143
      %p236 = pneg %p140
      %p237 = pneg %p164
      %p238 = pneg %p161
      %s239 = smul.u32 2, %s22
      %p240 = scmp.lt.s32.totalorder %s21, 1
      %s241 = scalar_select %p240, %s21, 1
      %p242 = scmp.lt.s32.totalorder %s239, 1
      %s243 = scalar_select %p242, %s239, 1
      %s244 = smul.addr %s241, 2
      %s245 = sadd.s32 %s243, %s244
      %s246 = smul.addr %s245, 4
      %s247 = scalar_lea.vmem %s0, %s246
      %s248 = smul.u32 2, %s22
      %s249 = smul.u32 2, %s22
      %p250 = scmp.lt.s32.totalorder %s21, 1
      %s251 = scalar_select %p250, %s21, 1
      %p252 = scmp.lt.s32.totalorder %s249, 1
      %s253 = scalar_select %p252, %s249, 1
      %s254 = smul.addr %s251, 2
      %s255 = sadd.s32 %s253, %s254
      %s256 = smul.addr %s255, 8
      %s257 = scalar_lea.vmem %s3, %s256
      %s258 = smul.u32 2, %s22
      %v259 = vld [vmem:[%s1] sm:$0xff]
      %v260 = vld [vmem:[%s247] sm:$0xff]
      %v261 = vld [vmem:[%s2] sm:$0xff]
      %263 = vset.pattern.permute.xlu0 0
      %264 = vperm.xlu0 %263, %v261
      %v265 = vpop.permute.xlu0 %264
      %268 = vst [vmem:[#allocation1] ss:$2 sm:$0xff] %v260
      %v269 = vld.sshfl [vmem:[#allocation1] sm:$0xff pattern:$0x75316420]
      %v270 = vld.sshfl [vmem:[#allocation1 + $0x8] sm:$0xff pattern:$0x75316420]
      %vm271 = vcmask 31744
      %v273 = vsel %vm271, %v259, 0
      %vm275 = vcmask 1043456
      %v276 = vsel %vm275, %v269, 0
      %v278 = vsel %vm275, %v270, 0
      %280 = vmatpush.msra.mxu0 0.0
      %281 = vmatpush.msra.mxu0 0.0
      %282 = vmatpush.msra.mxu0 0.0
      %283 = vmatpush.msra.mxu0 0.0
      %284 = vmatpush.msra.mxu0 0.0
      %285 = vmatpush.msra.mxu0 0.0
      %286 = vmatpush.msra.mxu0 0.0
      %287 = vmatpush.msra.mxu0 0.0
      %288 = vmatpush.msra.mxu0 0.0
      %289 = vmatpush.msra.mxu0 0.0
      %290 = vmatpush.msra.mxu0 0.0
      %291 = vmatpush.msra.mxu0 0.0
      %292 = vmatpush.msra.mxu0 0.0
      %293 = vmatpush.msra.mxu0 0.0
      %294 = vmatpush.msra.mxu0 0.0
      %295 = vmatpush.msra.mxu0 %v276
      %296 = vmatmul.f32.gmra.mxu0 %v273
      %v297 = vpop.f32.mrf.mxu0
      %v298 = vadd.f32 %v265, %v297
      %299 = vdwg.mxu0
      %300 = vmatpush.msra.mxu0 0.0
      %301 = vmatpush.msra.mxu0 0.0
      %302 = vmatpush.msra.mxu0 0.0
      %303 = vmatpush.msra.mxu0 0.0
      %304 = vmatpush.msra.mxu0 0.0
      %305 = vmatpush.msra.mxu0 0.0
      %306 = vmatpush.msra.mxu0 0.0
      %307 = vmatpush.msra.mxu0 0.0
      %308 = vmatpush.msra.mxu0 0.0
      %309 = vmatpush.msra.mxu0 0.0
      %310 = vmatpush.msra.mxu0 0.0
      %311 = vmatpush.msra.mxu0 0.0
      %312 = vmatpush.msra.mxu0 0.0
      %313 = vmatpush.msra.mxu0 0.0
      %314 = vmatpush.msra.mxu0 0.0
      %315 = vmatpush.msra.mxu0 %v278
      %316 = vmatmul.f32.gmra.mxu0 %v273
      %v317 = vpop.f32.mrf.mxu0
      %v318 = vadd.f32 %v265, %v317
      %319 = vdwg.mxu0
      %vm320 = vcmp.ge.f32.partialorder %v298, 0.0
      %vm321 = vcmp.ge.f32.partialorder %v318, 0.0
      %v322 = vmul.f32 %v298, 0.01
      %v323 = vmul.f32 %v318, 0.01
      %v324 = vsel %vm320, %v298, %v322
      %v325 = vsel %vm321, %v318, %v323
      %326 = vst [vmem:[%s257] sm:$0xff] %v324
      %327 = vst [vmem:[%s257 + $0x8] sm:$0xff] %v325
      %p328 = scmp.eq.s32.totalorder %s21, 0
      %p329 = scmp.eq.s32.totalorder %s22, 0
      %p330 = pnand %p328, %p329
      %p331 = pneg %p330
      // Predicated region
      $region33: #{decoder_block_forward.13} parent=31 // pred_check
        _
      $region34: #{decoder_block_forward.13} parent=31 // pred_check_branch
        %333 = sbr.rel (%p330) target = $region36
      $region35: #{decoder_block_forward.13} parent=31 // pred_region
        %vm334 = vcmask 7168
        %335 = vst.msk [vmem:[%s4] sm:$0xff] %vm334, 0.0
        %336 = vst.msk [vmem:[%s5] sm:$0xff] %vm334, 0.0
      $region36: #{decoder_block_forward.13} parent=31 // pred_fallthru
        _
      %v337 = vld [vmem:[%s4] sm:$0xff]
      %v338 = vadd.f32 %v324, %v325
      %339 = vadd.xlane.f32.xlu0 %v338
      %v340 = vpop.xlane.xlu0 %339
      %v341 = vadd.f32 %v337, %v340
      %vm342 = vcmask 7168
      %343 = vst.msk [vmem:[%s4] sm:$0xff] %vm342, %v341
      %v344 = vld [vmem:[%s5] sm:$0xff]
      %v345 = vmul.f32 %v324, %v324
      %v346 = vmul.f32 %v325, %v325
      %v347 = vadd.f32 %v345, %v346
      %348 = vadd.xlane.f32.xlu0 %v347
      %v349 = vpop.xlane.xlu0 %348
      %v350 = vadd.f32 %v344, %v349
      %351 = vst.msk [vmem:[%s5] sm:$0xff] %vm342, %v350
      %s352 = smul.u32 2, %s22
      %p353 = scmp.lt.s32.totalorder %s21, 1
      %s354 = scalar_select %p353, %s21, 1
      %p355 = scmp.lt.s32.totalorder %s352, 1
      %s356 = scalar_select %p355, %s352, 1
      %s357 = smul.addr %s354, 2
      %s358 = sadd.s32 %s356, %s357
      %s359 = smul.addr %s358, 8
      %s360 = scalar_lea.vmem %s3, %s359
      // Predicated region
      $region37: #{decoder_block_forward.13} parent=31 // pred_check
        %p361 = pneg %p119
      $region38: #{decoder_block_forward.13} parent=31 // pred_check_branch
        %363 = sbr.rel (%p361) target = $region40
      $region39: #{decoder_block_forward.13} parent=31 // pred_region
        %s364 = smul.u32 2, %s22
      $region40: #{decoder_block_forward.13} parent=31 // pred_fallthru
        _
      // Predicated region
      $region41: #{decoder_block_forward.13} parent=31 // pred_check
        %p365 = pneg %p140
      $region42: #{decoder_block_forward.13} parent=31 // pred_check_branch
        %367 = sbr.rel (%p365) target = $region44
      $region43: #{decoder_block_forward.13} parent=31 // pred_region
        _
      $region44: #{decoder_block_forward.13} parent=31 // pred_fallthru
        _
      // Predicated region
      $region45: #{decoder_block_forward.13} parent=31 // pred_check
        %p368 = pneg %p161
      $region46: #{decoder_block_forward.13} parent=31 // pred_check_branch
        %370 = sbr.rel (%p368) target = $region48
      $region47: #{decoder_block_forward.13} parent=31 // pred_region
        _
      $region48: #{decoder_block_forward.13} parent=31 // pred_fallthru
        _
      // Predicated region
      $region49: #{decoder_block_forward.13} parent=31 // pred_check
        %p371 = pneg %p140
      $region50: #{decoder_block_forward.13} parent=31 // pred_check_branch
        %373 = sbr.rel (%p371) target = $region52
      $region51: #{decoder_block_forward.13} parent=31 // pred_region
        _
      $region52: #{decoder_block_forward.13} parent=31 // pred_fallthru
        _
      // Predicated region
      $region53: #{decoder_block_forward.13} parent=31 // pred_check
        %p374 = pneg %p161
      $region54: #{decoder_block_forward.13} parent=31 // pred_check_branch
        %376 = sbr.rel (%p374) target = $region56
      $region55: #{decoder_block_forward.13} parent=31 // pred_region
        _
      $region56: #{decoder_block_forward.13} parent=31 // pred_fallthru
        _
    $region32: #{decoder_block_forward.13} parent=5 // pred_fallthru
      _
    %p377 = scmp.le.s32.totalorder 2, %s12
    // Predicated region
    $region57: #{decoder_block_forward.13} parent=5 // pred_check
      %p378 = pneg %p377
    $region58: #{decoder_block_forward.13} parent=5 // pred_check_branch
      %380 = sbr.rel (%p378) target = $region60
    $region59: #{decoder_block_forward.13} parent=5 // pred_region
      %s381 = ssub.s32 %s12, 2
      // Predicated region
      $region61: #{decoder_block_forward.13} parent=59 // pred_check
        %p382 = pneg %p125
      $region62: #{decoder_block_forward.13} parent=59 // pred_check_branch
        %384 = sbr.rel (%p382) target = $region64
      $region63: #{decoder_block_forward.13} parent=59 // pred_region
        %s385 = smul.u32 2, %s24
        %p386 = scmp.lt.s32.totalorder %s23, 1
        %s387 = scalar_select %p386, %s23, 1
        %p388 = scmp.lt.s32.totalorder %s385, 1
        %s389 = scalar_select %p388, %s385, 1
        %s390 = smul.addr %s387, 2
        %s391 = sadd.s32 %s389, %s390
        %s392 = smul.addr %s391, 8
        %s393 = scalar_lea.vmem %s3, %s392
      $region64: #{decoder_block_forward.13} parent=59 // pred_fallthru
        _
    $region60: #{decoder_block_forward.13} parent=5 // pred_fallthru
      _
  $region6: #{decoder_block_forward.13} parent=0 // loop_footer
    %s16 = sadd.s32 1, %s12
  $region7: #{decoder_block_forward.13} parent=0 // loop_footer_branch
    %11 = sbr.rel target = $region3
  $region8: #{decoder_block_forward.13} parent=0 // loop_exit
    _

// kernel: decoder_block_forward.14
$region0: #{decoder_block_forward.14}
  #allocation0 [shape = 'u32[]', space=smem, size = 0x4, offset = 0x4, fixed_abs, tag = 'smem constant byte address 0x4 - core index']
  #allocation1 [shape = 'u32[72,128]{1,0:T(1,128)}', space=vmem, size = 0x9000, scoped, tag = 'internal scratch']
  %s0 = inlined_call_operand.vmem [shape: f32[2,8,256], index: 0, kind: input, shape index: {}]
  %s1 = inlined_call_operand.vmem [shape: f32[8,8], index: 1, kind: input, shape index: {}]
  %s2 = inlined_call_operand.vmem [shape: f32[8,1], index: 2, kind: input, shape index: {}]
  %s3 = inlined_call_operand.vmem [shape: f32[2,8,256], index: 3, kind: output, shape index: {0}]
  %s4 = inlined_call_operand.vmem [shape: f32[8,1], index: 4, kind: output, shape index: {1}]
  %s5 = inlined_call_operand.vmem [shape: f32[8,1], index: 5, kind: output, shape index: {2}]
  %6 = xla_tuple %s3, %s4, %s5
  %s7 = sld [smem:[#allocation0]]
  $region65: #{decoder_block_forward.14} parent=0
    _
  %s9 = ssub.s32 1, %s7
  %s10 = scalar_select 0, %s9, %s7
  loop: start=0, step=1, limit=4
  $region2: #{decoder_block_forward.14} parent=0 // loop_pre_header
    _
  $region3: #{decoder_block_forward.14} parent=0 // loop_header
    %s12 = sphi 0, %s16
    %p13 = scmp.ge.s32.totalorder %s12, 4
    %s19 = sphi 0, %s31
    %s20 = sphi 0, %s27
    %s21 = sphi 0, %s19
    %s22 = sphi 0, %s20
    %s23 = sphi 0, %s21
    %s24 = sphi 0, %s22
    %s36 = sphi 0, %s38
    %s39 = sphi 0, %s36
    %s40 = sphi 0, %s39
    %s56 = sphi 0, %s40
    %s60 = sphi 0, %s60
    %s62 = sphi 0, %s60
    %s63 = sphi 0, %s62
    %s77 = sphi 0, %s63
    %s81 = sphi 0, %s81
    %s83 = sphi 0, %s81
    %s84 = sphi 0, %s83
    %s98 = sphi 0, %s84
    %s106 = sphi 0, %s108
    %s109 = sphi 0, %s106
    %s110 = sphi 0, %s109
    %s126 = sphi 0, %s110
    %s130 = sphi 0, %s130
    %s132 = sphi 0, %s130
    %s133 = sphi 0, %s132
    %s147 = sphi 0, %s133
    %s151 = sphi 0, %s151
    %s153 = sphi 0, %s151
    %s154 = sphi 0, %s153
    %s168 = sphi 0, %s154
  $region4: #{decoder_block_forward.14} parent=0 // loop_header_branch
    %15 = sbr.rel (%p13) target = $region8
  $region5: #{decoder_block_forward.14} parent=0 // loop_body
    %s17 = ssub.s32 %s12, 1
    %s18 = ssub.s32 %s12, 2
    %s25 = sadd.s32 1, %s20
    %p26 = scmp.ge.s32.totalorder %s25, 1
    %s27 = scalar_select %p26, 0, %s25
    %s28 = sadd.s32 1, %s19
    %s29 = scalar_select %p26, %s28, %s19
    %p30 = scmp.ge.s32.totalorder %s29, 2
    %s31 = scalar_select %p30, 0, %s29
    %s32 = ssub.s32 %s19, %s31
    %s33 = ssub.s32 %s20, %s27
    %s34 = sor.u32 %s32, %s33
    %p35 = scmp.eq.s32.totalorder %s34, 0
    %s37 = sadd.s32 %s36, 1
    %s38 = scalar_select %p35, %s36, %s37
    %p41 = pneg %p35
    %p42 = scmp.eq.s32.totalorder %s12, 1
    %p43 = por %p41, %p42
    %p44 = scmp.ne.s32.totalorder %s36, %s39
    %p45 = scmp.eq.s32.totalorder %s12, 0
    %p46 = por %p44, %p45
    %p47 = scmp.ne.s32.totalorder %s36, %s39
    %p48 = scmp.eq.s32.totalorder %s17, 1
    %p49 = por %p47, %p48
    %p50 = scmp.ne.s32.totalorder %s39, %s40
    %p51 = scmp.eq.s32.totalorder %s17, 0
    %p52 = por %p50, %p51
    %p53 = scmp.ne.s32.totalorder %s39, %s40
    %p54 = scmp.eq.s32.totalorder %s18, 1
    %p55 = por %p53, %p54
    %p57 = scmp.ne.s32.totalorder %s40, %s56
    %p58 = scmp.eq.s32.totalorder %s18, 0
    %p59 = por %p57, %p58
    %s61 = sadd.s32 %s60, 1
    %p64 = scmp.eq.s32.totalorder %s12, 1
    %p65 = scmp.ne.s32.totalorder %s60, %s62
    %p66 = scmp.eq.s32.totalorder %s12, 0
    %p67 = por %p65, %p66
    %p68 = scmp.ne.s32.totalorder %s60, %s62
    %p69 = scmp.eq.s32.totalorder %s17, 1
    %p70 = por %p68, %p69
    %p71 = scmp.ne.s32.totalorder %s62, %s63
    %p72 = scmp.eq.s32.totalorder %s17, 0
    %p73 = por %p71, %p72
    %p74 = scmp.ne.s32.totalorder %s62, %s63
    %p75 = scmp.eq.s32.totalorder %s18, 1
    %p76 = por %p74, %p75
    %p78 = scmp.ne.s32.totalorder %s63, %s77
    %p79 = scmp.eq.s32.totalorder %s18, 0
    %p80 = por %p78, %p79
    %s82 = sadd.s32 %s81, 1
    %p85 = scmp.eq.s32.totalorder %s12, 1
    %p86 = scmp.ne.s32.totalorder %s81, %s83
    %p87 = scmp.eq.s32.totalorder %s12, 0
    %p88 = por %p86, %p87
    %p89 = scmp.ne.s32.totalorder %s81, %s83
    %p90 = scmp.eq.s32.totalorder %s17, 1
    %p91 = por %p89, %p90
    %p92 = scmp.ne.s32.totalorder %s83, %s84
    %p93 = scmp.eq.s32.totalorder %s17, 0
    %p94 = por %p92, %p93
    %p95 = scmp.ne.s32.totalorder %s83, %s84
    %p96 = scmp.eq.s32.totalorder %s18, 1
    %p97 = por %p95, %p96
    %p99 = scmp.ne.s32.totalorder %s84, %s98
    %p100 = scmp.eq.s32.totalorder %s18, 0
    %p101 = por %p99, %p100
    %s102 = ssub.s32 %s19, %s31
    %s103 = ssub.s32 %s20, %s27
    %s104 = sor.u32 %s102, %s103
    %p105 = scmp.eq.s32.totalorder %s104, 0
    %s107 = sadd.s32 %s106, 1
    %s108 = scalar_select %p105, %s106, %s107
    %p111 = pneg %p105
    %p112 = scmp.eq.s32.totalorder %s12, 1
    %p113 = por %p111, %p112
    %p114 = scmp.ne.s32.totalorder %s106, %s109
    %p115 = scmp.eq.s32.totalorder %s12, 0
    %p116 = por %p114, %p115
    %p117 = scmp.ne.s32.totalorder %s106, %s109
    %p118 = scmp.eq.s32.totalorder %s17, 1
    %p119 = por %p117, %p118
    %p120 = scmp.ne.s32.totalorder %s109, %s110
    %p121 = scmp.eq.s32.totalorder %s17, 0
    %p122 = por %p120, %p121
    %p123 = scmp.ne.s32.totalorder %s109, %s110
    %p124 = scmp.eq.s32.totalorder %s18, 1
    %p125 = por %p123, %p124
    %p127 = scmp.ne.s32.totalorder %s110, %s126
    %p128 = scmp.eq.s32.totalorder %s18, 0
    %p129 = por %p127, %p128
    %s131 = sadd.s32 %s130, 1
    %p134 = scmp.eq.s32.totalorder %s12, 1
    %p135 = scmp.ne.s32.totalorder %s130, %s132
    %p136 = scmp.eq.s32.totalorder %s12, 0
    %p137 = por %p135, %p136
    %p138 = scmp.ne.s32.totalorder %s130, %s132
    %p139 = scmp.eq.s32.totalorder %s17, 1
    %p140 = por %p138, %p139
    %p141 = scmp.ne.s32.totalorder %s132, %s133
    %p142 = scmp.eq.s32.totalorder %s17, 0
    %p143 = por %p141, %p142
    %p144 = scmp.ne.s32.totalorder %s132, %s133
    %p145 = scmp.eq.s32.totalorder %s18, 1
    %p146 = por %p144, %p145
    %p148 = scmp.ne.s32.totalorder %s133, %s147
    %p149 = scmp.eq.s32.totalorder %s18, 0
    %p150 = por %p148, %p149
    %s152 = sadd.s32 %s151, 1
    %p155 = scmp.eq.s32.totalorder %s12, 1
    %p156 = scmp.ne.s32.totalorder %s151, %s153
    %p157 = scmp.eq.s32.totalorder %s12, 0
    %p158 = por %p156, %p157
    %p159 = scmp.ne.s32.totalorder %s151, %s153
    %p160 = scmp.eq.s32.totalorder %s17, 1
    %p161 = por %p159, %p160
    %p162 = scmp.ne.s32.totalorder %s153, %s154
    %p163 = scmp.eq.s32.totalorder %s17, 0
    %p164 = por %p162, %p163
    %p165 = scmp.ne.s32.totalorder %s153, %s154
    %p166 = scmp.eq.s32.totalorder %s18, 1
    %p167 = por %p165, %p166
    %p169 = scmp.ne.s32.totalorder %s154, %s168
    %p170 = scmp.eq.s32.totalorder %s18, 0
    %p171 = por %p169, %p170
    %p172 = scmp.le.s32.totalorder 1, %s12
    %p173 = scmp.lt.s32.totalorder %s12, 3
    %p174 = pnand %p172, %p173
    %p175 = pneg %p174
    // Predicated region
    $region9: #{decoder_block_forward.14} parent=5 // pred_check
      _
    $region10: #{decoder_block_forward.14} parent=5 // pred_check_branch
      %177 = sbr.rel (%p174) target = $region12
    $region11: #{decoder_block_forward.14} parent=5 // pred_region
      %s178 = ssub.s32 %s12, 1
      // Predicated region
      $region13: #{decoder_block_forward.14} parent=11 // pred_check
        %p179 = pneg %p73
      $region14: #{decoder_block_forward.14} parent=11 // pred_check_branch
        %181 = sbr.rel (%p179) target = $region16
      $region15: #{decoder_block_forward.14} parent=11 // pred_region
        _
      $region16: #{decoder_block_forward.14} parent=11 // pred_fallthru
        _
      // Predicated region
      $region17: #{decoder_block_forward.14} parent=11 // pred_check
        %p182 = pneg %p94
      $region18: #{decoder_block_forward.14} parent=11 // pred_check_branch
        %184 = sbr.rel (%p182) target = $region20
      $region19: #{decoder_block_forward.14} parent=11 // pred_region
        _
      $region20: #{decoder_block_forward.14} parent=11 // pred_fallthru
        _
    $region12: #{decoder_block_forward.14} parent=5 // pred_fallthru
      _
    %p185 = scmp.lt.s32.totalorder %s12, 2
    // Predicated region
    $region21: #{decoder_block_forward.14} parent=5 // pred_check
      %p186 = pneg %p185
    $region22: #{decoder_block_forward.14} parent=5 // pred_check_branch
      %188 = sbr.rel (%p186) target = $region24
    $region23: #{decoder_block_forward.14} parent=5 // pred_region
      // Predicated region
      $region25: #{decoder_block_forward.14} parent=23 // pred_check
        %p189 = pneg %p46
      $region26: #{decoder_block_forward.14} parent=23 // pred_check_branch
        %191 = sbr.rel (%p189) target = $region28
      $region27: #{decoder_block_forward.14} parent=23 // pred_region
        %s192 = smul.u32 2, %s20
        %p193 = scmp.lt.s32.totalorder %s19, 1
        %s194 = scalar_select %p193, %s19, 1
        %p195 = scmp.lt.s32.totalorder %s192, 1
        %s196 = scalar_select %p195, %s192, 1
        %s197 = smul.addr %s194, 2
        %s198 = sadd.s32 %s196, %s197
        %s199 = smul.addr %s198, 8
        %s200 = scalar_lea.vmem %s0, %s199
        %s201 = smul.u32 2, %s20
      $region28: #{decoder_block_forward.14} parent=23 // pred_fallthru
        _
    $region24: #{decoder_block_forward.14} parent=5 // pred_fallthru
      _
    %p202 = scmp.le.s32.totalorder 1, %s12
    %p203 = scmp.lt.s32.totalorder %s12, 3
    %p204 = pnand %p202, %p203
    %p205 = pneg %p204
    // Predicated region
    $region29: #{decoder_block_forward.14} parent=5 // pred_check
      _
    $region30: #{decoder_block_forward.14} parent=5 // pred_check_branch
      %207 = sbr.rel (%p204) target = $region32
    $region31: #{decoder_block_forward.14} parent=5 // pred_region
      %s208 = ssub.s32 %s12, 1
      %s209 = smul.u32 2, %s22
      %p210 = scmp.lt.s32.totalorder %s21, 1
      %s211 = scalar_select %p210, %s21, 1
      %p212 = scmp.lt.s32.totalorder %s209, 1
      %s213 = scalar_select %p212, %s209, 1
      %s214 = smul.addr %s211, 2
      %s215 = sadd.s32 %s213, %s214
      %s216 = smul.addr %s215, 8
      %s217 = scalar_lea.vmem %s0, %s216
      %p218 = pneg %p52
      %p219 = pneg %p49
      %p220 = pneg %p73
      %p221 = pneg %p70
      %p222 = pneg %p94
      %p223 = pneg %p91
      %p224 = pneg %p122
      %p225 = pneg %p119
      %s226 = smul.u32 2, %s22
      %p227 = scmp.lt.s32.totalorder %s21, 1
      %s228 = scalar_select %p227, %s21, 1
      %p229 = scmp.lt.s32.totalorder %s226, 1
      %s230 = scalar_select %p229, %s226, 1
      %s231 = smul.addr %s228, 2
      %s232 = sadd.s32 %s230, %s231
      %s233 = smul.addr %s232, 8
      %s234 = scalar_lea.vmem %s3, %s233
      %p235 = pneg %p143
      %p236 = pneg %p140
      %p237 = pneg %p164
      %p238 = pneg %p161
      %s239 = smul.u32 2, %s22
      %p240 = scmp.lt.s32.totalorder %s21, 1
      %s241 = scalar_select %p240, %s21, 1
      %p242 = scmp.lt.s32.totalorder %s239, 1
      %s243 = scalar_select %p242, %s239, 1
      %s244 = smul.addr %s241, 2
      %s245 = sadd.s32 %s243, %s244
      %s246 = smul.addr %s245, 8
      %s247 = scalar_lea.vmem %s0, %s246
      %s248 = smul.u32 2, %s22
      %s249 = smul.u32 2, %s22
      %p250 = scmp.lt.s32.totalorder %s21, 1
      %s251 = scalar_select %p250, %s21, 1
      %p252 = scmp.lt.s32.totalorder %s249, 1
      %s253 = scalar_select %p252, %s249, 1
      %s254 = smul.addr %s251, 2
      %s255 = sadd.s32 %s253, %s254
      %s256 = smul.addr %s255, 8
      %s257 = scalar_lea.vmem %s3, %s256
      %s258 = smul.u32 2, %s22
      %v259 = vld [vmem:[%s1] sm:$0xff]
      %v260 = vld [vmem:[%s247] sm:$0xff]
      %v261 = vld [vmem:[%s247 + $0x8] sm:$0xff]
      %v262 = vld [vmem:[%s2] sm:$0xff]
      %264 = vset.pattern.permute.xlu0 0
      %265 = vperm.xlu0 %264, %v262
      %v266 = vpop.permute.xlu0 %265
      %vm268 = vcmask 64512
      %v270 = vsel %vm268, %v259, 0
      %272 = vmatpush.msra.mxu0 0.0
      %273 = vmatpush.msra.mxu0 0.0
      %274 = vmatpush.msra.mxu0 0.0
      %275 = vmatpush.msra.mxu0 0.0
      %276 = vmatpush.msra.mxu0 0.0
      %277 = vmatpush.msra.mxu0 0.0
      %278 = vmatpush.msra.mxu0 0.0
      %279 = vmatpush.msra.mxu0 0.0
      %280 = vmatpush.msra.mxu0 0.0
      %281 = vmatpush.msra.mxu0 0.0
      %282 = vmatpush.msra.mxu0 0.0
      %283 = vmatpush.msra.mxu0 0.0
      %284 = vmatpush.msra.mxu0 0.0
      %285 = vmatpush.msra.mxu0 0.0
      %286 = vmatpush.msra.mxu0 0.0
      %287 = vmatpush.msra.mxu0 %v260
      %288 = vmatmul.f32.gmra.mxu0 %v270
      %v289 = vpop.f32.mrf.mxu0
      %v290 = vadd.f32 %v266, %v289
      %291 = vdwg.mxu0
      %292 = vmatpush.msra.mxu0 0.0
      %293 = vmatpush.msra.mxu0 0.0
      %294 = vmatpush.msra.mxu0 0.0
      %295 = vmatpush.msra.mxu0 0.0
      %296 = vmatpush.msra.mxu0 0.0
      %297 = vmatpush.msra.mxu0 0.0
      %298 = vmatpush.msra.mxu0 0.0
      %299 = vmatpush.msra.mxu0 0.0
      %300 = vmatpush.msra.mxu0 0.0
      %301 = vmatpush.msra.mxu0 0.0
      %302 = vmatpush.msra.mxu0 0.0
      %303 = vmatpush.msra.mxu0 0.0
      %304 = vmatpush.msra.mxu0 0.0
      %305 = vmatpush.msra.mxu0 0.0
      %306 = vmatpush.msra.mxu0 0.0
      %307 = vmatpush.msra.mxu0 %v261
      %308 = vmatmul.f32.gmra.mxu0 %v270
      %v309 = vpop.f32.mrf.mxu0
      %v310 = vadd.f32 %v266, %v309
      %311 = vdwg.mxu0
      %vm312 = vcmp.ge.f32.partialorder %v290, 0.0
      %vm313 = vcmp.ge.f32.partialorder %v310, 0.0
      %v314 = vmul.f32 %v290, 0.01
      %v315 = vmul.f32 %v310, 0.01
      %v316 = vsel %vm312, %v290, %v314
      %v317 = vsel %vm313, %v310, %v315
      %318 = vst [vmem:[%s257] sm:$0xff] %v316
      %319 = vst [vmem:[%s257 + $0x8] sm:$0xff] %v317
      %p320 = scmp.eq.s32.totalorder %s21, 0
      %p321 = scmp.eq.s32.totalorder %s22, 0
      %p322 = pnand %p320, %p321
      %p323 = pneg %p322
      // Predicated region
      $region33: #{decoder_block_forward.14} parent=31 // pred_check
        _
      $region34: #{decoder_block_forward.14} parent=31 // pred_check_branch
        %325 = sbr.rel (%p322) target = $region36
      $region35: #{decoder_block_forward.14} parent=31 // pred_region
        %vm326 = vcmask 7168
        %327 = vst.msk [vmem:[%s4] sm:$0xff] %vm326, 0.0
        %328 = vst.msk [vmem:[%s5] sm:$0xff] %vm326, 0.0
      $region36: #{decoder_block_forward.14} parent=31 // pred_fallthru
        _
      %v329 = vld [vmem:[%s4] sm:$0xff]
      %v330 = vadd.f32 %v316, %v317
      %331 = vadd.xlane.f32.xlu0 %v330
      %v332 = vpop.xlane.xlu0 %331
      %v333 = vadd.f32 %v329, %v332
      %vm334 = vcmask 7168
      %335 = vst.msk [vmem:[%s4] sm:$0xff] %vm334, %v333
      %v336 = vld [vmem:[%s5] sm:$0xff]
      %v337 = vmul.f32 %v316, %v316
      %v338 = vmul.f32 %v317, %v317
      %v339 = vadd.f32 %v337, %v338
      %340 = vadd.xlane.f32.xlu0 %v339
      %v341 = vpop.xlane.xlu0 %340
      %v342 = vadd.f32 %v336, %v341
      %343 = vst.msk [vmem:[%s5] sm:$0xff] %vm334, %v342
      %s344 = smul.u32 2, %s22
      %p345 = scmp.lt.s32.totalorder %s21, 1
      %s346 = scalar_select %p345, %s21, 1
      %p347 = scmp.lt.s32.totalorder %s344, 1
      %s348 = scalar_select %p347, %s344, 1
      %s349 = smul.addr %s346, 2
      %s350 = sadd.s32 %s348, %s349
      %s351 = smul.addr %s350, 8
      %s352 = scalar_lea.vmem %s3, %s351
      // Predicated region
      $region37: #{decoder_block_forward.14} parent=31 // pred_check
        %p353 = pneg %p119
      $region38: #{decoder_block_forward.14} parent=31 // pred_check_branch
        %355 = sbr.rel (%p353) target = $region40
      $region39: #{decoder_block_forward.14} parent=31 // pred_region
        %s356 = smul.u32 2, %s22
      $region40: #{decoder_block_forward.14} parent=31 // pred_fallthru
        _
      // Predicated region
      $region41: #{decoder_block_forward.14} parent=31 // pred_check
        %p357 = pneg %p140
      $region42: #{decoder_block_forward.14} parent=31 // pred_check_branch
        %359 = sbr.rel (%p357) target = $region44
      $region43: #{decoder_block_forward.14} parent=31 // pred_region
        _
      $region44: #{decoder_block_forward.14} parent=31 // pred_fallthru
        _
      // Predicated region
      $region45: #{decoder_block_forward.14} parent=31 // pred_check
        %p360 = pneg %p161
      $region46: #{decoder_block_forward.14} parent=31 // pred_check_branch
        %362 = sbr.rel (%p360) target = $region48
      $region47: #{decoder_block_forward.14} parent=31 // pred_region
        _
      $region48: #{decoder_block_forward.14} parent=31 // pred_fallthru
        _
      // Predicated region
      $region49: #{decoder_block_forward.14} parent=31 // pred_check
        %p363 = pneg %p140
      $region50: #{decoder_block_forward.14} parent=31 // pred_check_branch
        %365 = sbr.rel (%p363) target = $region52
      $region51: #{decoder_block_forward.14} parent=31 // pred_region
        _
      $region52: #{decoder_block_forward.14} parent=31 // pred_fallthru
        _
      // Predicated region
      $region53: #{decoder_block_forward.14} parent=31 // pred_check
        %p366 = pneg %p161
      $region54: #{decoder_block_forward.14} parent=31 // pred_check_branch
        %368 = sbr.rel (%p366) target = $region56
      $region55: #{decoder_block_forward.14} parent=31 // pred_region
        _
      $region56: #{decoder_block_forward.14} parent=31 // pred_fallthru
        _
    $region32: #{decoder_block_forward.14} parent=5 // pred_fallthru
      _
    %p369 = scmp.le.s32.totalorder 2, %s12
    // Predicated region
    $region57: #{decoder_block_forward.14} parent=5 // pred_check
      %p370 = pneg %p369
    $region58: #{decoder_block_forward.14} parent=5 // pred_check_branch
      %372 = sbr.rel (%p370) target = $region60
    $region59: #{decoder_block_forward.14} parent=5 // pred_region
      %s373 = ssub.s32 %s12, 2
      // Predicated region
      $region61: #{decoder_block_forward.14} parent=59 // pred_check
        %p374 = pneg %p125
      $region62: #{decoder_block_forward.14} parent=59 // pred_check_branch
        %376 = sbr.rel (%p374) target = $region64
      $region63: #{decoder_block_forward.14} parent=59 // pred_region
        %s377 = smul.u32 2, %s24
        %p378 = scmp.lt.s32.totalorder %s23, 1
        %s379 = scalar_select %p378, %s23, 1
        %p380 = scmp.lt.s32.totalorder %s377, 1
        %s381 = scalar_select %p380, %s377, 1
        %s382 = smul.addr %s379, 2
        %s383 = sadd.s32 %s381, %s382
        %s384 = smul.addr %s383, 8
        %s385 = scalar_lea.vmem %s3, %s384
      $region64: #{decoder_block_forward.14} parent=59 // pred_fallthru
        _
    $region60: #{decoder_block_forward.14} parent=5 // pred_fallthru
      _
  $region6: #{decoder_block_forward.14} parent=0 // loop_footer
    %s16 = sadd.s32 1, %s12
  $region7: #{decoder_block_forward.14} parent=0 // loop_footer_branch
    %11 = sbr.rel target = $region3
  $region8: #{decoder_block_forward.14} parent=0 // loop_exit
    _

// kernel: decoder_block_forward.20
$region0: #{decoder_block_forward.20}
  #allocation0 [shape = 'u32[]', space=smem, size = 0x4, offset = 0x4, fixed_abs, tag = 'smem constant byte address 0x4 - core index']
  #allocation1 [shape = 'u32[72,128]{1,0:T(1,128)}', space=vmem, size = 0x9000, scoped, tag = 'internal scratch']
  %s0 = inlined_call_operand.vmem [shape: f32[2,32,256], index: 0, kind: input, shape index: {}]
  %s1 = inlined_call_operand.vmem [shape: f32[8,32], index: 1, kind: input, shape index: {}]
  %s2 = inlined_call_operand.vmem [shape: f32[8,1], index: 2, kind: input, shape index: {}]
  %s3 = inlined_call_operand.vmem [shape: f32[2,8,256], index: 3, kind: output, shape index: {0}]
  %s4 = inlined_call_operand.vmem [shape: f32[8,1], index: 4, kind: output, shape index: {1}]
  %s5 = inlined_call_operand.vmem [shape: f32[8,1], index: 5, kind: output, shape index: {2}]
  %6 = xla_tuple %s3, %s4, %s5
  %s7 = sld [smem:[#allocation0]]
  $region65: #{decoder_block_forward.20} parent=0
    _
  %s9 = ssub.s32 1, %s7
  %s10 = scalar_select 0, %s9, %s7
  loop: start=0, step=1, limit=4
  $region2: #{decoder_block_forward.20} parent=0 // loop_pre_header
    _
  $region3: #{decoder_block_forward.20} parent=0 // loop_header
    %s12 = sphi 0, %s16
    %p13 = scmp.ge.s32.totalorder %s12, 4
    %s19 = sphi 0, %s31
    %s20 = sphi 0, %s27
    %s21 = sphi 0, %s19
    %s22 = sphi 0, %s20
    %s23 = sphi 0, %s21
    %s24 = sphi 0, %s22
    %s36 = sphi 0, %s38
    %s39 = sphi 0, %s36
    %s40 = sphi 0, %s39
    %s56 = sphi 0, %s40
    %s60 = sphi 0, %s60
    %s62 = sphi 0, %s60
    %s63 = sphi 0, %s62
    %s77 = sphi 0, %s63
    %s81 = sphi 0, %s81
    %s83 = sphi 0, %s81
    %s84 = sphi 0, %s83
    %s98 = sphi 0, %s84
    %s106 = sphi 0, %s108
    %s109 = sphi 0, %s106
    %s110 = sphi 0, %s109
    %s126 = sphi 0, %s110
    %s130 = sphi 0, %s130
    %s132 = sphi 0, %s130
    %s133 = sphi 0, %s132
    %s147 = sphi 0, %s133
    %s151 = sphi 0, %s151
    %s153 = sphi 0, %s151
    %s154 = sphi 0, %s153
    %s168 = sphi 0, %s154
  $region4: #{decoder_block_forward.20} parent=0 // loop_header_branch
    %15 = sbr.rel (%p13) target = $region8
  $region5: #{decoder_block_forward.20} parent=0 // loop_body
    %s17 = ssub.s32 %s12, 1
    %s18 = ssub.s32 %s12, 2
    %s25 = sadd.s32 1, %s20
    %p26 = scmp.ge.s32.totalorder %s25, 1
    %s27 = scalar_select %p26, 0, %s25
    %s28 = sadd.s32 1, %s19
    %s29 = scalar_select %p26, %s28, %s19
    %p30 = scmp.ge.s32.totalorder %s29, 2
    %s31 = scalar_select %p30, 0, %s29
    %s32 = ssub.s32 %s19, %s31
    %s33 = ssub.s32 %s20, %s27
    %s34 = sor.u32 %s32, %s33
    %p35 = scmp.eq.s32.totalorder %s34, 0
    %s37 = sadd.s32 %s36, 1
    %s38 = scalar_select %p35, %s36, %s37
    %p41 = pneg %p35
    %p42 = scmp.eq.s32.totalorder %s12, 1
    %p43 = por %p41, %p42
    %p44 = scmp.ne.s32.totalorder %s36, %s39
    %p45 = scmp.eq.s32.totalorder %s12, 0
    %p46 = por %p44, %p45
    %p47 = scmp.ne.s32.totalorder %s36, %s39
    %p48 = scmp.eq.s32.totalorder %s17, 1
    %p49 = por %p47, %p48
    %p50 = scmp.ne.s32.totalorder %s39, %s40
    %p51 = scmp.eq.s32.totalorder %s17, 0
    %p52 = por %p50, %p51
    %p53 = scmp.ne.s32.totalorder %s39, %s40
    %p54 = scmp.eq.s32.totalorder %s18, 1
    %p55 = por %p53, %p54
    %p57 = scmp.ne.s32.totalorder %s40, %s56
    %p58 = scmp.eq.s32.totalorder %s18, 0
    %p59 = por %p57, %p58
    %s61 = sadd.s32 %s60, 1
    %p64 = scmp.eq.s32.totalorder %s12, 1
    %p65 = scmp.ne.s32.totalorder %s60, %s62
    %p66 = scmp.eq.s32.totalorder %s12, 0
    %p67 = por %p65, %p66
    %p68 = scmp.ne.s32.totalorder %s60, %s62
    %p69 = scmp.eq.s32.totalorder %s17, 1
    %p70 = por %p68, %p69
    %p71 = scmp.ne.s32.totalorder %s62, %s63
    %p72 = scmp.eq.s32.totalorder %s17, 0
    %p73 = por %p71, %p72
    %p74 = scmp.ne.s32.totalorder %s62, %s63
    %p75 = scmp.eq.s32.totalorder %s18, 1
    %p76 = por %p74, %p75
    %p78 = scmp.ne.s32.totalorder %s63, %s77
    %p79 = scmp.eq.s32.totalorder %s18, 0
    %p80 = por %p78, %p79
    %s82 = sadd.s32 %s81, 1
    %p85 = scmp.eq.s32.totalorder %s12, 1
    %p86 = scmp.ne.s32.totalorder %s81, %s83
    %p87 = scmp.eq.s32.totalorder %s12, 0
    %p88 = por %p86, %p87
    %p89 = scmp.ne.s32.totalorder %s81, %s83
    %p90 = scmp.eq.s32.totalorder %s17, 1
    %p91 = por %p89, %p90
    %p92 = scmp.ne.s32.totalorder %s83, %s84
    %p93 = scmp.eq.s32.totalorder %s17, 0
    %p94 = por %p92, %p93
    %p95 = scmp.ne.s32.totalorder %s83, %s84
    %p96 = scmp.eq.s32.totalorder %s18, 1
    %p97 = por %p95, %p96
    %p99 = scmp.ne.s32.totalorder %s84, %s98
    %p100 = scmp.eq.s32.totalorder %s18, 0
    %p101 = por %p99, %p100
    %s102 = ssub.s32 %s19, %s31
    %s103 = ssub.s32 %s20, %s27
    %s104 = sor.u32 %s102, %s103
    %p105 = scmp.eq.s32.totalorder %s104, 0
    %s107 = sadd.s32 %s106, 1
    %s108 = scalar_select %p105, %s106, %s107
    %p111 = pneg %p105
    %p112 = scmp.eq.s32.totalorder %s12, 1
    %p113 = por %p111, %p112
    %p114 = scmp.ne.s32.totalorder %s106, %s109
    %p115 = scmp.eq.s32.totalorder %s12, 0
    %p116 = por %p114, %p115
    %p117 = scmp.ne.s32.totalorder %s106, %s109
    %p118 = scmp.eq.s32.totalorder %s17, 1
    %p119 = por %p117, %p118
    %p120 = scmp.ne.s32.totalorder %s109, %s110
    %p121 = scmp.eq.s32.totalorder %s17, 0
    %p122 = por %p120, %p121
    %p123 = scmp.ne.s32.totalorder %s109, %s110
    %p124 = scmp.eq.s32.totalorder %s18, 1
    %p125 = por %p123, %p124
    %p127 = scmp.ne.s32.totalorder %s110, %s126
    %p128 = scmp.eq.s32.totalorder %s18, 0
    %p129 = por %p127, %p128
    %s131 = sadd.s32 %s130, 1
    %p134 = scmp.eq.s32.totalorder %s12, 1
    %p135 = scmp.ne.s32.totalorder %s130, %s132
    %p136 = scmp.eq.s32.totalorder %s12, 0
    %p137 = por %p135, %p136
    %p138 = scmp.ne.s32.totalorder %s130, %s132
    %p139 = scmp.eq.s32.totalorder %s17, 1
    %p140 = por %p138, %p139
    %p141 = scmp.ne.s32.totalorder %s132, %s133
    %p142 = scmp.eq.s32.totalorder %s17, 0
    %p143 = por %p141, %p142
    %p144 = scmp.ne.s32.totalorder %s132, %s133
    %p145 = scmp.eq.s32.totalorder %s18, 1
    %p146 = por %p144, %p145
    %p148 = scmp.ne.s32.totalorder %s133, %s147
    %p149 = scmp.eq.s32.totalorder %s18, 0
    %p150 = por %p148, %p149
    %s152 = sadd.s32 %s151, 1
    %p155 = scmp.eq.s32.totalorder %s12, 1
    %p156 = scmp.ne.s32.totalorder %s151, %s153
    %p157 = scmp.eq.s32.totalorder %s12, 0
    %p158 = por %p156, %p157
    %p159 = scmp.ne.s32.totalorder %s151, %s153
    %p160 = scmp.eq.s32.totalorder %s17, 1
    %p161 = por %p159, %p160
    %p162 = scmp.ne.s32.totalorder %s153, %s154
    %p163 = scmp.eq.s32.totalorder %s17, 0
    %p164 = por %p162, %p163
    %p165 = scmp.ne.s32.totalorder %s153, %s154
    %p166 = scmp.eq.s32.totalorder %s18, 1
    %p167 = por %p165, %p166
    %p169 = scmp.ne.s32.totalorder %s154, %s168
    %p170 = scmp.eq.s32.totalorder %s18, 0
    %p171 = por %p169, %p170
    %p172 = scmp.le.s32.totalorder 1, %s12
    %p173 = scmp.lt.s32.totalorder %s12, 3
    %p174 = pnand %p172, %p173
    %p175 = pneg %p174
    // Predicated region
    $region9: #{decoder_block_forward.20} parent=5 // pred_check
      _
    $region10: #{decoder_block_forward.20} parent=5 // pred_check_branch
      %177 = sbr.rel (%p174) target = $region12
    $region11: #{decoder_block_forward.20} parent=5 // pred_region
      %s178 = ssub.s32 %s12, 1
      // Predicated region
      $region13: #{decoder_block_forward.20} parent=11 // pred_check
        %p179 = pneg %p73
      $region14: #{decoder_block_forward.20} parent=11 // pred_check_branch
        %181 = sbr.rel (%p179) target = $region16
      $region15: #{decoder_block_forward.20} parent=11 // pred_region
        _
      $region16: #{decoder_block_forward.20} parent=11 // pred_fallthru
        _
      // Predicated region
      $region17: #{decoder_block_forward.20} parent=11 // pred_check
        %p182 = pneg %p94
      $region18: #{decoder_block_forward.20} parent=11 // pred_check_branch
        %184 = sbr.rel (%p182) target = $region20
      $region19: #{decoder_block_forward.20} parent=11 // pred_region
        _
      $region20: #{decoder_block_forward.20} parent=11 // pred_fallthru
        _
    $region12: #{decoder_block_forward.20} parent=5 // pred_fallthru
      _
    %p185 = scmp.lt.s32.totalorder %s12, 2
    // Predicated region
    $region21: #{decoder_block_forward.20} parent=5 // pred_check
      %p186 = pneg %p185
    $region22: #{decoder_block_forward.20} parent=5 // pred_check_branch
      %188 = sbr.rel (%p186) target = $region24
    $region23: #{decoder_block_forward.20} parent=5 // pred_region
      // Predicated region
      $region25: #{decoder_block_forward.20} parent=23 // pred_check
        %p189 = pneg %p46
      $region26: #{decoder_block_forward.20} parent=23 // pred_check_branch
        %191 = sbr.rel (%p189) target = $region28
      $region27: #{decoder_block_forward.20} parent=23 // pred_region
        %s192 = smul.u32 2, %s20
        %p193 = scmp.lt.s32.totalorder %s19, 1
        %s194 = scalar_select %p193, %s19, 1
        %p195 = scmp.lt.s32.totalorder %s192, 1
        %s196 = scalar_select %p195, %s192, 1
        %s197 = smul.addr %s194, 8
        %s198 = sadd.s32 %s196, %s197
        %s199 = smul.addr %s198, 8
        %s200 = scalar_lea.vmem %s0, %s199
        %s201 = smul.u32 2, %s20
      $region28: #{decoder_block_forward.20} parent=23 // pred_fallthru
        _
    $region24: #{decoder_block_forward.20} parent=5 // pred_fallthru
      _
    %p202 = scmp.le.s32.totalorder 1, %s12
    %p203 = scmp.lt.s32.totalorder %s12, 3
    %p204 = pnand %p202, %p203
    %p205 = pneg %p204
    // Predicated region
    $region29: #{decoder_block_forward.20} parent=5 // pred_check
      _
    $region30: #{decoder_block_forward.20} parent=5 // pred_check_branch
      %207 = sbr.rel (%p204) target = $region32
    $region31: #{decoder_block_forward.20} parent=5 // pred_region
      %s208 = ssub.s32 %s12, 1
      %s209 = smul.u32 2, %s22
      %p210 = scmp.lt.s32.totalorder %s21, 1
      %s211 = scalar_select %p210, %s21, 1
      %p212 = scmp.lt.s32.totalorder %s209, 1
      %s213 = scalar_select %p212, %s209, 1
      %s214 = smul.addr %s211, 8
      %s215 = sadd.s32 %s213, %s214
      %s216 = smul.addr %s215, 8
      %s217 = scalar_lea.vmem %s0, %s216
      %p218 = pneg %p52
      %p219 = pneg %p49
      %p220 = pneg %p73
      %p221 = pneg %p70
      %p222 = pneg %p94
      %p223 = pneg %p91
      %p224 = pneg %p122
      %p225 = pneg %p119
      %s226 = smul.u32 2, %s22
      %p227 = scmp.lt.s32.totalorder %s21, 1
      %s228 = scalar_select %p227, %s21, 1
      %p229 = scmp.lt.s32.totalorder %s226, 1
      %s230 = scalar_select %p229, %s226, 1
      %s231 = smul.addr %s228, 2
      %s232 = sadd.s32 %s230, %s231
      %s233 = smul.addr %s232, 8
      %s234 = scalar_lea.vmem %s3, %s233
      %p235 = pneg %p143
      %p236 = pneg %p140
      %p237 = pneg %p164
      %p238 = pneg %p161
      %s239 = smul.u32 2, %s22
      %p240 = scmp.lt.s32.totalorder %s21, 1
      %s241 = scalar_select %p240, %s21, 1
      %p242 = scmp.lt.s32.totalorder %s239, 1
      %s243 = scalar_select %p242, %s239, 1
      %s244 = smul.addr %s241, 8
      %s245 = sadd.s32 %s243, %s244
      %s246 = smul.addr %s245, 8
      %s247 = scalar_lea.vmem %s0, %s246
      %s248 = smul.u32 2, %s22
      %s249 = smul.u32 2, %s22
      %p250 = scmp.lt.s32.totalorder %s21, 1
      %s251 = scalar_select %p250, %s21, 1
      %p252 = scmp.lt.s32.totalorder %s249, 1
      %s253 = scalar_select %p252, %s249, 1
      %s254 = smul.addr %s251, 2
      %s255 = sadd.s32 %s253, %s254
      %s256 = smul.addr %s255, 8
      %s257 = scalar_lea.vmem %s3, %s256
      %s258 = smul.u32 2, %s22
      %v259 = vld [vmem:[%s1] sm:$0xff]
      %v260 = vld [vmem:[%s247] sm:$0xff]
      %v261 = vld [vmem:[%s247 + $0x8] sm:$0xff]
      %v262 = vld [vmem:[%s247 + $0x10] sm:$0xff]
      %v263 = vld [vmem:[%s247 + $0x18] sm:$0xff]
      %v264 = vld [vmem:[%s247 + $0x20] sm:$0xff]
      %v265 = vld [vmem:[%s247 + $0x28] sm:$0xff]
      %v266 = vld [vmem:[%s247 + $0x30] sm:$0xff]
      %v267 = vld [vmem:[%s247 + $0x38] sm:$0xff]
      %v268 = vld [vmem:[%s2] sm:$0xff]
      %270 = vset.pattern.permute.xlu0 0
      %271 = vperm.xlu0 %270, %v268
      %v272 = vpop.permute.xlu0 %271
      %vm274 = vcmask 261120
      %v276 = vsel %vm274, %v259, 0
      %278 = vmatpush.msra.mxu0 0.0
      %279 = vmatpush.msra.mxu0 0.0
      %280 = vmatpush.msra.mxu0 0.0
      %281 = vmatpush.msra.mxu0 0.0
      %282 = vmatpush.msra.mxu0 0.0
      %283 = vmatpush.msra.mxu0 0.0
      %284 = vmatpush.msra.mxu0 0.0
      %285 = vmatpush.msra.mxu0 0.0
      %286 = vmatpush.msra.mxu0 0.0
      %287 = vmatpush.msra.mxu0 0.0
      %288 = vmatpush.msra.mxu0 0.0
      %289 = vmatpush.msra.mxu0 0.0
      %290 = vmatpush.msra.mxu0 %v266
      %291 = vmatpush.msra.mxu0 %v264
      %292 = vmatpush.msra.mxu0 %v262
      %293 = vmatpush.msra.mxu0 %v260
      %294 = vmatmul.f32.gmra.mxu0 %v276
      %v295 = vpop.f32.mrf.mxu0
      %v296 = vadd.f32 %v272, %v295
      %297 = vdwg.mxu0
      %298 = vmatpush.msra.mxu0 0.0
      %299 = vmatpush.msra.mxu0 0.0
      %300 = vmatpush.msra.mxu0 0.0
      %301 = vmatpush.msra.mxu0 0.0
      %302 = vmatpush.msra.mxu0 0.0
      %303 = vmatpush.msra.mxu0 0.0
      %304 = vmatpush.msra.mxu0 0.0
      %305 = vmatpush.msra.mxu0 0.0
      %306 = vmatpush.msra.mxu0 0.0
      %307 = vmatpush.msra.mxu0 0.0
      %308 = vmatpush.msra.mxu0 0.0
      %309 = vmatpush.msra.mxu0 0.0
      %310 = vmatpush.msra.mxu0 %v267
      %311 = vmatpush.msra.mxu0 %v265
      %312 = vmatpush.msra.mxu0 %v263
      %313 = vmatpush.msra.mxu0 %v261
      %314 = vmatmul.f32.gmra.mxu0 %v276
      %v315 = vpop.f32.mrf.mxu0
      %v316 = vadd.f32 %v272, %v315
      %317 = vdwg.mxu0
      %vm318 = vcmp.ge.f32.partialorder %v296, 0.0
      %vm319 = vcmp.ge.f32.partialorder %v316, 0.0
      %v320 = vmul.f32 %v296, 0.01
      %v321 = vmul.f32 %v316, 0.01
      %v322 = vsel %vm318, %v296, %v320
      %v323 = vsel %vm319, %v316, %v321
      %324 = vst [vmem:[%s257] sm:$0xff] %v322
      %325 = vst [vmem:[%s257 + $0x8] sm:$0xff] %v323
      %p326 = scmp.eq.s32.totalorder %s21, 0
      %p327 = scmp.eq.s32.totalorder %s22, 0
      %p328 = pnand %p326, %p327
      %p329 = pneg %p328
      // Predicated region
      $region33: #{decoder_block_forward.20} parent=31 // pred_check
        _
      $region34: #{decoder_block_forward.20} parent=31 // pred_check_branch
        %331 = sbr.rel (%p328) target = $region36
      $region35: #{decoder_block_forward.20} parent=31 // pred_region
        %vm332 = vcmask 7168
        %333 = vst.msk [vmem:[%s4] sm:$0xff] %vm332, 0.0
        %334 = vst.msk [vmem:[%s5] sm:$0xff] %vm332, 0.0
      $region36: #{decoder_block_forward.20} parent=31 // pred_fallthru
        _
      %v335 = vld [vmem:[%s4] sm:$0xff]
      %v336 = vadd.f32 %v322, %v323
      %337 = vadd.xlane.f32.xlu0 %v336
      %v338 = vpop.xlane.xlu0 %337
      %v339 = vadd.f32 %v335, %v338
      %vm340 = vcmask 7168
      %341 = vst.msk [vmem:[%s4] sm:$0xff] %vm340, %v339
      %v342 = vld [vmem:[%s5] sm:$0xff]
      %v343 = vmul.f32 %v322, %v322
      %v344 = vmul.f32 %v323, %v323
      %v345 = vadd.f32 %v343, %v344
      %346 = vadd.xlane.f32.xlu0 %v345
      %v347 = vpop.xlane.xlu0 %346
      %v348 = vadd.f32 %v342, %v347
      %349 = vst.msk [vmem:[%s5] sm:$0xff] %vm340, %v348
      %s350 = smul.u32 2, %s22
      %p351 = scmp.lt.s32.totalorder %s21, 1
      %s352 = scalar_select %p351, %s21, 1
      %p353 = scmp.lt.s32.totalorder %s350, 1
      %s354 = scalar_select %p353, %s350, 1
      %s355 = smul.addr %s352, 2
      %s356 = sadd.s32 %s354, %s355
      %s357 = smul.addr %s356, 8
      %s358 = scalar_lea.vmem %s3, %s357
      // Predicated region
      $region37: #{decoder_block_forward.20} parent=31 // pred_check
        %p359 = pneg %p119
      $region38: #{decoder_block_forward.20} parent=31 // pred_check_branch
        %361 = sbr.rel (%p359) target = $region40
      $region39: #{decoder_block_forward.20} parent=31 // pred_region
        %s362 = smul.u32 2, %s22
      $region40: #{decoder_block_forward.20} parent=31 // pred_fallthru
        _
      // Predicated region
      $region41: #{decoder_block_forward.20} parent=31 // pred_check
        %p363 = pneg %p140
      $region42: #{decoder_block_forward.20} parent=31 // pred_check_branch
        %365 = sbr.rel (%p363) target = $region44
      $region43: #{decoder_block_forward.20} parent=31 // pred_region
        _
      $region44: #{decoder_block_forward.20} parent=31 // pred_fallthru
        _
      // Predicated region
      $region45: #{decoder_block_forward.20} parent=31 // pred_check
        %p366 = pneg %p161
      $region46: #{decoder_block_forward.20} parent=31 // pred_check_branch
        %368 = sbr.rel (%p366) target = $region48
      $region47: #{decoder_block_forward.20} parent=31 // pred_region
        _
      $region48: #{decoder_block_forward.20} parent=31 // pred_fallthru
        _
      // Predicated region
      $region49: #{decoder_block_forward.20} parent=31 // pred_check
        %p369 = pneg %p140
      $region50: #{decoder_block_forward.20} parent=31 // pred_check_branch
        %371 = sbr.rel (%p369) target = $region52
      $region51: #{decoder_block_forward.20} parent=31 // pred_region
        _
      $region52: #{decoder_block_forward.20} parent=31 // pred_fallthru
        _
      // Predicated region
      $region53: #{decoder_block_forward.20} parent=31 // pred_check
        %p372 = pneg %p161
      $region54: #{decoder_block_forward.20} parent=31 // pred_check_branch
        %374 = sbr.rel (%p372) target = $region56
      $region55: #{decoder_block_forward.20} parent=31 // pred_region
        _
      $region56: #{decoder_block_forward.20} parent=31 // pred_fallthru
        _
    $region32: #{decoder_block_forward.20} parent=5 // pred_fallthru
      _
    %p375 = scmp.le.s32.totalorder 2, %s12
    // Predicated region
    $region57: #{decoder_block_forward.20} parent=5 // pred_check
      %p376 = pneg %p375
    $region58: #{decoder_block_forward.20} parent=5 // pred_check_branch
      %378 = sbr.rel (%p376) target = $region60
    $region59: #{decoder_block_forward.20} parent=5 // pred_region
      %s379 = ssub.s32 %s12, 2
      // Predicated region
      $region61: #{decoder_block_forward.20} parent=59 // pred_check
        %p380 = pneg %p125
      $region62: #{decoder_block_forward.20} parent=59 // pred_check_branch
        %382 = sbr.rel (%p380) target = $region64
      $region63: #{decoder_block_forward.20} parent=59 // pred_region
        %s383 = smul.u32 2, %s24
        %p384 = scmp.lt.s32.totalorder %s23, 1
        %s385 = scalar_select %p384, %s23, 1
        %p386 = scmp.lt.s32.totalorder %s383, 1
        %s387 = scalar_select %p386, %s383, 1
        %s388 = smul.addr %s385, 2
        %s389 = sadd.s32 %s387, %s388
        %s390 = smul.addr %s389, 8
        %s391 = scalar_lea.vmem %s3, %s390
      $region64: #{decoder_block_forward.20} parent=59 // pred_fallthru
        _
    $region60: #{decoder_block_forward.20} parent=5 // pred_fallthru
      _
  $region6: #{decoder_block_forward.20} parent=0 // loop_footer
    %s16 = sadd.s32 1, %s12
  $region7: #{decoder_block_forward.20} parent=0 // loop_footer_branch
    %11 = sbr.rel target = $region3
  $region8: #{decoder_block_forward.20} parent=0 // loop_exit
    _

// kernel: decoder_block_forward.16
$region0: #{decoder_block_forward.16}
  #allocation0 [shape = 'u32[]', space=smem, size = 0x4, offset = 0x4, fixed_abs, tag = 'smem constant byte address 0x4 - core index']
  #allocation1 [shape = 'u32[72,128]{1,0:T(1,128)}', space=vmem, size = 0x9000, scoped, tag = 'internal scratch']
  %s0 = inlined_call_operand.vmem [shape: f32[2,16,256], index: 0, kind: input, shape index: {}]
  %s1 = inlined_call_operand.vmem [shape: f32[8,16], index: 1, kind: input, shape index: {}]
  %s2 = inlined_call_operand.vmem [shape: f32[8,1], index: 2, kind: input, shape index: {}]
  %s3 = inlined_call_operand.vmem [shape: f32[2,8,256], index: 3, kind: output, shape index: {0}]
  %s4 = inlined_call_operand.vmem [shape: f32[8,1], index: 4, kind: output, shape index: {1}]
  %s5 = inlined_call_operand.vmem [shape: f32[8,1], index: 5, kind: output, shape index: {2}]
  %6 = xla_tuple %s3, %s4, %s5
  %s7 = sld [smem:[#allocation0]]
  $region65: #{decoder_block_forward.16} parent=0
    _
  %s9 = ssub.s32 1, %s7
  %s10 = scalar_select 0, %s9, %s7
  loop: start=0, step=1, limit=4
  $region2: #{decoder_block_forward.16} parent=0 // loop_pre_header
    _
  $region3: #{decoder_block_forward.16} parent=0 // loop_header
    %s12 = sphi 0, %s16
    %p13 = scmp.ge.s32.totalorder %s12, 4
    %s19 = sphi 0, %s31
    %s20 = sphi 0, %s27
    %s21 = sphi 0, %s19
    %s22 = sphi 0, %s20
    %s23 = sphi 0, %s21
    %s24 = sphi 0, %s22
    %s36 = sphi 0, %s38
    %s39 = sphi 0, %s36
    %s40 = sphi 0, %s39
    %s56 = sphi 0, %s40
    %s60 = sphi 0, %s60
    %s62 = sphi 0, %s60
    %s63 = sphi 0, %s62
    %s77 = sphi 0, %s63
    %s81 = sphi 0, %s81
    %s83 = sphi 0, %s81
    %s84 = sphi 0, %s83
    %s98 = sphi 0, %s84
    %s106 = sphi 0, %s108
    %s109 = sphi 0, %s106
    %s110 = sphi 0, %s109
    %s126 = sphi 0, %s110
    %s130 = sphi 0, %s130
    %s132 = sphi 0, %s130
    %s133 = sphi 0, %s132
    %s147 = sphi 0, %s133
    %s151 = sphi 0, %s151
    %s153 = sphi 0, %s151
    %s154 = sphi 0, %s153
    %s168 = sphi 0, %s154
  $region4: #{decoder_block_forward.16} parent=0 // loop_header_branch
    %15 = sbr.rel (%p13) target = $region8
  $region5: #{decoder_block_forward.16} parent=0 // loop_body
    %s17 = ssub.s32 %s12, 1
    %s18 = ssub.s32 %s12, 2
    %s25 = sadd.s32 1, %s20
    %p26 = scmp.ge.s32.totalorder %s25, 1
    %s27 = scalar_select %p26, 0, %s25
    %s28 = sadd.s32 1, %s19
    %s29 = scalar_select %p26, %s28, %s19
    %p30 = scmp.ge.s32.totalorder %s29, 2
    %s31 = scalar_select %p30, 0, %s29
    %s32 = ssub.s32 %s19, %s31
    %s33 = ssub.s32 %s20, %s27
    %s34 = sor.u32 %s32, %s33
    %p35 = scmp.eq.s32.totalorder %s34, 0
    %s37 = sadd.s32 %s36, 1
    %s38 = scalar_select %p35, %s36, %s37
    %p41 = pneg %p35
    %p42 = scmp.eq.s32.totalorder %s12, 1
    %p43 = por %p41, %p42
    %p44 = scmp.ne.s32.totalorder %s36, %s39
    %p45 = scmp.eq.s32.totalorder %s12, 0
    %p46 = por %p44, %p45
    %p47 = scmp.ne.s32.totalorder %s36, %s39
    %p48 = scmp.eq.s32.totalorder %s17, 1
    %p49 = por %p47, %p48
    %p50 = scmp.ne.s32.totalorder %s39, %s40
    %p51 = scmp.eq.s32.totalorder %s17, 0
    %p52 = por %p50, %p51
    %p53 = scmp.ne.s32.totalorder %s39, %s40
    %p54 = scmp.eq.s32.totalorder %s18, 1
    %p55 = por %p53, %p54
    %p57 = scmp.ne.s32.totalorder %s40, %s56
    %p58 = scmp.eq.s32.totalorder %s18, 0
    %p59 = por %p57, %p58
    %s61 = sadd.s32 %s60, 1
    %p64 = scmp.eq.s32.totalorder %s12, 1
    %p65 = scmp.ne.s32.totalorder %s60, %s62
    %p66 = scmp.eq.s32.totalorder %s12, 0
    %p67 = por %p65, %p66
    %p68 = scmp.ne.s32.totalorder %s60, %s62
    %p69 = scmp.eq.s32.totalorder %s17, 1
    %p70 = por %p68, %p69
    %p71 = scmp.ne.s32.totalorder %s62, %s63
    %p72 = scmp.eq.s32.totalorder %s17, 0
    %p73 = por %p71, %p72
    %p74 = scmp.ne.s32.totalorder %s62, %s63
    %p75 = scmp.eq.s32.totalorder %s18, 1
    %p76 = por %p74, %p75
    %p78 = scmp.ne.s32.totalorder %s63, %s77
    %p79 = scmp.eq.s32.totalorder %s18, 0
    %p80 = por %p78, %p79
    %s82 = sadd.s32 %s81, 1
    %p85 = scmp.eq.s32.totalorder %s12, 1
    %p86 = scmp.ne.s32.totalorder %s81, %s83
    %p87 = scmp.eq.s32.totalorder %s12, 0
    %p88 = por %p86, %p87
    %p89 = scmp.ne.s32.totalorder %s81, %s83
    %p90 = scmp.eq.s32.totalorder %s17, 1
    %p91 = por %p89, %p90
    %p92 = scmp.ne.s32.totalorder %s83, %s84
    %p93 = scmp.eq.s32.totalorder %s17, 0
    %p94 = por %p92, %p93
    %p95 = scmp.ne.s32.totalorder %s83, %s84
    %p96 = scmp.eq.s32.totalorder %s18, 1
    %p97 = por %p95, %p96
    %p99 = scmp.ne.s32.totalorder %s84, %s98
    %p100 = scmp.eq.s32.totalorder %s18, 0
    %p101 = por %p99, %p100
    %s102 = ssub.s32 %s19, %s31
    %s103 = ssub.s32 %s20, %s27
    %s104 = sor.u32 %s102, %s103
    %p105 = scmp.eq.s32.totalorder %s104, 0
    %s107 = sadd.s32 %s106, 1
    %s108 = scalar_select %p105, %s106, %s107
    %p111 = pneg %p105
    %p112 = scmp.eq.s32.totalorder %s12, 1
    %p113 = por %p111, %p112
    %p114 = scmp.ne.s32.totalorder %s106, %s109
    %p115 = scmp.eq.s32.totalorder %s12, 0
    %p116 = por %p114, %p115
    %p117 = scmp.ne.s32.totalorder %s106, %s109
    %p118 = scmp.eq.s32.totalorder %s17, 1
    %p119 = por %p117, %p118
    %p120 = scmp.ne.s32.totalorder %s109, %s110
    %p121 = scmp.eq.s32.totalorder %s17, 0
    %p122 = por %p120, %p121
    %p123 = scmp.ne.s32.totalorder %s109, %s110
    %p124 = scmp.eq.s32.totalorder %s18, 1
    %p125 = por %p123, %p124
    %p127 = scmp.ne.s32.totalorder %s110, %s126
    %p128 = scmp.eq.s32.totalorder %s18, 0
    %p129 = por %p127, %p128
    %s131 = sadd.s32 %s130, 1
    %p134 = scmp.eq.s32.totalorder %s12, 1
    %p135 = scmp.ne.s32.totalorder %s130, %s132
    %p136 = scmp.eq.s32.totalorder %s12, 0
    %p137 = por %p135, %p136
    %p138 = scmp.ne.s32.totalorder %s130, %s132
    %p139 = scmp.eq.s32.totalorder %s17, 1
    %p140 = por %p138, %p139
    %p141 = scmp.ne.s32.totalorder %s132, %s133
    %p142 = scmp.eq.s32.totalorder %s17, 0
    %p143 = por %p141, %p142
    %p144 = scmp.ne.s32.totalorder %s132, %s133
    %p145 = scmp.eq.s32.totalorder %s18, 1
    %p146 = por %p144, %p145
    %p148 = scmp.ne.s32.totalorder %s133, %s147
    %p149 = scmp.eq.s32.totalorder %s18, 0
    %p150 = por %p148, %p149
    %s152 = sadd.s32 %s151, 1
    %p155 = scmp.eq.s32.totalorder %s12, 1
    %p156 = scmp.ne.s32.totalorder %s151, %s153
    %p157 = scmp.eq.s32.totalorder %s12, 0
    %p158 = por %p156, %p157
    %p159 = scmp.ne.s32.totalorder %s151, %s153
    %p160 = scmp.eq.s32.totalorder %s17, 1
    %p161 = por %p159, %p160
    %p162 = scmp.ne.s32.totalorder %s153, %s154
    %p163 = scmp.eq.s32.totalorder %s17, 0
    %p164 = por %p162, %p163
    %p165 = scmp.ne.s32.totalorder %s153, %s154
    %p166 = scmp.eq.s32.totalorder %s18, 1
    %p167 = por %p165, %p166
    %p169 = scmp.ne.s32.totalorder %s154, %s168
    %p170 = scmp.eq.s32.totalorder %s18, 0
    %p171 = por %p169, %p170
    %p172 = scmp.le.s32.totalorder 1, %s12
    %p173 = scmp.lt.s32.totalorder %s12, 3
    %p174 = pnand %p172, %p173
    %p175 = pneg %p174
    // Predicated region
    $region9: #{decoder_block_forward.16} parent=5 // pred_check
      _
    $region10: #{decoder_block_forward.16} parent=5 // pred_check_branch
      %177 = sbr.rel (%p174) target = $region12
    $region11: #{decoder_block_forward.16} parent=5 // pred_region
      %s178 = ssub.s32 %s12, 1
      // Predicated region
      $region13: #{decoder_block_forward.16} parent=11 // pred_check
        %p179 = pneg %p73
      $region14: #{decoder_block_forward.16} parent=11 // pred_check_branch
        %181 = sbr.rel (%p179) target = $region16
      $region15: #{decoder_block_forward.16} parent=11 // pred_region
        _
      $region16: #{decoder_block_forward.16} parent=11 // pred_fallthru
        _
      // Predicated region
      $region17: #{decoder_block_forward.16} parent=11 // pred_check
        %p182 = pneg %p94
      $region18: #{decoder_block_forward.16} parent=11 // pred_check_branch
        %184 = sbr.rel (%p182) target = $region20
      $region19: #{decoder_block_forward.16} parent=11 // pred_region
        _
      $region20: #{decoder_block_forward.16} parent=11 // pred_fallthru
        _
    $region12: #{decoder_block_forward.16} parent=5 // pred_fallthru
      _
    %p185 = scmp.lt.s32.totalorder %s12, 2
    // Predicated region
    $region21: #{decoder_block_forward.16} parent=5 // pred_check
      %p186 = pneg %p185
    $region22: #{decoder_block_forward.16} parent=5 // pred_check_branch
      %188 = sbr.rel (%p186) target = $region24
    $region23: #{decoder_block_forward.16} parent=5 // pred_region
      // Predicated region
      $region25: #{decoder_block_forward.16} parent=23 // pred_check
        %p189 = pneg %p46
      $region26: #{decoder_block_forward.16} parent=23 // pred_check_branch
        %191 = sbr.rel (%p189) target = $region28
      $region27: #{decoder_block_forward.16} parent=23 // pred_region
        %s192 = smul.u32 2, %s20
        %p193 = scmp.lt.s32.totalorder %s19, 1
        %s194 = scalar_select %p193, %s19, 1
        %p195 = scmp.lt.s32.totalorder %s192, 1
        %s196 = scalar_select %p195, %s192, 1
        %s197 = smul.addr %s194, 4
        %s198 = sadd.s32 %s196, %s197
        %s199 = smul.addr %s198, 8
        %s200 = scalar_lea.vmem %s0, %s199
        %s201 = smul.u32 2, %s20
      $region28: #{decoder_block_forward.16} parent=23 // pred_fallthru
        _
    $region24: #{decoder_block_forward.16} parent=5 // pred_fallthru
      _
    %p202 = scmp.le.s32.totalorder 1, %s12
    %p203 = scmp.lt.s32.totalorder %s12, 3
    %p204 = pnand %p202, %p203
    %p205 = pneg %p204
    // Predicated region
    $region29: #{decoder_block_forward.16} parent=5 // pred_check
      _
    $region30: #{decoder_block_forward.16} parent=5 // pred_check_branch
      %207 = sbr.rel (%p204) target = $region32
    $region31: #{decoder_block_forward.16} parent=5 // pred_region
      %s208 = ssub.s32 %s12, 1
      %s209 = smul.u32 2, %s22
      %p210 = scmp.lt.s32.totalorder %s21, 1
      %s211 = scalar_select %p210, %s21, 1
      %p212 = scmp.lt.s32.totalorder %s209, 1
      %s213 = scalar_select %p212, %s209, 1
      %s214 = smul.addr %s211, 4
      %s215 = sadd.s32 %s213, %s214
      %s216 = smul.addr %s215, 8
      %s217 = scalar_lea.vmem %s0, %s216
      %p218 = pneg %p52
      %p219 = pneg %p49
      %p220 = pneg %p73
      %p221 = pneg %p70
      %p222 = pneg %p94
      %p223 = pneg %p91
      %p224 = pneg %p122
      %p225 = pneg %p119
      %s226 = smul.u32 2, %s22
      %p227 = scmp.lt.s32.totalorder %s21, 1
      %s228 = scalar_select %p227, %s21, 1
      %p229 = scmp.lt.s32.totalorder %s226, 1
      %s230 = scalar_select %p229, %s226, 1
      %s231 = smul.addr %s228, 2
      %s232 = sadd.s32 %s230, %s231
      %s233 = smul.addr %s232, 8
      %s234 = scalar_lea.vmem %s3, %s233
      %p235 = pneg %p143
      %p236 = pneg %p140
      %p237 = pneg %p164
      %p238 = pneg %p161
      %s239 = smul.u32 2, %s22
      %p240 = scmp.lt.s32.totalorder %s21, 1
      %s241 = scalar_select %p240, %s21, 1
      %p242 = scmp.lt.s32.totalorder %s239, 1
      %s243 = scalar_select %p242, %s239, 1
      %s244 = smul.addr %s241, 4
      %s245 = sadd.s32 %s243, %s244
      %s246 = smul.addr %s245, 8
      %s247 = scalar_lea.vmem %s0, %s246
      %s248 = smul.u32 2, %s22
      %s249 = smul.u32 2, %s22
      %p250 = scmp.lt.s32.totalorder %s21, 1
      %s251 = scalar_select %p250, %s21, 1
      %p252 = scmp.lt.s32.totalorder %s249, 1
      %s253 = scalar_select %p252, %s249, 1
      %s254 = smul.addr %s251, 2
      %s255 = sadd.s32 %s253, %s254
      %s256 = smul.addr %s255, 8
      %s257 = scalar_lea.vmem %s3, %s256
      %s258 = smul.u32 2, %s22
      %v259 = vld [vmem:[%s1] sm:$0xff]
      %v260 = vld [vmem:[%s247] sm:$0xff]
      %v261 = vld [vmem:[%s247 + $0x8] sm:$0xff]
      %v262 = vld [vmem:[%s247 + $0x10] sm:$0xff]
      %v263 = vld [vmem:[%s247 + $0x18] sm:$0xff]
      %v264 = vld [vmem:[%s2] sm:$0xff]
      %266 = vset.pattern.permute.xlu0 0
      %267 = vperm.xlu0 %266, %v264
      %v268 = vpop.permute.xlu0 %267
      %vm270 = vcmask 130048
      %v272 = vsel %vm270, %v259, 0
      %274 = vmatpush.msra.mxu0 0.0
      %275 = vmatpush.msra.mxu0 0.0
      %276 = vmatpush.msra.mxu0 0.0
      %277 = vmatpush.msra.mxu0 0.0
      %278 = vmatpush.msra.mxu0 0.0
      %279 = vmatpush.msra.mxu0 0.0
      %280 = vmatpush.msra.mxu0 0.0
      %281 = vmatpush.msra.mxu0 0.0
      %282 = vmatpush.msra.mxu0 0.0
      %283 = vmatpush.msra.mxu0 0.0
      %284 = vmatpush.msra.mxu0 0.0
      %285 = vmatpush.msra.mxu0 0.0
      %286 = vmatpush.msra.mxu0 0.0
      %287 = vmatpush.msra.mxu0 0.0
      %288 = vmatpush.msra.mxu0 %v262
      %289 = vmatpush.msra.mxu0 %v260
      %290 = vmatmul.f32.gmra.mxu0 %v272
      %v291 = vpop.f32.mrf.mxu0
      %v292 = vadd.f32 %v268, %v291
      %293 = vdwg.mxu0
      %294 = vmatpush.msra.mxu0 0.0
      %295 = vmatpush.msra.mxu0 0.0
      %296 = vmatpush.msra.mxu0 0.0
      %297 = vmatpush.msra.mxu0 0.0
      %298 = vmatpush.msra.mxu0 0.0
      %299 = vmatpush.msra.mxu0 0.0
      %300 = vmatpush.msra.mxu0 0.0
      %301 = vmatpush.msra.mxu0 0.0
      %302 = vmatpush.msra.mxu0 0.0
      %303 = vmatpush.msra.mxu0 0.0
      %304 = vmatpush.msra.mxu0 0.0
      %305 = vmatpush.msra.mxu0 0.0
      %306 = vmatpush.msra.mxu0 0.0
      %307 = vmatpush.msra.mxu0 0.0
      %308 = vmatpush.msra.mxu0 %v263
      %309 = vmatpush.msra.mxu0 %v261
      %310 = vmatmul.f32.gmra.mxu0 %v272
      %v311 = vpop.f32.mrf.mxu0
      %v312 = vadd.f32 %v268, %v311
      %313 = vdwg.mxu0
      %vm314 = vcmp.ge.f32.partialorder %v292, 0.0
      %vm315 = vcmp.ge.f32.partialorder %v312, 0.0
      %v316 = vmul.f32 %v292, 0.01
      %v317 = vmul.f32 %v312, 0.01
      %v318 = vsel %vm314, %v292, %v316
      %v319 = vsel %vm315, %v312, %v317
      %320 = vst [vmem:[%s257] sm:$0xff] %v318
      %321 = vst [vmem:[%s257 + $0x8] sm:$0xff] %v319
      %p322 = scmp.eq.s32.totalorder %s21, 0
      %p323 = scmp.eq.s32.totalorder %s22, 0
      %p324 = pnand %p322, %p323
      %p325 = pneg %p324
      // Predicated region
      $region33: #{decoder_block_forward.16} parent=31 // pred_check
        _
      $region34: #{decoder_block_forward.16} parent=31 // pred_check_branch
        %327 = sbr.rel (%p324) target = $region36
      $region35: #{decoder_block_forward.16} parent=31 // pred_region
        %vm328 = vcmask 7168
        %329 = vst.msk [vmem:[%s4] sm:$0xff] %vm328, 0.0
        %330 = vst.msk [vmem:[%s5] sm:$0xff] %vm328, 0.0
      $region36: #{decoder_block_forward.16} parent=31 // pred_fallthru
        _
      %v331 = vld [vmem:[%s4] sm:$0xff]
      %v332 = vadd.f32 %v318, %v319
      %333 = vadd.xlane.f32.xlu0 %v332
      %v334 = vpop.xlane.xlu0 %333
      %v335 = vadd.f32 %v331, %v334
      %vm336 = vcmask 7168
      %337 = vst.msk [vmem:[%s4] sm:$0xff] %vm336, %v335
      %v338 = vld [vmem:[%s5] sm:$0xff]
      %v339 = vmul.f32 %v318, %v318
      %v340 = vmul.f32 %v319, %v319
      %v341 = vadd.f32 %v339, %v340
      %342 = vadd.xlane.f32.xlu0 %v341
      %v343 = vpop.xlane.xlu0 %342
      %v344 = vadd.f32 %v338, %v343
      %345 = vst.msk [vmem:[%s5] sm:$0xff] %vm336, %v344
      %s346 = smul.u32 2, %s22
      %p347 = scmp.lt.s32.totalorder %s21, 1
      %s348 = scalar_select %p347, %s21, 1
      %p349 = scmp.lt.s32.totalorder %s346, 1
      %s350 = scalar_select %p349, %s346, 1
      %s351 = smul.addr %s348, 2
      %s352 = sadd.s32 %s350, %s351
      %s353 = smul.addr %s352, 8
      %s354 = scalar_lea.vmem %s3, %s353
      // Predicated region
      $region37: #{decoder_block_forward.16} parent=31 // pred_check
        %p355 = pneg %p119
      $region38: #{decoder_block_forward.16} parent=31 // pred_check_branch
        %357 = sbr.rel (%p355) target = $region40
      $region39: #{decoder_block_forward.16} parent=31 // pred_region
        %s358 = smul.u32 2, %s22
      $region40: #{decoder_block_forward.16} parent=31 // pred_fallthru
        _
      // Predicated region
      $region41: #{decoder_block_forward.16} parent=31 // pred_check
        %p359 = pneg %p140
      $region42: #{decoder_block_forward.16} parent=31 // pred_check_branch
        %361 = sbr.rel (%p359) target = $region44
      $region43: #{decoder_block_forward.16} parent=31 // pred_region
        _
      $region44: #{decoder_block_forward.16} parent=31 // pred_fallthru
        _
      // Predicated region
      $region45: #{decoder_block_forward.16} parent=31 // pred_check
        %p362 = pneg %p161
      $region46: #{decoder_block_forward.16} parent=31 // pred_check_branch
        %364 = sbr.rel (%p362) target = $region48
      $region47: #{decoder_block_forward.16} parent=31 // pred_region
        _
      $region48: #{decoder_block_forward.16} parent=31 // pred_fallthru
        _
      // Predicated region
      $region49: #{decoder_block_forward.16} parent=31 // pred_check
        %p365 = pneg %p140
      $region50: #{decoder_block_forward.16} parent=31 // pred_check_branch
        %367 = sbr.rel (%p365) target = $region52
      $region51: #{decoder_block_forward.16} parent=31 // pred_region
        _
      $region52: #{decoder_block_forward.16} parent=31 // pred_fallthru
        _
      // Predicated region
      $region53: #{decoder_block_forward.16} parent=31 // pred_check
        %p368 = pneg %p161
      $region54: #{decoder_block_forward.16} parent=31 // pred_check_branch
        %370 = sbr.rel (%p368) target = $region56
      $region55: #{decoder_block_forward.16} parent=31 // pred_region
        _
      $region56: #{decoder_block_forward.16} parent=31 // pred_fallthru
        _
    $region32: #{decoder_block_forward.16} parent=5 // pred_fallthru
      _
    %p371 = scmp.le.s32.totalorder 2, %s12
    // Predicated region
    $region57: #{decoder_block_forward.16} parent=5 // pred_check
      %p372 = pneg %p371
    $region58: #{decoder_block_forward.16} parent=5 // pred_check_branch
      %374 = sbr.rel (%p372) target = $region60
    $region59: #{decoder_block_forward.16} parent=5 // pred_region
      %s375 = ssub.s32 %s12, 2
      // Predicated region
      $region61: #{decoder_block_forward.16} parent=59 // pred_check
        %p376 = pneg %p125
      $region62: #{decoder_block_forward.16} parent=59 // pred_check_branch
        %378 = sbr.rel (%p376) target = $region64
      $region63: #{decoder_block_forward.16} parent=59 // pred_region
        %s379 = smul.u32 2, %s24
        %p380 = scmp.lt.s32.totalorder %s23, 1
        %s381 = scalar_select %p380, %s23, 1
        %p382 = scmp.lt.s32.totalorder %s379, 1
        %s383 = scalar_select %p382, %s379, 1
        %s384 = smul.addr %s381, 2
        %s385 = sadd.s32 %s383, %s384
        %s386 = smul.addr %s385, 8
        %s387 = scalar_lea.vmem %s3, %s386
      $region64: #{decoder_block_forward.16} parent=59 // pred_fallthru
        _
    $region60: #{decoder_block_forward.16} parent=5 // pred_fallthru
      _
  $region6: #{decoder_block_forward.16} parent=0 // loop_footer
    %s16 = sadd.s32 1, %s12
  $region7: #{decoder_block_forward.16} parent=0 // loop_footer_branch
    %11 = sbr.rel target = $region3
  $region8: #{decoder_block_forward.16} parent=0 // loop_exit
    _

// kernel: decoder_block_forward.21
$region0: #{decoder_block_forward.21}
  #allocation0 [shape = 'u32[]', space=smem, size = 0x4, offset = 0x4, fixed_abs, tag = 'smem constant byte address 0x4 - core index']
  #allocation1 [shape = 'u32[72,128]{1,0:T(1,128)}', space=vmem, size = 0x9000, scoped, tag = 'internal scratch']
  %s0 = inlined_call_operand.vmem [shape: f32[2,216,2048], index: 0, kind: input, shape index: {}]
  %s1 = inlined_call_operand.vmem [shape: f32[8,216], index: 1, kind: input, shape index: {}]
  %s2 = inlined_call_operand.vmem [shape: f32[8,1], index: 2, kind: input, shape index: {}]
  %s3 = inlined_call_operand.vmem [shape: f32[2,8,2048], index: 3, kind: output, shape index: {0}]
  %s4 = inlined_call_operand.vmem [shape: f32[8,1], index: 4, kind: output, shape index: {1}]
  %s5 = inlined_call_operand.vmem [shape: f32[8,1], index: 5, kind: output, shape index: {2}]
  %6 = xla_tuple %s3, %s4, %s5
  %s7 = sld [smem:[#allocation0]]
  $region65: #{decoder_block_forward.21} parent=0
    _
  %s9 = ssub.s32 1, %s7
  %s10 = scalar_select 0, %s9, %s7
  loop: start=0, step=1, limit=4
  $region2: #{decoder_block_forward.21} parent=0 // loop_pre_header
    _
  $region3: #{decoder_block_forward.21} parent=0 // loop_header
    %s12 = sphi 0, %s16
    %p13 = scmp.ge.s32.totalorder %s12, 4
    %s19 = sphi 0, %s31
    %s20 = sphi 0, %s27
    %s21 = sphi 0, %s19
    %s22 = sphi 0, %s20
    %s23 = sphi 0, %s21
    %s24 = sphi 0, %s22
    %s36 = sphi 0, %s38
    %s39 = sphi 0, %s36
    %s40 = sphi 0, %s39
    %s56 = sphi 0, %s40
    %s60 = sphi 0, %s60
    %s62 = sphi 0, %s60
    %s63 = sphi 0, %s62
    %s77 = sphi 0, %s63
    %s81 = sphi 0, %s81
    %s83 = sphi 0, %s81
    %s84 = sphi 0, %s83
    %s98 = sphi 0, %s84
    %s106 = sphi 0, %s108
    %s109 = sphi 0, %s106
    %s110 = sphi 0, %s109
    %s126 = sphi 0, %s110
    %s130 = sphi 0, %s130
    %s132 = sphi 0, %s130
    %s133 = sphi 0, %s132
    %s147 = sphi 0, %s133
    %s151 = sphi 0, %s151
    %s153 = sphi 0, %s151
    %s154 = sphi 0, %s153
    %s168 = sphi 0, %s154
  $region4: #{decoder_block_forward.21} parent=0 // loop_header_branch
    %15 = sbr.rel (%p13) target = $region8
  $region5: #{decoder_block_forward.21} parent=0 // loop_body
    %s17 = ssub.s32 %s12, 1
    %s18 = ssub.s32 %s12, 2
    %s25 = sadd.s32 1, %s20
    %p26 = scmp.ge.s32.totalorder %s25, 1
    %s27 = scalar_select %p26, 0, %s25
    %s28 = sadd.s32 1, %s19
    %s29 = scalar_select %p26, %s28, %s19
    %p30 = scmp.ge.s32.totalorder %s29, 2
    %s31 = scalar_select %p30, 0, %s29
    %s32 = ssub.s32 %s19, %s31
    %s33 = ssub.s32 %s20, %s27
    %s34 = sor.u32 %s32, %s33
    %p35 = scmp.eq.s32.totalorder %s34, 0
    %s37 = sadd.s32 %s36, 1
    %s38 = scalar_select %p35, %s36, %s37
    %p41 = pneg %p35
    %p42 = scmp.eq.s32.totalorder %s12, 1
    %p43 = por %p41, %p42
    %p44 = scmp.ne.s32.totalorder %s36, %s39
    %p45 = scmp.eq.s32.totalorder %s12, 0
    %p46 = por %p44, %p45
    %p47 = scmp.ne.s32.totalorder %s36, %s39
    %p48 = scmp.eq.s32.totalorder %s17, 1
    %p49 = por %p47, %p48
    %p50 = scmp.ne.s32.totalorder %s39, %s40
    %p51 = scmp.eq.s32.totalorder %s17, 0
    %p52 = por %p50, %p51
    %p53 = scmp.ne.s32.totalorder %s39, %s40
    %p54 = scmp.eq.s32.totalorder %s18, 1
    %p55 = por %p53, %p54
    %p57 = scmp.ne.s32.totalorder %s40, %s56
    %p58 = scmp.eq.s32.totalorder %s18, 0
    %p59 = por %p57, %p58
    %s61 = sadd.s32 %s60, 1
    %p64 = scmp.eq.s32.totalorder %s12, 1
    %p65 = scmp.ne.s32.totalorder %s60, %s62
    %p66 = scmp.eq.s32.totalorder %s12, 0
    %p67 = por %p65, %p66
    %p68 = scmp.ne.s32.totalorder %s60, %s62
    %p69 = scmp.eq.s32.totalorder %s17, 1
    %p70 = por %p68, %p69
    %p71 = scmp.ne.s32.totalorder %s62, %s63
    %p72 = scmp.eq.s32.totalorder %s17, 0
    %p73 = por %p71, %p72
    %p74 = scmp.ne.s32.totalorder %s62, %s63
    %p75 = scmp.eq.s32.totalorder %s18, 1
    %p76 = por %p74, %p75
    %p78 = scmp.ne.s32.totalorder %s63, %s77
    %p79 = scmp.eq.s32.totalorder %s18, 0
    %p80 = por %p78, %p79
    %s82 = sadd.s32 %s81, 1
    %p85 = scmp.eq.s32.totalorder %s12, 1
    %p86 = scmp.ne.s32.totalorder %s81, %s83
    %p87 = scmp.eq.s32.totalorder %s12, 0
    %p88 = por %p86, %p87
    %p89 = scmp.ne.s32.totalorder %s81, %s83
    %p90 = scmp.eq.s32.totalorder %s17, 1
    %p91 = por %p89, %p90
    %p92 = scmp.ne.s32.totalorder %s83, %s84
    %p93 = scmp.eq.s32.totalorder %s17, 0
    %p94 = por %p92, %p93
    %p95 = scmp.ne.s32.totalorder %s83, %s84
    %p96 = scmp.eq.s32.totalorder %s18, 1
    %p97 = por %p95, %p96
    %p99 = scmp.ne.s32.totalorder %s84, %s98
    %p100 = scmp.eq.s32.totalorder %s18, 0
    %p101 = por %p99, %p100
    %s102 = ssub.s32 %s19, %s31
    %s103 = ssub.s32 %s20, %s27
    %s104 = sor.u32 %s102, %s103
    %p105 = scmp.eq.s32.totalorder %s104, 0
    %s107 = sadd.s32 %s106, 1
    %s108 = scalar_select %p105, %s106, %s107
    %p111 = pneg %p105
    %p112 = scmp.eq.s32.totalorder %s12, 1
    %p113 = por %p111, %p112
    %p114 = scmp.ne.s32.totalorder %s106, %s109
    %p115 = scmp.eq.s32.totalorder %s12, 0
    %p116 = por %p114, %p115
    %p117 = scmp.ne.s32.totalorder %s106, %s109
    %p118 = scmp.eq.s32.totalorder %s17, 1
    %p119 = por %p117, %p118
    %p120 = scmp.ne.s32.totalorder %s109, %s110
    %p121 = scmp.eq.s32.totalorder %s17, 0
    %p122 = por %p120, %p121
    %p123 = scmp.ne.s32.totalorder %s109, %s110
    %p124 = scmp.eq.s32.totalorder %s18, 1
    %p125 = por %p123, %p124
    %p127 = scmp.ne.s32.totalorder %s110, %s126
    %p128 = scmp.eq.s32.totalorder %s18, 0
    %p129 = por %p127, %p128
    %s131 = sadd.s32 %s130, 1
    %p134 = scmp.eq.s32.totalorder %s12, 1
    %p135 = scmp.ne.s32.totalorder %s130, %s132
    %p136 = scmp.eq.s32.totalorder %s12, 0
    %p137 = por %p135, %p136
    %p138 = scmp.ne.s32.totalorder %s130, %s132
    %p139 = scmp.eq.s32.totalorder %s17, 1
    %p140 = por %p138, %p139
    %p141 = scmp.ne.s32.totalorder %s132, %s133
    %p142 = scmp.eq.s32.totalorder %s17, 0
    %p143 = por %p141, %p142
    %p144 = scmp.ne.s32.totalorder %s132, %s133
    %p145 = scmp.eq.s32.totalorder %s18, 1
    %p146 = por %p144, %p145
    %p148 = scmp.ne.s32.totalorder %s133, %s147
    %p149 = scmp.eq.s32.totalorder %s18, 0
    %p150 = por %p148, %p149
    %s152 = sadd.s32 %s151, 1
    %p155 = scmp.eq.s32.totalorder %s12, 1
    %p156 = scmp.ne.s32.totalorder %s151, %s153
    %p157 = scmp.eq.s32.totalorder %s12, 0
    %p158 = por %p156, %p157
    %p159 = scmp.ne.s32.totalorder %s151, %s153
    %p160 = scmp.eq.s32.totalorder %s17, 1
    %p161 = por %p159, %p160
    %p162 = scmp.ne.s32.totalorder %s153, %s154
    %p163 = scmp.eq.s32.totalorder %s17, 0
    %p164 = por %p162, %p163
    %p165 = scmp.ne.s32.totalorder %s153, %s154
    %p166 = scmp.eq.s32.totalorder %s18, 1
    %p167 = por %p165, %p166
    %p169 = scmp.ne.s32.totalorder %s154, %s168
    %p170 = scmp.eq.s32.totalorder %s18, 0
    %p171 = por %p169, %p170
    %p172 = scmp.le.s32.totalorder 1, %s12
    %p173 = scmp.lt.s32.totalorder %s12, 3
    %p174 = pnand %p172, %p173
    %p175 = pneg %p174
    // Predicated region
    $region9: #{decoder_block_forward.21} parent=5 // pred_check
      _
    $region10: #{decoder_block_forward.21} parent=5 // pred_check_branch
      %177 = sbr.rel (%p174) target = $region12
    $region11: #{decoder_block_forward.21} parent=5 // pred_region
      %s178 = ssub.s32 %s12, 1
      // Predicated region
      $region13: #{decoder_block_forward.21} parent=11 // pred_check
        %p179 = pneg %p73
      $region14: #{decoder_block_forward.21} parent=11 // pred_check_branch
        %181 = sbr.rel (%p179) target = $region16
      $region15: #{decoder_block_forward.21} parent=11 // pred_region
        _
      $region16: #{decoder_block_forward.21} parent=11 // pred_fallthru
        _
      // Predicated region
      $region17: #{decoder_block_forward.21} parent=11 // pred_check
        %p182 = pneg %p94
      $region18: #{decoder_block_forward.21} parent=11 // pred_check_branch
        %184 = sbr.rel (%p182) target = $region20
      $region19: #{decoder_block_forward.21} parent=11 // pred_region
        _
      $region20: #{decoder_block_forward.21} parent=11 // pred_fallthru
        _
    $region12: #{decoder_block_forward.21} parent=5 // pred_fallthru
      _
    %p185 = scmp.lt.s32.totalorder %s12, 2
    // Predicated region
    $region21: #{decoder_block_forward.21} parent=5 // pred_check
      %p186 = pneg %p185
    $region22: #{decoder_block_forward.21} parent=5 // pred_check_branch
      %188 = sbr.rel (%p186) target = $region24
    $region23: #{decoder_block_forward.21} parent=5 // pred_region
      // Predicated region
      $region25: #{decoder_block_forward.21} parent=23 // pred_check
        %p189 = pneg %p46
      $region26: #{decoder_block_forward.21} parent=23 // pred_check_branch
        %191 = sbr.rel (%p189) target = $region28
      $region27: #{decoder_block_forward.21} parent=23 // pred_region
        %s192 = smul.u32 16, %s20
        %p193 = scmp.lt.s32.totalorder %s19, 1
        %s194 = scalar_select %p193, %s19, 1
        %p195 = scmp.lt.s32.totalorder %s192, 15
        %s196 = scalar_select %p195, %s192, 15
        %s197 = smul.addr %s194, 432
        %s198 = sadd.s32 %s196, %s197
        %s199 = smul.addr %s198, 8
        %s200 = scalar_lea.vmem %s0, %s199
        %s201 = smul.u32 16, %s20
      $region28: #{decoder_block_forward.21} parent=23 // pred_fallthru
        _
    $region24: #{decoder_block_forward.21} parent=5 // pred_fallthru
      _
    %p202 = scmp.le.s32.totalorder 1, %s12
    %p203 = scmp.lt.s32.totalorder %s12, 3
    %p204 = pnand %p202, %p203
    %p205 = pneg %p204
    // Predicated region
    $region29: #{decoder_block_forward.21} parent=5 // pred_check
      _
    $region30: #{decoder_block_forward.21} parent=5 // pred_check_branch
      %207 = sbr.rel (%p204) target = $region32
    $region31: #{decoder_block_forward.21} parent=5 // pred_region
      %s208 = ssub.s32 %s12, 1
      %s209 = smul.u32 16, %s22
      %p210 = scmp.lt.s32.totalorder %s21, 1
      %s211 = scalar_select %p210, %s21, 1
      %p212 = scmp.lt.s32.totalorder %s209, 15
      %s213 = scalar_select %p212, %s209, 15
      %s214 = smul.addr %s211, 432
      %s215 = sadd.s32 %s213, %s214
      %s216 = smul.addr %s215, 8
      %s217 = scalar_lea.vmem %s0, %s216
      %p218 = pneg %p52
      %p219 = pneg %p49
      %p220 = pneg %p73
      %p221 = pneg %p70
      %p222 = pneg %p94
      %p223 = pneg %p91
      %p224 = pneg %p122
      %p225 = pneg %p119
      %s226 = smul.u32 16, %s22
      %p227 = scmp.lt.s32.totalorder %s21, 1
      %s228 = scalar_select %p227, %s21, 1
      %p229 = scmp.lt.s32.totalorder %s226, 15
      %s230 = scalar_select %p229, %s226, 15
      %s231 = smul.addr %s228, 16
      %s232 = sadd.s32 %s230, %s231
      %s233 = smul.addr %s232, 8
      %s234 = scalar_lea.vmem %s3, %s233
      %p235 = pneg %p143
      %p236 = pneg %p140
      %p237 = pneg %p164
      %p238 = pneg %p161
      %s239 = smul.u32 16, %s22
      %p240 = scmp.lt.s32.totalorder %s21, 1
      %s241 = scalar_select %p240, %s21, 1
      %p242 = scmp.lt.s32.totalorder %s239, 15
      %s243 = scalar_select %p242, %s239, 15
      %s244 = smul.addr %s241, 432
      %s245 = sadd.s32 %s243, %s244
      %s246 = smul.addr %s245, 8
      %s247 = scalar_lea.vmem %s0, %s246
      %s248 = smul.u32 16, %s22
      %s249 = smul.u32 16, %s22
      %p250 = scmp.lt.s32.totalorder %s21, 1
      %s251 = scalar_select %p250, %s21, 1
      %p252 = scmp.lt.s32.totalorder %s249, 15
      %s253 = scalar_select %p252, %s249, 15
      %s254 = smul.addr %s251, 16
      %s255 = sadd.s32 %s253, %s254
      %s256 = smul.addr %s255, 8
      %s257 = scalar_lea.vmem %s3, %s256
      %s258 = smul.u32 16, %s22
      %v259 = vld [vmem:[%s1] sm:$0xff]
      %v260 = vld [vmem:[%s1 + $0x8] sm:$0xff]
      %v261 = vld [vmem:[%s247] sm:$0xff]
      %v262 = vld [vmem:[%s247 + $0x8] sm:$0xff]
      %v263 = vld [vmem:[%s247 + $0x10] sm:$0xff]
      %v264 = vld [vmem:[%s247 + $0x18] sm:$0xff]
      %v265 = vld [vmem:[%s247 + $0x20] sm:$0xff]
      %v266 = vld [vmem:[%s247 + $0x28] sm:$0xff]
      %v267 = vld [vmem:[%s247 + $0x30] sm:$0xff]
      %v268 = vld [vmem:[%s247 + $0x38] sm:$0xff]
      %v269 = vld [vmem:[%s247 + $0x40] sm:$0xff]
      %v270 = vld [vmem:[%s247 + $0x48] sm:$0xff]
      %v271 = vld [vmem:[%s247 + $0x50] sm:$0xff]
      %v272 = vld [vmem:[%s247 + $0x58] sm:$0xff]
      %v273 = vld [vmem:[%s247 + $0x60] sm:$0xff]
      %v274 = vld [vmem:[%s247 + $0x68] sm:$0xff]
      %v275 = vld [vmem:[%s247 + $0x70] sm:$0xff]
      %v276 = vld [vmem:[%s247 + $0x78] sm:$0xff]
      %v277 = vld [vmem:[%s247 + $0x80] sm:$0xff]
      %v278 = vld [vmem:[%s247 + $0x88] sm:$0xff]
      %v279 = vld [vmem:[%s247 + $0x90] sm:$0xff]
      %v280 = vld [vmem:[%s247 + $0x98] sm:$0xff]
      %v281 = vld [vmem:[%s247 + $0xa0] sm:$0xff]
      %v282 = vld [vmem:[%s247 + $0xa8] sm:$0xff]
      %v283 = vld [vmem:[%s247 + $0xb0] sm:$0xff]
      %v284 = vld [vmem:[%s247 + $0xb8] sm:$0xff]
      %v285 = vld [vmem:[%s247 + $0xc0] sm:$0xff]
      %v286 = vld [vmem:[%s247 + $0xc8] sm:$0xff]
      %v287 = vld [vmem:[%s247 + $0xd0] sm:$0xff]
      %v288 = vld [vmem:[%s247 + $0xd8] sm:$0xff]
      %v289 = vld [vmem:[%s247 + $0xe0] sm:$0xff]
      %v290 = vld [vmem:[%s247 + $0xe8] sm:$0xff]
      %v291 = vld [vmem:[%s247 + $0xf0] sm:$0xff]
      %v292 = vld [vmem:[%s247 + $0xf8] sm:$0xff]
      %v293 = vld [vmem:[%s247 + $0x100] sm:$0xff]
      %v294 = vld [vmem:[%s247 + $0x108] sm:$0xff]
      %v295 = vld [vmem:[%s247 + $0x110] sm:$0xff]
      %v296 = vld [vmem:[%s247 + $0x118] sm:$0xff]
      %v297 = vld [vmem:[%s247 + $0x120] sm:$0xff]
      %v298 = vld [vmem:[%s247 + $0x128] sm:$0xff]
      %v299 = vld [vmem:[%s247 + $0x130] sm:$0xff]
      %v300 = vld [vmem:[%s247 + $0x138] sm:$0xff]
      %v301 = vld [vmem:[%s247 + $0x140] sm:$0xff]
      %v302 = vld [vmem:[%s247 + $0x148] sm:$0xff]
      %v303 = vld [vmem:[%s247 + $0x150] sm:$0xff]
      %v304 = vld [vmem:[%s247 + $0x158] sm:$0xff]
      %v305 = vld [vmem:[%s247 + $0x160] sm:$0xff]
      %v306 = vld [vmem:[%s247 + $0x168] sm:$0xff]
      %v307 = vld [vmem:[%s247 + $0x170] sm:$0xff]
      %v308 = vld [vmem:[%s247 + $0x178] sm:$0xff]
      %v309 = vld [vmem:[%s247 + $0x180] sm:$0xff]
      %v310 = vld [vmem:[%s247 + $0x188] sm:$0xff]
      %v311 = vld [vmem:[%s247 + $0x190] sm:$0xff]
      %v312 = vld [vmem:[%s247 + $0x198] sm:$0xff]
      %v313 = vld [vmem:[%s247 + $0x1a0] sm:$0xff]
      %v314 = vld [vmem:[%s247 + $0x1a8] sm:$0xff]
      %v315 = vld [vmem:[%s247 + $0x1b0] sm:$0xff]
      %v316 = vld [vmem:[%s247 + $0x1b8] sm:$0xff]
      %v317 = vld [vmem:[%s247 + $0x1c0] sm:$0xff]
      %v318 = vld [vmem:[%s247 + $0x1c8] sm:$0xff]
      %v319 = vld [vmem:[%s247 + $0x1d0] sm:$0xff]
      %v320 = vld [vmem:[%s247 + $0x1d8] sm:$0xff]
      %v321 = vld [vmem:[%s247 + $0x1e0] sm:$0xff]
      %v322 = vld [vmem:[%s247 + $0x1e8] sm:$0xff]
      %v323 = vld [vmem:[%s247 + $0x1f0] sm:$0xff]
      %v324 = vld [vmem:[%s247 + $0x1f8] sm:$0xff]
      %v325 = vld [vmem:[%s247 + $0x200] sm:$0xff]
      %v326 = vld [vmem:[%s247 + $0x208] sm:$0xff]
      %v327 = vld [vmem:[%s247 + $0x210] sm:$0xff]
      %v328 = vld [vmem:[%s247 + $0x218] sm:$0xff]
      %v329 = vld [vmem:[%s247 + $0x220] sm:$0xff]
      %v330 = vld [vmem:[%s247 + $0x228] sm:$0xff]
      %v331 = vld [vmem:[%s247 + $0x230] sm:$0xff]
      %v332 = vld [vmem:[%s247 + $0x238] sm:$0xff]
      %v333 = vld [vmem:[%s247 + $0x240] sm:$0xff]
      %v334 = vld [vmem:[%s247 + $0x248] sm:$0xff]
      %v335 = vld [vmem:[%s247 + $0x250] sm:$0xff]
      %v336 = vld [vmem:[%s247 + $0x258] sm:$0xff]
      %v337 = vld [vmem:[%s247 + $0x260] sm:$0xff]
      %v338 = vld [vmem:[%s247 + $0x268] sm:$0xff]
      %v339 = vld [vmem:[%s247 + $0x270] sm:$0xff]
      %v340 = vld [vmem:[%s247 + $0x278] sm:$0xff]
      %v341 = vld [vmem:[%s247 + $0x280] sm:$0xff]
      %v342 = vld [vmem:[%s247 + $0x288] sm:$0xff]
      %v343 = vld [vmem:[%s247 + $0x290] sm:$0xff]
      %v344 = vld [vmem:[%s247 + $0x298] sm:$0xff]
      %v345 = vld [vmem:[%s247 + $0x2a0] sm:$0xff]
      %v346 = vld [vmem:[%s247 + $0x2a8] sm:$0xff]
      %v347 = vld [vmem:[%s247 + $0x2b0] sm:$0xff]
      %v348 = vld [vmem:[%s247 + $0x2b8] sm:$0xff]
      %v349 = vld [vmem:[%s247 + $0x2c0] sm:$0xff]
      %v350 = vld [vmem:[%s247 + $0x2c8] sm:$0xff]
      %v351 = vld [vmem:[%s247 + $0x2d0] sm:$0xff]
      %v352 = vld [vmem:[%s247 + $0x2d8] sm:$0xff]
      %v353 = vld [vmem:[%s247 + $0x2e0] sm:$0xff]
      %v354 = vld [vmem:[%s247 + $0x2e8] sm:$0xff]
      %v355 = vld [vmem:[%s247 + $0x2f0] sm:$0xff]
      %v356 = vld [vmem:[%s247 + $0x2f8] sm:$0xff]
      %v357 = vld [vmem:[%s247 + $0x300] sm:$0xff]
      %v358 = vld [vmem:[%s247 + $0x308] sm:$0xff]
      %v359 = vld [vmem:[%s247 + $0x310] sm:$0xff]
      %v360 = vld [vmem:[%s247 + $0x318] sm:$0xff]
      %v361 = vld [vmem:[%s247 + $0x320] sm:$0xff]
      %v362 = vld [vmem:[%s247 + $0x328] sm:$0xff]
      %v363 = vld [vmem:[%s247 + $0x330] sm:$0xff]
      %v364 = vld [vmem:[%s247 + $0x338] sm:$0xff]
      %v365 = vld [vmem:[%s247 + $0x340] sm:$0xff]
      %v366 = vld [vmem:[%s247 + $0x348] sm:$0xff]
      %v367 = vld [vmem:[%s247 + $0x350] sm:$0xff]
      %v368 = vld [vmem:[%s247 + $0x358] sm:$0xff]
      %v369 = vld [vmem:[%s247 + $0x360] sm:$0xff]
      %v370 = vld [vmem:[%s247 + $0x368] sm:$0xff]
      %v371 = vld [vmem:[%s247 + $0x370] sm:$0xff]
      %v372 = vld [vmem:[%s247 + $0x378] sm:$0xff]
      %v373 = vld [vmem:[%s247 + $0x380] sm:$0xff]
      %v374 = vld [vmem:[%s247 + $0x388] sm:$0xff]
      %v375 = vld [vmem:[%s247 + $0x390] sm:$0xff]
      %v376 = vld [vmem:[%s247 + $0x398] sm:$0xff]
      %v377 = vld [vmem:[%s247 + $0x3a0] sm:$0xff]
      %v378 = vld [vmem:[%s247 + $0x3a8] sm:$0xff]
      %v379 = vld [vmem:[%s247 + $0x3b0] sm:$0xff]
      %v380 = vld [vmem:[%s247 + $0x3b8] sm:$0xff]
      %v381 = vld [vmem:[%s247 + $0x3c0] sm:$0xff]
      %v382 = vld [vmem:[%s247 + $0x3c8] sm:$0xff]
      %v383 = vld [vmem:[%s247 + $0x3d0] sm:$0xff]
      %v384 = vld [vmem:[%s247 + $0x3d8] sm:$0xff]
      %v385 = vld [vmem:[%s247 + $0x3e0] sm:$0xff]
      %v386 = vld [vmem:[%s247 + $0x3e8] sm:$0xff]
      %v387 = vld [vmem:[%s247 + $0x3f0] sm:$0xff]
      %v388 = vld [vmem:[%s247 + $0x3f8] sm:$0xff]
      %v389 = vld [vmem:[%s247 + $0x400] sm:$0xff]
      %v390 = vld [vmem:[%s247 + $0x408] sm:$0xff]
      %v391 = vld [vmem:[%s247 + $0x410] sm:$0xff]
      %v392 = vld [vmem:[%s247 + $0x418] sm:$0xff]
      %v393 = vld [vmem:[%s247 + $0x420] sm:$0xff]
      %v394 = vld [vmem:[%s247 + $0x428] sm:$0xff]
      %v395 = vld [vmem:[%s247 + $0x430] sm:$0xff]
      %v396 = vld [vmem:[%s247 + $0x438] sm:$0xff]
      %v397 = vld [vmem:[%s247 + $0x440] sm:$0xff]
      %v398 = vld [vmem:[%s247 + $0x448] sm:$0xff]
      %v399 = vld [vmem:[%s247 + $0x450] sm:$0xff]
      %v400 = vld [vmem:[%s247 + $0x458] sm:$0xff]
      %v401 = vld [vmem:[%s247 + $0x460] sm:$0xff]
      %v402 = vld [vmem:[%s247 + $0x468] sm:$0xff]
      %v403 = vld [vmem:[%s247 + $0x470] sm:$0xff]
      %v404 = vld [vmem:[%s247 + $0x478] sm:$0xff]
      %v405 = vld [vmem:[%s247 + $0x480] sm:$0xff]
      %v406 = vld [vmem:[%s247 + $0x488] sm:$0xff]
      %v407 = vld [vmem:[%s247 + $0x490] sm:$0xff]
      %v408 = vld [vmem:[%s247 + $0x498] sm:$0xff]
      %v409 = vld [vmem:[%s247 + $0x4a0] sm:$0xff]
      %v410 = vld [vmem:[%s247 + $0x4a8] sm:$0xff]
      %v411 = vld [vmem:[%s247 + $0x4b0] sm:$0xff]
      %v412 = vld [vmem:[%s247 + $0x4b8] sm:$0xff]
      %v413 = vld [vmem:[%s247 + $0x4c0] sm:$0xff]
      %v414 = vld [vmem:[%s247 + $0x4c8] sm:$0xff]
      %v415 = vld [vmem:[%s247 + $0x4d0] sm:$0xff]
      %v416 = vld [vmem:[%s247 + $0x4d8] sm:$0xff]
      %v417 = vld [vmem:[%s247 + $0x4e0] sm:$0xff]
      %v418 = vld [vmem:[%s247 + $0x4e8] sm:$0xff]
      %v419 = vld [vmem:[%s247 + $0x4f0] sm:$0xff]
      %v420 = vld [vmem:[%s247 + $0x4f8] sm:$0xff]
      %v421 = vld [vmem:[%s247 + $0x500] sm:$0xff]
      %v422 = vld [vmem:[%s247 + $0x508] sm:$0xff]
      %v423 = vld [vmem:[%s247 + $0x510] sm:$0xff]
      %v424 = vld [vmem:[%s247 + $0x518] sm:$0xff]
      %v425 = vld [vmem:[%s247 + $0x520] sm:$0xff]
      %v426 = vld [vmem:[%s247 + $0x528] sm:$0xff]
      %v427 = vld [vmem:[%s247 + $0x530] sm:$0xff]
      %v428 = vld [vmem:[%s247 + $0x538] sm:$0xff]
      %v429 = vld [vmem:[%s247 + $0x540] sm:$0xff]
      %v430 = vld [vmem:[%s247 + $0x548] sm:$0xff]
      %v431 = vld [vmem:[%s247 + $0x550] sm:$0xff]
      %v432 = vld [vmem:[%s247 + $0x558] sm:$0xff]
      %v433 = vld [vmem:[%s247 + $0x560] sm:$0xff]
      %v434 = vld [vmem:[%s247 + $0x568] sm:$0xff]
      %v435 = vld [vmem:[%s247 + $0x570] sm:$0xff]
      %v436 = vld [vmem:[%s247 + $0x578] sm:$0xff]
      %v437 = vld [vmem:[%s247 + $0x580] sm:$0xff]
      %v438 = vld [vmem:[%s247 + $0x588] sm:$0xff]
      %v439 = vld [vmem:[%s247 + $0x590] sm:$0xff]
      %v440 = vld [vmem:[%s247 + $0x598] sm:$0xff]
      %v441 = vld [vmem:[%s247 + $0x5a0] sm:$0xff]
      %v442 = vld [vmem:[%s247 + $0x5a8] sm:$0xff]
      %v443 = vld [vmem:[%s247 + $0x5b0] sm:$0xff]
      %v444 = vld [vmem:[%s247 + $0x5b8] sm:$0xff]
      %v445 = vld [vmem:[%s247 + $0x5c0] sm:$0xff]
      %v446 = vld [vmem:[%s247 + $0x5c8] sm:$0xff]
      %v447 = vld [vmem:[%s247 + $0x5d0] sm:$0xff]
      %v448 = vld [vmem:[%s247 + $0x5d8] sm:$0xff]
      %v449 = vld [vmem:[%s247 + $0x5e0] sm:$0xff]
      %v450 = vld [vmem:[%s247 + $0x5e8] sm:$0xff]
      %v451 = vld [vmem:[%s247 + $0x5f0] sm:$0xff]
      %v452 = vld [vmem:[%s247 + $0x5f8] sm:$0xff]
      %v453 = vld [vmem:[%s247 + $0x600] sm:$0xff]
      %v454 = vld [vmem:[%s247 + $0x608] sm:$0xff]
      %v455 = vld [vmem:[%s247 + $0x610] sm:$0xff]
      %v456 = vld [vmem:[%s247 + $0x618] sm:$0xff]
      %v457 = vld [vmem:[%s247 + $0x620] sm:$0xff]
      %v458 = vld [vmem:[%s247 + $0x628] sm:$0xff]
      %v459 = vld [vmem:[%s247 + $0x630] sm:$0xff]
      %v460 = vld [vmem:[%s247 + $0x638] sm:$0xff]
      %v461 = vld [vmem:[%s247 + $0x640] sm:$0xff]
      %v462 = vld [vmem:[%s247 + $0x648] sm:$0xff]
      %v463 = vld [vmem:[%s247 + $0x650] sm:$0xff]
      %v464 = vld [vmem:[%s247 + $0x658] sm:$0xff]
      %v465 = vld [vmem:[%s247 + $0x660] sm:$0xff]
      %v466 = vld [vmem:[%s247 + $0x668] sm:$0xff]
      %v467 = vld [vmem:[%s247 + $0x670] sm:$0xff]
      %v468 = vld [vmem:[%s247 + $0x678] sm:$0xff]
      %v469 = vld [vmem:[%s247 + $0x680] sm:$0xff]
      %v470 = vld [vmem:[%s247 + $0x688] sm:$0xff]
      %v471 = vld [vmem:[%s247 + $0x690] sm:$0xff]
      %v472 = vld [vmem:[%s247 + $0x698] sm:$0xff]
      %v473 = vld [vmem:[%s247 + $0x6a0] sm:$0xff]
      %v474 = vld [vmem:[%s247 + $0x6a8] sm:$0xff]
      %v475 = vld [vmem:[%s247 + $0x6b0] sm:$0xff]
      %v476 = vld [vmem:[%s247 + $0x6b8] sm:$0xff]
      %v477 = vld [vmem:[%s247 + $0x6c0] sm:$0xff]
      %v478 = vld [vmem:[%s247 + $0x6c8] sm:$0xff]
      %v479 = vld [vmem:[%s247 + $0x6d0] sm:$0xff]
      %v480 = vld [vmem:[%s247 + $0x6d8] sm:$0xff]
      %v481 = vld [vmem:[%s247 + $0x6e0] sm:$0xff]
      %v482 = vld [vmem:[%s247 + $0x6e8] sm:$0xff]
      %v483 = vld [vmem:[%s247 + $0x6f0] sm:$0xff]
      %v484 = vld [vmem:[%s247 + $0x6f8] sm:$0xff]
      %v485 = vld [vmem:[%s247 + $0x700] sm:$0xff]
      %v486 = vld [vmem:[%s247 + $0x708] sm:$0xff]
      %v487 = vld [vmem:[%s247 + $0x710] sm:$0xff]
      %v488 = vld [vmem:[%s247 + $0x718] sm:$0xff]
      %v489 = vld [vmem:[%s247 + $0x720] sm:$0xff]
      %v490 = vld [vmem:[%s247 + $0x728] sm:$0xff]
      %v491 = vld [vmem:[%s247 + $0x730] sm:$0xff]
      %v492 = vld [vmem:[%s247 + $0x738] sm:$0xff]
      %v493 = vld [vmem:[%s247 + $0x740] sm:$0xff]
      %v494 = vld [vmem:[%s247 + $0x748] sm:$0xff]
      %v495 = vld [vmem:[%s247 + $0x750] sm:$0xff]
      %v496 = vld [vmem:[%s247 + $0x758] sm:$0xff]
      %v497 = vld [vmem:[%s247 + $0x760] sm:$0xff]
      %v498 = vld [vmem:[%s247 + $0x768] sm:$0xff]
      %v499 = vld [vmem:[%s247 + $0x770] sm:$0xff]
      %v500 = vld [vmem:[%s247 + $0x778] sm:$0xff]
      %v501 = vld [vmem:[%s247 + $0x780] sm:$0xff]
      %v502 = vld [vmem:[%s247 + $0x788] sm:$0xff]
      %v503 = vld [vmem:[%s247 + $0x790] sm:$0xff]
      %v504 = vld [vmem:[%s247 + $0x798] sm:$0xff]
      %v505 = vld [vmem:[%s247 + $0x7a0] sm:$0xff]
      %v506 = vld [vmem:[%s247 + $0x7a8] sm:$0xff]
      %v507 = vld [vmem:[%s247 + $0x7b0] sm:$0xff]
      %v508 = vld [vmem:[%s247 + $0x7b8] sm:$0xff]
      %v509 = vld [vmem:[%s247 + $0x7c0] sm:$0xff]
      %v510 = vld [vmem:[%s247 + $0x7c8] sm:$0xff]
      %v511 = vld [vmem:[%s247 + $0x7d0] sm:$0xff]
      %v512 = vld [vmem:[%s247 + $0x7d8] sm:$0xff]
      %v513 = vld [vmem:[%s247 + $0x7e0] sm:$0xff]
      %v514 = vld [vmem:[%s247 + $0x7e8] sm:$0xff]
      %v515 = vld [vmem:[%s247 + $0x7f0] sm:$0xff]
      %v516 = vld [vmem:[%s247 + $0x7f8] sm:$0xff]
      %v517 = vld [vmem:[%s247 + $0x800] sm:$0xff]
      %v518 = vld [vmem:[%s247 + $0x808] sm:$0xff]
      %v519 = vld [vmem:[%s247 + $0x810] sm:$0xff]
      %v520 = vld [vmem:[%s247 + $0x818] sm:$0xff]
      %v521 = vld [vmem:[%s247 + $0x820] sm:$0xff]
      %v522 = vld [vmem:[%s247 + $0x828] sm:$0xff]
      %v523 = vld [vmem:[%s247 + $0x830] sm:$0xff]
      %v524 = vld [vmem:[%s247 + $0x838] sm:$0xff]
      %v525 = vld [vmem:[%s247 + $0x840] sm:$0xff]
      %v526 = vld [vmem:[%s247 + $0x848] sm:$0xff]
      %v527 = vld [vmem:[%s247 + $0x850] sm:$0xff]
      %v528 = vld [vmem:[%s247 + $0x858] sm:$0xff]
      %v529 = vld [vmem:[%s247 + $0x860] sm:$0xff]
      %v530 = vld [vmem:[%s247 + $0x868] sm:$0xff]
      %v531 = vld [vmem:[%s247 + $0x870] sm:$0xff]
      %v532 = vld [vmem:[%s247 + $0x878] sm:$0xff]
      %v533 = vld [vmem:[%s247 + $0x880] sm:$0xff]
      %v534 = vld [vmem:[%s247 + $0x888] sm:$0xff]
      %v535 = vld [vmem:[%s247 + $0x890] sm:$0xff]
      %v536 = vld [vmem:[%s247 + $0x898] sm:$0xff]
      %v537 = vld [vmem:[%s247 + $0x8a0] sm:$0xff]
      %v538 = vld [vmem:[%s247 + $0x8a8] sm:$0xff]
      %v539 = vld [vmem:[%s247 + $0x8b0] sm:$0xff]
      %v540 = vld [vmem:[%s247 + $0x8b8] sm:$0xff]
      %v541 = vld [vmem:[%s247 + $0x8c0] sm:$0xff]
      %v542 = vld [vmem:[%s247 + $0x8c8] sm:$0xff]
      %v543 = vld [vmem:[%s247 + $0x8d0] sm:$0xff]
      %v544 = vld [vmem:[%s247 + $0x8d8] sm:$0xff]
      %v545 = vld [vmem:[%s247 + $0x8e0] sm:$0xff]
      %v546 = vld [vmem:[%s247 + $0x8e8] sm:$0xff]
      %v547 = vld [vmem:[%s247 + $0x8f0] sm:$0xff]
      %v548 = vld [vmem:[%s247 + $0x8f8] sm:$0xff]
      %v549 = vld [vmem:[%s247 + $0x900] sm:$0xff]
      %v550 = vld [vmem:[%s247 + $0x908] sm:$0xff]
      %v551 = vld [vmem:[%s247 + $0x910] sm:$0xff]
      %v552 = vld [vmem:[%s247 + $0x918] sm:$0xff]
      %v553 = vld [vmem:[%s247 + $0x920] sm:$0xff]
      %v554 = vld [vmem:[%s247 + $0x928] sm:$0xff]
      %v555 = vld [vmem:[%s247 + $0x930] sm:$0xff]
      %v556 = vld [vmem:[%s247 + $0x938] sm:$0xff]
      %v557 = vld [vmem:[%s247 + $0x940] sm:$0xff]
      %v558 = vld [vmem:[%s247 + $0x948] sm:$0xff]
      %v559 = vld [vmem:[%s247 + $0x950] sm:$0xff]
      %v560 = vld [vmem:[%s247 + $0x958] sm:$0xff]
      %v561 = vld [vmem:[%s247 + $0x960] sm:$0xff]
      %v562 = vld [vmem:[%s247 + $0x968] sm:$0xff]
      %v563 = vld [vmem:[%s247 + $0x970] sm:$0xff]
      %v564 = vld [vmem:[%s247 + $0x978] sm:$0xff]
      %v565 = vld [vmem:[%s247 + $0x980] sm:$0xff]
      %v566 = vld [vmem:[%s247 + $0x988] sm:$0xff]
      %v567 = vld [vmem:[%s247 + $0x990] sm:$0xff]
      %v568 = vld [vmem:[%s247 + $0x998] sm:$0xff]
      %v569 = vld [vmem:[%s247 + $0x9a0] sm:$0xff]
      %v570 = vld [vmem:[%s247 + $0x9a8] sm:$0xff]
      %v571 = vld [vmem:[%s247 + $0x9b0] sm:$0xff]
      %v572 = vld [vmem:[%s247 + $0x9b8] sm:$0xff]
      %v573 = vld [vmem:[%s247 + $0x9c0] sm:$0xff]
      %v574 = vld [vmem:[%s247 + $0x9c8] sm:$0xff]
      %v575 = vld [vmem:[%s247 + $0x9d0] sm:$0xff]
      %v576 = vld [vmem:[%s247 + $0x9d8] sm:$0xff]
      %v577 = vld [vmem:[%s247 + $0x9e0] sm:$0xff]
      %v578 = vld [vmem:[%s247 + $0x9e8] sm:$0xff]
      %v579 = vld [vmem:[%s247 + $0x9f0] sm:$0xff]
      %v580 = vld [vmem:[%s247 + $0x9f8] sm:$0xff]
      %v581 = vld [vmem:[%s247 + $0xa00] sm:$0xff]
      %v582 = vld [vmem:[%s247 + $0xa08] sm:$0xff]
      %v583 = vld [vmem:[%s247 + $0xa10] sm:$0xff]
      %v584 = vld [vmem:[%s247 + $0xa18] sm:$0xff]
      %v585 = vld [vmem:[%s247 + $0xa20] sm:$0xff]
      %v586 = vld [vmem:[%s247 + $0xa28] sm:$0xff]
      %v587 = vld [vmem:[%s247 + $0xa30] sm:$0xff]
      %v588 = vld [vmem:[%s247 + $0xa38] sm:$0xff]
      %v589 = vld [vmem:[%s247 + $0xa40] sm:$0xff]
      %v590 = vld [vmem:[%s247 + $0xa48] sm:$0xff]
      %v591 = vld [vmem:[%s247 + $0xa50] sm:$0xff]
      %v592 = vld [vmem:[%s247 + $0xa58] sm:$0xff]
      %v593 = vld [vmem:[%s247 + $0xa60] sm:$0xff]
      %v594 = vld [vmem:[%s247 + $0xa68] sm:$0xff]
      %v595 = vld [vmem:[%s247 + $0xa70] sm:$0xff]
      %v596 = vld [vmem:[%s247 + $0xa78] sm:$0xff]
      %v597 = vld [vmem:[%s247 + $0xa80] sm:$0xff]
      %v598 = vld [vmem:[%s247 + $0xa88] sm:$0xff]
      %v599 = vld [vmem:[%s247 + $0xa90] sm:$0xff]
      %v600 = vld [vmem:[%s247 + $0xa98] sm:$0xff]
      %v601 = vld [vmem:[%s247 + $0xaa0] sm:$0xff]
      %v602 = vld [vmem:[%s247 + $0xaa8] sm:$0xff]
      %v603 = vld [vmem:[%s247 + $0xab0] sm:$0xff]
      %v604 = vld [vmem:[%s247 + $0xab8] sm:$0xff]
      %v605 = vld [vmem:[%s247 + $0xac0] sm:$0xff]
      %v606 = vld [vmem:[%s247 + $0xac8] sm:$0xff]
      %v607 = vld [vmem:[%s247 + $0xad0] sm:$0xff]
      %v608 = vld [vmem:[%s247 + $0xad8] sm:$0xff]
      %v609 = vld [vmem:[%s247 + $0xae0] sm:$0xff]
      %v610 = vld [vmem:[%s247 + $0xae8] sm:$0xff]
      %v611 = vld [vmem:[%s247 + $0xaf0] sm:$0xff]
      %v612 = vld [vmem:[%s247 + $0xaf8] sm:$0xff]
      %v613 = vld [vmem:[%s247 + $0xb00] sm:$0xff]
      %v614 = vld [vmem:[%s247 + $0xb08] sm:$0xff]
      %v615 = vld [vmem:[%s247 + $0xb10] sm:$0xff]
      %v616 = vld [vmem:[%s247 + $0xb18] sm:$0xff]
      %v617 = vld [vmem:[%s247 + $0xb20] sm:$0xff]
      %v618 = vld [vmem:[%s247 + $0xb28] sm:$0xff]
      %v619 = vld [vmem:[%s247 + $0xb30] sm:$0xff]
      %v620 = vld [vmem:[%s247 + $0xb38] sm:$0xff]
      %v621 = vld [vmem:[%s247 + $0xb40] sm:$0xff]
      %v622 = vld [vmem:[%s247 + $0xb48] sm:$0xff]
      %v623 = vld [vmem:[%s247 + $0xb50] sm:$0xff]
      %v624 = vld [vmem:[%s247 + $0xb58] sm:$0xff]
      %v625 = vld [vmem:[%s247 + $0xb60] sm:$0xff]
      %v626 = vld [vmem:[%s247 + $0xb68] sm:$0xff]
      %v627 = vld [vmem:[%s247 + $0xb70] sm:$0xff]
      %v628 = vld [vmem:[%s247 + $0xb78] sm:$0xff]
      %v629 = vld [vmem:[%s247 + $0xb80] sm:$0xff]
      %v630 = vld [vmem:[%s247 + $0xb88] sm:$0xff]
      %v631 = vld [vmem:[%s247 + $0xb90] sm:$0xff]
      %v632 = vld [vmem:[%s247 + $0xb98] sm:$0xff]
      %v633 = vld [vmem:[%s247 + $0xba0] sm:$0xff]
      %v634 = vld [vmem:[%s247 + $0xba8] sm:$0xff]
      %v635 = vld [vmem:[%s247 + $0xbb0] sm:$0xff]
      %v636 = vld [vmem:[%s247 + $0xbb8] sm:$0xff]
      %v637 = vld [vmem:[%s247 + $0xbc0] sm:$0xff]
      %v638 = vld [vmem:[%s247 + $0xbc8] sm:$0xff]
      %v639 = vld [vmem:[%s247 + $0xbd0] sm:$0xff]
      %v640 = vld [vmem:[%s247 + $0xbd8] sm:$0xff]
      %v641 = vld [vmem:[%s247 + $0xbe0] sm:$0xff]
      %v642 = vld [vmem:[%s247 + $0xbe8] sm:$0xff]
      %v643 = vld [vmem:[%s247 + $0xbf0] sm:$0xff]
      %v644 = vld [vmem:[%s247 + $0xbf8] sm:$0xff]
      %v645 = vld [vmem:[%s247 + $0xc00] sm:$0xff]
      %v646 = vld [vmem:[%s247 + $0xc08] sm:$0xff]
      %v647 = vld [vmem:[%s247 + $0xc10] sm:$0xff]
      %v648 = vld [vmem:[%s247 + $0xc18] sm:$0xff]
      %v649 = vld [vmem:[%s247 + $0xc20] sm:$0xff]
      %v650 = vld [vmem:[%s247 + $0xc28] sm:$0xff]
      %v651 = vld [vmem:[%s247 + $0xc30] sm:$0xff]
      %v652 = vld [vmem:[%s247 + $0xc38] sm:$0xff]
      %v653 = vld [vmem:[%s247 + $0xc40] sm:$0xff]
      %v654 = vld [vmem:[%s247 + $0xc48] sm:$0xff]
      %v655 = vld [vmem:[%s247 + $0xc50] sm:$0xff]
      %v656 = vld [vmem:[%s247 + $0xc58] sm:$0xff]
      %v657 = vld [vmem:[%s247 + $0xc60] sm:$0xff]
      %v658 = vld [vmem:[%s247 + $0xc68] sm:$0xff]
      %v659 = vld [vmem:[%s247 + $0xc70] sm:$0xff]
      %v660 = vld [vmem:[%s247 + $0xc78] sm:$0xff]
      %v661 = vld [vmem:[%s247 + $0xc80] sm:$0xff]
      %v662 = vld [vmem:[%s247 + $0xc88] sm:$0xff]
      %v663 = vld [vmem:[%s247 + $0xc90] sm:$0xff]
      %v664 = vld [vmem:[%s247 + $0xc98] sm:$0xff]
      %v665 = vld [vmem:[%s247 + $0xca0] sm:$0xff]
      %v666 = vld [vmem:[%s247 + $0xca8] sm:$0xff]
      %v667 = vld [vmem:[%s247 + $0xcb0] sm:$0xff]
      %v668 = vld [vmem:[%s247 + $0xcb8] sm:$0xff]
      %v669 = vld [vmem:[%s247 + $0xcc0] sm:$0xff]
      %v670 = vld [vmem:[%s247 + $0xcc8] sm:$0xff]
      %v671 = vld [vmem:[%s247 + $0xcd0] sm:$0xff]
      %v672 = vld [vmem:[%s247 + $0xcd8] sm:$0xff]
      %v673 = vld [vmem:[%s247 + $0xce0] sm:$0xff]
      %v674 = vld [vmem:[%s247 + $0xce8] sm:$0xff]
      %v675 = vld [vmem:[%s247 + $0xcf0] sm:$0xff]
      %v676 = vld [vmem:[%s247 + $0xcf8] sm:$0xff]
      %v677 = vld [vmem:[%s247 + $0xd00] sm:$0xff]
      %v678 = vld [vmem:[%s247 + $0xd08] sm:$0xff]
      %v679 = vld [vmem:[%s247 + $0xd10] sm:$0xff]
      %v680 = vld [vmem:[%s247 + $0xd18] sm:$0xff]
      %v681 = vld [vmem:[%s247 + $0xd20] sm:$0xff]
      %v682 = vld [vmem:[%s247 + $0xd28] sm:$0xff]
      %v683 = vld [vmem:[%s247 + $0xd30] sm:$0xff]
      %v684 = vld [vmem:[%s247 + $0xd38] sm:$0xff]
      %v685 = vld [vmem:[%s247 + $0xd40] sm:$0xff]
      %v686 = vld [vmem:[%s247 + $0xd48] sm:$0xff]
      %v687 = vld [vmem:[%s247 + $0xd50] sm:$0xff]
      %v688 = vld [vmem:[%s247 + $0xd58] sm:$0xff]
      %v689 = vld [vmem:[%s247 + $0xd60] sm:$0xff]
      %v690 = vld [vmem:[%s247 + $0xd68] sm:$0xff]
      %v691 = vld [vmem:[%s247 + $0xd70] sm:$0xff]
      %v692 = vld [vmem:[%s247 + $0xd78] sm:$0xff]
      %v693 = vld [vmem:[%s2] sm:$0xff]
      %695 = vset.pattern.permute.xlu0 0
      %696 = vperm.xlu0 %695, %v693
      %v697 = vpop.permute.xlu0 %696
      %vm699 = vcmask 719872
      %v701 = vsel %vm699, %v260, 0
      %703 = vmatpush.msra.mxu0 %v501
      %704 = vmatpush.msra.mxu0 %v485
      %705 = vmatpush.msra.mxu0 %v469
      %706 = vmatpush.msra.mxu0 %v453
      %707 = vmatpush.msra.mxu0 %v437
      %708 = vmatpush.msra.mxu0 %v421
      %709 = vmatpush.msra.mxu0 %v405
      %710 = vmatpush.msra.mxu0 %v389
      %711 = vmatpush.msra.mxu0 %v373
      %712 = vmatpush.msra.mxu0 %v357
      %713 = vmatpush.msra.mxu0 %v341
      %714 = vmatpush.msra.mxu0 %v325
      %715 = vmatpush.msra.mxu0 %v309
      %716 = vmatpush.msra.mxu0 %v293
      %717 = vmatpush.msra.mxu0 %v277
      %718 = vmatpush.msra.mxu0 %v261
      %719 = vmatmul.f32.gmra.mxu0 %v259
      %v720 = vpop.f32.mrf.mxu0
      %v721 = vadd.f32 %v697, %v720
      %722 = vdwg.mxu0
      %723 = vmatpush.msra.mxu0 0.0
      %724 = vmatpush.msra.mxu0 0.0
      %725 = vmatpush.msra.mxu0 0.0
      %726 = vmatpush.msra.mxu0 0.0
      %727 = vmatpush.msra.mxu0 0.0
      %728 = vmatpush.msra.mxu0 %v677
      %729 = vmatpush.msra.mxu0 %v661
      %730 = vmatpush.msra.mxu0 %v645
      %731 = vmatpush.msra.mxu0 %v629
      %732 = vmatpush.msra.mxu0 %v613
      %733 = vmatpush.msra.mxu0 %v597
      %734 = vmatpush.msra.mxu0 %v581
      %735 = vmatpush.msra.mxu0 %v565
      %736 = vmatpush.msra.mxu0 %v549
      %737 = vmatpush.msra.mxu0 %v533
      %738 = vmatpush.msra.mxu0 %v517
      %739 = vmatmul.f32.gmra.mxu0 %v701
      %v740 = vpop.f32.mrf.mxu0
      %v741 = vadd.f32 %v721, %v740
      %742 = vdwg.mxu0
      %743 = vmatpush.msra.mxu0 %v502
      %744 = vmatpush.msra.mxu0 %v486
      %745 = vmatpush.msra.mxu0 %v470
      %746 = vmatpush.msra.mxu0 %v454
      %747 = vmatpush.msra.mxu0 %v438
      %748 = vmatpush.msra.mxu0 %v422
      %749 = vmatpush.msra.mxu0 %v406
      %750 = vmatpush.msra.mxu0 %v390
      %751 = vmatpush.msra.mxu0 %v374
      %752 = vmatpush.msra.mxu0 %v358
      %753 = vmatpush.msra.mxu0 %v342
      %754 = vmatpush.msra.mxu0 %v326
      %755 = vmatpush.msra.mxu0 %v310
      %756 = vmatpush.msra.mxu0 %v294
      %757 = vmatpush.msra.mxu0 %v278
      %758 = vmatpush.msra.mxu0 %v262
      %759 = vmatmul.f32.gmra.mxu0 %v259
      %v760 = vpop.f32.mrf.mxu0
      %v761 = vadd.f32 %v697, %v760
      %762 = vdwg.mxu0
      %763 = vmatpush.msra.mxu0 0.0
      %764 = vmatpush.msra.mxu0 0.0
      %765 = vmatpush.msra.mxu0 0.0
      %766 = vmatpush.msra.mxu0 0.0
      %767 = vmatpush.msra.mxu0 0.0
      %768 = vmatpush.msra.mxu0 %v678
      %769 = vmatpush.msra.mxu0 %v662
      %770 = vmatpush.msra.mxu0 %v646
      %771 = vmatpush.msra.mxu0 %v630
      %772 = vmatpush.msra.mxu0 %v614
      %773 = vmatpush.msra.mxu0 %v598
      %774 = vmatpush.msra.mxu0 %v582
      %775 = vmatpush.msra.mxu0 %v566
      %776 = vmatpush.msra.mxu0 %v550
      %777 = vmatpush.msra.mxu0 %v534
      %778 = vmatpush.msra.mxu0 %v518
      %779 = vmatmul.f32.gmra.mxu0 %v701
      %v780 = vpop.f32.mrf.mxu0
      %v781 = vadd.f32 %v761, %v780
      %782 = vdwg.mxu0
      %783 = vmatpush.msra.mxu0 %v503
      %784 = vmatpush.msra.mxu0 %v487
      %785 = vmatpush.msra.mxu0 %v471
      %786 = vmatpush.msra.mxu0 %v455
      %787 = vmatpush.msra.mxu0 %v439
      %788 = vmatpush.msra.mxu0 %v423
      %789 = vmatpush.msra.mxu0 %v407
      %790 = vmatpush.msra.mxu0 %v391
      %791 = vmatpush.msra.mxu0 %v375
      %792 = vmatpush.msra.mxu0 %v359
      %793 = vmatpush.msra.mxu0 %v343
      %794 = vmatpush.msra.mxu0 %v327
      %795 = vmatpush.msra.mxu0 %v311
      %796 = vmatpush.msra.mxu0 %v295
      %797 = vmatpush.msra.mxu0 %v279
      %798 = vmatpush.msra.mxu0 %v263
      %799 = vmatmul.f32.gmra.mxu0 %v259
      %v800 = vpop.f32.mrf.mxu0
      %v801 = vadd.f32 %v697, %v800
      %802 = vdwg.mxu0
      %803 = vmatpush.msra.mxu0 0.0
      %804 = vmatpush.msra.mxu0 0.0
      %805 = vmatpush.msra.mxu0 0.0
      %806 = vmatpush.msra.mxu0 0.0
      %807 = vmatpush.msra.mxu0 0.0
      %808 = vmatpush.msra.mxu0 %v679
      %809 = vmatpush.msra.mxu0 %v663
      %810 = vmatpush.msra.mxu0 %v647
      %811 = vmatpush.msra.mxu0 %v631
      %812 = vmatpush.msra.mxu0 %v615
      %813 = vmatpush.msra.mxu0 %v599
      %814 = vmatpush.msra.mxu0 %v583
      %815 = vmatpush.msra.mxu0 %v567
      %816 = vmatpush.msra.mxu0 %v551
      %817 = vmatpush.msra.mxu0 %v535
      %818 = vmatpush.msra.mxu0 %v519
      %819 = vmatmul.f32.gmra.mxu0 %v701
      %v820 = vpop.f32.mrf.mxu0
      %v821 = vadd.f32 %v801, %v820
      %822 = vdwg.mxu0
      %823 = vmatpush.msra.mxu0 %v504
      %824 = vmatpush.msra.mxu0 %v488
      %825 = vmatpush.msra.mxu0 %v472
      %826 = vmatpush.msra.mxu0 %v456
      %827 = vmatpush.msra.mxu0 %v440
      %828 = vmatpush.msra.mxu0 %v424
      %829 = vmatpush.msra.mxu0 %v408
      %830 = vmatpush.msra.mxu0 %v392
      %831 = vmatpush.msra.mxu0 %v376
      %832 = vmatpush.msra.mxu0 %v360
      %833 = vmatpush.msra.mxu0 %v344
      %834 = vmatpush.msra.mxu0 %v328
      %835 = vmatpush.msra.mxu0 %v312
      %836 = vmatpush.msra.mxu0 %v296
      %837 = vmatpush.msra.mxu0 %v280
      %838 = vmatpush.msra.mxu0 %v264
      %839 = vmatmul.f32.gmra.mxu0 %v259
      %v840 = vpop.f32.mrf.mxu0
      %v841 = vadd.f32 %v697, %v840
      %842 = vdwg.mxu0
      %843 = vmatpush.msra.mxu0 0.0
      %844 = vmatpush.msra.mxu0 0.0
      %845 = vmatpush.msra.mxu0 0.0
      %846 = vmatpush.msra.mxu0 0.0
      %847 = vmatpush.msra.mxu0 0.0
      %848 = vmatpush.msra.mxu0 %v680
      %849 = vmatpush.msra.mxu0 %v664
      %850 = vmatpush.msra.mxu0 %v648
      %851 = vmatpush.msra.mxu0 %v632
      %852 = vmatpush.msra.mxu0 %v616
      %853 = vmatpush.msra.mxu0 %v600
      %854 = vmatpush.msra.mxu0 %v584
      %855 = vmatpush.msra.mxu0 %v568
      %856 = vmatpush.msra.mxu0 %v552
      %857 = vmatpush.msra.mxu0 %v536
      %858 = vmatpush.msra.mxu0 %v520
      %859 = vmatmul.f32.gmra.mxu0 %v701
      %v860 = vpop.f32.mrf.mxu0
      %v861 = vadd.f32 %v841, %v860
      %862 = vdwg.mxu0
      %863 = vmatpush.msra.mxu0 %v505
      %864 = vmatpush.msra.mxu0 %v489
      %865 = vmatpush.msra.mxu0 %v473
      %866 = vmatpush.msra.mxu0 %v457
      %867 = vmatpush.msra.mxu0 %v441
      %868 = vmatpush.msra.mxu0 %v425
      %869 = vmatpush.msra.mxu0 %v409
      %870 = vmatpush.msra.mxu0 %v393
      %871 = vmatpush.msra.mxu0 %v377
      %872 = vmatpush.msra.mxu0 %v361
      %873 = vmatpush.msra.mxu0 %v345
      %874 = vmatpush.msra.mxu0 %v329
      %875 = vmatpush.msra.mxu0 %v313
      %876 = vmatpush.msra.mxu0 %v297
      %877 = vmatpush.msra.mxu0 %v281
      %878 = vmatpush.msra.mxu0 %v265
      %879 = vmatmul.f32.gmra.mxu0 %v259
      %v880 = vpop.f32.mrf.mxu0
      %v881 = vadd.f32 %v697, %v880
      %882 = vdwg.mxu0
      %883 = vmatpush.msra.mxu0 0.0
      %884 = vmatpush.msra.mxu0 0.0
      %885 = vmatpush.msra.mxu0 0.0
      %886 = vmatpush.msra.mxu0 0.0
      %887 = vmatpush.msra.mxu0 0.0
      %888 = vmatpush.msra.mxu0 %v681
      %889 = vmatpush.msra.mxu0 %v665
      %890 = vmatpush.msra.mxu0 %v649
      %891 = vmatpush.msra.mxu0 %v633
      %892 = vmatpush.msra.mxu0 %v617
      %893 = vmatpush.msra.mxu0 %v601
      %894 = vmatpush.msra.mxu0 %v585
      %895 = vmatpush.msra.mxu0 %v569
      %896 = vmatpush.msra.mxu0 %v553
      %897 = vmatpush.msra.mxu0 %v537
      %898 = vmatpush.msra.mxu0 %v521
      %899 = vmatmul.f32.gmra.mxu0 %v701
      %v900 = vpop.f32.mrf.mxu0
      %v901 = vadd.f32 %v881, %v900
      %902 = vdwg.mxu0
      %903 = vmatpush.msra.mxu0 %v506
      %904 = vmatpush.msra.mxu0 %v490
      %905 = vmatpush.msra.mxu0 %v474
      %906 = vmatpush.msra.mxu0 %v458
      %907 = vmatpush.msra.mxu0 %v442
      %908 = vmatpush.msra.mxu0 %v426
      %909 = vmatpush.msra.mxu0 %v410
      %910 = vmatpush.msra.mxu0 %v394
      %911 = vmatpush.msra.mxu0 %v378
      %912 = vmatpush.msra.mxu0 %v362
      %913 = vmatpush.msra.mxu0 %v346
      %914 = vmatpush.msra.mxu0 %v330
      %915 = vmatpush.msra.mxu0 %v314
      %916 = vmatpush.msra.mxu0 %v298
      %917 = vmatpush.msra.mxu0 %v282
      %918 = vmatpush.msra.mxu0 %v266
      %919 = vmatmul.f32.gmra.mxu0 %v259
      %v920 = vpop.f32.mrf.mxu0
      %v921 = vadd.f32 %v697, %v920
      %922 = vdwg.mxu0
      %923 = vmatpush.msra.mxu0 0.0
      %924 = vmatpush.msra.mxu0 0.0
      %925 = vmatpush.msra.mxu0 0.0
      %926 = vmatpush.msra.mxu0 0.0
      %927 = vmatpush.msra.mxu0 0.0
      %928 = vmatpush.msra.mxu0 %v682
      %929 = vmatpush.msra.mxu0 %v666
      %930 = vmatpush.msra.mxu0 %v650
      %931 = vmatpush.msra.mxu0 %v634
      %932 = vmatpush.msra.mxu0 %v618
      %933 = vmatpush.msra.mxu0 %v602
      %934 = vmatpush.msra.mxu0 %v586
      %935 = vmatpush.msra.mxu0 %v570
      %936 = vmatpush.msra.mxu0 %v554
      %937 = vmatpush.msra.mxu0 %v538
      %938 = vmatpush.msra.mxu0 %v522
      %939 = vmatmul.f32.gmra.mxu0 %v701
      %v940 = vpop.f32.mrf.mxu0
      %v941 = vadd.f32 %v921, %v940
      %942 = vdwg.mxu0
      %943 = vmatpush.msra.mxu0 %v507
      %944 = vmatpush.msra.mxu0 %v491
      %945 = vmatpush.msra.mxu0 %v475
      %946 = vmatpush.msra.mxu0 %v459
      %947 = vmatpush.msra.mxu0 %v443
      %948 = vmatpush.msra.mxu0 %v427
      %949 = vmatpush.msra.mxu0 %v411
      %950 = vmatpush.msra.mxu0 %v395
      %951 = vmatpush.msra.mxu0 %v379
      %952 = vmatpush.msra.mxu0 %v363
      %953 = vmatpush.msra.mxu0 %v347
      %954 = vmatpush.msra.mxu0 %v331
      %955 = vmatpush.msra.mxu0 %v315
      %956 = vmatpush.msra.mxu0 %v299
      %957 = vmatpush.msra.mxu0 %v283
      %958 = vmatpush.msra.mxu0 %v267
      %959 = vmatmul.f32.gmra.mxu0 %v259
      %v960 = vpop.f32.mrf.mxu0
      %v961 = vadd.f32 %v697, %v960
      %962 = vdwg.mxu0
      %963 = vmatpush.msra.mxu0 0.0
      %964 = vmatpush.msra.mxu0 0.0
      %965 = vmatpush.msra.mxu0 0.0
      %966 = vmatpush.msra.mxu0 0.0
      %967 = vmatpush.msra.mxu0 0.0
      %968 = vmatpush.msra.mxu0 %v683
      %969 = vmatpush.msra.mxu0 %v667
      %970 = vmatpush.msra.mxu0 %v651
      %971 = vmatpush.msra.mxu0 %v635
      %972 = vmatpush.msra.mxu0 %v619
      %973 = vmatpush.msra.mxu0 %v603
      %974 = vmatpush.msra.mxu0 %v587
      %975 = vmatpush.msra.mxu0 %v571
      %976 = vmatpush.msra.mxu0 %v555
      %977 = vmatpush.msra.mxu0 %v539
      %978 = vmatpush.msra.mxu0 %v523
      %979 = vmatmul.f32.gmra.mxu0 %v701
      %v980 = vpop.f32.mrf.mxu0
      %v981 = vadd.f32 %v961, %v980
      %982 = vdwg.mxu0
      %983 = vmatpush.msra.mxu0 %v508
      %984 = vmatpush.msra.mxu0 %v492
      %985 = vmatpush.msra.mxu0 %v476
      %986 = vmatpush.msra.mxu0 %v460
      %987 = vmatpush.msra.mxu0 %v444
      %988 = vmatpush.msra.mxu0 %v428
      %989 = vmatpush.msra.mxu0 %v412
      %990 = vmatpush.msra.mxu0 %v396
      %991 = vmatpush.msra.mxu0 %v380
      %992 = vmatpush.msra.mxu0 %v364
      %993 = vmatpush.msra.mxu0 %v348
      %994 = vmatpush.msra.mxu0 %v332
      %995 = vmatpush.msra.mxu0 %v316
      %996 = vmatpush.msra.mxu0 %v300
      %997 = vmatpush.msra.mxu0 %v284
      %998 = vmatpush.msra.mxu0 %v268
      %999 = vmatmul.f32.gmra.mxu0 %v259
      %v1000 = vpop.f32.mrf.mxu0
      %v1001 = vadd.f32 %v697, %v1000
      %1002 = vdwg.mxu0
      %1003 = vmatpush.msra.mxu0 0.0
      %1004 = vmatpush.msra.mxu0 0.0
      %1005 = vmatpush.msra.mxu0 0.0
      %1006 = vmatpush.msra.mxu0 0.0
      %1007 = vmatpush.msra.mxu0 0.0
      %1008 = vmatpush.msra.mxu0 %v684
      %1009 = vmatpush.msra.mxu0 %v668
      %1010 = vmatpush.msra.mxu0 %v652
      %1011 = vmatpush.msra.mxu0 %v636
      %1012 = vmatpush.msra.mxu0 %v620
      %1013 = vmatpush.msra.mxu0 %v604
      %1014 = vmatpush.msra.mxu0 %v588
      %1015 = vmatpush.msra.mxu0 %v572
      %1016 = vmatpush.msra.mxu0 %v556
      %1017 = vmatpush.msra.mxu0 %v540
      %1018 = vmatpush.msra.mxu0 %v524
      %1019 = vmatmul.f32.gmra.mxu0 %v701
      %v1020 = vpop.f32.mrf.mxu0
      %v1021 = vadd.f32 %v1001, %v1020
      %1022 = vdwg.mxu0
      %1023 = vmatpush.msra.mxu0 %v509
      %1024 = vmatpush.msra.mxu0 %v493
      %1025 = vmatpush.msra.mxu0 %v477
      %1026 = vmatpush.msra.mxu0 %v461
      %1027 = vmatpush.msra.mxu0 %v445
      %1028 = vmatpush.msra.mxu0 %v429
      %1029 = vmatpush.msra.mxu0 %v413
      %1030 = vmatpush.msra.mxu0 %v397
      %1031 = vmatpush.msra.mxu0 %v381
      %1032 = vmatpush.msra.mxu0 %v365
      %1033 = vmatpush.msra.mxu0 %v349
      %1034 = vmatpush.msra.mxu0 %v333
      %1035 = vmatpush.msra.mxu0 %v317
      %1036 = vmatpush.msra.mxu0 %v301
      %1037 = vmatpush.msra.mxu0 %v285
      %1038 = vmatpush.msra.mxu0 %v269
      %1039 = vmatmul.f32.gmra.mxu0 %v259
      %v1040 = vpop.f32.mrf.mxu0
      %v1041 = vadd.f32 %v697, %v1040
      %1042 = vdwg.mxu0
      %1043 = vmatpush.msra.mxu0 0.0
      %1044 = vmatpush.msra.mxu0 0.0
      %1045 = vmatpush.msra.mxu0 0.0
      %1046 = vmatpush.msra.mxu0 0.0
      %1047 = vmatpush.msra.mxu0 0.0
      %1048 = vmatpush.msra.mxu0 %v685
      %1049 = vmatpush.msra.mxu0 %v669
      %1050 = vmatpush.msra.mxu0 %v653
      %1051 = vmatpush.msra.mxu0 %v637
      %1052 = vmatpush.msra.mxu0 %v621
      %1053 = vmatpush.msra.mxu0 %v605
      %1054 = vmatpush.msra.mxu0 %v589
      %1055 = vmatpush.msra.mxu0 %v573
      %1056 = vmatpush.msra.mxu0 %v557
      %1057 = vmatpush.msra.mxu0 %v541
      %1058 = vmatpush.msra.mxu0 %v525
      %1059 = vmatmul.f32.gmra.mxu0 %v701
      %v1060 = vpop.f32.mrf.mxu0
      %v1061 = vadd.f32 %v1041, %v1060
      %1062 = vdwg.mxu0
      %1063 = vmatpush.msra.mxu0 %v510
      %1064 = vmatpush.msra.mxu0 %v494
      %1065 = vmatpush.msra.mxu0 %v478
      %1066 = vmatpush.msra.mxu0 %v462
      %1067 = vmatpush.msra.mxu0 %v446
      %1068 = vmatpush.msra.mxu0 %v430
      %1069 = vmatpush.msra.mxu0 %v414
      %1070 = vmatpush.msra.mxu0 %v398
      %1071 = vmatpush.msra.mxu0 %v382
      %1072 = vmatpush.msra.mxu0 %v366
      %1073 = vmatpush.msra.mxu0 %v350
      %1074 = vmatpush.msra.mxu0 %v334
      %1075 = vmatpush.msra.mxu0 %v318
      %1076 = vmatpush.msra.mxu0 %v302
      %1077 = vmatpush.msra.mxu0 %v286
      %1078 = vmatpush.msra.mxu0 %v270
      %1079 = vmatmul.f32.gmra.mxu0 %v259
      %v1080 = vpop.f32.mrf.mxu0
      %v1081 = vadd.f32 %v697, %v1080
      %1082 = vdwg.mxu0
      %1083 = vmatpush.msra.mxu0 0.0
      %1084 = vmatpush.msra.mxu0 0.0
      %1085 = vmatpush.msra.mxu0 0.0
      %1086 = vmatpush.msra.mxu0 0.0
      %1087 = vmatpush.msra.mxu0 0.0
      %1088 = vmatpush.msra.mxu0 %v686
      %1089 = vmatpush.msra.mxu0 %v670
      %1090 = vmatpush.msra.mxu0 %v654
      %1091 = vmatpush.msra.mxu0 %v638
      %1092 = vmatpush.msra.mxu0 %v622
      %1093 = vmatpush.msra.mxu0 %v606
      %1094 = vmatpush.msra.mxu0 %v590
      %1095 = vmatpush.msra.mxu0 %v574
      %1096 = vmatpush.msra.mxu0 %v558
      %1097 = vmatpush.msra.mxu0 %v542
      %1098 = vmatpush.msra.mxu0 %v526
      %1099 = vmatmul.f32.gmra.mxu0 %v701
      %v1100 = vpop.f32.mrf.mxu0
      %v1101 = vadd.f32 %v1081, %v1100
      %1102 = vdwg.mxu0
      %1103 = vmatpush.msra.mxu0 %v511
      %1104 = vmatpush.msra.mxu0 %v495
      %1105 = vmatpush.msra.mxu0 %v479
      %1106 = vmatpush.msra.mxu0 %v463
      %1107 = vmatpush.msra.mxu0 %v447
      %1108 = vmatpush.msra.mxu0 %v431
      %1109 = vmatpush.msra.mxu0 %v415
      %1110 = vmatpush.msra.mxu0 %v399
      %1111 = vmatpush.msra.mxu0 %v383
      %1112 = vmatpush.msra.mxu0 %v367
      %1113 = vmatpush.msra.mxu0 %v351
      %1114 = vmatpush.msra.mxu0 %v335
      %1115 = vmatpush.msra.mxu0 %v319
      %1116 = vmatpush.msra.mxu0 %v303
      %1117 = vmatpush.msra.mxu0 %v287
      %1118 = vmatpush.msra.mxu0 %v271
      %1119 = vmatmul.f32.gmra.mxu0 %v259
      %v1120 = vpop.f32.mrf.mxu0
      %v1121 = vadd.f32 %v697, %v1120
      %1122 = vdwg.mxu0
      %1123 = vmatpush.msra.mxu0 0.0
      %1124 = vmatpush.msra.mxu0 0.0
      %1125 = vmatpush.msra.mxu0 0.0
      %1126 = vmatpush.msra.mxu0 0.0
      %1127 = vmatpush.msra.mxu0 0.0
      %1128 = vmatpush.msra.mxu0 %v687
      %1129 = vmatpush.msra.mxu0 %v671
      %1130 = vmatpush.msra.mxu0 %v655
      %1131 = vmatpush.msra.mxu0 %v639
      %1132 = vmatpush.msra.mxu0 %v623
      %1133 = vmatpush.msra.mxu0 %v607
      %1134 = vmatpush.msra.mxu0 %v591
      %1135 = vmatpush.msra.mxu0 %v575
      %1136 = vmatpush.msra.mxu0 %v559
      %1137 = vmatpush.msra.mxu0 %v543
      %1138 = vmatpush.msra.mxu0 %v527
      %1139 = vmatmul.f32.gmra.mxu0 %v701
      %v1140 = vpop.f32.mrf.mxu0
      %v1141 = vadd.f32 %v1121, %v1140
      %1142 = vdwg.mxu0
      %1143 = vmatpush.msra.mxu0 %v512
      %1144 = vmatpush.msra.mxu0 %v496
      %1145 = vmatpush.msra.mxu0 %v480
      %1146 = vmatpush.msra.mxu0 %v464
      %1147 = vmatpush.msra.mxu0 %v448
      %1148 = vmatpush.msra.mxu0 %v432
      %1149 = vmatpush.msra.mxu0 %v416
      %1150 = vmatpush.msra.mxu0 %v400
      %1151 = vmatpush.msra.mxu0 %v384
      %1152 = vmatpush.msra.mxu0 %v368
      %1153 = vmatpush.msra.mxu0 %v352
      %1154 = vmatpush.msra.mxu0 %v336
      %1155 = vmatpush.msra.mxu0 %v320
      %1156 = vmatpush.msra.mxu0 %v304
      %1157 = vmatpush.msra.mxu0 %v288
      %1158 = vmatpush.msra.mxu0 %v272
      %1159 = vmatmul.f32.gmra.mxu0 %v259
      %v1160 = vpop.f32.mrf.mxu0
      %v1161 = vadd.f32 %v697, %v1160
      %1162 = vdwg.mxu0
      %1163 = vmatpush.msra.mxu0 0.0
      %1164 = vmatpush.msra.mxu0 0.0
      %1165 = vmatpush.msra.mxu0 0.0
      %1166 = vmatpush.msra.mxu0 0.0
      %1167 = vmatpush.msra.mxu0 0.0
      %1168 = vmatpush.msra.mxu0 %v688
      %1169 = vmatpush.msra.mxu0 %v672
      %1170 = vmatpush.msra.mxu0 %v656
      %1171 = vmatpush.msra.mxu0 %v640
      %1172 = vmatpush.msra.mxu0 %v624
      %1173 = vmatpush.msra.mxu0 %v608
      %1174 = vmatpush.msra.mxu0 %v592
      %1175 = vmatpush.msra.mxu0 %v576
      %1176 = vmatpush.msra.mxu0 %v560
      %1177 = vmatpush.msra.mxu0 %v544
      %1178 = vmatpush.msra.mxu0 %v528
      %1179 = vmatmul.f32.gmra.mxu0 %v701
      %v1180 = vpop.f32.mrf.mxu0
      %v1181 = vadd.f32 %v1161, %v1180
      %1182 = vdwg.mxu0
      %1183 = vmatpush.msra.mxu0 %v513
      %1184 = vmatpush.msra.mxu0 %v497
      %1185 = vmatpush.msra.mxu0 %v481
      %1186 = vmatpush.msra.mxu0 %v465
      %1187 = vmatpush.msra.mxu0 %v449
      %1188 = vmatpush.msra.mxu0 %v433
      %1189 = vmatpush.msra.mxu0 %v417
      %1190 = vmatpush.msra.mxu0 %v401
      %1191 = vmatpush.msra.mxu0 %v385
      %1192 = vmatpush.msra.mxu0 %v369
      %1193 = vmatpush.msra.mxu0 %v353
      %1194 = vmatpush.msra.mxu0 %v337
      %1195 = vmatpush.msra.mxu0 %v321
      %1196 = vmatpush.msra.mxu0 %v305
      %1197 = vmatpush.msra.mxu0 %v289
      %1198 = vmatpush.msra.mxu0 %v273
      %1199 = vmatmul.f32.gmra.mxu0 %v259
      %v1200 = vpop.f32.mrf.mxu0
      %v1201 = vadd.f32 %v697, %v1200
      %1202 = vdwg.mxu0
      %1203 = vmatpush.msra.mxu0 0.0
      %1204 = vmatpush.msra.mxu0 0.0
      %1205 = vmatpush.msra.mxu0 0.0
      %1206 = vmatpush.msra.mxu0 0.0
      %1207 = vmatpush.msra.mxu0 0.0
      %1208 = vmatpush.msra.mxu0 %v689
      %1209 = vmatpush.msra.mxu0 %v673
      %1210 = vmatpush.msra.mxu0 %v657
      %1211 = vmatpush.msra.mxu0 %v641
      %1212 = vmatpush.msra.mxu0 %v625
      %1213 = vmatpush.msra.mxu0 %v609
      %1214 = vmatpush.msra.mxu0 %v593
      %1215 = vmatpush.msra.mxu0 %v577
      %1216 = vmatpush.msra.mxu0 %v561
      %1217 = vmatpush.msra.mxu0 %v545
      %1218 = vmatpush.msra.mxu0 %v529
      %1219 = vmatmul.f32.gmra.mxu0 %v701
      %v1220 = vpop.f32.mrf.mxu0
      %v1221 = vadd.f32 %v1201, %v1220
      %1222 = vdwg.mxu0
      %1223 = vmatpush.msra.mxu0 %v514
      %1224 = vmatpush.msra.mxu0 %v498
      %1225 = vmatpush.msra.mxu0 %v482
      %1226 = vmatpush.msra.mxu0 %v466
      %1227 = vmatpush.msra.mxu0 %v450
      %1228 = vmatpush.msra.mxu0 %v434
      %1229 = vmatpush.msra.mxu0 %v418
      %1230 = vmatpush.msra.mxu0 %v402
      %1231 = vmatpush.msra.mxu0 %v386
      %1232 = vmatpush.msra.mxu0 %v370
      %1233 = vmatpush.msra.mxu0 %v354
      %1234 = vmatpush.msra.mxu0 %v338
      %1235 = vmatpush.msra.mxu0 %v322
      %1236 = vmatpush.msra.mxu0 %v306
      %1237 = vmatpush.msra.mxu0 %v290
      %1238 = vmatpush.msra.mxu0 %v274
      %1239 = vmatmul.f32.gmra.mxu0 %v259
      %v1240 = vpop.f32.mrf.mxu0
      %v1241 = vadd.f32 %v697, %v1240
      %1242 = vdwg.mxu0
      %1243 = vmatpush.msra.mxu0 0.0
      %1244 = vmatpush.msra.mxu0 0.0
      %1245 = vmatpush.msra.mxu0 0.0
      %1246 = vmatpush.msra.mxu0 0.0
      %1247 = vmatpush.msra.mxu0 0.0
      %1248 = vmatpush.msra.mxu0 %v690
      %1249 = vmatpush.msra.mxu0 %v674
      %1250 = vmatpush.msra.mxu0 %v658
      %1251 = vmatpush.msra.mxu0 %v642
      %1252 = vmatpush.msra.mxu0 %v626
      %1253 = vmatpush.msra.mxu0 %v610
      %1254 = vmatpush.msra.mxu0 %v594
      %1255 = vmatpush.msra.mxu0 %v578
      %1256 = vmatpush.msra.mxu0 %v562
      %1257 = vmatpush.msra.mxu0 %v546
      %1258 = vmatpush.msra.mxu0 %v530
      %1259 = vmatmul.f32.gmra.mxu0 %v701
      %v1260 = vpop.f32.mrf.mxu0
      %v1261 = vadd.f32 %v1241, %v1260
      %1262 = vdwg.mxu0
      %1263 = vmatpush.msra.mxu0 %v515
      %1264 = vmatpush.msra.mxu0 %v499
      %1265 = vmatpush.msra.mxu0 %v483
      %1266 = vmatpush.msra.mxu0 %v467
      %1267 = vmatpush.msra.mxu0 %v451
      %1268 = vmatpush.msra.mxu0 %v435
      %1269 = vmatpush.msra.mxu0 %v419
      %1270 = vmatpush.msra.mxu0 %v403
      %1271 = vmatpush.msra.mxu0 %v387
      %1272 = vmatpush.msra.mxu0 %v371
      %1273 = vmatpush.msra.mxu0 %v355
      %1274 = vmatpush.msra.mxu0 %v339
      %1275 = vmatpush.msra.mxu0 %v323
      %1276 = vmatpush.msra.mxu0 %v307
      %1277 = vmatpush.msra.mxu0 %v291
      %1278 = vmatpush.msra.mxu0 %v275
      %1279 = vmatmul.f32.gmra.mxu0 %v259
      %v1280 = vpop.f32.mrf.mxu0
      %v1281 = vadd.f32 %v697, %v1280
      %1282 = vdwg.mxu0
      %1283 = vmatpush.msra.mxu0 0.0
      %1284 = vmatpush.msra.mxu0 0.0
      %1285 = vmatpush.msra.mxu0 0.0
      %1286 = vmatpush.msra.mxu0 0.0
      %1287 = vmatpush.msra.mxu0 0.0
      %1288 = vmatpush.msra.mxu0 %v691
      %1289 = vmatpush.msra.mxu0 %v675
      %1290 = vmatpush.msra.mxu0 %v659
      %1291 = vmatpush.msra.mxu0 %v643
      %1292 = vmatpush.msra.mxu0 %v627
      %1293 = vmatpush.msra.mxu0 %v611
      %1294 = vmatpush.msra.mxu0 %v595
      %1295 = vmatpush.msra.mxu0 %v579
      %1296 = vmatpush.msra.mxu0 %v563
      %1297 = vmatpush.msra.mxu0 %v547
      %1298 = vmatpush.msra.mxu0 %v531
      %1299 = vmatmul.f32.gmra.mxu0 %v701
      %v1300 = vpop.f32.mrf.mxu0
      %v1301 = vadd.f32 %v1281, %v1300
      %1302 = vdwg.mxu0
      %1303 = vmatpush.msra.mxu0 %v516
      %1304 = vmatpush.msra.mxu0 %v500
      %1305 = vmatpush.msra.mxu0 %v484
      %1306 = vmatpush.msra.mxu0 %v468
      %1307 = vmatpush.msra.mxu0 %v452
      %1308 = vmatpush.msra.mxu0 %v436
      %1309 = vmatpush.msra.mxu0 %v420
      %1310 = vmatpush.msra.mxu0 %v404
      %1311 = vmatpush.msra.mxu0 %v388
      %1312 = vmatpush.msra.mxu0 %v372
      %1313 = vmatpush.msra.mxu0 %v356
      %1314 = vmatpush.msra.mxu0 %v340
      %1315 = vmatpush.msra.mxu0 %v324
      %1316 = vmatpush.msra.mxu0 %v308
      %1317 = vmatpush.msra.mxu0 %v292
      %1318 = vmatpush.msra.mxu0 %v276
      %1319 = vmatmul.f32.gmra.mxu0 %v259
      %v1320 = vpop.f32.mrf.mxu0
      %v1321 = vadd.f32 %v697, %v1320
      %1322 = vdwg.mxu0
      %1323 = vmatpush.msra.mxu0 0.0
      %1324 = vmatpush.msra.mxu0 0.0
      %1325 = vmatpush.msra.mxu0 0.0
      %1326 = vmatpush.msra.mxu0 0.0
      %1327 = vmatpush.msra.mxu0 0.0
      %1328 = vmatpush.msra.mxu0 %v692
      %1329 = vmatpush.msra.mxu0 %v676
      %1330 = vmatpush.msra.mxu0 %v660
      %1331 = vmatpush.msra.mxu0 %v644
      %1332 = vmatpush.msra.mxu0 %v628
      %1333 = vmatpush.msra.mxu0 %v612
      %1334 = vmatpush.msra.mxu0 %v596
      %1335 = vmatpush.msra.mxu0 %v580
      %1336 = vmatpush.msra.mxu0 %v564
      %1337 = vmatpush.msra.mxu0 %v548
      %1338 = vmatpush.msra.mxu0 %v532
      %1339 = vmatmul.f32.gmra.mxu0 %v701
      %v1340 = vpop.f32.mrf.mxu0
      %v1341 = vadd.f32 %v1321, %v1340
      %1342 = vdwg.mxu0
      %vm1343 = vcmp.ge.f32.partialorder %v741, 0.0
      %vm1344 = vcmp.ge.f32.partialorder %v781, 0.0
      %vm1345 = vcmp.ge.f32.partialorder %v821, 0.0
      %vm1346 = vcmp.ge.f32.partialorder %v861, 0.0
      %vm1347 = vcmp.ge.f32.partialorder %v901, 0.0
      %vm1348 = vcmp.ge.f32.partialorder %v941, 0.0
      %vm1349 = vcmp.ge.f32.partialorder %v981, 0.0
      %vm1350 = vcmp.ge.f32.partialorder %v1021, 0.0
      %vm1351 = vcmp.ge.f32.partialorder %v1061, 0.0
      %vm1352 = vcmp.ge.f32.partialorder %v1101, 0.0
      %vm1353 = vcmp.ge.f32.partialorder %v1141, 0.0
      %vm1354 = vcmp.ge.f32.partialorder %v1181, 0.0
      %vm1355 = vcmp.ge.f32.partialorder %v1221, 0.0
      %vm1356 = vcmp.ge.f32.partialorder %v1261, 0.0
      %vm1357 = vcmp.ge.f32.partialorder %v1301, 0.0
      %vm1358 = vcmp.ge.f32.partialorder %v1341, 0.0
      %v1359 = vmul.f32 %v741, 0.01
      %v1360 = vmul.f32 %v781, 0.01
      %v1361 = vmul.f32 %v821, 0.01
      %v1362 = vmul.f32 %v861, 0.01
      %v1363 = vmul.f32 %v901, 0.01
      %v1364 = vmul.f32 %v941, 0.01
      %v1365 = vmul.f32 %v981, 0.01
      %v1366 = vmul.f32 %v1021, 0.01
      %v1367 = vmul.f32 %v1061, 0.01
      %v1368 = vmul.f32 %v1101, 0.01
      %v1369 = vmul.f32 %v1141, 0.01
      %v1370 = vmul.f32 %v1181, 0.01
      %v1371 = vmul.f32 %v1221, 0.01
      %v1372 = vmul.f32 %v1261, 0.01
      %v1373 = vmul.f32 %v1301, 0.01
      %v1374 = vmul.f32 %v1341, 0.01
      %v1375 = vsel %vm1343, %v741, %v1359
      %v1376 = vsel %vm1344, %v781, %v1360
      %v1377 = vsel %vm1345, %v821, %v1361
      %v1378 = vsel %vm1346, %v861, %v1362
      %v1379 = vsel %vm1347, %v901, %v1363
      %v1380 = vsel %vm1348, %v941, %v1364
      %v1381 = vsel %vm1349, %v981, %v1365
      %v1382 = vsel %vm1350, %v1021, %v1366
      %v1383 = vsel %vm1351, %v1061, %v1367
      %v1384 = vsel %vm1352, %v1101, %v1368
      %v1385 = vsel %vm1353, %v1141, %v1369
      %v1386 = vsel %vm1354, %v1181, %v1370
      %v1387 = vsel %vm1355, %v1221, %v1371
      %v1388 = vsel %vm1356, %v1261, %v1372
      %v1389 = vsel %vm1357, %v1301, %v1373
      %v1390 = vsel %vm1358, %v1341, %v1374
      %1391 = vst [vmem:[%s257] sm:$0xff] %v1375
      %1392 = vst [vmem:[%s257 + $0x8] sm:$0xff] %v1376
      %1393 = vst [vmem:[%s257 + $0x10] sm:$0xff] %v1377
      %1394 = vst [vmem:[%s257 + $0x18] sm:$0xff] %v1378
      %1395 = vst [vmem:[%s257 + $0x20] sm:$0xff] %v1379
      %1396 = vst [vmem:[%s257 + $0x28] sm:$0xff] %v1380
      %1397 = vst [vmem:[%s257 + $0x30] sm:$0xff] %v1381
      %1398 = vst [vmem:[%s257 + $0x38] sm:$0xff] %v1382
      %1399 = vst [vmem:[%s257 + $0x40] sm:$0xff] %v1383
      %1400 = vst [vmem:[%s257 + $0x48] sm:$0xff] %v1384
      %1401 = vst [vmem:[%s257 + $0x50] sm:$0xff] %v1385
      %1402 = vst [vmem:[%s257 + $0x58] sm:$0xff] %v1386
      %1403 = vst [vmem:[%s257 + $0x60] sm:$0xff] %v1387
      %1404 = vst [vmem:[%s257 + $0x68] sm:$0xff] %v1388
      %1405 = vst [vmem:[%s257 + $0x70] sm:$0xff] %v1389
      %1406 = vst [vmem:[%s257 + $0x78] sm:$0xff] %v1390
      %p1407 = scmp.eq.s32.totalorder %s21, 0
      %p1408 = scmp.eq.s32.totalorder %s22, 0
      %p1409 = pnand %p1407, %p1408
      %p1410 = pneg %p1409
      // Predicated region
      $region33: #{decoder_block_forward.21} parent=31 // pred_check
        _
      $region34: #{decoder_block_forward.21} parent=31 // pred_check_branch
        %1412 = sbr.rel (%p1409) target = $region36
      $region35: #{decoder_block_forward.21} parent=31 // pred_region
        %vm1413 = vcmask 7168
        %1414 = vst.msk [vmem:[%s4] sm:$0xff] %vm1413, 0.0
        %1415 = vst.msk [vmem:[%s5] sm:$0xff] %vm1413, 0.0
      $region36: #{decoder_block_forward.21} parent=31 // pred_fallthru
        _
      %v1416 = vld [vmem:[%s4] sm:$0xff]
      %v1417 = vadd.f32 %v1375, %v1376
      %v1418 = vadd.f32 %v1417, %v1377
      %v1419 = vadd.f32 %v1418, %v1378
      %v1420 = vadd.f32 %v1419, %v1379
      %v1421 = vadd.f32 %v1420, %v1380
      %v1422 = vadd.f32 %v1421, %v1381
      %v1423 = vadd.f32 %v1422, %v1382
      %v1424 = vadd.f32 %v1423, %v1383
      %v1425 = vadd.f32 %v1424, %v1384
      %v1426 = vadd.f32 %v1425, %v1385
      %v1427 = vadd.f32 %v1426, %v1386
      %v1428 = vadd.f32 %v1427, %v1387
      %v1429 = vadd.f32 %v1428, %v1388
      %v1430 = vadd.f32 %v1429, %v1389
      %v1431 = vadd.f32 %v1430, %v1390
      %1432 = vadd.xlane.f32.xlu0 %v1431
      %v1433 = vpop.xlane.xlu0 %1432
      %v1434 = vadd.f32 %v1416, %v1433
      %vm1435 = vcmask 7168
      %1436 = vst.msk [vmem:[%s4] sm:$0xff] %vm1435, %v1434
      %v1437 = vld [vmem:[%s5] sm:$0xff]
      %v1438 = vmul.f32 %v1375, %v1375
      %v1439 = vmul.f32 %v1376, %v1376
      %v1440 = vmul.f32 %v1377, %v1377
      %v1441 = vmul.f32 %v1378, %v1378
      %v1442 = vmul.f32 %v1379, %v1379
      %v1443 = vmul.f32 %v1380, %v1380
      %v1444 = vmul.f32 %v1381, %v1381
      %v1445 = vmul.f32 %v1382, %v1382
      %v1446 = vmul.f32 %v1383, %v1383
      %v1447 = vmul.f32 %v1384, %v1384
      %v1448 = vmul.f32 %v1385, %v1385
      %v1449 = vmul.f32 %v1386, %v1386
      %v1450 = vmul.f32 %v1387, %v1387
      %v1451 = vmul.f32 %v1388, %v1388
      %v1452 = vmul.f32 %v1389, %v1389
      %v1453 = vmul.f32 %v1390, %v1390
      %v1454 = vadd.f32 %v1438, %v1439
      %v1455 = vadd.f32 %v1454, %v1440
      %v1456 = vadd.f32 %v1455, %v1441
      %v1457 = vadd.f32 %v1456, %v1442
      %v1458 = vadd.f32 %v1457, %v1443
      %v1459 = vadd.f32 %v1458, %v1444
      %v1460 = vadd.f32 %v1459, %v1445
      %v1461 = vadd.f32 %v1460, %v1446
      %v1462 = vadd.f32 %v1461, %v1447
      %v1463 = vadd.f32 %v1462, %v1448
      %v1464 = vadd.f32 %v1463, %v1449
      %v1465 = vadd.f32 %v1464, %v1450
      %v1466 = vadd.f32 %v1465, %v1451
      %v1467 = vadd.f32 %v1466, %v1452
      %v1468 = vadd.f32 %v1467, %v1453
      %1469 = vadd.xlane.f32.xlu0 %v1468
      %v1470 = vpop.xlane.xlu0 %1469
      %v1471 = vadd.f32 %v1437, %v1470
      %1472 = vst.msk [vmem:[%s5] sm:$0xff] %vm1435, %v1471
      %s1473 = smul.u32 16, %s22
      %p1474 = scmp.lt.s32.totalorder %s21, 1
      %s1475 = scalar_select %p1474, %s21, 1
      %p1476 = scmp.lt.s32.totalorder %s1473, 15
      %s1477 = scalar_select %p1476, %s1473, 15
      %s1478 = smul.addr %s1475, 16
      %s1479 = sadd.s32 %s1477, %s1478
      %s1480 = smul.addr %s1479, 8
      %s1481 = scalar_lea.vmem %s3, %s1480
      // Predicated region
      $region37: #{decoder_block_forward.21} parent=31 // pred_check
        %p1482 = pneg %p119
      $region38: #{decoder_block_forward.21} parent=31 // pred_check_branch
        %1484 = sbr.rel (%p1482) target = $region40
      $region39: #{decoder_block_forward.21} parent=31 // pred_region
        %s1485 = smul.u32 16, %s22
      $region40: #{decoder_block_forward.21} parent=31 // pred_fallthru
        _
      // Predicated region
      $region41: #{decoder_block_forward.21} parent=31 // pred_check
        %p1486 = pneg %p140
      $region42: #{decoder_block_forward.21} parent=31 // pred_check_branch
        %1488 = sbr.rel (%p1486) target = $region44
      $region43: #{decoder_block_forward.21} parent=31 // pred_region
        _
      $region44: #{decoder_block_forward.21} parent=31 // pred_fallthru
        _
      // Predicated region
      $region45: #{decoder_block_forward.21} parent=31 // pred_check
        %p1489 = pneg %p161
      $region46: #{decoder_block_forward.21} parent=31 // pred_check_branch
        %1491 = sbr.rel (%p1489) target = $region48
      $region47: #{decoder_block_forward.21} parent=31 // pred_region
        _
      $region48: #{decoder_block_forward.21} parent=31 // pred_fallthru
        _
      // Predicated region
      $region49: #{decoder_block_forward.21} parent=31 // pred_check
        %p1492 = pneg %p140
      $region50: #{decoder_block_forward.21} parent=31 // pred_check_branch
        %1494 = sbr.rel (%p1492) target = $region52
      $region51: #{decoder_block_forward.21} parent=31 // pred_region
        _
      $region52: #{decoder_block_forward.21} parent=31 // pred_fallthru
        _
      // Predicated region
      $region53: #{decoder_block_forward.21} parent=31 // pred_check
        %p1495 = pneg %p161
      $region54: #{decoder_block_forward.21} parent=31 // pred_check_branch
        %1497 = sbr.rel (%p1495) target = $region56
      $region55: #{decoder_block_forward.21} parent=31 // pred_region
        _
      $region56: #{decoder_block_forward.21} parent=31 // pred_fallthru
        _
    $region32: #{decoder_block_forward.21} parent=5 // pred_fallthru
      _
    %p1498 = scmp.le.s32.totalorder 2, %s12
    // Predicated region
    $region57: #{decoder_block_forward.21} parent=5 // pred_check
      %p1499 = pneg %p1498
    $region58: #{decoder_block_forward.21} parent=5 // pred_check_branch
      %1501 = sbr.rel (%p1499) target = $region60
    $region59: #{decoder_block_forward.21} parent=5 // pred_region
      %s1502 = ssub.s32 %s12, 2
      // Predicated region
      $region61: #{decoder_block_forward.21} parent=59 // pred_check
        %p1503 = pneg %p125
      $region62: #{decoder_block_forward.21} parent=59 // pred_check_branch
        %1505 = sbr.rel (%p1503) target = $region64
      $region63: #{decoder_block_forward.21} parent=59 // pred_region
        %s1506 = smul.u32 16, %s24
        %p1507 = scmp.lt.s32.totalorder %s23, 1
        %s1508 = scalar_select %p1507, %s23, 1
        %p1509 = scmp.lt.s32.totalorder %s1506, 15
        %s1510 = scalar_select %p1509, %s1506, 15
        %s1511 = smul.addr %s1508, 16
        %s1512 = sadd.s32 %s1510, %s1511
        %s1513 = smul.addr %s1512, 8
        %s1514 = scalar_lea.vmem %s3, %s1513
      $region64: #{decoder_block_forward.21} parent=59 // pred_fallthru
        _
    $region60: #{decoder_block_forward.21} parent=5 // pred_fallthru
      _
  $region6: #{decoder_block_forward.21} parent=0 // loop_footer
    %s16 = sadd.s32 1, %s12
  $region7: #{decoder_block_forward.21} parent=0 // loop_footer_branch
    %11 = sbr.rel target = $region3
  $region8: #{decoder_block_forward.21} parent=0 // loop_exit
    _

// kernel: decoder_block_forward.23
$region0: #{decoder_block_forward.23}
  #allocation0 [shape = 'u32[]', space=smem, size = 0x4, offset = 0x4, fixed_abs, tag = 'smem constant byte address 0x4 - core index']
  #allocation1 [shape = 'u32[72,128]{1,0:T(1,128)}', space=vmem, size = 0x9000, scoped, tag = 'internal scratch']
  %s0 = inlined_call_operand.vmem [shape: f32[2,8,2048], index: 0, kind: input, shape index: {}]
  %s1 = inlined_call_operand.vmem [shape: f32[2,8,2048], index: 1, kind: input, shape index: {}]
  %s2 = inlined_call_operand.vmem [shape: f32[8,1], index: 2, kind: input, shape index: {}]
  %s3 = inlined_call_operand.vmem [shape: f32[8,1], index: 3, kind: input, shape index: {}]
  %s4 = inlined_call_operand.vmem [shape: f32[2,8,2048], index: 4, kind: output, shape index: {}]
  %s5 = sld [smem:[#allocation0]]
  $region49: #{decoder_block_forward.23} parent=0
    _
  %s7 = ssub.s32 1, %s5
  %s8 = scalar_select 0, %s7, %s5
  loop: start=0, step=1, limit=4
  $region2: #{decoder_block_forward.23} parent=0 // loop_pre_header
    _
  $region3: #{decoder_block_forward.23} parent=0 // loop_header
    %s10 = sphi 0, %s14
    %p11 = scmp.ge.s32.totalorder %s10, 4
    %s17 = sphi 0, %s29
    %s18 = sphi 0, %s25
    %s19 = sphi 0, %s17
    %s20 = sphi 0, %s18
    %s21 = sphi 0, %s19
    %s22 = sphi 0, %s20
    %s34 = sphi 0, %s36
    %s37 = sphi 0, %s34
    %s38 = sphi 0, %s37
    %s54 = sphi 0, %s38
    %s62 = sphi 0, %s64
    %s65 = sphi 0, %s62
    %s66 = sphi 0, %s65
    %s82 = sphi 0, %s66
    %s86 = sphi 0, %s86
    %s88 = sphi 0, %s86
    %s89 = sphi 0, %s88
    %s103 = sphi 0, %s89
    %s107 = sphi 0, %s107
    %s109 = sphi 0, %s107
    %s110 = sphi 0, %s109
    %s124 = sphi 0, %s110
    %s132 = sphi 0, %s134
    %s135 = sphi 0, %s132
    %s136 = sphi 0, %s135
    %s152 = sphi 0, %s136
  $region4: #{decoder_block_forward.23} parent=0 // loop_header_branch
    %13 = sbr.rel (%p11) target = $region8
  $region5: #{decoder_block_forward.23} parent=0 // loop_body
    %s15 = ssub.s32 %s10, 1
    %s16 = ssub.s32 %s10, 2
    %s23 = sadd.s32 1, %s18
    %p24 = scmp.ge.s32.totalorder %s23, 1
    %s25 = scalar_select %p24, 0, %s23
    %s26 = sadd.s32 1, %s17
    %s27 = scalar_select %p24, %s26, %s17
    %p28 = scmp.ge.s32.totalorder %s27, 2
    %s29 = scalar_select %p28, 0, %s27
    %s30 = ssub.s32 %s17, %s29
    %s31 = ssub.s32 %s18, %s25
    %s32 = sor.u32 %s30, %s31
    %p33 = scmp.eq.s32.totalorder %s32, 0
    %s35 = sadd.s32 %s34, 1
    %s36 = scalar_select %p33, %s34, %s35
    %p39 = pneg %p33
    %p40 = scmp.eq.s32.totalorder %s10, 1
    %p41 = por %p39, %p40
    %p42 = scmp.ne.s32.totalorder %s34, %s37
    %p43 = scmp.eq.s32.totalorder %s10, 0
    %p44 = por %p42, %p43
    %p45 = scmp.ne.s32.totalorder %s34, %s37
    %p46 = scmp.eq.s32.totalorder %s15, 1
    %p47 = por %p45, %p46
    %p48 = scmp.ne.s32.totalorder %s37, %s38
    %p49 = scmp.eq.s32.totalorder %s15, 0
    %p50 = por %p48, %p49
    %p51 = scmp.ne.s32.totalorder %s37, %s38
    %p52 = scmp.eq.s32.totalorder %s16, 1
    %p53 = por %p51, %p52
    %p55 = scmp.ne.s32.totalorder %s38, %s54
    %p56 = scmp.eq.s32.totalorder %s16, 0
    %p57 = por %p55, %p56
    %s58 = ssub.s32 %s17, %s29
    %s59 = ssub.s32 %s18, %s25
    %s60 = sor.u32 %s58, %s59
    %p61 = scmp.eq.s32.totalorder %s60, 0
    %s63 = sadd.s32 %s62, 1
    %s64 = scalar_select %p61, %s62, %s63
    %p67 = pneg %p61
    %p68 = scmp.eq.s32.totalorder %s10, 1
    %p69 = por %p67, %p68
    %p70 = scmp.ne.s32.totalorder %s62, %s65
    %p71 = scmp.eq.s32.totalorder %s10, 0
    %p72 = por %p70, %p71
    %p73 = scmp.ne.s32.totalorder %s62, %s65
    %p74 = scmp.eq.s32.totalorder %s15, 1
    %p75 = por %p73, %p74
    %p76 = scmp.ne.s32.totalorder %s65, %s66
    %p77 = scmp.eq.s32.totalorder %s15, 0
    %p78 = por %p76, %p77
    %p79 = scmp.ne.s32.totalorder %s65, %s66
    %p80 = scmp.eq.s32.totalorder %s16, 1
    %p81 = por %p79, %p80
    %p83 = scmp.ne.s32.totalorder %s66, %s82
    %p84 = scmp.eq.s32.totalorder %s16, 0
    %p85 = por %p83, %p84
    %s87 = sadd.s32 %s86, 1
    %p90 = scmp.eq.s32.totalorder %s10, 1
    %p91 = scmp.ne.s32.totalorder %s86, %s88
    %p92 = scmp.eq.s32.totalorder %s10, 0
    %p93 = por %p91, %p92
    %p94 = scmp.ne.s32.totalorder %s86, %s88
    %p95 = scmp.eq.s32.totalorder %s15, 1
    %p96 = por %p94, %p95
    %p97 = scmp.ne.s32.totalorder %s88, %s89
    %p98 = scmp.eq.s32.totalorder %s15, 0
    %p99 = por %p97, %p98
    %p100 = scmp.ne.s32.totalorder %s88, %s89
    %p101 = scmp.eq.s32.totalorder %s16, 1
    %p102 = por %p100, %p101
    %p104 = scmp.ne.s32.totalorder %s89, %s103
    %p105 = scmp.eq.s32.totalorder %s16, 0
    %p106 = por %p104, %p105
    %s108 = sadd.s32 %s107, 1
    %p111 = scmp.eq.s32.totalorder %s10, 1
    %p112 = scmp.ne.s32.totalorder %s107, %s109
    %p113 = scmp.eq.s32.totalorder %s10, 0
    %p114 = por %p112, %p113
    %p115 = scmp.ne.s32.totalorder %s107, %s109
    %p116 = scmp.eq.s32.totalorder %s15, 1
    %p117 = por %p115, %p116
    %p118 = scmp.ne.s32.totalorder %s109, %s110
    %p119 = scmp.eq.s32.totalorder %s15, 0
    %p120 = por %p118, %p119
    %p121 = scmp.ne.s32.totalorder %s109, %s110
    %p122 = scmp.eq.s32.totalorder %s16, 1
    %p123 = por %p121, %p122
    %p125 = scmp.ne.s32.totalorder %s110, %s124
    %p126 = scmp.eq.s32.totalorder %s16, 0
    %p127 = por %p125, %p126
    %s128 = ssub.s32 %s17, %s29
    %s129 = ssub.s32 %s18, %s25
    %s130 = sor.u32 %s128, %s129
    %p131 = scmp.eq.s32.totalorder %s130, 0
    %s133 = sadd.s32 %s132, 1
    %s134 = scalar_select %p131, %s132, %s133
    %p137 = pneg %p131
    %p138 = scmp.eq.s32.totalorder %s10, 1
    %p139 = por %p137, %p138
    %p140 = scmp.ne.s32.totalorder %s132, %s135
    %p141 = scmp.eq.s32.totalorder %s10, 0
    %p142 = por %p140, %p141
    %p143 = scmp.ne.s32.totalorder %s132, %s135
    %p144 = scmp.eq.s32.totalorder %s15, 1
    %p145 = por %p143, %p144
    %p146 = scmp.ne.s32.totalorder %s135, %s136
    %p147 = scmp.eq.s32.totalorder %s15, 0
    %p148 = por %p146, %p147
    %p149 = scmp.ne.s32.totalorder %s135, %s136
    %p150 = scmp.eq.s32.totalorder %s16, 1
    %p151 = por %p149, %p150
    %p153 = scmp.ne.s32.totalorder %s136, %s152
    %p154 = scmp.eq.s32.totalorder %s16, 0
    %p155 = por %p153, %p154
    %p156 = scmp.le.s32.totalorder 1, %s10
    %p157 = scmp.lt.s32.totalorder %s10, 3
    %p158 = pnand %p156, %p157
    %p159 = pneg %p158
    // Predicated region
    $region9: #{decoder_block_forward.23} parent=5 // pred_check
      _
    $region10: #{decoder_block_forward.23} parent=5 // pred_check_branch
      %161 = sbr.rel (%p158) target = $region12
    $region11: #{decoder_block_forward.23} parent=5 // pred_region
      %s162 = ssub.s32 %s10, 1
      // Predicated region
      $region13: #{decoder_block_forward.23} parent=11 // pred_check
        %p163 = pneg %p99
      $region14: #{decoder_block_forward.23} parent=11 // pred_check_branch
        %165 = sbr.rel (%p163) target = $region16
      $region15: #{decoder_block_forward.23} parent=11 // pred_region
        _
      $region16: #{decoder_block_forward.23} parent=11 // pred_fallthru
        _
      // Predicated region
      $region17: #{decoder_block_forward.23} parent=11 // pred_check
        %p166 = pneg %p120
      $region18: #{decoder_block_forward.23} parent=11 // pred_check_branch
        %168 = sbr.rel (%p166) target = $region20
      $region19: #{decoder_block_forward.23} parent=11 // pred_region
        _
      $region20: #{decoder_block_forward.23} parent=11 // pred_fallthru
        _
    $region12: #{decoder_block_forward.23} parent=5 // pred_fallthru
      _
    %p169 = scmp.lt.s32.totalorder %s10, 2
    // Predicated region
    $region21: #{decoder_block_forward.23} parent=5 // pred_check
      %p170 = pneg %p169
    $region22: #{decoder_block_forward.23} parent=5 // pred_check_branch
      %172 = sbr.rel (%p170) target = $region24
    $region23: #{decoder_block_forward.23} parent=5 // pred_region
      // Predicated region
      $region25: #{decoder_block_forward.23} parent=23 // pred_check
        %p173 = pneg %p44
      $region26: #{decoder_block_forward.23} parent=23 // pred_check_branch
        %175 = sbr.rel (%p173) target = $region28
      $region27: #{decoder_block_forward.23} parent=23 // pred_region
        %s176 = smul.u32 16, %s18
        %p177 = scmp.lt.s32.totalorder %s17, 1
        %s178 = scalar_select %p177, %s17, 1
        %p179 = scmp.lt.s32.totalorder %s176, 15
        %s180 = scalar_select %p179, %s176, 15
        %s181 = smul.addr %s178, 16
        %s182 = sadd.s32 %s180, %s181
        %s183 = smul.addr %s182, 8
        %s184 = scalar_lea.vmem %s0, %s183
        %s185 = smul.u32 16, %s18
      $region28: #{decoder_block_forward.23} parent=23 // pred_fallthru
        _
      // Predicated region
      $region29: #{decoder_block_forward.23} parent=23 // pred_check
        %p186 = pneg %p72
      $region30: #{decoder_block_forward.23} parent=23 // pred_check_branch
        %188 = sbr.rel (%p186) target = $region32
      $region31: #{decoder_block_forward.23} parent=23 // pred_region
        %s189 = smul.u32 16, %s18
        %p190 = scmp.lt.s32.totalorder %s17, 1
        %s191 = scalar_select %p190, %s17, 1
        %p192 = scmp.lt.s32.totalorder %s189, 15
        %s193 = scalar_select %p192, %s189, 15
        %s194 = smul.addr %s191, 16
        %s195 = sadd.s32 %s193, %s194
        %s196 = smul.addr %s195, 8
        %s197 = scalar_lea.vmem %s1, %s196
        %s198 = smul.u32 16, %s18
      $region32: #{decoder_block_forward.23} parent=23 // pred_fallthru
        _
    $region24: #{decoder_block_forward.23} parent=5 // pred_fallthru
      _
    %p199 = scmp.le.s32.totalorder 1, %s10
    %p200 = scmp.lt.s32.totalorder %s10, 3
    %p201 = pnand %p199, %p200
    %p202 = pneg %p201
    // Predicated region
    $region33: #{decoder_block_forward.23} parent=5 // pred_check
      _
    $region34: #{decoder_block_forward.23} parent=5 // pred_check_branch
      %204 = sbr.rel (%p201) target = $region36
    $region35: #{decoder_block_forward.23} parent=5 // pred_region
      %s205 = ssub.s32 %s10, 1
      %s206 = smul.u32 16, %s20
      %p207 = scmp.lt.s32.totalorder %s19, 1
      %s208 = scalar_select %p207, %s19, 1
      %p209 = scmp.lt.s32.totalorder %s206, 15
      %s210 = scalar_select %p209, %s206, 15
      %s211 = smul.addr %s208, 16
      %s212 = sadd.s32 %s210, %s211
      %s213 = smul.addr %s212, 8
      %s214 = scalar_lea.vmem %s0, %s213
      %p215 = pneg %p50
      %p216 = pneg %p47
      %s217 = smul.u32 16, %s20
      %p218 = scmp.lt.s32.totalorder %s19, 1
      %s219 = scalar_select %p218, %s19, 1
      %p220 = scmp.lt.s32.totalorder %s217, 15
      %s221 = scalar_select %p220, %s217, 15
      %s222 = smul.addr %s219, 16
      %s223 = sadd.s32 %s221, %s222
      %s224 = smul.addr %s223, 8
      %s225 = scalar_lea.vmem %s1, %s224
      %p226 = pneg %p78
      %p227 = pneg %p75
      %p228 = pneg %p99
      %p229 = pneg %p96
      %p230 = pneg %p120
      %p231 = pneg %p117
      %p232 = pneg %p148
      %p233 = pneg %p145
      %s234 = smul.u32 16, %s20
      %p235 = scmp.lt.s32.totalorder %s19, 1
      %s236 = scalar_select %p235, %s19, 1
      %p237 = scmp.lt.s32.totalorder %s234, 15
      %s238 = scalar_select %p237, %s234, 15
      %s239 = smul.addr %s236, 16
      %s240 = sadd.s32 %s238, %s239
      %s241 = smul.addr %s240, 8
      %s242 = scalar_lea.vmem %s4, %s241
      %s243 = smul.u32 16, %s20
      %p244 = scmp.lt.s32.totalorder %s19, 1
      %s245 = scalar_select %p244, %s19, 1
      %p246 = scmp.lt.s32.totalorder %s243, 15
      %s247 = scalar_select %p246, %s243, 15
      %s248 = smul.addr %s245, 16
      %s249 = sadd.s32 %s247, %s248
      %s250 = smul.addr %s249, 8
      %s251 = scalar_lea.vmem %s0, %s250
      %s252 = smul.u32 16, %s20
      %s253 = smul.u32 16, %s20
      %p254 = scmp.lt.s32.totalorder %s19, 1
      %s255 = scalar_select %p254, %s19, 1
      %p256 = scmp.lt.s32.totalorder %s253, 15
      %s257 = scalar_select %p256, %s253, 15
      %s258 = smul.addr %s255, 16
      %s259 = sadd.s32 %s257, %s258
      %s260 = smul.addr %s259, 8
      %s261 = scalar_lea.vmem %s1, %s260
      %s262 = smul.u32 16, %s20
      %s263 = smul.u32 16, %s20
      %p264 = scmp.lt.s32.totalorder %s19, 1
      %s265 = scalar_select %p264, %s19, 1
      %p266 = scmp.lt.s32.totalorder %s263, 15
      %s267 = scalar_select %p266, %s263, 15
      %s268 = smul.addr %s265, 16
      %s269 = sadd.s32 %s267, %s268
      %s270 = smul.addr %s269, 8
      %s271 = scalar_lea.vmem %s4, %s270
      %s272 = smul.u32 16, %s20
      %v273 = vld [vmem:[%s251] sm:$0xff]
      %v274 = vld [vmem:[%s251 + $0x8] sm:$0xff]
      %v275 = vld [vmem:[%s251 + $0x10] sm:$0xff]
      %v276 = vld [vmem:[%s251 + $0x18] sm:$0xff]
      %v277 = vld [vmem:[%s251 + $0x20] sm:$0xff]
      %v278 = vld [vmem:[%s251 + $0x28] sm:$0xff]
      %v279 = vld [vmem:[%s251 + $0x30] sm:$0xff]
      %v280 = vld [vmem:[%s251 + $0x38] sm:$0xff]
      %v281 = vld [vmem:[%s251 + $0x40] sm:$0xff]
      %v282 = vld [vmem:[%s251 + $0x48] sm:$0xff]
      %v283 = vld [vmem:[%s251 + $0x50] sm:$0xff]
      %v284 = vld [vmem:[%s251 + $0x58] sm:$0xff]
      %v285 = vld [vmem:[%s251 + $0x60] sm:$0xff]
      %v286 = vld [vmem:[%s251 + $0x68] sm:$0xff]
      %v287 = vld [vmem:[%s251 + $0x70] sm:$0xff]
      %v288 = vld [vmem:[%s251 + $0x78] sm:$0xff]
      %v289 = vld [vmem:[%s2] sm:$0xff]
      %291 = vset.pattern.permute.xlu0 0
      %292 = vperm.xlu0 %291, %v289
      %v293 = vpop.permute.xlu0 %292
      %v295 = vmul.f32 %v273, %v293
      %v296 = vmul.f32 %v274, %v293
      %v297 = vmul.f32 %v275, %v293
      %v298 = vmul.f32 %v276, %v293
      %v299 = vmul.f32 %v277, %v293
      %v300 = vmul.f32 %v278, %v293
      %v301 = vmul.f32 %v279, %v293
      %v302 = vmul.f32 %v280, %v293
      %v303 = vmul.f32 %v281, %v293
      %v304 = vmul.f32 %v282, %v293
      %v305 = vmul.f32 %v283, %v293
      %v306 = vmul.f32 %v284, %v293
      %v307 = vmul.f32 %v285, %v293
      %v308 = vmul.f32 %v286, %v293
      %v309 = vmul.f32 %v287, %v293
      %v310 = vmul.f32 %v288, %v293
      %v311 = vld [vmem:[%s3] sm:$0xff]
      %313 = vset.pattern.permute.xlu0 0
      %314 = vperm.xlu0 %313, %v311
      %v315 = vpop.permute.xlu0 %314
      %v317 = vadd.f32 %v295, %v315
      %v318 = vadd.f32 %v296, %v315
      %v319 = vadd.f32 %v297, %v315
      %v320 = vadd.f32 %v298, %v315
      %v321 = vadd.f32 %v299, %v315
      %v322 = vadd.f32 %v300, %v315
      %v323 = vadd.f32 %v301, %v315
      %v324 = vadd.f32 %v302, %v315
      %v325 = vadd.f32 %v303, %v315
      %v326 = vadd.f32 %v304, %v315
      %v327 = vadd.f32 %v305, %v315
      %v328 = vadd.f32 %v306, %v315
      %v329 = vadd.f32 %v307, %v315
      %v330 = vadd.f32 %v308, %v315
      %v331 = vadd.f32 %v309, %v315
      %v332 = vadd.f32 %v310, %v315
      %v333 = vld [vmem:[%s261] sm:$0xff]
      %v334 = vld [vmem:[%s261 + $0x8] sm:$0xff]
      %v335 = vld [vmem:[%s261 + $0x10] sm:$0xff]
      %v336 = vld [vmem:[%s261 + $0x18] sm:$0xff]
      %v337 = vld [vmem:[%s261 + $0x20] sm:$0xff]
      %v338 = vld [vmem:[%s261 + $0x28] sm:$0xff]
      %v339 = vld [vmem:[%s261 + $0x30] sm:$0xff]
      %v340 = vld [vmem:[%s261 + $0x38] sm:$0xff]
      %v341 = vld [vmem:[%s261 + $0x40] sm:$0xff]
      %v342 = vld [vmem:[%s261 + $0x48] sm:$0xff]
      %v343 = vld [vmem:[%s261 + $0x50] sm:$0xff]
      %v344 = vld [vmem:[%s261 + $0x58] sm:$0xff]
      %v345 = vld [vmem:[%s261 + $0x60] sm:$0xff]
      %v346 = vld [vmem:[%s261 + $0x68] sm:$0xff]
      %v347 = vld [vmem:[%s261 + $0x70] sm:$0xff]
      %v348 = vld [vmem:[%s261 + $0x78] sm:$0xff]
      %v349 = vadd.f32 %v317, %v333
      %v350 = vadd.f32 %v318, %v334
      %v351 = vadd.f32 %v319, %v335
      %v352 = vadd.f32 %v320, %v336
      %v353 = vadd.f32 %v321, %v337
      %v354 = vadd.f32 %v322, %v338
      %v355 = vadd.f32 %v323, %v339
      %v356 = vadd.f32 %v324, %v340
      %v357 = vadd.f32 %v325, %v341
      %v358 = vadd.f32 %v326, %v342
      %v359 = vadd.f32 %v327, %v343
      %v360 = vadd.f32 %v328, %v344
      %v361 = vadd.f32 %v329, %v345
      %v362 = vadd.f32 %v330, %v346
      %v363 = vadd.f32 %v331, %v347
      %v364 = vadd.f32 %v332, %v348
      %365 = vst [vmem:[%s271] sm:$0xff] %v349
      %366 = vst [vmem:[%s271 + $0x8] sm:$0xff] %v350
      %367 = vst [vmem:[%s271 + $0x10] sm:$0xff] %v351
      %368 = vst [vmem:[%s271 + $0x18] sm:$0xff] %v352
      %369 = vst [vmem:[%s271 + $0x20] sm:$0xff] %v353
      %370 = vst [vmem:[%s271 + $0x28] sm:$0xff] %v354
      %371 = vst [vmem:[%s271 + $0x30] sm:$0xff] %v355
      %372 = vst [vmem:[%s271 + $0x38] sm:$0xff] %v356
      %373 = vst [vmem:[%s271 + $0x40] sm:$0xff] %v357
      %374 = vst [vmem:[%s271 + $0x48] sm:$0xff] %v358
      %375 = vst [vmem:[%s271 + $0x50] sm:$0xff] %v359
      %376 = vst [vmem:[%s271 + $0x58] sm:$0xff] %v360
      %377 = vst [vmem:[%s271 + $0x60] sm:$0xff] %v361
      %378 = vst [vmem:[%s271 + $0x68] sm:$0xff] %v362
      %379 = vst [vmem:[%s271 + $0x70] sm:$0xff] %v363
      %380 = vst [vmem:[%s271 + $0x78] sm:$0xff] %v364
      %s381 = smul.u32 16, %s20
      %p382 = scmp.lt.s32.totalorder %s19, 1
      %s383 = scalar_select %p382, %s19, 1
      %p384 = scmp.lt.s32.totalorder %s381, 15
      %s385 = scalar_select %p384, %s381, 15
      %s386 = smul.addr %s383, 16
      %s387 = sadd.s32 %s385, %s386
      %s388 = smul.addr %s387, 8
      %s389 = scalar_lea.vmem %s4, %s388
      // Predicated region
      $region37: #{decoder_block_forward.23} parent=35 // pred_check
        %p390 = pneg %p145
      $region38: #{decoder_block_forward.23} parent=35 // pred_check_branch
        %392 = sbr.rel (%p390) target = $region40
      $region39: #{decoder_block_forward.23} parent=35 // pred_region
        %s393 = smul.u32 16, %s20
      $region40: #{decoder_block_forward.23} parent=35 // pred_fallthru
        _
    $region36: #{decoder_block_forward.23} parent=5 // pred_fallthru
      _
    %p394 = scmp.le.s32.totalorder 2, %s10
    // Predicated region
    $region41: #{decoder_block_forward.23} parent=5 // pred_check
      %p395 = pneg %p394
    $region42: #{decoder_block_forward.23} parent=5 // pred_check_branch
      %397 = sbr.rel (%p395) target = $region44
    $region43: #{decoder_block_forward.23} parent=5 // pred_region
      %s398 = ssub.s32 %s10, 2
      // Predicated region
      $region45: #{decoder_block_forward.23} parent=43 // pred_check
        %p399 = pneg %p151
      $region46: #{decoder_block_forward.23} parent=43 // pred_check_branch
        %401 = sbr.rel (%p399) target = $region48
      $region47: #{decoder_block_forward.23} parent=43 // pred_region
        %s402 = smul.u32 16, %s22
        %p403 = scmp.lt.s32.totalorder %s21, 1
        %s404 = scalar_select %p403, %s21, 1
        %p405 = scmp.lt.s32.totalorder %s402, 15
        %s406 = scalar_select %p405, %s402, 15
        %s407 = smul.addr %s404, 16
        %s408 = sadd.s32 %s406, %s407
        %s409 = smul.addr %s408, 8
        %s410 = scalar_lea.vmem %s4, %s409
      $region48: #{decoder_block_forward.23} parent=43 // pred_fallthru
        _
    $region44: #{decoder_block_forward.23} parent=5 // pred_fallthru
      _
  $region6: #{decoder_block_forward.23} parent=0 // loop_footer
    %s14 = sadd.s32 1, %s10
  $region7: #{decoder_block_forward.23} parent=0 // loop_footer_branch
    %9 = sbr.rel target = $region3
  $region8: #{decoder_block_forward.23} parent=0 // loop_exit
    _

// kernel: decoder_block_forward.22
$region0: #{decoder_block_forward.22}
  #allocation0 [shape = 'u32[]', space=smem, size = 0x4, offset = 0x4, fixed_abs, tag = 'smem constant byte address 0x4 - core index']
  #allocation1 [shape = 'u32[72,128]{1,0:T(1,128)}', space=vmem, size = 0x9000, scoped, tag = 'internal scratch']
  %s0 = inlined_call_operand.vmem [shape: f32[2,216,2048], index: 0, kind: input, shape index: {}]
  %s1 = inlined_call_operand.vmem [shape: f32[8,216], index: 1, kind: input, shape index: {}]
  %s2 = inlined_call_operand.vmem [shape: f32[8,1], index: 2, kind: input, shape index: {}]
  %s3 = inlined_call_operand.vmem [shape: f32[2,8,2048], index: 3, kind: output, shape index: {0}]
  %s4 = inlined_call_operand.vmem [shape: f32[8,1], index: 4, kind: output, shape index: {1}]
  %s5 = inlined_call_operand.vmem [shape: f32[8,1], index: 5, kind: output, shape index: {2}]
  %6 = xla_tuple %s3, %s4, %s5
  %s7 = sld [smem:[#allocation0]]
  $region65: #{decoder_block_forward.22} parent=0
    _
  %s9 = ssub.s32 1, %s7
  %s10 = scalar_select 0, %s9, %s7
  loop: start=0, step=1, limit=4
  $region2: #{decoder_block_forward.22} parent=0 // loop_pre_header
    _
  $region3: #{decoder_block_forward.22} parent=0 // loop_header
    %s12 = sphi 0, %s16
    %p13 = scmp.ge.s32.totalorder %s12, 4
    %s19 = sphi 0, %s31
    %s20 = sphi 0, %s27
    %s21 = sphi 0, %s19
    %s22 = sphi 0, %s20
    %s23 = sphi 0, %s21
    %s24 = sphi 0, %s22
    %s36 = sphi 0, %s38
    %s39 = sphi 0, %s36
    %s40 = sphi 0, %s39
    %s56 = sphi 0, %s40
    %s60 = sphi 0, %s60
    %s62 = sphi 0, %s60
    %s63 = sphi 0, %s62
    %s77 = sphi 0, %s63
    %s81 = sphi 0, %s81
    %s83 = sphi 0, %s81
    %s84 = sphi 0, %s83
    %s98 = sphi 0, %s84
    %s106 = sphi 0, %s108
    %s109 = sphi 0, %s106
    %s110 = sphi 0, %s109
    %s126 = sphi 0, %s110
    %s130 = sphi 0, %s130
    %s132 = sphi 0, %s130
    %s133 = sphi 0, %s132
    %s147 = sphi 0, %s133
    %s151 = sphi 0, %s151
    %s153 = sphi 0, %s151
    %s154 = sphi 0, %s153
    %s168 = sphi 0, %s154
  $region4: #{decoder_block_forward.22} parent=0 // loop_header_branch
    %15 = sbr.rel (%p13) target = $region8
  $region5: #{decoder_block_forward.22} parent=0 // loop_body
    %s17 = ssub.s32 %s12, 1
    %s18 = ssub.s32 %s12, 2
    %s25 = sadd.s32 1, %s20
    %p26 = scmp.ge.s32.totalorder %s25, 1
    %s27 = scalar_select %p26, 0, %s25
    %s28 = sadd.s32 1, %s19
    %s29 = scalar_select %p26, %s28, %s19
    %p30 = scmp.ge.s32.totalorder %s29, 2
    %s31 = scalar_select %p30, 0, %s29
    %s32 = ssub.s32 %s19, %s31
    %s33 = ssub.s32 %s20, %s27
    %s34 = sor.u32 %s32, %s33
    %p35 = scmp.eq.s32.totalorder %s34, 0
    %s37 = sadd.s32 %s36, 1
    %s38 = scalar_select %p35, %s36, %s37
    %p41 = pneg %p35
    %p42 = scmp.eq.s32.totalorder %s12, 1
    %p43 = por %p41, %p42
    %p44 = scmp.ne.s32.totalorder %s36, %s39
    %p45 = scmp.eq.s32.totalorder %s12, 0
    %p46 = por %p44, %p45
    %p47 = scmp.ne.s32.totalorder %s36, %s39
    %p48 = scmp.eq.s32.totalorder %s17, 1
    %p49 = por %p47, %p48
    %p50 = scmp.ne.s32.totalorder %s39, %s40
    %p51 = scmp.eq.s32.totalorder %s17, 0
    %p52 = por %p50, %p51
    %p53 = scmp.ne.s32.totalorder %s39, %s40
    %p54 = scmp.eq.s32.totalorder %s18, 1
    %p55 = por %p53, %p54
    %p57 = scmp.ne.s32.totalorder %s40, %s56
    %p58 = scmp.eq.s32.totalorder %s18, 0
    %p59 = por %p57, %p58
    %s61 = sadd.s32 %s60, 1
    %p64 = scmp.eq.s32.totalorder %s12, 1
    %p65 = scmp.ne.s32.totalorder %s60, %s62
    %p66 = scmp.eq.s32.totalorder %s12, 0
    %p67 = por %p65, %p66
    %p68 = scmp.ne.s32.totalorder %s60, %s62
    %p69 = scmp.eq.s32.totalorder %s17, 1
    %p70 = por %p68, %p69
    %p71 = scmp.ne.s32.totalorder %s62, %s63
    %p72 = scmp.eq.s32.totalorder %s17, 0
    %p73 = por %p71, %p72
    %p74 = scmp.ne.s32.totalorder %s62, %s63
    %p75 = scmp.eq.s32.totalorder %s18, 1
    %p76 = por %p74, %p75
    %p78 = scmp.ne.s32.totalorder %s63, %s77
    %p79 = scmp.eq.s32.totalorder %s18, 0
    %p80 = por %p78, %p79
    %s82 = sadd.s32 %s81, 1
    %p85 = scmp.eq.s32.totalorder %s12, 1
    %p86 = scmp.ne.s32.totalorder %s81, %s83
    %p87 = scmp.eq.s32.totalorder %s12, 0
    %p88 = por %p86, %p87
    %p89 = scmp.ne.s32.totalorder %s81, %s83
    %p90 = scmp.eq.s32.totalorder %s17, 1
    %p91 = por %p89, %p90
    %p92 = scmp.ne.s32.totalorder %s83, %s84
    %p93 = scmp.eq.s32.totalorder %s17, 0
    %p94 = por %p92, %p93
    %p95 = scmp.ne.s32.totalorder %s83, %s84
    %p96 = scmp.eq.s32.totalorder %s18, 1
    %p97 = por %p95, %p96
    %p99 = scmp.ne.s32.totalorder %s84, %s98
    %p100 = scmp.eq.s32.totalorder %s18, 0
    %p101 = por %p99, %p100
    %s102 = ssub.s32 %s19, %s31
    %s103 = ssub.s32 %s20, %s27
    %s104 = sor.u32 %s102, %s103
    %p105 = scmp.eq.s32.totalorder %s104, 0
    %s107 = sadd.s32 %s106, 1
    %s108 = scalar_select %p105, %s106, %s107
    %p111 = pneg %p105
    %p112 = scmp.eq.s32.totalorder %s12, 1
    %p113 = por %p111, %p112
    %p114 = scmp.ne.s32.totalorder %s106, %s109
    %p115 = scmp.eq.s32.totalorder %s12, 0
    %p116 = por %p114, %p115
    %p117 = scmp.ne.s32.totalorder %s106, %s109
    %p118 = scmp.eq.s32.totalorder %s17, 1
    %p119 = por %p117, %p118
    %p120 = scmp.ne.s32.totalorder %s109, %s110
    %p121 = scmp.eq.s32.totalorder %s17, 0
    %p122 = por %p120, %p121
    %p123 = scmp.ne.s32.totalorder %s109, %s110
    %p124 = scmp.eq.s32.totalorder %s18, 1
    %p125 = por %p123, %p124
    %p127 = scmp.ne.s32.totalorder %s110, %s126
    %p128 = scmp.eq.s32.totalorder %s18, 0
    %p129 = por %p127, %p128
    %s131 = sadd.s32 %s130, 1
    %p134 = scmp.eq.s32.totalorder %s12, 1
    %p135 = scmp.ne.s32.totalorder %s130, %s132
    %p136 = scmp.eq.s32.totalorder %s12, 0
    %p137 = por %p135, %p136
    %p138 = scmp.ne.s32.totalorder %s130, %s132
    %p139 = scmp.eq.s32.totalorder %s17, 1
    %p140 = por %p138, %p139
    %p141 = scmp.ne.s32.totalorder %s132, %s133
    %p142 = scmp.eq.s32.totalorder %s17, 0
    %p143 = por %p141, %p142
    %p144 = scmp.ne.s32.totalorder %s132, %s133
    %p145 = scmp.eq.s32.totalorder %s18, 1
    %p146 = por %p144, %p145
    %p148 = scmp.ne.s32.totalorder %s133, %s147
    %p149 = scmp.eq.s32.totalorder %s18, 0
    %p150 = por %p148, %p149
    %s152 = sadd.s32 %s151, 1
    %p155 = scmp.eq.s32.totalorder %s12, 1
    %p156 = scmp.ne.s32.totalorder %s151, %s153
    %p157 = scmp.eq.s32.totalorder %s12, 0
    %p158 = por %p156, %p157
    %p159 = scmp.ne.s32.totalorder %s151, %s153
    %p160 = scmp.eq.s32.totalorder %s17, 1
    %p161 = por %p159, %p160
    %p162 = scmp.ne.s32.totalorder %s153, %s154
    %p163 = scmp.eq.s32.totalorder %s17, 0
    %p164 = por %p162, %p163
    %p165 = scmp.ne.s32.totalorder %s153, %s154
    %p166 = scmp.eq.s32.totalorder %s18, 1
    %p167 = por %p165, %p166
    %p169 = scmp.ne.s32.totalorder %s154, %s168
    %p170 = scmp.eq.s32.totalorder %s18, 0
    %p171 = por %p169, %p170
    %p172 = scmp.le.s32.totalorder 1, %s12
    %p173 = scmp.lt.s32.totalorder %s12, 3
    %p174 = pnand %p172, %p173
    %p175 = pneg %p174
    // Predicated region
    $region9: #{decoder_block_forward.22} parent=5 // pred_check
      _
    $region10: #{decoder_block_forward.22} parent=5 // pred_check_branch
      %177 = sbr.rel (%p174) target = $region12
    $region11: #{decoder_block_forward.22} parent=5 // pred_region
      %s178 = ssub.s32 %s12, 1
      // Predicated region
      $region13: #{decoder_block_forward.22} parent=11 // pred_check
        %p179 = pneg %p73
      $region14: #{decoder_block_forward.22} parent=11 // pred_check_branch
        %181 = sbr.rel (%p179) target = $region16
      $region15: #{decoder_block_forward.22} parent=11 // pred_region
        _
      $region16: #{decoder_block_forward.22} parent=11 // pred_fallthru
        _
      // Predicated region
      $region17: #{decoder_block_forward.22} parent=11 // pred_check
        %p182 = pneg %p94
      $region18: #{decoder_block_forward.22} parent=11 // pred_check_branch
        %184 = sbr.rel (%p182) target = $region20
      $region19: #{decoder_block_forward.22} parent=11 // pred_region
        _
      $region20: #{decoder_block_forward.22} parent=11 // pred_fallthru
        _
    $region12: #{decoder_block_forward.22} parent=5 // pred_fallthru
      _
    %p185 = scmp.lt.s32.totalorder %s12, 2
    // Predicated region
    $region21: #{decoder_block_forward.22} parent=5 // pred_check
      %p186 = pneg %p185
    $region22: #{decoder_block_forward.22} parent=5 // pred_check_branch
      %188 = sbr.rel (%p186) target = $region24
    $region23: #{decoder_block_forward.22} parent=5 // pred_region
      // Predicated region
      $region25: #{decoder_block_forward.22} parent=23 // pred_check
        %p189 = pneg %p46
      $region26: #{decoder_block_forward.22} parent=23 // pred_check_branch
        %191 = sbr.rel (%p189) target = $region28
      $region27: #{decoder_block_forward.22} parent=23 // pred_region
        %s192 = smul.u32 16, %s20
        %p193 = scmp.lt.s32.totalorder %s19, 1
        %s194 = scalar_select %p193, %s19, 1
        %p195 = scmp.lt.s32.totalorder %s192, 15
        %s196 = scalar_select %p195, %s192, 15
        %s197 = smul.addr %s194, 432
        %s198 = sadd.s32 %s196, %s197
        %s199 = smul.addr %s198, 8
        %s200 = scalar_lea.vmem %s0, %s199
        %s201 = smul.u32 16, %s20
      $region28: #{decoder_block_forward.22} parent=23 // pred_fallthru
        _
    $region24: #{decoder_block_forward.22} parent=5 // pred_fallthru
      _
    %p202 = scmp.le.s32.totalorder 1, %s12
    %p203 = scmp.lt.s32.totalorder %s12, 3
    %p204 = pnand %p202, %p203
    %p205 = pneg %p204
    // Predicated region
    $region29: #{decoder_block_forward.22} parent=5 // pred_check
      _
    $region30: #{decoder_block_forward.22} parent=5 // pred_check_branch
      %207 = sbr.rel (%p204) target = $region32
    $region31: #{decoder_block_forward.22} parent=5 // pred_region
      %s208 = ssub.s32 %s12, 1
      %s209 = smul.u32 16, %s22
      %p210 = scmp.lt.s32.totalorder %s21, 1
      %s211 = scalar_select %p210, %s21, 1
      %p212 = scmp.lt.s32.totalorder %s209, 15
      %s213 = scalar_select %p212, %s209, 15
      %s214 = smul.addr %s211, 432
      %s215 = sadd.s32 %s213, %s214
      %s216 = smul.addr %s215, 8
      %s217 = scalar_lea.vmem %s0, %s216
      %p218 = pneg %p52
      %p219 = pneg %p49
      %p220 = pneg %p73
      %p221 = pneg %p70
      %p222 = pneg %p94
      %p223 = pneg %p91
      %p224 = pneg %p122
      %p225 = pneg %p119
      %s226 = smul.u32 16, %s22
      %p227 = scmp.lt.s32.totalorder %s21, 1
      %s228 = scalar_select %p227, %s21, 1
      %p229 = scmp.lt.s32.totalorder %s226, 15
      %s230 = scalar_select %p229, %s226, 15
      %s231 = smul.addr %s228, 16
      %s232 = sadd.s32 %s230, %s231
      %s233 = smul.addr %s232, 8
      %s234 = scalar_lea.vmem %s3, %s233
      %p235 = pneg %p143
      %p236 = pneg %p140
      %p237 = pneg %p164
      %p238 = pneg %p161
      %s239 = smul.u32 16, %s22
      %p240 = scmp.lt.s32.totalorder %s21, 1
      %s241 = scalar_select %p240, %s21, 1
      %p242 = scmp.lt.s32.totalorder %s239, 15
      %s243 = scalar_select %p242, %s239, 15
      %s244 = smul.addr %s241, 432
      %s245 = sadd.s32 %s243, %s244
      %s246 = smul.addr %s245, 8
      %s247 = scalar_lea.vmem %s0, %s246
      %s248 = smul.u32 16, %s22
      %s249 = smul.u32 16, %s22
      %p250 = scmp.lt.s32.totalorder %s21, 1
      %s251 = scalar_select %p250, %s21, 1
      %p252 = scmp.lt.s32.totalorder %s249, 15
      %s253 = scalar_select %p252, %s249, 15
      %s254 = smul.addr %s251, 16
      %s255 = sadd.s32 %s253, %s254
      %s256 = smul.addr %s255, 8
      %s257 = scalar_lea.vmem %s3, %s256
      %s258 = smul.u32 16, %s22
      %v259 = vld [vmem:[%s1] sm:$0xff]
      %v260 = vld [vmem:[%s1 + $0x8] sm:$0xff]
      %v261 = vld [vmem:[%s247] sm:$0xff]
      %v262 = vld [vmem:[%s247 + $0x8] sm:$0xff]
      %v263 = vld [vmem:[%s247 + $0x10] sm:$0xff]
      %v264 = vld [vmem:[%s247 + $0x18] sm:$0xff]
      %v265 = vld [vmem:[%s247 + $0x20] sm:$0xff]
      %v266 = vld [vmem:[%s247 + $0x28] sm:$0xff]
      %v267 = vld [vmem:[%s247 + $0x30] sm:$0xff]
      %v268 = vld [vmem:[%s247 + $0x38] sm:$0xff]
      %v269 = vld [vmem:[%s247 + $0x40] sm:$0xff]
      %v270 = vld [vmem:[%s247 + $0x48] sm:$0xff]
      %v271 = vld [vmem:[%s247 + $0x50] sm:$0xff]
      %v272 = vld [vmem:[%s247 + $0x58] sm:$0xff]
      %v273 = vld [vmem:[%s247 + $0x60] sm:$0xff]
      %v274 = vld [vmem:[%s247 + $0x68] sm:$0xff]
      %v275 = vld [vmem:[%s247 + $0x70] sm:$0xff]
      %v276 = vld [vmem:[%s247 + $0x78] sm:$0xff]
      %v277 = vld [vmem:[%s247 + $0x80] sm:$0xff]
      %v278 = vld [vmem:[%s247 + $0x88] sm:$0xff]
      %v279 = vld [vmem:[%s247 + $0x90] sm:$0xff]
      %v280 = vld [vmem:[%s247 + $0x98] sm:$0xff]
      %v281 = vld [vmem:[%s247 + $0xa0] sm:$0xff]
      %v282 = vld [vmem:[%s247 + $0xa8] sm:$0xff]
      %v283 = vld [vmem:[%s247 + $0xb0] sm:$0xff]
      %v284 = vld [vmem:[%s247 + $0xb8] sm:$0xff]
      %v285 = vld [vmem:[%s247 + $0xc0] sm:$0xff]
      %v286 = vld [vmem:[%s247 + $0xc8] sm:$0xff]
      %v287 = vld [vmem:[%s247 + $0xd0] sm:$0xff]
      %v288 = vld [vmem:[%s247 + $0xd8] sm:$0xff]
      %v289 = vld [vmem:[%s247 + $0xe0] sm:$0xff]
      %v290 = vld [vmem:[%s247 + $0xe8] sm:$0xff]
      %v291 = vld [vmem:[%s247 + $0xf0] sm:$0xff]
      %v292 = vld [vmem:[%s247 + $0xf8] sm:$0xff]
      %v293 = vld [vmem:[%s247 + $0x100] sm:$0xff]
      %v294 = vld [vmem:[%s247 + $0x108] sm:$0xff]
      %v295 = vld [vmem:[%s247 + $0x110] sm:$0xff]
      %v296 = vld [vmem:[%s247 + $0x118] sm:$0xff]
      %v297 = vld [vmem:[%s247 + $0x120] sm:$0xff]
      %v298 = vld [vmem:[%s247 + $0x128] sm:$0xff]
      %v299 = vld [vmem:[%s247 + $0x130] sm:$0xff]
      %v300 = vld [vmem:[%s247 + $0x138] sm:$0xff]
      %v301 = vld [vmem:[%s247 + $0x140] sm:$0xff]
      %v302 = vld [vmem:[%s247 + $0x148] sm:$0xff]
      %v303 = vld [vmem:[%s247 + $0x150] sm:$0xff]
      %v304 = vld [vmem:[%s247 + $0x158] sm:$0xff]
      %v305 = vld [vmem:[%s247 + $0x160] sm:$0xff]
      %v306 = vld [vmem:[%s247 + $0x168] sm:$0xff]
      %v307 = vld [vmem:[%s247 + $0x170] sm:$0xff]
      %v308 = vld [vmem:[%s247 + $0x178] sm:$0xff]
      %v309 = vld [vmem:[%s247 + $0x180] sm:$0xff]
      %v310 = vld [vmem:[%s247 + $0x188] sm:$0xff]
      %v311 = vld [vmem:[%s247 + $0x190] sm:$0xff]
      %v312 = vld [vmem:[%s247 + $0x198] sm:$0xff]
      %v313 = vld [vmem:[%s247 + $0x1a0] sm:$0xff]
      %v314 = vld [vmem:[%s247 + $0x1a8] sm:$0xff]
      %v315 = vld [vmem:[%s247 + $0x1b0] sm:$0xff]
      %v316 = vld [vmem:[%s247 + $0x1b8] sm:$0xff]
      %v317 = vld [vmem:[%s247 + $0x1c0] sm:$0xff]
      %v318 = vld [vmem:[%s247 + $0x1c8] sm:$0xff]
      %v319 = vld [vmem:[%s247 + $0x1d0] sm:$0xff]
      %v320 = vld [vmem:[%s247 + $0x1d8] sm:$0xff]
      %v321 = vld [vmem:[%s247 + $0x1e0] sm:$0xff]
      %v322 = vld [vmem:[%s247 + $0x1e8] sm:$0xff]
      %v323 = vld [vmem:[%s247 + $0x1f0] sm:$0xff]
      %v324 = vld [vmem:[%s247 + $0x1f8] sm:$0xff]
      %v325 = vld [vmem:[%s247 + $0x200] sm:$0xff]
      %v326 = vld [vmem:[%s247 + $0x208] sm:$0xff]
      %v327 = vld [vmem:[%s247 + $0x210] sm:$0xff]
      %v328 = vld [vmem:[%s247 + $0x218] sm:$0xff]
      %v329 = vld [vmem:[%s247 + $0x220] sm:$0xff]
      %v330 = vld [vmem:[%s247 + $0x228] sm:$0xff]
      %v331 = vld [vmem:[%s247 + $0x230] sm:$0xff]
      %v332 = vld [vmem:[%s247 + $0x238] sm:$0xff]
      %v333 = vld [vmem:[%s247 + $0x240] sm:$0xff]
      %v334 = vld [vmem:[%s247 + $0x248] sm:$0xff]
      %v335 = vld [vmem:[%s247 + $0x250] sm:$0xff]
      %v336 = vld [vmem:[%s247 + $0x258] sm:$0xff]
      %v337 = vld [vmem:[%s247 + $0x260] sm:$0xff]
      %v338 = vld [vmem:[%s247 + $0x268] sm:$0xff]
      %v339 = vld [vmem:[%s247 + $0x270] sm:$0xff]
      %v340 = vld [vmem:[%s247 + $0x278] sm:$0xff]
      %v341 = vld [vmem:[%s247 + $0x280] sm:$0xff]
      %v342 = vld [vmem:[%s247 + $0x288] sm:$0xff]
      %v343 = vld [vmem:[%s247 + $0x290] sm:$0xff]
      %v344 = vld [vmem:[%s247 + $0x298] sm:$0xff]
      %v345 = vld [vmem:[%s247 + $0x2a0] sm:$0xff]
      %v346 = vld [vmem:[%s247 + $0x2a8] sm:$0xff]
      %v347 = vld [vmem:[%s247 + $0x2b0] sm:$0xff]
      %v348 = vld [vmem:[%s247 + $0x2b8] sm:$0xff]
      %v349 = vld [vmem:[%s247 + $0x2c0] sm:$0xff]
      %v350 = vld [vmem:[%s247 + $0x2c8] sm:$0xff]
      %v351 = vld [vmem:[%s247 + $0x2d0] sm:$0xff]
      %v352 = vld [vmem:[%s247 + $0x2d8] sm:$0xff]
      %v353 = vld [vmem:[%s247 + $0x2e0] sm:$0xff]
      %v354 = vld [vmem:[%s247 + $0x2e8] sm:$0xff]
      %v355 = vld [vmem:[%s247 + $0x2f0] sm:$0xff]
      %v356 = vld [vmem:[%s247 + $0x2f8] sm:$0xff]
      %v357 = vld [vmem:[%s247 + $0x300] sm:$0xff]
      %v358 = vld [vmem:[%s247 + $0x308] sm:$0xff]
      %v359 = vld [vmem:[%s247 + $0x310] sm:$0xff]
      %v360 = vld [vmem:[%s247 + $0x318] sm:$0xff]
      %v361 = vld [vmem:[%s247 + $0x320] sm:$0xff]
      %v362 = vld [vmem:[%s247 + $0x328] sm:$0xff]
      %v363 = vld [vmem:[%s247 + $0x330] sm:$0xff]
      %v364 = vld [vmem:[%s247 + $0x338] sm:$0xff]
      %v365 = vld [vmem:[%s247 + $0x340] sm:$0xff]
      %v366 = vld [vmem:[%s247 + $0x348] sm:$0xff]
      %v367 = vld [vmem:[%s247 + $0x350] sm:$0xff]
      %v368 = vld [vmem:[%s247 + $0x358] sm:$0xff]
      %v369 = vld [vmem:[%s247 + $0x360] sm:$0xff]
      %v370 = vld [vmem:[%s247 + $0x368] sm:$0xff]
      %v371 = vld [vmem:[%s247 + $0x370] sm:$0xff]
      %v372 = vld [vmem:[%s247 + $0x378] sm:$0xff]
      %v373 = vld [vmem:[%s247 + $0x380] sm:$0xff]
      %v374 = vld [vmem:[%s247 + $0x388] sm:$0xff]
      %v375 = vld [vmem:[%s247 + $0x390] sm:$0xff]
      %v376 = vld [vmem:[%s247 + $0x398] sm:$0xff]
      %v377 = vld [vmem:[%s247 + $0x3a0] sm:$0xff]
      %v378 = vld [vmem:[%s247 + $0x3a8] sm:$0xff]
      %v379 = vld [vmem:[%s247 + $0x3b0] sm:$0xff]
      %v380 = vld [vmem:[%s247 + $0x3b8] sm:$0xff]
      %v381 = vld [vmem:[%s247 + $0x3c0] sm:$0xff]
      %v382 = vld [vmem:[%s247 + $0x3c8] sm:$0xff]
      %v383 = vld [vmem:[%s247 + $0x3d0] sm:$0xff]
      %v384 = vld [vmem:[%s247 + $0x3d8] sm:$0xff]
      %v385 = vld [vmem:[%s247 + $0x3e0] sm:$0xff]
      %v386 = vld [vmem:[%s247 + $0x3e8] sm:$0xff]
      %v387 = vld [vmem:[%s247 + $0x3f0] sm:$0xff]
      %v388 = vld [vmem:[%s247 + $0x3f8] sm:$0xff]
      %v389 = vld [vmem:[%s247 + $0x400] sm:$0xff]
      %v390 = vld [vmem:[%s247 + $0x408] sm:$0xff]
      %v391 = vld [vmem:[%s247 + $0x410] sm:$0xff]
      %v392 = vld [vmem:[%s247 + $0x418] sm:$0xff]
      %v393 = vld [vmem:[%s247 + $0x420] sm:$0xff]
      %v394 = vld [vmem:[%s247 + $0x428] sm:$0xff]
      %v395 = vld [vmem:[%s247 + $0x430] sm:$0xff]
      %v396 = vld [vmem:[%s247 + $0x438] sm:$0xff]
      %v397 = vld [vmem:[%s247 + $0x440] sm:$0xff]
      %v398 = vld [vmem:[%s247 + $0x448] sm:$0xff]
      %v399 = vld [vmem:[%s247 + $0x450] sm:$0xff]
      %v400 = vld [vmem:[%s247 + $0x458] sm:$0xff]
      %v401 = vld [vmem:[%s247 + $0x460] sm:$0xff]
      %v402 = vld [vmem:[%s247 + $0x468] sm:$0xff]
      %v403 = vld [vmem:[%s247 + $0x470] sm:$0xff]
      %v404 = vld [vmem:[%s247 + $0x478] sm:$0xff]
      %v405 = vld [vmem:[%s247 + $0x480] sm:$0xff]
      %v406 = vld [vmem:[%s247 + $0x488] sm:$0xff]
      %v407 = vld [vmem:[%s247 + $0x490] sm:$0xff]
      %v408 = vld [vmem:[%s247 + $0x498] sm:$0xff]
      %v409 = vld [vmem:[%s247 + $0x4a0] sm:$0xff]
      %v410 = vld [vmem:[%s247 + $0x4a8] sm:$0xff]
      %v411 = vld [vmem:[%s247 + $0x4b0] sm:$0xff]
      %v412 = vld [vmem:[%s247 + $0x4b8] sm:$0xff]
      %v413 = vld [vmem:[%s247 + $0x4c0] sm:$0xff]
      %v414 = vld [vmem:[%s247 + $0x4c8] sm:$0xff]
      %v415 = vld [vmem:[%s247 + $0x4d0] sm:$0xff]
      %v416 = vld [vmem:[%s247 + $0x4d8] sm:$0xff]
      %v417 = vld [vmem:[%s247 + $0x4e0] sm:$0xff]
      %v418 = vld [vmem:[%s247 + $0x4e8] sm:$0xff]
      %v419 = vld [vmem:[%s247 + $0x4f0] sm:$0xff]
      %v420 = vld [vmem:[%s247 + $0x4f8] sm:$0xff]
      %v421 = vld [vmem:[%s247 + $0x500] sm:$0xff]
      %v422 = vld [vmem:[%s247 + $0x508] sm:$0xff]
      %v423 = vld [vmem:[%s247 + $0x510] sm:$0xff]
      %v424 = vld [vmem:[%s247 + $0x518] sm:$0xff]
      %v425 = vld [vmem:[%s247 + $0x520] sm:$0xff]
      %v426 = vld [vmem:[%s247 + $0x528] sm:$0xff]
      %v427 = vld [vmem:[%s247 + $0x530] sm:$0xff]
      %v428 = vld [vmem:[%s247 + $0x538] sm:$0xff]
      %v429 = vld [vmem:[%s247 + $0x540] sm:$0xff]
      %v430 = vld [vmem:[%s247 + $0x548] sm:$0xff]
      %v431 = vld [vmem:[%s247 + $0x550] sm:$0xff]
      %v432 = vld [vmem:[%s247 + $0x558] sm:$0xff]
      %v433 = vld [vmem:[%s247 + $0x560] sm:$0xff]
      %v434 = vld [vmem:[%s247 + $0x568] sm:$0xff]
      %v435 = vld [vmem:[%s247 + $0x570] sm:$0xff]
      %v436 = vld [vmem:[%s247 + $0x578] sm:$0xff]
      %v437 = vld [vmem:[%s247 + $0x580] sm:$0xff]
      %v438 = vld [vmem:[%s247 + $0x588] sm:$0xff]
      %v439 = vld [vmem:[%s247 + $0x590] sm:$0xff]
      %v440 = vld [vmem:[%s247 + $0x598] sm:$0xff]
      %v441 = vld [vmem:[%s247 + $0x5a0] sm:$0xff]
      %v442 = vld [vmem:[%s247 + $0x5a8] sm:$0xff]
      %v443 = vld [vmem:[%s247 + $0x5b0] sm:$0xff]
      %v444 = vld [vmem:[%s247 + $0x5b8] sm:$0xff]
      %v445 = vld [vmem:[%s247 + $0x5c0] sm:$0xff]
      %v446 = vld [vmem:[%s247 + $0x5c8] sm:$0xff]
      %v447 = vld [vmem:[%s247 + $0x5d0] sm:$0xff]
      %v448 = vld [vmem:[%s247 + $0x5d8] sm:$0xff]
      %v449 = vld [vmem:[%s247 + $0x5e0] sm:$0xff]
      %v450 = vld [vmem:[%s247 + $0x5e8] sm:$0xff]
      %v451 = vld [vmem:[%s247 + $0x5f0] sm:$0xff]
      %v452 = vld [vmem:[%s247 + $0x5f8] sm:$0xff]
      %v453 = vld [vmem:[%s247 + $0x600] sm:$0xff]
      %v454 = vld [vmem:[%s247 + $0x608] sm:$0xff]
      %v455 = vld [vmem:[%s247 + $0x610] sm:$0xff]
      %v456 = vld [vmem:[%s247 + $0x618] sm:$0xff]
      %v457 = vld [vmem:[%s247 + $0x620] sm:$0xff]
      %v458 = vld [vmem:[%s247 + $0x628] sm:$0xff]
      %v459 = vld [vmem:[%s247 + $0x630] sm:$0xff]
      %v460 = vld [vmem:[%s247 + $0x638] sm:$0xff]
      %v461 = vld [vmem:[%s247 + $0x640] sm:$0xff]
      %v462 = vld [vmem:[%s247 + $0x648] sm:$0xff]
      %v463 = vld [vmem:[%s247 + $0x650] sm:$0xff]
      %v464 = vld [vmem:[%s247 + $0x658] sm:$0xff]
      %v465 = vld [vmem:[%s247 + $0x660] sm:$0xff]
      %v466 = vld [vmem:[%s247 + $0x668] sm:$0xff]
      %v467 = vld [vmem:[%s247 + $0x670] sm:$0xff]
      %v468 = vld [vmem:[%s247 + $0x678] sm:$0xff]
      %v469 = vld [vmem:[%s247 + $0x680] sm:$0xff]
      %v470 = vld [vmem:[%s247 + $0x688] sm:$0xff]
      %v471 = vld [vmem:[%s247 + $0x690] sm:$0xff]
      %v472 = vld [vmem:[%s247 + $0x698] sm:$0xff]
      %v473 = vld [vmem:[%s247 + $0x6a0] sm:$0xff]
      %v474 = vld [vmem:[%s247 + $0x6a8] sm:$0xff]
      %v475 = vld [vmem:[%s247 + $0x6b0] sm:$0xff]
      %v476 = vld [vmem:[%s247 + $0x6b8] sm:$0xff]
      %v477 = vld [vmem:[%s247 + $0x6c0] sm:$0xff]
      %v478 = vld [vmem:[%s247 + $0x6c8] sm:$0xff]
      %v479 = vld [vmem:[%s247 + $0x6d0] sm:$0xff]
      %v480 = vld [vmem:[%s247 + $0x6d8] sm:$0xff]
      %v481 = vld [vmem:[%s247 + $0x6e0] sm:$0xff]
      %v482 = vld [vmem:[%s247 + $0x6e8] sm:$0xff]
      %v483 = vld [vmem:[%s247 + $0x6f0] sm:$0xff]
      %v484 = vld [vmem:[%s247 + $0x6f8] sm:$0xff]
      %v485 = vld [vmem:[%s247 + $0x700] sm:$0xff]
      %v486 = vld [vmem:[%s247 + $0x708] sm:$0xff]
      %v487 = vld [vmem:[%s247 + $0x710] sm:$0xff]
      %v488 = vld [vmem:[%s247 + $0x718] sm:$0xff]
      %v489 = vld [vmem:[%s247 + $0x720] sm:$0xff]
      %v490 = vld [vmem:[%s247 + $0x728] sm:$0xff]
      %v491 = vld [vmem:[%s247 + $0x730] sm:$0xff]
      %v492 = vld [vmem:[%s247 + $0x738] sm:$0xff]
      %v493 = vld [vmem:[%s247 + $0x740] sm:$0xff]
      %v494 = vld [vmem:[%s247 + $0x748] sm:$0xff]
      %v495 = vld [vmem:[%s247 + $0x750] sm:$0xff]
      %v496 = vld [vmem:[%s247 + $0x758] sm:$0xff]
      %v497 = vld [vmem:[%s247 + $0x760] sm:$0xff]
      %v498 = vld [vmem:[%s247 + $0x768] sm:$0xff]
      %v499 = vld [vmem:[%s247 + $0x770] sm:$0xff]
      %v500 = vld [vmem:[%s247 + $0x778] sm:$0xff]
      %v501 = vld [vmem:[%s247 + $0x780] sm:$0xff]
      %v502 = vld [vmem:[%s247 + $0x788] sm:$0xff]
      %v503 = vld [vmem:[%s247 + $0x790] sm:$0xff]
      %v504 = vld [vmem:[%s247 + $0x798] sm:$0xff]
      %v505 = vld [vmem:[%s247 + $0x7a0] sm:$0xff]
      %v506 = vld [vmem:[%s247 + $0x7a8] sm:$0xff]
      %v507 = vld [vmem:[%s247 + $0x7b0] sm:$0xff]
      %v508 = vld [vmem:[%s247 + $0x7b8] sm:$0xff]
      %v509 = vld [vmem:[%s247 + $0x7c0] sm:$0xff]
      %v510 = vld [vmem:[%s247 + $0x7c8] sm:$0xff]
      %v511 = vld [vmem:[%s247 + $0x7d0] sm:$0xff]
      %v512 = vld [vmem:[%s247 + $0x7d8] sm:$0xff]
      %v513 = vld [vmem:[%s247 + $0x7e0] sm:$0xff]
      %v514 = vld [vmem:[%s247 + $0x7e8] sm:$0xff]
      %v515 = vld [vmem:[%s247 + $0x7f0] sm:$0xff]
      %v516 = vld [vmem:[%s247 + $0x7f8] sm:$0xff]
      %v517 = vld [vmem:[%s247 + $0x800] sm:$0xff]
      %v518 = vld [vmem:[%s247 + $0x808] sm:$0xff]
      %v519 = vld [vmem:[%s247 + $0x810] sm:$0xff]
      %v520 = vld [vmem:[%s247 + $0x818] sm:$0xff]
      %v521 = vld [vmem:[%s247 + $0x820] sm:$0xff]
      %v522 = vld [vmem:[%s247 + $0x828] sm:$0xff]
      %v523 = vld [vmem:[%s247 + $0x830] sm:$0xff]
      %v524 = vld [vmem:[%s247 + $0x838] sm:$0xff]
      %v525 = vld [vmem:[%s247 + $0x840] sm:$0xff]
      %v526 = vld [vmem:[%s247 + $0x848] sm:$0xff]
      %v527 = vld [vmem:[%s247 + $0x850] sm:$0xff]
      %v528 = vld [vmem:[%s247 + $0x858] sm:$0xff]
      %v529 = vld [vmem:[%s247 + $0x860] sm:$0xff]
      %v530 = vld [vmem:[%s247 + $0x868] sm:$0xff]
      %v531 = vld [vmem:[%s247 + $0x870] sm:$0xff]
      %v532 = vld [vmem:[%s247 + $0x878] sm:$0xff]
      %v533 = vld [vmem:[%s247 + $0x880] sm:$0xff]
      %v534 = vld [vmem:[%s247 + $0x888] sm:$0xff]
      %v535 = vld [vmem:[%s247 + $0x890] sm:$0xff]
      %v536 = vld [vmem:[%s247 + $0x898] sm:$0xff]
      %v537 = vld [vmem:[%s247 + $0x8a0] sm:$0xff]
      %v538 = vld [vmem:[%s247 + $0x8a8] sm:$0xff]
      %v539 = vld [vmem:[%s247 + $0x8b0] sm:$0xff]
      %v540 = vld [vmem:[%s247 + $0x8b8] sm:$0xff]
      %v541 = vld [vmem:[%s247 + $0x8c0] sm:$0xff]
      %v542 = vld [vmem:[%s247 + $0x8c8] sm:$0xff]
      %v543 = vld [vmem:[%s247 + $0x8d0] sm:$0xff]
      %v544 = vld [vmem:[%s247 + $0x8d8] sm:$0xff]
      %v545 = vld [vmem:[%s247 + $0x8e0] sm:$0xff]
      %v546 = vld [vmem:[%s247 + $0x8e8] sm:$0xff]
      %v547 = vld [vmem:[%s247 + $0x8f0] sm:$0xff]
      %v548 = vld [vmem:[%s247 + $0x8f8] sm:$0xff]
      %v549 = vld [vmem:[%s247 + $0x900] sm:$0xff]
      %v550 = vld [vmem:[%s247 + $0x908] sm:$0xff]
      %v551 = vld [vmem:[%s247 + $0x910] sm:$0xff]
      %v552 = vld [vmem:[%s247 + $0x918] sm:$0xff]
      %v553 = vld [vmem:[%s247 + $0x920] sm:$0xff]
      %v554 = vld [vmem:[%s247 + $0x928] sm:$0xff]
      %v555 = vld [vmem:[%s247 + $0x930] sm:$0xff]
      %v556 = vld [vmem:[%s247 + $0x938] sm:$0xff]
      %v557 = vld [vmem:[%s247 + $0x940] sm:$0xff]
      %v558 = vld [vmem:[%s247 + $0x948] sm:$0xff]
      %v559 = vld [vmem:[%s247 + $0x950] sm:$0xff]
      %v560 = vld [vmem:[%s247 + $0x958] sm:$0xff]
      %v561 = vld [vmem:[%s247 + $0x960] sm:$0xff]
      %v562 = vld [vmem:[%s247 + $0x968] sm:$0xff]
      %v563 = vld [vmem:[%s247 + $0x970] sm:$0xff]
      %v564 = vld [vmem:[%s247 + $0x978] sm:$0xff]
      %v565 = vld [vmem:[%s247 + $0x980] sm:$0xff]
      %v566 = vld [vmem:[%s247 + $0x988] sm:$0xff]
      %v567 = vld [vmem:[%s247 + $0x990] sm:$0xff]
      %v568 = vld [vmem:[%s247 + $0x998] sm:$0xff]
      %v569 = vld [vmem:[%s247 + $0x9a0] sm:$0xff]
      %v570 = vld [vmem:[%s247 + $0x9a8] sm:$0xff]
      %v571 = vld [vmem:[%s247 + $0x9b0] sm:$0xff]
      %v572 = vld [vmem:[%s247 + $0x9b8] sm:$0xff]
      %v573 = vld [vmem:[%s247 + $0x9c0] sm:$0xff]
      %v574 = vld [vmem:[%s247 + $0x9c8] sm:$0xff]
      %v575 = vld [vmem:[%s247 + $0x9d0] sm:$0xff]
      %v576 = vld [vmem:[%s247 + $0x9d8] sm:$0xff]
      %v577 = vld [vmem:[%s247 + $0x9e0] sm:$0xff]
      %v578 = vld [vmem:[%s247 + $0x9e8] sm:$0xff]
      %v579 = vld [vmem:[%s247 + $0x9f0] sm:$0xff]
      %v580 = vld [vmem:[%s247 + $0x9f8] sm:$0xff]
      %v581 = vld [vmem:[%s247 + $0xa00] sm:$0xff]
      %v582 = vld [vmem:[%s247 + $0xa08] sm:$0xff]
      %v583 = vld [vmem:[%s247 + $0xa10] sm:$0xff]
      %v584 = vld [vmem:[%s247 + $0xa18] sm:$0xff]
      %v585 = vld [vmem:[%s247 + $0xa20] sm:$0xff]
      %v586 = vld [vmem:[%s247 + $0xa28] sm:$0xff]
      %v587 = vld [vmem:[%s247 + $0xa30] sm:$0xff]
      %v588 = vld [vmem:[%s247 + $0xa38] sm:$0xff]
      %v589 = vld [vmem:[%s247 + $0xa40] sm:$0xff]
      %v590 = vld [vmem:[%s247 + $0xa48] sm:$0xff]
      %v591 = vld [vmem:[%s247 + $0xa50] sm:$0xff]
      %v592 = vld [vmem:[%s247 + $0xa58] sm:$0xff]
      %v593 = vld [vmem:[%s247 + $0xa60] sm:$0xff]
      %v594 = vld [vmem:[%s247 + $0xa68] sm:$0xff]
      %v595 = vld [vmem:[%s247 + $0xa70] sm:$0xff]
      %v596 = vld [vmem:[%s247 + $0xa78] sm:$0xff]
      %v597 = vld [vmem:[%s247 + $0xa80] sm:$0xff]
      %v598 = vld [vmem:[%s247 + $0xa88] sm:$0xff]
      %v599 = vld [vmem:[%s247 + $0xa90] sm:$0xff]
      %v600 = vld [vmem:[%s247 + $0xa98] sm:$0xff]
      %v601 = vld [vmem:[%s247 + $0xaa0] sm:$0xff]
      %v602 = vld [vmem:[%s247 + $0xaa8] sm:$0xff]
      %v603 = vld [vmem:[%s247 + $0xab0] sm:$0xff]
      %v604 = vld [vmem:[%s247 + $0xab8] sm:$0xff]
      %v605 = vld [vmem:[%s247 + $0xac0] sm:$0xff]
      %v606 = vld [vmem:[%s247 + $0xac8] sm:$0xff]
      %v607 = vld [vmem:[%s247 + $0xad0] sm:$0xff]
      %v608 = vld [vmem:[%s247 + $0xad8] sm:$0xff]
      %v609 = vld [vmem:[%s247 + $0xae0] sm:$0xff]
      %v610 = vld [vmem:[%s247 + $0xae8] sm:$0xff]
      %v611 = vld [vmem:[%s247 + $0xaf0] sm:$0xff]
      %v612 = vld [vmem:[%s247 + $0xaf8] sm:$0xff]
      %v613 = vld [vmem:[%s247 + $0xb00] sm:$0xff]
      %v614 = vld [vmem:[%s247 + $0xb08] sm:$0xff]
      %v615 = vld [vmem:[%s247 + $0xb10] sm:$0xff]
      %v616 = vld [vmem:[%s247 + $0xb18] sm:$0xff]
      %v617 = vld [vmem:[%s247 + $0xb20] sm:$0xff]
      %v618 = vld [vmem:[%s247 + $0xb28] sm:$0xff]
      %v619 = vld [vmem:[%s247 + $0xb30] sm:$0xff]
      %v620 = vld [vmem:[%s247 + $0xb38] sm:$0xff]
      %v621 = vld [vmem:[%s247 + $0xb40] sm:$0xff]
      %v622 = vld [vmem:[%s247 + $0xb48] sm:$0xff]
      %v623 = vld [vmem:[%s247 + $0xb50] sm:$0xff]
      %v624 = vld [vmem:[%s247 + $0xb58] sm:$0xff]
      %v625 = vld [vmem:[%s247 + $0xb60] sm:$0xff]
      %v626 = vld [vmem:[%s247 + $0xb68] sm:$0xff]
      %v627 = vld [vmem:[%s247 + $0xb70] sm:$0xff]
      %v628 = vld [vmem:[%s247 + $0xb78] sm:$0xff]
      %v629 = vld [vmem:[%s247 + $0xb80] sm:$0xff]
      %v630 = vld [vmem:[%s247 + $0xb88] sm:$0xff]
      %v631 = vld [vmem:[%s247 + $0xb90] sm:$0xff]
      %v632 = vld [vmem:[%s247 + $0xb98] sm:$0xff]
      %v633 = vld [vmem:[%s247 + $0xba0] sm:$0xff]
      %v634 = vld [vmem:[%s247 + $0xba8] sm:$0xff]
      %v635 = vld [vmem:[%s247 + $0xbb0] sm:$0xff]
      %v636 = vld [vmem:[%s247 + $0xbb8] sm:$0xff]
      %v637 = vld [vmem:[%s247 + $0xbc0] sm:$0xff]
      %v638 = vld [vmem:[%s247 + $0xbc8] sm:$0xff]
      %v639 = vld [vmem:[%s247 + $0xbd0] sm:$0xff]
      %v640 = vld [vmem:[%s247 + $0xbd8] sm:$0xff]
      %v641 = vld [vmem:[%s247 + $0xbe0] sm:$0xff]
      %v642 = vld [vmem:[%s247 + $0xbe8] sm:$0xff]
      %v643 = vld [vmem:[%s247 + $0xbf0] sm:$0xff]
      %v644 = vld [vmem:[%s247 + $0xbf8] sm:$0xff]
      %v645 = vld [vmem:[%s247 + $0xc00] sm:$0xff]
      %v646 = vld [vmem:[%s247 + $0xc08] sm:$0xff]
      %v647 = vld [vmem:[%s247 + $0xc10] sm:$0xff]
      %v648 = vld [vmem:[%s247 + $0xc18] sm:$0xff]
      %v649 = vld [vmem:[%s247 + $0xc20] sm:$0xff]
      %v650 = vld [vmem:[%s247 + $0xc28] sm:$0xff]
      %v651 = vld [vmem:[%s247 + $0xc30] sm:$0xff]
      %v652 = vld [vmem:[%s247 + $0xc38] sm:$0xff]
      %v653 = vld [vmem:[%s247 + $0xc40] sm:$0xff]
      %v654 = vld [vmem:[%s247 + $0xc48] sm:$0xff]
      %v655 = vld [vmem:[%s247 + $0xc50] sm:$0xff]
      %v656 = vld [vmem:[%s247 + $0xc58] sm:$0xff]
      %v657 = vld [vmem:[%s247 + $0xc60] sm:$0xff]
      %v658 = vld [vmem:[%s247 + $0xc68] sm:$0xff]
      %v659 = vld [vmem:[%s247 + $0xc70] sm:$0xff]
      %v660 = vld [vmem:[%s247 + $0xc78] sm:$0xff]
      %v661 = vld [vmem:[%s247 + $0xc80] sm:$0xff]
      %v662 = vld [vmem:[%s247 + $0xc88] sm:$0xff]
      %v663 = vld [vmem:[%s247 + $0xc90] sm:$0xff]
      %v664 = vld [vmem:[%s247 + $0xc98] sm:$0xff]
      %v665 = vld [vmem:[%s247 + $0xca0] sm:$0xff]
      %v666 = vld [vmem:[%s247 + $0xca8] sm:$0xff]
      %v667 = vld [vmem:[%s247 + $0xcb0] sm:$0xff]
      %v668 = vld [vmem:[%s247 + $0xcb8] sm:$0xff]
      %v669 = vld [vmem:[%s247 + $0xcc0] sm:$0xff]
      %v670 = vld [vmem:[%s247 + $0xcc8] sm:$0xff]
      %v671 = vld [vmem:[%s247 + $0xcd0] sm:$0xff]
      %v672 = vld [vmem:[%s247 + $0xcd8] sm:$0xff]
      %v673 = vld [vmem:[%s247 + $0xce0] sm:$0xff]
      %v674 = vld [vmem:[%s247 + $0xce8] sm:$0xff]
      %v675 = vld [vmem:[%s247 + $0xcf0] sm:$0xff]
      %v676 = vld [vmem:[%s247 + $0xcf8] sm:$0xff]
      %v677 = vld [vmem:[%s247 + $0xd00] sm:$0xff]
      %v678 = vld [vmem:[%s247 + $0xd08] sm:$0xff]
      %v679 = vld [vmem:[%s247 + $0xd10] sm:$0xff]
      %v680 = vld [vmem:[%s247 + $0xd18] sm:$0xff]
      %v681 = vld [vmem:[%s247 + $0xd20] sm:$0xff]
      %v682 = vld [vmem:[%s247 + $0xd28] sm:$0xff]
      %v683 = vld [vmem:[%s247 + $0xd30] sm:$0xff]
      %v684 = vld [vmem:[%s247 + $0xd38] sm:$0xff]
      %v685 = vld [vmem:[%s247 + $0xd40] sm:$0xff]
      %v686 = vld [vmem:[%s247 + $0xd48] sm:$0xff]
      %v687 = vld [vmem:[%s247 + $0xd50] sm:$0xff]
      %v688 = vld [vmem:[%s247 + $0xd58] sm:$0xff]
      %v689 = vld [vmem:[%s247 + $0xd60] sm:$0xff]
      %v690 = vld [vmem:[%s247 + $0xd68] sm:$0xff]
      %v691 = vld [vmem:[%s247 + $0xd70] sm:$0xff]
      %v692 = vld [vmem:[%s247 + $0xd78] sm:$0xff]
      %v693 = vld [vmem:[%s2] sm:$0xff]
      %695 = vset.pattern.permute.xlu0 0
      %696 = vperm.xlu0 %695, %v693
      %v697 = vpop.permute.xlu0 %696
      %vm699 = vcmask 719872
      %v701 = vsel %vm699, %v260, 0
      %703 = vmatpush.msra.mxu0 %v501
      %704 = vmatpush.msra.mxu0 %v485
      %705 = vmatpush.msra.mxu0 %v469
      %706 = vmatpush.msra.mxu0 %v453
      %707 = vmatpush.msra.mxu0 %v437
      %708 = vmatpush.msra.mxu0 %v421
      %709 = vmatpush.msra.mxu0 %v405
      %710 = vmatpush.msra.mxu0 %v389
      %711 = vmatpush.msra.mxu0 %v373
      %712 = vmatpush.msra.mxu0 %v357
      %713 = vmatpush.msra.mxu0 %v341
      %714 = vmatpush.msra.mxu0 %v325
      %715 = vmatpush.msra.mxu0 %v309
      %716 = vmatpush.msra.mxu0 %v293
      %717 = vmatpush.msra.mxu0 %v277
      %718 = vmatpush.msra.mxu0 %v261
      %719 = vmatmul.f32.gmra.mxu0 %v259
      %v720 = vpop.f32.mrf.mxu0
      %v721 = vadd.f32 %v697, %v720
      %722 = vdwg.mxu0
      %723 = vmatpush.msra.mxu0 0.0
      %724 = vmatpush.msra.mxu0 0.0
      %725 = vmatpush.msra.mxu0 0.0
      %726 = vmatpush.msra.mxu0 0.0
      %727 = vmatpush.msra.mxu0 0.0
      %728 = vmatpush.msra.mxu0 %v677
      %729 = vmatpush.msra.mxu0 %v661
      %730 = vmatpush.msra.mxu0 %v645
      %731 = vmatpush.msra.mxu0 %v629
      %732 = vmatpush.msra.mxu0 %v613
      %733 = vmatpush.msra.mxu0 %v597
      %734 = vmatpush.msra.mxu0 %v581
      %735 = vmatpush.msra.mxu0 %v565
      %736 = vmatpush.msra.mxu0 %v549
      %737 = vmatpush.msra.mxu0 %v533
      %738 = vmatpush.msra.mxu0 %v517
      %739 = vmatmul.f32.gmra.mxu0 %v701
      %v740 = vpop.f32.mrf.mxu0
      %v741 = vadd.f32 %v721, %v740
      %742 = vdwg.mxu0
      %743 = vmatpush.msra.mxu0 %v502
      %744 = vmatpush.msra.mxu0 %v486
      %745 = vmatpush.msra.mxu0 %v470
      %746 = vmatpush.msra.mxu0 %v454
      %747 = vmatpush.msra.mxu0 %v438
      %748 = vmatpush.msra.mxu0 %v422
      %749 = vmatpush.msra.mxu0 %v406
      %750 = vmatpush.msra.mxu0 %v390
      %751 = vmatpush.msra.mxu0 %v374
      %752 = vmatpush.msra.mxu0 %v358
      %753 = vmatpush.msra.mxu0 %v342
      %754 = vmatpush.msra.mxu0 %v326
      %755 = vmatpush.msra.mxu0 %v310
      %756 = vmatpush.msra.mxu0 %v294
      %757 = vmatpush.msra.mxu0 %v278
      %758 = vmatpush.msra.mxu0 %v262
      %759 = vmatmul.f32.gmra.mxu0 %v259
      %v760 = vpop.f32.mrf.mxu0
      %v761 = vadd.f32 %v697, %v760
      %762 = vdwg.mxu0
      %763 = vmatpush.msra.mxu0 0.0
      %764 = vmatpush.msra.mxu0 0.0
      %765 = vmatpush.msra.mxu0 0.0
      %766 = vmatpush.msra.mxu0 0.0
      %767 = vmatpush.msra.mxu0 0.0
      %768 = vmatpush.msra.mxu0 %v678
      %769 = vmatpush.msra.mxu0 %v662
      %770 = vmatpush.msra.mxu0 %v646
      %771 = vmatpush.msra.mxu0 %v630
      %772 = vmatpush.msra.mxu0 %v614
      %773 = vmatpush.msra.mxu0 %v598
      %774 = vmatpush.msra.mxu0 %v582
      %775 = vmatpush.msra.mxu0 %v566
      %776 = vmatpush.msra.mxu0 %v550
      %777 = vmatpush.msra.mxu0 %v534
      %778 = vmatpush.msra.mxu0 %v518
      %779 = vmatmul.f32.gmra.mxu0 %v701
      %v780 = vpop.f32.mrf.mxu0
      %v781 = vadd.f32 %v761, %v780
      %782 = vdwg.mxu0
      %783 = vmatpush.msra.mxu0 %v503
      %784 = vmatpush.msra.mxu0 %v487
      %785 = vmatpush.msra.mxu0 %v471
      %786 = vmatpush.msra.mxu0 %v455
      %787 = vmatpush.msra.mxu0 %v439
      %788 = vmatpush.msra.mxu0 %v423
      %789 = vmatpush.msra.mxu0 %v407
      %790 = vmatpush.msra.mxu0 %v391
      %791 = vmatpush.msra.mxu0 %v375
      %792 = vmatpush.msra.mxu0 %v359
      %793 = vmatpush.msra.mxu0 %v343
      %794 = vmatpush.msra.mxu0 %v327
      %795 = vmatpush.msra.mxu0 %v311
      %796 = vmatpush.msra.mxu0 %v295
      %797 = vmatpush.msra.mxu0 %v279
      %798 = vmatpush.msra.mxu0 %v263
      %799 = vmatmul.f32.gmra.mxu0 %v259
      %v800 = vpop.f32.mrf.mxu0
      %v801 = vadd.f32 %v697, %v800
      %802 = vdwg.mxu0
      %803 = vmatpush.msra.mxu0 0.0
      %804 = vmatpush.msra.mxu0 0.0
      %805 = vmatpush.msra.mxu0 0.0
      %806 = vmatpush.msra.mxu0 0.0
      %807 = vmatpush.msra.mxu0 0.0
      %808 = vmatpush.msra.mxu0 %v679
      %809 = vmatpush.msra.mxu0 %v663
      %810 = vmatpush.msra.mxu0 %v647
      %811 = vmatpush.msra.mxu0 %v631
      %812 = vmatpush.msra.mxu0 %v615
      %813 = vmatpush.msra.mxu0 %v599
      %814 = vmatpush.msra.mxu0 %v583
      %815 = vmatpush.msra.mxu0 %v567
      %816 = vmatpush.msra.mxu0 %v551
      %817 = vmatpush.msra.mxu0 %v535
      %818 = vmatpush.msra.mxu0 %v519
      %819 = vmatmul.f32.gmra.mxu0 %v701
      %v820 = vpop.f32.mrf.mxu0
      %v821 = vadd.f32 %v801, %v820
      %822 = vdwg.mxu0
      %823 = vmatpush.msra.mxu0 %v504
      %824 = vmatpush.msra.mxu0 %v488
      %825 = vmatpush.msra.mxu0 %v472
      %826 = vmatpush.msra.mxu0 %v456
      %827 = vmatpush.msra.mxu0 %v440
      %828 = vmatpush.msra.mxu0 %v424
      %829 = vmatpush.msra.mxu0 %v408
      %830 = vmatpush.msra.mxu0 %v392
      %831 = vmatpush.msra.mxu0 %v376
      %832 = vmatpush.msra.mxu0 %v360
      %833 = vmatpush.msra.mxu0 %v344
      %834 = vmatpush.msra.mxu0 %v328
      %835 = vmatpush.msra.mxu0 %v312
      %836 = vmatpush.msra.mxu0 %v296
      %837 = vmatpush.msra.mxu0 %v280
      %838 = vmatpush.msra.mxu0 %v264
      %839 = vmatmul.f32.gmra.mxu0 %v259
      %v840 = vpop.f32.mrf.mxu0
      %v841 = vadd.f32 %v697, %v840
      %842 = vdwg.mxu0
      %843 = vmatpush.msra.mxu0 0.0
      %844 = vmatpush.msra.mxu0 0.0
      %845 = vmatpush.msra.mxu0 0.0
      %846 = vmatpush.msra.mxu0 0.0
      %847 = vmatpush.msra.mxu0 0.0
      %848 = vmatpush.msra.mxu0 %v680
      %849 = vmatpush.msra.mxu0 %v664
      %850 = vmatpush.msra.mxu0 %v648
      %851 = vmatpush.msra.mxu0 %v632
      %852 = vmatpush.msra.mxu0 %v616
      %853 = vmatpush.msra.mxu0 %v600
      %854 = vmatpush.msra.mxu0 %v584
      %855 = vmatpush.msra.mxu0 %v568
      %856 = vmatpush.msra.mxu0 %v552
      %857 = vmatpush.msra.mxu0 %v536
      %858 = vmatpush.msra.mxu0 %v520
      %859 = vmatmul.f32.gmra.mxu0 %v701
      %v860 = vpop.f32.mrf.mxu0
      %v861 = vadd.f32 %v841, %v860
      %862 = vdwg.mxu0
      %863 = vmatpush.msra.mxu0 %v505
      %864 = vmatpush.msra.mxu0 %v489
      %865 = vmatpush.msra.mxu0 %v473
      %866 = vmatpush.msra.mxu0 %v457
      %867 = vmatpush.msra.mxu0 %v441
      %868 = vmatpush.msra.mxu0 %v425
      %869 = vmatpush.msra.mxu0 %v409
      %870 = vmatpush.msra.mxu0 %v393
      %871 = vmatpush.msra.mxu0 %v377
      %872 = vmatpush.msra.mxu0 %v361
      %873 = vmatpush.msra.mxu0 %v345
      %874 = vmatpush.msra.mxu0 %v329
      %875 = vmatpush.msra.mxu0 %v313
      %876 = vmatpush.msra.mxu0 %v297
      %877 = vmatpush.msra.mxu0 %v281
      %878 = vmatpush.msra.mxu0 %v265
      %879 = vmatmul.f32.gmra.mxu0 %v259
      %v880 = vpop.f32.mrf.mxu0
      %v881 = vadd.f32 %v697, %v880
      %882 = vdwg.mxu0
      %883 = vmatpush.msra.mxu0 0.0
      %884 = vmatpush.msra.mxu0 0.0
      %885 = vmatpush.msra.mxu0 0.0
      %886 = vmatpush.msra.mxu0 0.0
      %887 = vmatpush.msra.mxu0 0.0
      %888 = vmatpush.msra.mxu0 %v681
      %889 = vmatpush.msra.mxu0 %v665
      %890 = vmatpush.msra.mxu0 %v649
      %891 = vmatpush.msra.mxu0 %v633
      %892 = vmatpush.msra.mxu0 %v617
      %893 = vmatpush.msra.mxu0 %v601
      %894 = vmatpush.msra.mxu0 %v585
      %895 = vmatpush.msra.mxu0 %v569
      %896 = vmatpush.msra.mxu0 %v553
      %897 = vmatpush.msra.mxu0 %v537
      %898 = vmatpush.msra.mxu0 %v521
      %899 = vmatmul.f32.gmra.mxu0 %v701
      %v900 = vpop.f32.mrf.mxu0
      %v901 = vadd.f32 %v881, %v900
      %902 = vdwg.mxu0
      %903 = vmatpush.msra.mxu0 %v506
      %904 = vmatpush.msra.mxu0 %v490
      %905 = vmatpush.msra.mxu0 %v474
      %906 = vmatpush.msra.mxu0 %v458
      %907 = vmatpush.msra.mxu0 %v442
      %908 = vmatpush.msra.mxu0 %v426
      %909 = vmatpush.msra.mxu0 %v410
      %910 = vmatpush.msra.mxu0 %v394
      %911 = vmatpush.msra.mxu0 %v378
      %912 = vmatpush.msra.mxu0 %v362
      %913 = vmatpush.msra.mxu0 %v346
      %914 = vmatpush.msra.mxu0 %v330
      %915 = vmatpush.msra.mxu0 %v314
      %916 = vmatpush.msra.mxu0 %v298
      %917 = vmatpush.msra.mxu0 %v282
      %918 = vmatpush.msra.mxu0 %v266
      %919 = vmatmul.f32.gmra.mxu0 %v259
      %v920 = vpop.f32.mrf.mxu0
      %v921 = vadd.f32 %v697, %v920
      %922 = vdwg.mxu0
      %923 = vmatpush.msra.mxu0 0.0
      %924 = vmatpush.msra.mxu0 0.0
      %925 = vmatpush.msra.mxu0 0.0
      %926 = vmatpush.msra.mxu0 0.0
      %927 = vmatpush.msra.mxu0 0.0
      %928 = vmatpush.msra.mxu0 %v682
      %929 = vmatpush.msra.mxu0 %v666
      %930 = vmatpush.msra.mxu0 %v650
      %931 = vmatpush.msra.mxu0 %v634
      %932 = vmatpush.msra.mxu0 %v618
      %933 = vmatpush.msra.mxu0 %v602
      %934 = vmatpush.msra.mxu0 %v586
      %935 = vmatpush.msra.mxu0 %v570
      %936 = vmatpush.msra.mxu0 %v554
      %937 = vmatpush.msra.mxu0 %v538
      %938 = vmatpush.msra.mxu0 %v522
      %939 = vmatmul.f32.gmra.mxu0 %v701
      %v940 = vpop.f32.mrf.mxu0
      %v941 = vadd.f32 %v921, %v940
      %942 = vdwg.mxu0
      %943 = vmatpush.msra.mxu0 %v507
      %944 = vmatpush.msra.mxu0 %v491
      %945 = vmatpush.msra.mxu0 %v475
      %946 = vmatpush.msra.mxu0 %v459
      %947 = vmatpush.msra.mxu0 %v443
      %948 = vmatpush.msra.mxu0 %v427
      %949 = vmatpush.msra.mxu0 %v411
      %950 = vmatpush.msra.mxu0 %v395
      %951 = vmatpush.msra.mxu0 %v379
      %952 = vmatpush.msra.mxu0 %v363
      %953 = vmatpush.msra.mxu0 %v347
      %954 = vmatpush.msra.mxu0 %v331
      %955 = vmatpush.msra.mxu0 %v315
      %956 = vmatpush.msra.mxu0 %v299
      %957 = vmatpush.msra.mxu0 %v283
      %958 = vmatpush.msra.mxu0 %v267
      %959 = vmatmul.f32.gmra.mxu0 %v259
      %v960 = vpop.f32.mrf.mxu0
      %v961 = vadd.f32 %v697, %v960
      %962 = vdwg.mxu0
      %963 = vmatpush.msra.mxu0 0.0
      %964 = vmatpush.msra.mxu0 0.0
      %965 = vmatpush.msra.mxu0 0.0
      %966 = vmatpush.msra.mxu0 0.0
      %967 = vmatpush.msra.mxu0 0.0
      %968 = vmatpush.msra.mxu0 %v683
      %969 = vmatpush.msra.mxu0 %v667
      %970 = vmatpush.msra.mxu0 %v651
      %971 = vmatpush.msra.mxu0 %v635
      %972 = vmatpush.msra.mxu0 %v619
      %973 = vmatpush.msra.mxu0 %v603
      %974 = vmatpush.msra.mxu0 %v587
      %975 = vmatpush.msra.mxu0 %v571
      %976 = vmatpush.msra.mxu0 %v555
      %977 = vmatpush.msra.mxu0 %v539
      %978 = vmatpush.msra.mxu0 %v523
      %979 = vmatmul.f32.gmra.mxu0 %v701
      %v980 = vpop.f32.mrf.mxu0
      %v981 = vadd.f32 %v961, %v980
      %982 = vdwg.mxu0
      %983 = vmatpush.msra.mxu0 %v508
      %984 = vmatpush.msra.mxu0 %v492
      %985 = vmatpush.msra.mxu0 %v476
      %986 = vmatpush.msra.mxu0 %v460
      %987 = vmatpush.msra.mxu0 %v444
      %988 = vmatpush.msra.mxu0 %v428
      %989 = vmatpush.msra.mxu0 %v412
      %990 = vmatpush.msra.mxu0 %v396
      %991 = vmatpush.msra.mxu0 %v380
      %992 = vmatpush.msra.mxu0 %v364
      %993 = vmatpush.msra.mxu0 %v348
      %994 = vmatpush.msra.mxu0 %v332
      %995 = vmatpush.msra.mxu0 %v316
      %996 = vmatpush.msra.mxu0 %v300
      %997 = vmatpush.msra.mxu0 %v284
      %998 = vmatpush.msra.mxu0 %v268
      %999 = vmatmul.f32.gmra.mxu0 %v259
      %v1000 = vpop.f32.mrf.mxu0
      %v1001 = vadd.f32 %v697, %v1000
      %1002 = vdwg.mxu0
      %1003 = vmatpush.msra.mxu0 0.0
      %1004 = vmatpush.msra.mxu0 0.0
      %1005 = vmatpush.msra.mxu0 0.0
      %1006 = vmatpush.msra.mxu0 0.0
      %1007 = vmatpush.msra.mxu0 0.0
      %1008 = vmatpush.msra.mxu0 %v684
      %1009 = vmatpush.msra.mxu0 %v668
      %1010 = vmatpush.msra.mxu0 %v652
      %1011 = vmatpush.msra.mxu0 %v636
      %1012 = vmatpush.msra.mxu0 %v620
      %1013 = vmatpush.msra.mxu0 %v604
      %1014 = vmatpush.msra.mxu0 %v588
      %1015 = vmatpush.msra.mxu0 %v572
      %1016 = vmatpush.msra.mxu0 %v556
      %1017 = vmatpush.msra.mxu0 %v540
      %1018 = vmatpush.msra.mxu0 %v524
      %1019 = vmatmul.f32.gmra.mxu0 %v701
      %v1020 = vpop.f32.mrf.mxu0
      %v1021 = vadd.f32 %v1001, %v1020
      %1022 = vdwg.mxu0
      %1023 = vmatpush.msra.mxu0 %v509
      %1024 = vmatpush.msra.mxu0 %v493
      %1025 = vmatpush.msra.mxu0 %v477
      %1026 = vmatpush.msra.mxu0 %v461
      %1027 = vmatpush.msra.mxu0 %v445
      %1028 = vmatpush.msra.mxu0 %v429
      %1029 = vmatpush.msra.mxu0 %v413
      %1030 = vmatpush.msra.mxu0 %v397
      %1031 = vmatpush.msra.mxu0 %v381
      %1032 = vmatpush.msra.mxu0 %v365
      %1033 = vmatpush.msra.mxu0 %v349
      %1034 = vmatpush.msra.mxu0 %v333
      %1035 = vmatpush.msra.mxu0 %v317
      %1036 = vmatpush.msra.mxu0 %v301
      %1037 = vmatpush.msra.mxu0 %v285
      %1038 = vmatpush.msra.mxu0 %v269
      %1039 = vmatmul.f32.gmra.mxu0 %v259
      %v1040 = vpop.f32.mrf.mxu0
      %v1041 = vadd.f32 %v697, %v1040
      %1042 = vdwg.mxu0
      %1043 = vmatpush.msra.mxu0 0.0
      %1044 = vmatpush.msra.mxu0 0.0
      %1045 = vmatpush.msra.mxu0 0.0
      %1046 = vmatpush.msra.mxu0 0.0
      %1047 = vmatpush.msra.mxu0 0.0
      %1048 = vmatpush.msra.mxu0 %v685
      %1049 = vmatpush.msra.mxu0 %v669
      %1050 = vmatpush.msra.mxu0 %v653
      %1051 = vmatpush.msra.mxu0 %v637
      %1052 = vmatpush.msra.mxu0 %v621
      %1053 = vmatpush.msra.mxu0 %v605
      %1054 = vmatpush.msra.mxu0 %v589
      %1055 = vmatpush.msra.mxu0 %v573
      %1056 = vmatpush.msra.mxu0 %v557
      %1057 = vmatpush.msra.mxu0 %v541
      %1058 = vmatpush.msra.mxu0 %v525
      %1059 = vmatmul.f32.gmra.mxu0 %v701
      %v1060 = vpop.f32.mrf.mxu0
      %v1061 = vadd.f32 %v1041, %v1060
      %1062 = vdwg.mxu0
      %1063 = vmatpush.msra.mxu0 %v510
      %1064 = vmatpush.msra.mxu0 %v494
      %1065 = vmatpush.msra.mxu0 %v478
      %1066 = vmatpush.msra.mxu0 %v462
      %1067 = vmatpush.msra.mxu0 %v446
      %1068 = vmatpush.msra.mxu0 %v430
      %1069 = vmatpush.msra.mxu0 %v414
      %1070 = vmatpush.msra.mxu0 %v398
      %1071 = vmatpush.msra.mxu0 %v382
      %1072 = vmatpush.msra.mxu0 %v366
      %1073 = vmatpush.msra.mxu0 %v350
      %1074 = vmatpush.msra.mxu0 %v334
      %1075 = vmatpush.msra.mxu0 %v318
      %1076 = vmatpush.msra.mxu0 %v302
      %1077 = vmatpush.msra.mxu0 %v286
      %1078 = vmatpush.msra.mxu0 %v270
      %1079 = vmatmul.f32.gmra.mxu0 %v259
      %v1080 = vpop.f32.mrf.mxu0
      %v1081 = vadd.f32 %v697, %v1080
      %1082 = vdwg.mxu0
      %1083 = vmatpush.msra.mxu0 0.0
      %1084 = vmatpush.msra.mxu0 0.0
      %1085 = vmatpush.msra.mxu0 0.0
      %1086 = vmatpush.msra.mxu0 0.0
      %1087 = vmatpush.msra.mxu0 0.0
      %1088 = vmatpush.msra.mxu0 %v686
      %1089 = vmatpush.msra.mxu0 %v670
      %1090 = vmatpush.msra.mxu0 %v654
      %1091 = vmatpush.msra.mxu0 %v638
      %1092 = vmatpush.msra.mxu0 %v622
      %1093 = vmatpush.msra.mxu0 %v606
      %1094 = vmatpush.msra.mxu0 %v590
      %1095 = vmatpush.msra.mxu0 %v574
      %1096 = vmatpush.msra.mxu0 %v558
      %1097 = vmatpush.msra.mxu0 %v542
      %1098 = vmatpush.msra.mxu0 %v526
      %1099 = vmatmul.f32.gmra.mxu0 %v701
      %v1100 = vpop.f32.mrf.mxu0
      %v1101 = vadd.f32 %v1081, %v1100
      %1102 = vdwg.mxu0
      %1103 = vmatpush.msra.mxu0 %v511
      %1104 = vmatpush.msra.mxu0 %v495
      %1105 = vmatpush.msra.mxu0 %v479
      %1106 = vmatpush.msra.mxu0 %v463
      %1107 = vmatpush.msra.mxu0 %v447
      %1108 = vmatpush.msra.mxu0 %v431
      %1109 = vmatpush.msra.mxu0 %v415
      %1110 = vmatpush.msra.mxu0 %v399
      %1111 = vmatpush.msra.mxu0 %v383
      %1112 = vmatpush.msra.mxu0 %v367
      %1113 = vmatpush.msra.mxu0 %v351
      %1114 = vmatpush.msra.mxu0 %v335
      %1115 = vmatpush.msra.mxu0 %v319
      %1116 = vmatpush.msra.mxu0 %v303
      %1117 = vmatpush.msra.mxu0 %v287
      %1118 = vmatpush.msra.mxu0 %v271
      %1119 = vmatmul.f32.gmra.mxu0 %v259
      %v1120 = vpop.f32.mrf.mxu0
      %v1121 = vadd.f32 %v697, %v1120
      %1122 = vdwg.mxu0
      %1123 = vmatpush.msra.mxu0 0.0
      %1124 = vmatpush.msra.mxu0 0.0
      %1125 = vmatpush.msra.mxu0 0.0
      %1126 = vmatpush.msra.mxu0 0.0
      %1127 = vmatpush.msra.mxu0 0.0
      %1128 = vmatpush.msra.mxu0 %v687
      %1129 = vmatpush.msra.mxu0 %v671
      %1130 = vmatpush.msra.mxu0 %v655
      %1131 = vmatpush.msra.mxu0 %v639
      %1132 = vmatpush.msra.mxu0 %v623
      %1133 = vmatpush.msra.mxu0 %v607
      %1134 = vmatpush.msra.mxu0 %v591
      %1135 = vmatpush.msra.mxu0 %v575
      %1136 = vmatpush.msra.mxu0 %v559
      %1137 = vmatpush.msra.mxu0 %v543
      %1138 = vmatpush.msra.mxu0 %v527
      %1139 = vmatmul.f32.gmra.mxu0 %v701
      %v1140 = vpop.f32.mrf.mxu0
      %v1141 = vadd.f32 %v1121, %v1140
      %1142 = vdwg.mxu0
      %1143 = vmatpush.msra.mxu0 %v512
      %1144 = vmatpush.msra.mxu0 %v496
      %1145 = vmatpush.msra.mxu0 %v480
      %1146 = vmatpush.msra.mxu0 %v464
      %1147 = vmatpush.msra.mxu0 %v448
      %1148 = vmatpush.msra.mxu0 %v432
      %1149 = vmatpush.msra.mxu0 %v416
      %1150 = vmatpush.msra.mxu0 %v400
      %1151 = vmatpush.msra.mxu0 %v384
      %1152 = vmatpush.msra.mxu0 %v368
      %1153 = vmatpush.msra.mxu0 %v352
      %1154 = vmatpush.msra.mxu0 %v336
      %1155 = vmatpush.msra.mxu0 %v320
      %1156 = vmatpush.msra.mxu0 %v304
      %1157 = vmatpush.msra.mxu0 %v288
      %1158 = vmatpush.msra.mxu0 %v272
      %1159 = vmatmul.f32.gmra.mxu0 %v259
      %v1160 = vpop.f32.mrf.mxu0
      %v1161 = vadd.f32 %v697, %v1160
      %1162 = vdwg.mxu0
      %1163 = vmatpush.msra.mxu0 0.0
      %1164 = vmatpush.msra.mxu0 0.0
      %1165 = vmatpush.msra.mxu0 0.0
      %1166 = vmatpush.msra.mxu0 0.0
      %1167 = vmatpush.msra.mxu0 0.0
      %1168 = vmatpush.msra.mxu0 %v688
      %1169 = vmatpush.msra.mxu0 %v672
      %1170 = vmatpush.msra.mxu0 %v656
      %1171 = vmatpush.msra.mxu0 %v640
      %1172 = vmatpush.msra.mxu0 %v624
      %1173 = vmatpush.msra.mxu0 %v608
      %1174 = vmatpush.msra.mxu0 %v592
      %1175 = vmatpush.msra.mxu0 %v576
      %1176 = vmatpush.msra.mxu0 %v560
      %1177 = vmatpush.msra.mxu0 %v544
      %1178 = vmatpush.msra.mxu0 %v528
      %1179 = vmatmul.f32.gmra.mxu0 %v701
      %v1180 = vpop.f32.mrf.mxu0
      %v1181 = vadd.f32 %v1161, %v1180
      %1182 = vdwg.mxu0
      %1183 = vmatpush.msra.mxu0 %v513
      %1184 = vmatpush.msra.mxu0 %v497
      %1185 = vmatpush.msra.mxu0 %v481
      %1186 = vmatpush.msra.mxu0 %v465
      %1187 = vmatpush.msra.mxu0 %v449
      %1188 = vmatpush.msra.mxu0 %v433
      %1189 = vmatpush.msra.mxu0 %v417
      %1190 = vmatpush.msra.mxu0 %v401
      %1191 = vmatpush.msra.mxu0 %v385
      %1192 = vmatpush.msra.mxu0 %v369
      %1193 = vmatpush.msra.mxu0 %v353
      %1194 = vmatpush.msra.mxu0 %v337
      %1195 = vmatpush.msra.mxu0 %v321
      %1196 = vmatpush.msra.mxu0 %v305
      %1197 = vmatpush.msra.mxu0 %v289
      %1198 = vmatpush.msra.mxu0 %v273
      %1199 = vmatmul.f32.gmra.mxu0 %v259
      %v1200 = vpop.f32.mrf.mxu0
      %v1201 = vadd.f32 %v697, %v1200
      %1202 = vdwg.mxu0
      %1203 = vmatpush.msra.mxu0 0.0
      %1204 = vmatpush.msra.mxu0 0.0
      %1205 = vmatpush.msra.mxu0 0.0
      %1206 = vmatpush.msra.mxu0 0.0
      %1207 = vmatpush.msra.mxu0 0.0
      %1208 = vmatpush.msra.mxu0 %v689
      %1209 = vmatpush.msra.mxu0 %v673
      %1210 = vmatpush.msra.mxu0 %v657
      %1211 = vmatpush.msra.mxu0 %v641
      %1212 = vmatpush.msra.mxu0 %v625
      %1213 = vmatpush.msra.mxu0 %v609
      %1214 = vmatpush.msra.mxu0 %v593
      %1215 = vmatpush.msra.mxu0 %v577
      %1216 = vmatpush.msra.mxu0 %v561
      %1217 = vmatpush.msra.mxu0 %v545
      %1218 = vmatpush.msra.mxu0 %v529
      %1219 = vmatmul.f32.gmra.mxu0 %v701
      %v1220 = vpop.f32.mrf.mxu0
      %v1221 = vadd.f32 %v1201, %v1220
      %1222 = vdwg.mxu0
      %1223 = vmatpush.msra.mxu0 %v514
      %1224 = vmatpush.msra.mxu0 %v498
      %1225 = vmatpush.msra.mxu0 %v482
      %1226 = vmatpush.msra.mxu0 %v466
      %1227 = vmatpush.msra.mxu0 %v450
      %1228 = vmatpush.msra.mxu0 %v434
      %1229 = vmatpush.msra.mxu0 %v418
      %1230 = vmatpush.msra.mxu0 %v402
      %1231 = vmatpush.msra.mxu0 %v386
      %1232 = vmatpush.msra.mxu0 %v370
      %1233 = vmatpush.msra.mxu0 %v354
      %1234 = vmatpush.msra.mxu0 %v338
      %1235 = vmatpush.msra.mxu0 %v322
      %1236 = vmatpush.msra.mxu0 %v306
      %1237 = vmatpush.msra.mxu0 %v290
      %1238 = vmatpush.msra.mxu0 %v274
      %1239 = vmatmul.f32.gmra.mxu0 %v259
      %v1240 = vpop.f32.mrf.mxu0
      %v1241 = vadd.f32 %v697, %v1240
      %1242 = vdwg.mxu0
      %1243 = vmatpush.msra.mxu0 0.0
      %1244 = vmatpush.msra.mxu0 0.0
      %1245 = vmatpush.msra.mxu0 0.0
      %1246 = vmatpush.msra.mxu0 0.0
      %1247 = vmatpush.msra.mxu0 0.0
      %1248 = vmatpush.msra.mxu0 %v690
      %1249 = vmatpush.msra.mxu0 %v674
      %1250 = vmatpush.msra.mxu0 %v658
      %1251 = vmatpush.msra.mxu0 %v642
      %1252 = vmatpush.msra.mxu0 %v626
      %1253 = vmatpush.msra.mxu0 %v610
      %1254 = vmatpush.msra.mxu0 %v594
      %1255 = vmatpush.msra.mxu0 %v578
      %1256 = vmatpush.msra.mxu0 %v562
      %1257 = vmatpush.msra.mxu0 %v546
      %1258 = vmatpush.msra.mxu0 %v530
      %1259 = vmatmul.f32.gmra.mxu0 %v701
      %v1260 = vpop.f32.mrf.mxu0
      %v1261 = vadd.f32 %v1241, %v1260
      %1262 = vdwg.mxu0
      %1263 = vmatpush.msra.mxu0 %v515
      %1264 = vmatpush.msra.mxu0 %v499
      %1265 = vmatpush.msra.mxu0 %v483
      %1266 = vmatpush.msra.mxu0 %v467
      %1267 = vmatpush.msra.mxu0 %v451
      %1268 = vmatpush.msra.mxu0 %v435
      %1269 = vmatpush.msra.mxu0 %v419
      %1270 = vmatpush.msra.mxu0 %v403
      %1271 = vmatpush.msra.mxu0 %v387
      %1272 = vmatpush.msra.mxu0 %v371
      %1273 = vmatpush.msra.mxu0 %v355
      %1274 = vmatpush.msra.mxu0 %v339
      %1275 = vmatpush.msra.mxu0 %v323
      %1276 = vmatpush.msra.mxu0 %v307
      %1277 = vmatpush.msra.mxu0 %v291
      %1278 = vmatpush.msra.mxu0 %v275
      %1279 = vmatmul.f32.gmra.mxu0 %v259
      %v1280 = vpop.f32.mrf.mxu0
      %v1281 = vadd.f32 %v697, %v1280
      %1282 = vdwg.mxu0
      %1283 = vmatpush.msra.mxu0 0.0
      %1284 = vmatpush.msra.mxu0 0.0
      %1285 = vmatpush.msra.mxu0 0.0
      %1286 = vmatpush.msra.mxu0 0.0
      %1287 = vmatpush.msra.mxu0 0.0
      %1288 = vmatpush.msra.mxu0 %v691
      %1289 = vmatpush.msra.mxu0 %v675
      %1290 = vmatpush.msra.mxu0 %v659
      %1291 = vmatpush.msra.mxu0 %v643
      %1292 = vmatpush.msra.mxu0 %v627
      %1293 = vmatpush.msra.mxu0 %v611
      %1294 = vmatpush.msra.mxu0 %v595
      %1295 = vmatpush.msra.mxu0 %v579
      %1296 = vmatpush.msra.mxu0 %v563
      %1297 = vmatpush.msra.mxu0 %v547
      %1298 = vmatpush.msra.mxu0 %v531
      %1299 = vmatmul.f32.gmra.mxu0 %v701
      %v1300 = vpop.f32.mrf.mxu0
      %v1301 = vadd.f32 %v1281, %v1300
      %1302 = vdwg.mxu0
      %1303 = vmatpush.msra.mxu0 %v516
      %1304 = vmatpush.msra.mxu0 %v500
      %1305 = vmatpush.msra.mxu0 %v484
      %1306 = vmatpush.msra.mxu0 %v468
      %1307 = vmatpush.msra.mxu0 %v452
      %1308 = vmatpush.msra.mxu0 %v436
      %1309 = vmatpush.msra.mxu0 %v420
      %1310 = vmatpush.msra.mxu0 %v404
      %1311 = vmatpush.msra.mxu0 %v388
      %1312 = vmatpush.msra.mxu0 %v372
      %1313 = vmatpush.msra.mxu0 %v356
      %1314 = vmatpush.msra.mxu0 %v340
      %1315 = vmatpush.msra.mxu0 %v324
      %1316 = vmatpush.msra.mxu0 %v308
      %1317 = vmatpush.msra.mxu0 %v292
      %1318 = vmatpush.msra.mxu0 %v276
      %1319 = vmatmul.f32.gmra.mxu0 %v259
      %v1320 = vpop.f32.mrf.mxu0
      %v1321 = vadd.f32 %v697, %v1320
      %1322 = vdwg.mxu0
      %1323 = vmatpush.msra.mxu0 0.0
      %1324 = vmatpush.msra.mxu0 0.0
      %1325 = vmatpush.msra.mxu0 0.0
      %1326 = vmatpush.msra.mxu0 0.0
      %1327 = vmatpush.msra.mxu0 0.0
      %1328 = vmatpush.msra.mxu0 %v692
      %1329 = vmatpush.msra.mxu0 %v676
      %1330 = vmatpush.msra.mxu0 %v660
      %1331 = vmatpush.msra.mxu0 %v644
      %1332 = vmatpush.msra.mxu0 %v628
      %1333 = vmatpush.msra.mxu0 %v612
      %1334 = vmatpush.msra.mxu0 %v596
      %1335 = vmatpush.msra.mxu0 %v580
      %1336 = vmatpush.msra.mxu0 %v564
      %1337 = vmatpush.msra.mxu0 %v548
      %1338 = vmatpush.msra.mxu0 %v532
      %1339 = vmatmul.f32.gmra.mxu0 %v701
      %v1340 = vpop.f32.mrf.mxu0
      %v1341 = vadd.f32 %v1321, %v1340
      %1342 = vdwg.mxu0
      %1343 = vst [vmem:[%s257] sm:$0xff] %v741
      %1344 = vst [vmem:[%s257 + $0x8] sm:$0xff] %v781
      %1345 = vst [vmem:[%s257 + $0x10] sm:$0xff] %v821
      %1346 = vst [vmem:[%s257 + $0x18] sm:$0xff] %v861
      %1347 = vst [vmem:[%s257 + $0x20] sm:$0xff] %v901
      %1348 = vst [vmem:[%s257 + $0x28] sm:$0xff] %v941
      %1349 = vst [vmem:[%s257 + $0x30] sm:$0xff] %v981
      %1350 = vst [vmem:[%s257 + $0x38] sm:$0xff] %v1021
      %1351 = vst [vmem:[%s257 + $0x40] sm:$0xff] %v1061
      %1352 = vst [vmem:[%s257 + $0x48] sm:$0xff] %v1101
      %1353 = vst [vmem:[%s257 + $0x50] sm:$0xff] %v1141
      %1354 = vst [vmem:[%s257 + $0x58] sm:$0xff] %v1181
      %1355 = vst [vmem:[%s257 + $0x60] sm:$0xff] %v1221
      %1356 = vst [vmem:[%s257 + $0x68] sm:$0xff] %v1261
      %1357 = vst [vmem:[%s257 + $0x70] sm:$0xff] %v1301
      %1358 = vst [vmem:[%s257 + $0x78] sm:$0xff] %v1341
      %p1359 = scmp.eq.s32.totalorder %s21, 0
      %p1360 = scmp.eq.s32.totalorder %s22, 0
      %p1361 = pnand %p1359, %p1360
      %p1362 = pneg %p1361
      // Predicated region
      $region33: #{decoder_block_forward.22} parent=31 // pred_check
        _
      $region34: #{decoder_block_forward.22} parent=31 // pred_check_branch
        %1364 = sbr.rel (%p1361) target = $region36
      $region35: #{decoder_block_forward.22} parent=31 // pred_region
        %vm1365 = vcmask 7168
        %1366 = vst.msk [vmem:[%s4] sm:$0xff] %vm1365, 0.0
        %1367 = vst.msk [vmem:[%s5] sm:$0xff] %vm1365, 0.0
      $region36: #{decoder_block_forward.22} parent=31 // pred_fallthru
        _
      %v1368 = vld [vmem:[%s4] sm:$0xff]
      %v1369 = vadd.f32 %v741, %v781
      %v1370 = vadd.f32 %v1369, %v821
      %v1371 = vadd.f32 %v1370, %v861
      %v1372 = vadd.f32 %v1371, %v901
      %v1373 = vadd.f32 %v1372, %v941
      %v1374 = vadd.f32 %v1373, %v981
      %v1375 = vadd.f32 %v1374, %v1021
      %v1376 = vadd.f32 %v1375, %v1061
      %v1377 = vadd.f32 %v1376, %v1101
      %v1378 = vadd.f32 %v1377, %v1141
      %v1379 = vadd.f32 %v1378, %v1181
      %v1380 = vadd.f32 %v1379, %v1221
      %v1381 = vadd.f32 %v1380, %v1261
      %v1382 = vadd.f32 %v1381, %v1301
      %v1383 = vadd.f32 %v1382, %v1341
      %1384 = vadd.xlane.f32.xlu0 %v1383
      %v1385 = vpop.xlane.xlu0 %1384
      %v1386 = vadd.f32 %v1368, %v1385
      %vm1387 = vcmask 7168
      %1388 = vst.msk [vmem:[%s4] sm:$0xff] %vm1387, %v1386
      %v1389 = vld [vmem:[%s5] sm:$0xff]
      %v1390 = vmul.f32 %v741, %v741
      %v1391 = vmul.f32 %v781, %v781
      %v1392 = vmul.f32 %v821, %v821
      %v1393 = vmul.f32 %v861, %v861
      %v1394 = vmul.f32 %v901, %v901
      %v1395 = vmul.f32 %v941, %v941
      %v1396 = vmul.f32 %v981, %v981
      %v1397 = vmul.f32 %v1021, %v1021
      %v1398 = vmul.f32 %v1061, %v1061
      %v1399 = vmul.f32 %v1101, %v1101
      %v1400 = vmul.f32 %v1141, %v1141
      %v1401 = vmul.f32 %v1181, %v1181
      %v1402 = vmul.f32 %v1221, %v1221
      %v1403 = vmul.f32 %v1261, %v1261
      %v1404 = vmul.f32 %v1301, %v1301
      %v1405 = vmul.f32 %v1341, %v1341
      %v1406 = vadd.f32 %v1390, %v1391
      %v1407 = vadd.f32 %v1406, %v1392
      %v1408 = vadd.f32 %v1407, %v1393
      %v1409 = vadd.f32 %v1408, %v1394
      %v1410 = vadd.f32 %v1409, %v1395
      %v1411 = vadd.f32 %v1410, %v1396
      %v1412 = vadd.f32 %v1411, %v1397
      %v1413 = vadd.f32 %v1412, %v1398
      %v1414 = vadd.f32 %v1413, %v1399
      %v1415 = vadd.f32 %v1414, %v1400
      %v1416 = vadd.f32 %v1415, %v1401
      %v1417 = vadd.f32 %v1416, %v1402
      %v1418 = vadd.f32 %v1417, %v1403
      %v1419 = vadd.f32 %v1418, %v1404
      %v1420 = vadd.f32 %v1419, %v1405
      %1421 = vadd.xlane.f32.xlu0 %v1420
      %v1422 = vpop.xlane.xlu0 %1421
      %v1423 = vadd.f32 %v1389, %v1422
      %1424 = vst.msk [vmem:[%s5] sm:$0xff] %vm1387, %v1423
      %s1425 = smul.u32 16, %s22
      %p1426 = scmp.lt.s32.totalorder %s21, 1
      %s1427 = scalar_select %p1426, %s21, 1
      %p1428 = scmp.lt.s32.totalorder %s1425, 15
      %s1429 = scalar_select %p1428, %s1425, 15
      %s1430 = smul.addr %s1427, 16
      %s1431 = sadd.s32 %s1429, %s1430
      %s1432 = smul.addr %s1431, 8
      %s1433 = scalar_lea.vmem %s3, %s1432
      // Predicated region
      $region37: #{decoder_block_forward.22} parent=31 // pred_check
        %p1434 = pneg %p119
      $region38: #{decoder_block_forward.22} parent=31 // pred_check_branch
        %1436 = sbr.rel (%p1434) target = $region40
      $region39: #{decoder_block_forward.22} parent=31 // pred_region
        %s1437 = smul.u32 16, %s22
      $region40: #{decoder_block_forward.22} parent=31 // pred_fallthru
        _
      // Predicated region
      $region41: #{decoder_block_forward.22} parent=31 // pred_check
        %p1438 = pneg %p140
      $region42: #{decoder_block_forward.22} parent=31 // pred_check_branch
        %1440 = sbr.rel (%p1438) target = $region44
      $region43: #{decoder_block_forward.22} parent=31 // pred_region
        _
      $region44: #{decoder_block_forward.22} parent=31 // pred_fallthru
        _
      // Predicated region
      $region45: #{decoder_block_forward.22} parent=31 // pred_check
        %p1441 = pneg %p161
      $region46: #{decoder_block_forward.22} parent=31 // pred_check_branch
        %1443 = sbr.rel (%p1441) target = $region48
      $region47: #{decoder_block_forward.22} parent=31 // pred_region
        _
      $region48: #{decoder_block_forward.22} parent=31 // pred_fallthru
        _
      // Predicated region
      $region49: #{decoder_block_forward.22} parent=31 // pred_check
        %p1444 = pneg %p140
      $region50: #{decoder_block_forward.22} parent=31 // pred_check_branch
        %1446 = sbr.rel (%p1444) target = $region52
      $region51: #{decoder_block_forward.22} parent=31 // pred_region
        _
      $region52: #{decoder_block_forward.22} parent=31 // pred_fallthru
        _
      // Predicated region
      $region53: #{decoder_block_forward.22} parent=31 // pred_check
        %p1447 = pneg %p161
      $region54: #{decoder_block_forward.22} parent=31 // pred_check_branch
        %1449 = sbr.rel (%p1447) target = $region56
      $region55: #{decoder_block_forward.22} parent=31 // pred_region
        _
      $region56: #{decoder_block_forward.22} parent=31 // pred_fallthru
        _
    $region32: #{decoder_block_forward.22} parent=5 // pred_fallthru
      _
    %p1450 = scmp.le.s32.totalorder 2, %s12
    // Predicated region
    $region57: #{decoder_block_forward.22} parent=5 // pred_check
      %p1451 = pneg %p1450
    $region58: #{decoder_block_forward.22} parent=5 // pred_check_branch
      %1453 = sbr.rel (%p1451) target = $region60
    $region59: #{decoder_block_forward.22} parent=5 // pred_region
      %s1454 = ssub.s32 %s12, 2
      // Predicated region
      $region61: #{decoder_block_forward.22} parent=59 // pred_check
        %p1455 = pneg %p125
      $region62: #{decoder_block_forward.22} parent=59 // pred_check_branch
        %1457 = sbr.rel (%p1455) target = $region64
      $region63: #{decoder_block_forward.22} parent=59 // pred_region
        %s1458 = smul.u32 16, %s24
        %p1459 = scmp.lt.s32.totalorder %s23, 1
        %s1460 = scalar_select %p1459, %s23, 1
        %p1461 = scmp.lt.s32.totalorder %s1458, 15
        %s1462 = scalar_select %p1461, %s1458, 15
        %s1463 = smul.addr %s1460, 16
        %s1464 = sadd.s32 %s1462, %s1463
        %s1465 = smul.addr %s1464, 8
        %s1466 = scalar_lea.vmem %s3, %s1465
      $region64: #{decoder_block_forward.22} parent=59 // pred_fallthru
        _
    $region60: #{decoder_block_forward.22} parent=5 // pred_fallthru
      _
  $region6: #{decoder_block_forward.22} parent=0 // loop_footer
    %s16 = sadd.s32 1, %s12
  $region7: #{decoder_block_forward.22} parent=0 // loop_footer_branch
    %11 = sbr.rel target = $region3
  $region8: #{decoder_block_forward.22} parent=0 // loop_exit
    _

</llo_original>
